<compile_context>
chip_gen: v7x
topology: tpu7x:2x2x1
jax: 0.10.0
libtpu: 0.0.40
codegen_flags: <defaults>
</compile_context>

<pallas_src>
import math
from functools import partial

import numpy as np
import jax
import jax.numpy as jnp
from jax.experimental import pallas as pl
from jax.experimental.pallas import tpu as pltpu

_VMEM = pltpu.MemorySpace.VMEM
_EPS = 1e-5
_VMEM_LIMIT = 32 * 1024 * 1024


# ----------------------------------------------------------------------------
# Small helpers
# ----------------------------------------------------------------------------

def _bcast_spec(shape, grid_rank):
    """Full-extent block, identical for every grid step (weights / biases)."""
    zeros = (0,) * len(shape)
    if grid_rank == 1:
        return pl.BlockSpec(shape, lambda i: zeros)
    if grid_rank == 2:
        return pl.BlockSpec(shape, lambda i, j: zeros)
    return pl.BlockSpec(shape, lambda *_: zeros)


def _row_tile(m, cap=256):
    # Largest row tile <= cap that divides M (keeps v7x 64 MiB VMEM safe).
    for t in (cap, 128, 64, 32, 16, 8):
        if t <= m and m % t == 0:
            return t
    return m


# XLA's float32 rational approximation of erf -> exact-GELU semantics without
# relying on lax.erf lowering inside Mosaic.
_ERF_ALPHA = (0.00022905065861350646, 0.0034082910107109506,
              0.050955695062380861, 0.18520832239976145, 1.128379143519084)
_ERF_BETA = (-1.1791602954361697e-07, 2.3547966471313185e-05,
             0.0010179625278914885, 0.014070470171167667,
             0.11098505178285362, 0.49746925110067538, 1.0)


def _erf_f32(x):
    x = jnp.clip(x, -4.0, 4.0)
    x2 = x * x
    p = jnp.float32(_ERF_ALPHA[0])
    for c in _ERF_ALPHA[1:]:
        p = p * x2 + jnp.float32(c)
    q = jnp.float32(_ERF_BETA[0])
    for c in _ERF_BETA[1:]:
        q = q * x2 + jnp.float32(c)
    return x * p * pl.reciprocal(q, approx=True)


def _gelu(x):
    return 0.5 * x * (1.0 + _erf_f32(x * jnp.float32(1.0 / math.sqrt(2.0))))


def _layernorm(x, g, b, eps=_EPS):
    mean = jnp.mean(x, axis=-1, keepdims=True)
    xc = x - mean
    var = jnp.mean(xc * xc, axis=-1, keepdims=True)
    return xc * jax.lax.rsqrt(var + eps) * g + b


# ----------------------------------------------------------------------------
# Pallas kernels
# ----------------------------------------------------------------------------

def _patch_embed_kernel(x_ref, w_ref, b_ref, g_ref, beta_ref, o_ref):
    # fused conv-as-matmul + bias + LayerNorm
    x = x_ref[...].astype(jnp.bfloat16)
    h = jnp.dot(x, w_ref[...], preferred_element_type=jnp.float32) + b_ref[...]
    o_ref[...] = _layernorm(h, g_ref[...], beta_ref[...]).astype(o_ref.dtype)


def _swin_block_kernel(x_ref, g1_ref, b1_ref, qkvw_ref, qkvb_ref,
                       projw_ref, projb_ref, bias_ref, mask_ref,
                       g2_ref, b2_ref, w1_ref, mb1_ref, w2_ref, mb2_ref,
                       o_ref, *, num_heads, num_windows, win_len, scale,
                       add_mask):
    """One batch element per grid step.  Rows are laid out as nW*L tokens."""
    x = x_ref[0].astype(jnp.float32)                          # (M, C), M=nW*L
    M, C = x.shape
    L = win_len
    hd = C // num_heads

    # ---- attention branch: LN1 + QKV + windowed MHSA + proj + residual -----
    y = _layernorm(x, g1_ref[...], b1_ref[...])
    qkv = jnp.dot(y.astype(jnp.bfloat16), qkvw_ref[...],
                  preferred_element_type=jnp.float32) + qkvb_ref[...]  # (M,3C)

    bias = bias_ref[...].astype(jnp.float32)                  # (nH, L, L)
    pw = projw_ref[...]                                       # (C, C) bf16

    win_out = []
    for w in range(num_windows):                              # static, small
        r0 = w * L
        acc = jnp.zeros((L, C), jnp.float32)
        for h in range(num_heads):                            # static, small
            q = qkv[r0:r0 + L, h * hd:(h + 1) * hd]
            k = qkv[r0:r0 + L, C + h * hd:C + (h + 1) * hd]
            v = qkv[r0:r0 + L, 2 * C + h * hd:2 * C + (h + 1) * hd]
            s = jax.lax.dot_general(
                q.astype(jnp.bfloat16), k.astype(jnp.bfloat16),
                (((1,), (1,)), ((), ())),
                preferred_element_type=jnp.float32) * scale   # (L, L)
            s = s + bias[h]
            if add_mask:
                s = s + mask_ref[w].astype(jnp.float32)
            s = s - jnp.max(s, axis=-1, keepdims=True)
            p = jnp.exp(s)
            p = p * pl.reciprocal(jnp.sum(p, axis=-1, keepdims=True),
                                  approx=True)
            o_h = jnp.dot(p.astype(jnp.bfloat16), v.astype(jnp.bfloat16),
                          preferred_element_type=jnp.float32)  # (L, hd)
            # projection of concatenated heads == sum of per-head projections
            acc = acc + jnp.dot(o_h.astype(jnp.bfloat16),
                                pw[h * hd:(h + 1) * hd, :],
                                preferred_element_type=jnp.float32)
        win_out.append(acc)
    attn = win_out[0] if num_windows == 1 else jnp.concatenate(win_out, axis=0)
    x = x + attn + projb_ref[...]                             # residual 1

    # ---- MLP branch: LN2 + Linear + GELU + Linear + residual ---------------
    y2 = _layernorm(x, g2_ref[...], b2_ref[...])
    h1 = jnp.dot(y2.astype(jnp.bfloat16), w1_ref[...],
                 preferred_element_type=jnp.float32) + mb1_ref[...]
    h1 = _gelu(h1)
    out = jnp.dot(h1.astype(jnp.bfloat16), w2_ref[...],
                  preferred_element_type=jnp.float32) + mb2_ref[...]
    o_ref[0] = (x + out).astype(o_ref.dtype)                  # residual 2


def _merge_kernel(x_ref, g_ref, b_ref, w_ref, o_ref):
    # fused patch-merging LayerNorm + channel reduction (no bias)
    x = x_ref[...].astype(jnp.float32)
    y = _layernorm(x, g_ref[...], b_ref[...])
    o_ref[...] = jnp.dot(y.astype(jnp.bfloat16), w_ref[...],
                         preferred_element_type=jnp.float32).astype(o_ref.dtype)


def _head_kernel(x_ref, g_ref, b_ref, w_ref, hb_ref, o_ref):
    # fused final LayerNorm + global average pool + classifier head
    x = x_ref[...].astype(jnp.float32)                        # (B, L, C)
    y = _layernorm(x, g_ref[...], b_ref[...])
    pooled = jnp.mean(y, axis=1)                              # (B, C)
    o_ref[...] = (jnp.dot(pooled.astype(jnp.bfloat16), w_ref[...],
                          preferred_element_type=jnp.float32)
                  + hb_ref[...]).astype(o_ref.dtype)


# ----------------------------------------------------------------------------
# pallas_call wrappers
# ----------------------------------------------------------------------------

def pallas_patch_embed(xp, w, b, g, beta):
    M, K = xp.shape
    N = w.shape[1]
    tm = _row_tile(M)
    cost = pl.CostEstimate(flops=2 * M * K * N, transcendentals=0,
                           bytes_accessed=4 * (M * K + M * N) + 2 * K * N)
    return pl.pallas_call(
        _patch_embed_kernel,
        out_shape=jax.ShapeDtypeStruct((M, N), jnp.float32),
        grid=(M // tm,),
        in_specs=[pl.BlockSpec((tm, K), lambda i: (i, 0)),
                  _bcast_spec((K, N), 1),
                  _bcast_spec((1, N), 1),
                  _bcast_spec((1, N), 1),
                  _bcast_spec((1, N), 1)],
        out_specs=pl.BlockSpec((tm, N), lambda i: (i, 0)),
        compiler_params=pltpu.CompilerParams(
            dimension_semantics=("parallel",), vmem_limit_bytes=_VMEM_LIMIT),
        cost_estimate=cost,
    )(xp, w, b.reshape(1, N), g.reshape(1, N), beta.reshape(1, N))


def pallas_swin_block(xw, p, num_heads, mask, scale, shifted):
    # xw: (B, nW*L, C) windowed (flattened) tokens ; mask: (nW or 1, L, L)
    B, M, C = xw.shape
    L = mask.shape[1]
    nW = M // L
    nH = num_heads
    Ch = p["mlp_w1"].shape[1]
    flops = B * (2 * M * C * 3 * C + 4 * M * L * C + 2 * M * C * C
                 + 4 * M * C * Ch)
    cost = pl.CostEstimate(
        flops=flops,
        transcendentals=B * (nH * nW * L * L + M * Ch),
        bytes_accessed=4 * (2 * B * M * C + nH * L * L + mask.size)
                       + 2 * (3 * C * C + C * C + 2 * C * Ch))
    return pl.pallas_call(
        partial(_swin_block_kernel, num_heads=nH, num_windows=nW, win_len=L,
                scale=scale, add_mask=shifted),
        out_shape=jax.ShapeDtypeStruct((B, M, C), xw.dtype),
        grid=(B,),
        in_specs=[pl.BlockSpec((1, M, C), lambda b: (b, 0, 0)),
                  _bcast_spec((1, C), 1), _bcast_spec((1, C), 1),      # norm1
                  _bcast_spec((C, 3 * C), 1), _bcast_spec((1, 3 * C), 1),
                  _bcast_spec((C, C), 1), _bcast_spec((1, C), 1),      # proj
                  _bcast_spec((nH, L, L), 1),                          # bias
                  _bcast_spec(mask.shape, 1),                          # mask
                  _bcast_spec((1, C), 1), _bcast_spec((1, C), 1),      # norm2
                  _bcast_spec((C, Ch), 1), _bcast_spec((1, Ch), 1),    # mlp1
                  _bcast_spec((Ch, C), 1), _bcast_spec((1, C), 1)],    # mlp2
        out_specs=pl.BlockSpec((1, M, C), lambda b: (b, 0, 0)),
        compiler_params=pltpu.CompilerParams(
            dimension_semantics=("parallel",), vmem_limit_bytes=_VMEM_LIMIT),
        cost_estimate=cost,
    )(xw,
      p["norm1_g"].reshape(1, C), p["norm1_b"].reshape(1, C),
      p["qkv_w"], p["qkv_b"].reshape(1, 3 * C),
      p["proj_w"], p["proj_b"].reshape(1, C),
      p["rel_bias"], mask,
      p["norm2_g"].reshape(1, C), p["norm2_b"].reshape(1, C),
      p["mlp_w1"], p["mlp_b1"].reshape(1, Ch),
      p["mlp_w2"], p["mlp_b2"].reshape(1, C))


def pallas_merge(x2d, g, b, w):
    M, C4 = x2d.shape
    N = w.shape[1]
    tm = _row_tile(M)
    cost = pl.CostEstimate(flops=2 * M * C4 * N, transcendentals=0,
                           bytes_accessed=4 * (M * C4 + M * N) + 2 * C4 * N)
    return pl.pallas_call(
        _merge_kernel,
        out_shape=jax.ShapeDtypeStruct((M, N), x2d.dtype),
        grid=(M // tm,),
        in_specs=[pl.BlockSpec((tm, C4), lambda i: (i, 0)),
                  _bcast_spec((1, C4), 1), _bcast_spec((1, C4), 1),
                  _bcast_spec((C4, N), 1)],
        out_specs=pl.BlockSpec((tm, N), lambda i: (i, 0)),
        compiler_params=pltpu.CompilerParams(
            dimension_semantics=("parallel",), vmem_limit_bytes=_VMEM_LIMIT),
        cost_estimate=cost,
    )(x2d, g.reshape(1, C4), b.reshape(1, C4), w)


def pallas_head(x3d, g, b, w, hb):
    B, L, C = x3d.shape
    N = w.shape[1]
    return pl.pallas_call(
        _head_kernel,
        out_shape=jax.ShapeDtypeStruct((B, N), jnp.float32),
        in_specs=[pl.BlockSpec(memory_space=_VMEM)] * 5,
        out_specs=pl.BlockSpec(memory_space=_VMEM),
        compiler_params=pltpu.CompilerParams(vmem_limit_bytes=_VMEM_LIMIT),
    )(x3d, g.reshape(1, C), b.reshape(1, C), w, hb.reshape(1, N))


# ----------------------------------------------------------------------------
# Swin forward (thin XLA glue + fused kernels)
# ----------------------------------------------------------------------------

def _relative_position_index(wh, ww):
    coords = np.stack(np.meshgrid(np.arange(wh), np.arange(ww), indexing="ij"))
    flat = coords.reshape(2, -1)
    rel = flat[:, :, None] - flat[:, None, :]
    rel = rel.transpose(1, 2, 0).astype(np.int64)
    rel[:, :, 0] += wh - 1
    rel[:, :, 1] += ww - 1
    rel[:, :, 0] *= 2 * ww - 1
    return rel.sum(-1)  # (L, L)


def _make_shift_mask(pH, pW, window_size, shift_size):
    wh, ww = window_size
    sh, sw = shift_size
    mask = np.zeros((pH, pW), np.float32)
    h_slices = ((0, pH - wh), (pH - wh, pH - sh), (pH - sh, pH))
    w_slices = ((0, pW - ww), (pW - ww, pW - sw), (pW - sw, pW))
    cnt = 0
    for hs in h_slices:
        for wsl in w_slices:
            mask[hs[0]:hs[1], wsl[0]:wsl[1]] = cnt
            cnt += 1
    L = wh * ww
    mask = mask.reshape(pH // wh, wh, pW // ww, ww).transpose(0, 2, 1, 3).reshape(-1, L)
    diff = mask[:, None, :] - mask[:, :, None]
    return np.where(diff != 0, np.float32(-100.0), np.float32(0.0))  # (nW, L, L)


def patch_embed(x, p, patch_size):
    B, Cin, H, W = x.shape
    ph, pw = patch_size
    Hp, Wp = H // ph, W // pw
    xp = x.reshape(B, Cin, Hp, ph, Wp, pw).transpose(0, 2, 4, 1, 3, 5)
    xp = xp.reshape(B * Hp * Wp, Cin * ph * pw)
    h = pallas_patch_embed(xp, p["w"], p["b"], p["norm_g"], p["norm_b"])
    return h.reshape(B, Hp, Wp, -1)


def swin_block(x, p, num_heads, window_size, shift_size):
    """x + MHSA(LN1(x)) then + MLP(LN2(.)); both residuals fused in-kernel."""
    B, H, W, C = x.shape
    wh, ww = window_size
    pad_b = (wh - H % wh) % wh
    pad_r = (ww - W % ww) % ww
    xp = jnp.pad(x, ((0, 0), (0, pad_b), (0, pad_r), (0, 0)))
    pH, pW = H + pad_b, W + pad_r
    sh, sw = shift_size
    if wh >= pH:
        sh = 0
    if ww >= pW:
        sw = 0
    shifted = sh > 0 or sw > 0
    if shifted:
        xp = jnp.roll(xp, shift=(-sh, -sw), axis=(1, 2))

    nwh, nww = pH // wh, pW // ww
    nW, L = nwh * nww, wh * ww
    # TODO(synk): fold roll + window partition into the BlockSpec index_map.
    xw = xp.reshape(B, nwh, wh, nww, ww, C).transpose(0, 1, 3, 2, 4, 5)
    xw = xw.reshape(B, nW * L, C)

    if shifted:
        mask = jnp.asarray(_make_shift_mask(pH, pW, (wh, ww), (sh, sw)))
    else:
        mask = jnp.zeros((1, L, L), jnp.float32)   # never read in-kernel

    scale = float(C // num_heads) ** -0.5
    ow = pallas_swin_block(xw, p, num_heads, mask, scale, shifted)

    o = ow.reshape(B, nwh, nww, wh, ww, C).transpose(0, 1, 3, 2, 4, 5)
    o = o.reshape(B, pH, pW, C)
    if shifted:
        o = jnp.roll(o, shift=(sh, sw), axis=(1, 2))
    return o[:, :H, :W, :]


def patch_merging(x, p):
    B, H, W, C = x.shape
    x = jnp.pad(x, ((0, 0), (0, H % 2), (0, W % 2), (0, 0)))
    x0 = x[:, 0::2, 0::2, :]
    x1 = x[:, 1::2, 0::2, :]
    x2 = x[:, 0::2, 1::2, :]
    x3 = x[:, 1::2, 1::2, :]
    x = jnp.concatenate([x0, x1, x2, x3], axis=-1)
    Bn, Hn, Wn, C4 = x.shape
    h = pallas_merge(x.reshape(-1, C4), p["norm_g"], p["norm_b"], p["red_w"])
    return h.reshape(Bn, Hn, Wn, 2 * C)


def swin_forward(params, x, *, patch_size, depths, num_heads, window_size):
    x = patch_embed(x, params["patch_embed"], patch_size)
    for i_stage in range(len(depths)):
        for i_layer in range(depths[i_stage]):
            shift = [0 if i_layer % 2 == 0 else w // 2 for w in window_size]
            x = swin_block(x, params["stages"][i_stage][i_layer],
                           num_heads[i_stage], window_size, shift)
        if i_stage < len(depths) - 1:
            x = patch_merging(x, params["mergers"][i_stage])
    B, H, W, C = x.shape
    return pallas_head(x.reshape(B, H * W, C), params["norm_g"], params["norm_b"],
                       params["head_w"], params["head_b"])


# ----------------------------------------------------------------------------
# Deterministic synthetic parameter init (shapes follow the PyTorch __init__).
# Matmul weights are stored in bf16 (MXU-native); LN params / biases stay f32.
# ----------------------------------------------------------------------------

def init_params(key, patch_size, emb_dim, depths, num_heads, window_size,
                mlp_ratio, num_classes):
    keys = iter(jax.random.split(key, 256))

    def nrm(shape, std=0.02):  # trunc_normal(std=0.02) approximated by normal
        return jax.random.normal(next(keys), shape, jnp.float32) * std

    def bf16(a):
        return a.astype(jnp.bfloat16)

    wh, ww = window_size
    L = wh * ww
    rel_idx = _relative_position_index(wh, ww)

    conv_w = nrm((emb_dim, 3, patch_size[0], patch_size[1]))
    params = {
        "patch_embed": dict(
            w=bf16(conv_w.reshape(emb_dim, -1).T),        # conv-as-matmul weight
            b=jnp.zeros((emb_dim,), jnp.float32),
            norm_g=jnp.ones((emb_dim,), jnp.float32),
            norm_b=jnp.zeros((emb_dim,), jnp.float32)),
        "stages": [], "mergers": []}

    for i_stage in range(len(depths)):
        dim = emb_dim * 2 ** i_stage
        hidden = int(dim * mlp_ratio)
        nH = num_heads[i_stage]
        blocks = []
        for _ in range(depths[i_stage]):
            table = nrm(((2 * wh - 1) * (2 * ww - 1), nH))
            rel_bias = table[rel_idx.reshape(-1)].reshape(L, L, nH).transpose(2, 0, 1)
            blocks.append(dict(
                norm1_g=jnp.ones((dim,), jnp.float32),
                norm1_b=jnp.zeros((dim,), jnp.float32),
                qkv_w=bf16(nrm((dim, 3 * dim))),
                qkv_b=jnp.zeros((3 * dim,), jnp.float32),
                proj_w=bf16(nrm((dim, dim))),
                proj_b=jnp.zeros((dim,), jnp.float32),
                rel_bias=rel_bias,
                norm2_g=jnp.ones((dim,), jnp.float32),
                norm2_b=jnp.zeros((dim,), jnp.float32),
                mlp_w1=bf16(nrm((dim, hidden))),
                mlp_b1=jnp.zeros((hidden,), jnp.float32),
                mlp_w2=bf16(nrm((hidden, dim))),
                mlp_b2=jnp.zeros((dim,), jnp.float32)))
        params["stages"].append(blocks)
        if i_stage < len(depths) - 1:
            params["mergers"].append(dict(
                norm_g=jnp.ones((4 * dim,), jnp.float32),
                norm_b=jnp.zeros((4 * dim,), jnp.float32),
                red_w=bf16(nrm((4 * dim, 2 * dim)))))

    num_features = emb_dim * 2 ** (len(depths) - 1)
    params["norm_g"] = jnp.ones((num_features,), jnp.float32)
    params["norm_b"] = jnp.zeros((num_features,), jnp.float32)
    params["head_w"] = bf16(nrm((num_features, num_classes)))
    params["head_b"] = jnp.zeros((num_classes,), jnp.float32)
    return params


# ----------------------------------------------------------------------------

if __name__ == "__main__":
    patch_size = (4, 4)
    emb_dim = 16
    depths = (2, 2)
    num_heads = (2, 4)
    window_size = (4, 4)
    mlp_ratio = 4.0
    num_classes = 10

    key = jax.random.PRNGKey(0)
    pkey, xkey = jax.random.split(key)
    params = init_params(pkey, patch_size, emb_dim, depths, num_heads,
                         window_size, mlp_ratio, num_classes)
    x = jax.random.normal(xkey, (2, 3, 32, 32), jnp.float32)  # NCHW like PyTorch

    fwd = jax.jit(partial(swin_forward, patch_size=patch_size, depths=depths,
                          num_heads=num_heads, window_size=window_size))
    out = fwd(params, x)
    jax.block_until_ready(out)
    assert out.shape == (2, num_classes) and out.dtype == jnp.float32
    print("KERNEL_OK")
</pallas_src>

<mosaic_0001>
module attributes {stable_mosaic.version = 11 : i64} {
  func.func @_patch_embed_kernel(%arg0: i32, %arg1: memref<128x48xf32, #tpu.memory_space<vmem>>, %arg2: memref<48x16xbf16, #tpu.memory_space<vmem>>, %arg3: memref<1x16xf32, #tpu.memory_space<vmem>>, %arg4: memref<1x16xf32, #tpu.memory_space<vmem>>, %arg5: memref<1x16xf32, #tpu.memory_space<vmem>>, %arg6: memref<128x16xf32, #tpu.memory_space<vmem>>) attributes {dimension_semantics = [#tpu.dimension_semantics<parallel>], iteration_bounds = array<i64: 1>, scalar_prefetch = 0 : i64, scratch_operands = 0 : i64, tpu.core_type = #tpu.core_type<tc>, window_params = [{transform_indices = @transform_0, window_bounds = array<i64: 128, 48>}, {pipeline_mode = #tpu.pipeline_mode<synchronous>, transform_indices = @transform_1, window_bounds = array<i64: 48, 16>}, {pipeline_mode = #tpu.pipeline_mode<synchronous>, transform_indices = @transform_2, window_bounds = array<i64: 1, 16>}, {pipeline_mode = #tpu.pipeline_mode<synchronous>, transform_indices = @transform_3, window_bounds = array<i64: 1, 16>}, {pipeline_mode = #tpu.pipeline_mode<synchronous>, transform_indices = @transform_4, window_bounds = array<i64: 1, 16>}, {transform_indices = @transform_5, window_bounds = array<i64: 128, 16>}]} {
    %c0 = arith.constant 0 : index
    %c0_0 = arith.constant 0 : index
    %0 = vector.load %arg1[%c0, %c0_0] : memref<128x48xf32, #tpu.memory_space<vmem>>, vector<128x48xf32>
    %1 = arith.truncf %0 : vector<128x48xf32> to vector<128x48xbf16>
    %c0_1 = arith.constant 0 : index
    %c0_2 = arith.constant 0 : index
    %2 = vector.load %arg2[%c0_1, %c0_2] : memref<48x16xbf16, #tpu.memory_space<vmem>>, vector<48x16xbf16>
    %cst = arith.constant dense<0.000000e+00> : vector<128x16xf32>
    %3 = tpu.matmul %1, %2, %cst {dimension_numbers = #tpu.dot_dimension_numbers<[1], [0], [0], [1], [0, 0, 1, 1], [], []>} : vector<128x48xbf16>, vector<48x16xbf16>, vector<128x16xf32> -> vector<128x16xf32>
    %c0_3 = arith.constant 0 : index
    %c0_4 = arith.constant 0 : index
    %4 = vector.load %arg3[%c0_3, %c0_4] : memref<1x16xf32, #tpu.memory_space<vmem>>, vector<1x16xf32>
    %5 = vector.broadcast %4 : vector<1x16xf32> to vector<128x16xf32>
    %6 = arith.addf %3, %5 : vector<128x16xf32>
    %c0_5 = arith.constant 0 : index
    %c0_6 = arith.constant 0 : index
    %7 = vector.load %arg4[%c0_5, %c0_6] : memref<1x16xf32, #tpu.memory_space<vmem>>, vector<1x16xf32>
    %c0_7 = arith.constant 0 : index
    %c0_8 = arith.constant 0 : index
    %8 = vector.load %arg5[%c0_7, %c0_8] : memref<1x16xf32, #tpu.memory_space<vmem>>, vector<1x16xf32>
    %cst_9 = arith.constant dense<0.000000e+00> : vector<128xf32>
    %9 = vector.multi_reduction <add>, %6, %cst_9 [1] : vector<128x16xf32> to vector<128xf32>
    %10 = vector.shape_cast %9 : vector<128xf32> to vector<128x1xf32>
    %cst_10 = arith.constant 1.600000e+01 : f32
    %11 = vector.broadcast %cst_10 : f32 to vector<128x1xf32>
    %12 = arith.divf %10, %11 : vector<128x1xf32>
    %13 = vector.broadcast %12 : vector<128x1xf32> to vector<128x16xf32>
    %14 = arith.subf %6, %13 : vector<128x16xf32>
    %15 = arith.mulf %14, %14 : vector<128x16xf32>
    %cst_11 = arith.constant dense<0.000000e+00> : vector<128xf32>
    %16 = vector.multi_reduction <add>, %15, %cst_11 [1] : vector<128x16xf32> to vector<128xf32>
    %17 = vector.shape_cast %16 : vector<128xf32> to vector<128x1xf32>
    %cst_12 = arith.constant 1.600000e+01 : f32
    %18 = vector.broadcast %cst_12 : f32 to vector<128x1xf32>
    %19 = arith.divf %17, %18 : vector<128x1xf32>
    %cst_13 = arith.constant 9.99999974E-6 : f32
    %20 = vector.broadcast %cst_13 : f32 to vector<128x1xf32>
    %21 = arith.addf %19, %20 : vector<128x1xf32>
    %22 = math.rsqrt %21 : vector<128x1xf32>
    %23 = vector.broadcast %22 : vector<128x1xf32> to vector<128x16xf32>
    %24 = arith.mulf %14, %23 : vector<128x16xf32>
    %25 = vector.broadcast %7 : vector<1x16xf32> to vector<128x16xf32>
    %26 = arith.mulf %24, %25 : vector<128x16xf32>
    %27 = vector.broadcast %8 : vector<1x16xf32> to vector<128x16xf32>
    %28 = arith.addf %26, %27 : vector<128x16xf32>
    %c0_14 = arith.constant 0 : index
    %c0_15 = arith.constant 0 : index
    %29 = vector.load %arg6[%c0_14, %c0_15] : memref<128x16xf32, #tpu.memory_space<vmem>>, vector<128x16xf32>
    tpu.vector_store %arg6[%c0_14, %c0_15], %28 {strides = array<i32>} : memref<128x16xf32, #tpu.memory_space<vmem>>, vector<128x16xf32>,
    return
  }
  func.func @transform_0(%arg0: i32) -> (i32, i32) {
    %c0_i32 = arith.constant 0 : i32
    %c0_i32_0 = arith.constant 0 : i32
    return %arg0, %c0_i32 : i32, i32
  }
  func.func @transform_1(%arg0: i32) -> (i32, i32) {
    %c0_i32 = arith.constant 0 : i32
    %c0_i32_0 = arith.constant 0 : i32
    %c0_i32_1 = arith.constant 0 : i32
    return %c0_i32, %c0_i32_0 : i32, i32
  }
  func.func @transform_2(%arg0: i32) -> (i32, i32) {
    %c0_i32 = arith.constant 0 : i32
    %c0_i32_0 = arith.constant 0 : i32
    %c0_i32_1 = arith.constant 0 : i32
    return %c0_i32, %c0_i32_0 : i32, i32
  }
  func.func @transform_3(%arg0: i32) -> (i32, i32) {
    %c0_i32 = arith.constant 0 : i32
    %c0_i32_0 = arith.constant 0 : i32
    %c0_i32_1 = arith.constant 0 : i32
    return %c0_i32, %c0_i32_0 : i32, i32
  }
  func.func @transform_4(%arg0: i32) -> (i32, i32) {
    %c0_i32 = arith.constant 0 : i32
    %c0_i32_0 = arith.constant 0 : i32
    %c0_i32_1 = arith.constant 0 : i32
    return %c0_i32, %c0_i32_0 : i32, i32
  }
  func.func @transform_5(%arg0: i32) -> (i32, i32) {
    %c0_i32 = arith.constant 0 : i32
    %c0_i32_0 = arith.constant 0 : i32
    return %arg0, %c0_i32 : i32, i32
  }
}

module attributes {stable_mosaic.version = 11 : i64} {
  func.func @_swin_block_kernel(%arg0: i32, %arg1: memref<1x64x16xf32, #tpu.memory_space<vmem>>, %arg2: memref<1x16xf32, #tpu.memory_space<vmem>>, %arg3: memref<1x16xf32, #tpu.memory_space<vmem>>, %arg4: memref<16x48xbf16, #tpu.memory_space<vmem>>, %arg5: memref<1x48xf32, #tpu.memory_space<vmem>>, %arg6: memref<16x16xbf16, #tpu.memory_space<vmem>>, %arg7: memref<1x16xf32, #tpu.memory_space<vmem>>, %arg8: memref<2x16x16xf32, #tpu.memory_space<vmem>>, %arg9: memref<1x16x16xf32, #tpu.memory_space<vmem>>, %arg10: memref<1x16xf32, #tpu.memory_space<vmem>>, %arg11: memref<1x16xf32, #tpu.memory_space<vmem>>, %arg12: memref<16x64xbf16, #tpu.memory_space<vmem>>, %arg13: memref<1x64xf32, #tpu.memory_space<vmem>>, %arg14: memref<64x16xbf16, #tpu.memory_space<vmem>>, %arg15: memref<1x16xf32, #tpu.memory_space<vmem>>, %arg16: memref<1x64x16xf32, #tpu.memory_space<vmem>>) attributes {dimension_semantics = [#tpu.dimension_semantics<parallel>], iteration_bounds = array<i64: 2>, scalar_prefetch = 0 : i64, scratch_operands = 0 : i64, tpu.core_type = #tpu.core_type<tc>, window_params = [{transform_indices = @transform_0, window_bounds = array<i64: 1, 64, 16>}, {pipeline_mode = #tpu.pipeline_mode<synchronous>, transform_indices = @transform_1, window_bounds = array<i64: 1, 16>}, {pipeline_mode = #tpu.pipeline_mode<synchronous>, transform_indices = @transform_2, window_bounds = array<i64: 1, 16>}, {pipeline_mode = #tpu.pipeline_mode<synchronous>, transform_indices = @transform_3, window_bounds = array<i64: 16, 48>}, {pipeline_mode = #tpu.pipeline_mode<synchronous>, transform_indices = @transform_4, window_bounds = array<i64: 1, 48>}, {pipeline_mode = #tpu.pipeline_mode<synchronous>, transform_indices = @transform_5, window_bounds = array<i64: 16, 16>}, {pipeline_mode = #tpu.pipeline_mode<synchronous>, transform_indices = @transform_6, window_bounds = array<i64: 1, 16>}, {pipeline_mode = #tpu.pipeline_mode<synchronous>, transform_indices = @transform_7, window_bounds = array<i64: 2, 16, 16>}, {pipeline_mode = #tpu.pipeline_mode<synchronous>, transform_indices = @transform_8, window_bounds = array<i64: 1, 16, 16>}, {pipeline_mode = #tpu.pipeline_mode<synchronous>, transform_indices = @transform_9, window_bounds = array<i64: 1, 16>}, {pipeline_mode = #tpu.pipeline_mode<synchronous>, transform_indices = @transform_10, window_bounds = array<i64: 1, 16>}, {pipeline_mode = #tpu.pipeline_mode<synchronous>, transform_indices = @transform_11, window_bounds = array<i64: 16, 64>}, {pipeline_mode = #tpu.pipeline_mode<synchronous>, transform_indices = @transform_12, window_bounds = array<i64: 1, 64>}, {pipeline_mode = #tpu.pipeline_mode<synchronous>, transform_indices = @transform_13, window_bounds = array<i64: 64, 16>}, {pipeline_mode = #tpu.pipeline_mode<synchronous>, transform_indices = @transform_14, window_bounds = array<i64: 1, 16>}, {transform_indices = @transform_15, window_bounds = array<i64: 1, 64, 16>}]} {
    %c0 = arith.constant 0 : index
    %c0_0 = arith.constant 0 : index
    %c0_1 = arith.constant 0 : index
    %0 = vector.load %arg1[%c0, %c0_0, %c0_1] : memref<1x64x16xf32, #tpu.memory_space<vmem>>, vector<1x64x16xf32>
    %1 = vector.shape_cast %0 : vector<1x64x16xf32> to vector<64x16xf32>
    %c0_2 = arith.constant 0 : index
    %c0_3 = arith.constant 0 : index
    %2 = vector.load %arg2[%c0_2, %c0_3] : memref<1x16xf32, #tpu.memory_space<vmem>>, vector<1x16xf32>
    %c0_4 = arith.constant 0 : index
    %c0_5 = arith.constant 0 : index
    %3 = vector.load %arg3[%c0_4, %c0_5] : memref<1x16xf32, #tpu.memory_space<vmem>>, vector<1x16xf32>
    %cst = arith.constant dense<0.000000e+00> : vector<64xf32>
    %4 = vector.multi_reduction <add>, %1, %cst [1] : vector<64x16xf32> to vector<64xf32>
    %5 = vector.shape_cast %4 : vector<64xf32> to vector<64x1xf32>
    %cst_6 = arith.constant 1.600000e+01 : f32
    %6 = vector.broadcast %cst_6 : f32 to vector<64x1xf32>
    %7 = arith.divf %5, %6 : vector<64x1xf32>
    %8 = vector.broadcast %7 : vector<64x1xf32> to vector<64x16xf32>
    %9 = arith.subf %1, %8 : vector<64x16xf32>
    %10 = arith.mulf %9, %9 : vector<64x16xf32>
    %cst_7 = arith.constant dense<0.000000e+00> : vector<64xf32>
    %11 = vector.multi_reduction <add>, %10, %cst_7 [1] : vector<64x16xf32> to vector<64xf32>
    %12 = vector.shape_cast %11 : vector<64xf32> to vector<64x1xf32>
    %cst_8 = arith.constant 1.600000e+01 : f32
    %13 = vector.broadcast %cst_8 : f32 to vector<64x1xf32>
    %14 = arith.divf %12, %13 : vector<64x1xf32>
    %cst_9 = arith.constant 9.99999974E-6 : f32
    %15 = vector.broadcast %cst_9 : f32 to vector<64x1xf32>
    %16 = arith.addf %14, %15 : vector<64x1xf32>
    %17 = math.rsqrt %16 : vector<64x1xf32>
    %18 = vector.broadcast %17 : vector<64x1xf32> to vector<64x16xf32>
    %19 = arith.mulf %9, %18 : vector<64x16xf32>
    %20 = vector.broadcast %2 : vector<1x16xf32> to vector<64x16xf32>
    %21 = arith.mulf %19, %20 : vector<64x16xf32>
    %22 = vector.broadcast %3 : vector<1x16xf32> to vector<64x16xf32>
    %23 = arith.addf %21, %22 : vector<64x16xf32>
    %24 = arith.truncf %23 : vector<64x16xf32> to vector<64x16xbf16>
    %c0_10 = arith.constant 0 : index
    %c0_11 = arith.constant 0 : index
    %25 = vector.load %arg4[%c0_10, %c0_11] : memref<16x48xbf16, #tpu.memory_space<vmem>>, vector<16x48xbf16>
    %cst_12 = arith.constant dense<0.000000e+00> : vector<64x48xf32>
    %26 = tpu.matmul %24, %25, %cst_12 {dimension_numbers = #tpu.dot_dimension_numbers<[1], [0], [0], [1], [0, 0, 1, 1], [], []>} : vector<64x16xbf16>, vector<16x48xbf16>, vector<64x48xf32> -> vector<64x48xf32>
    %c0_13 = arith.constant 0 : index
    %c0_14 = arith.constant 0 : index
    %27 = vector.load %arg5[%c0_13, %c0_14] : memref<1x48xf32, #tpu.memory_space<vmem>>, vector<1x48xf32>
    %28 = vector.broadcast %27 : vector<1x48xf32> to vector<64x48xf32>
    %29 = arith.addf %26, %28 : vector<64x48xf32>
    %c0_15 = arith.constant 0 : index
    %c0_16 = arith.constant 0 : index
    %c0_17 = arith.constant 0 : index
    %30 = vector.load %arg8[%c0_15, %c0_16, %c0_17] : memref<2x16x16xf32, #tpu.memory_space<vmem>>, vector<2x16x16xf32>
    %c0_18 = arith.constant 0 : index
    %c0_19 = arith.constant 0 : index
    %31 = vector.load %arg6[%c0_18, %c0_19] : memref<16x16xbf16, #tpu.memory_space<vmem>>, vector<16x16xbf16>
    %cst_20 = arith.constant 0.000000e+00 : f32
    %32 = vector.broadcast %cst_20 : f32 to vector<16x16xf32>
    %33 = vector.extract_strided_slice %29 {offsets = [0, 0], sizes = [16, 8], strides = [1, 1]} : vector<64x48xf32> to vector<16x8xf32>
    %34 = vector.extract_strided_slice %29 {offsets = [0, 16], sizes = [16, 8], strides = [1, 1]} : vector<64x48xf32> to vector<16x8xf32>
    %35 = vector.extract_strided_slice %29 {offsets = [0, 32], sizes = [16, 8], strides = [1, 1]} : vector<64x48xf32> to vector<16x8xf32>
    %36 = arith.truncf %33 : vector<16x8xf32> to vector<16x8xbf16>
    %37 = arith.truncf %34 : vector<16x8xf32> to vector<16x8xbf16>
    %cst_21 = arith.constant dense<0.000000e+00> : vector<16x16xf32>
    %38 = tpu.matmul %36, %37, %cst_21 {dimension_numbers = #tpu.dot_dimension_numbers<[1], [1], [0], [0], [0, 0, 1, 0], [], []>} : vector<16x8xbf16>, vector<16x8xbf16>, vector<16x16xf32> -> vector<16x16xf32>
    %cst_22 = arith.constant 0.353553385 : f32
    %39 = vector.broadcast %cst_22 : f32 to vector<16x16xf32>
    %40 = arith.mulf %38, %39 : vector<16x16xf32>
    %41 = vector.extract_strided_slice %30 {offsets = [0, 0, 0], sizes = [1, 16, 16], strides = [1, 1, 1]} : vector<2x16x16xf32> to vector<1x16x16xf32>
    %42 = vector.shape_cast %41 : vector<1x16x16xf32> to vector<16x16xf32>
    %43 = arith.addf %40, %42 : vector<16x16xf32>
    %cst_23 = arith.constant dense<0xFF800000> : vector<16xf32>
    %44 = vector.multi_reduction <maximumf>, %43, %cst_23 [1] : vector<16x16xf32> to vector<16xf32>
    %45 = vector.shape_cast %44 : vector<16xf32> to vector<16x1xf32>
    %46 = vector.broadcast %45 : vector<16x1xf32> to vector<16x16xf32>
    %47 = arith.subf %43, %46 : vector<16x16xf32>
    %48 = math.exp %47 : vector<16x16xf32>
    %cst_24 = arith.constant dense<0.000000e+00> : vector<16xf32>
    %49 = vector.multi_reduction <add>, %48, %cst_24 [1] : vector<16x16xf32> to vector<16xf32>
    %50 = vector.shape_cast %49 : vector<16xf32> to vector<16x1xf32>
    %51 = tpu.reciprocal %50 {approx = true} : vector<16x1xf32> -> vector<16x1xf32>
    %52 = vector.broadcast %51 : vector<16x1xf32> to vector<16x16xf32>
    %53 = arith.mulf %48, %52 : vector<16x16xf32>
    %54 = arith.truncf %53 : vector<16x16xf32> to vector<16x16xbf16>
    %55 = arith.truncf %35 : vector<16x8xf32> to vector<16x8xbf16>
    %cst_25 = arith.constant dense<0.000000e+00> : vector<16x8xf32>
    %56 = tpu.matmul %54, %55, %cst_25 {dimension_numbers = #tpu.dot_dimension_numbers<[1], [0], [0], [1], [0, 0, 1, 1], [], []>} : vector<16x16xbf16>, vector<16x8xbf16>, vector<16x8xf32> -> vector<16x8xf32>
    %57 = arith.truncf %56 : vector<16x8xf32> to vector<16x8xbf16>
    %58 = vector.extract_strided_slice %31 {offsets = [0, 0], sizes = [8, 16], strides = [1, 1]} : vector<16x16xbf16> to vector<8x16xbf16>
    %cst_26 = arith.constant dense<0.000000e+00> : vector<16x16xf32>
    %59 = tpu.matmul %57, %58, %cst_26 {dimension_numbers = #tpu.dot_dimension_numbers<[1], [0], [0], [1], [0, 0, 1, 1], [], []>} : vector<16x8xbf16>, vector<8x16xbf16>, vector<16x16xf32> -> vector<16x16xf32>
    %60 = arith.addf %32, %59 : vector<16x16xf32>
    %61 = vector.extract_strided_slice %29 {offsets = [0, 8], sizes = [16, 8], strides = [1, 1]} : vector<64x48xf32> to vector<16x8xf32>
    %62 = vector.extract_strided_slice %29 {offsets = [0, 24], sizes = [16, 8], strides = [1, 1]} : vector<64x48xf32> to vector<16x8xf32>
    %63 = vector.extract_strided_slice %29 {offsets = [0, 40], sizes = [16, 8], strides = [1, 1]} : vector<64x48xf32> to vector<16x8xf32>
    %64 = arith.truncf %61 : vector<16x8xf32> to vector<16x8xbf16>
    %65 = arith.truncf %62 : vector<16x8xf32> to vector<16x8xbf16>
    %cst_27 = arith.constant dense<0.000000e+00> : vector<16x16xf32>
    %66 = tpu.matmul %64, %65, %cst_27 {dimension_numbers = #tpu.dot_dimension_numbers<[1], [1], [0], [0], [0, 0, 1, 0], [], []>} : vector<16x8xbf16>, vector<16x8xbf16>, vector<16x16xf32> -> vector<16x16xf32>
    %cst_28 = arith.constant 0.353553385 : f32
    %67 = vector.broadcast %cst_28 : f32 to vector<16x16xf32>
    %68 = arith.mulf %66, %67 : vector<16x16xf32>
    %69 = vector.extract_strided_slice %30 {offsets = [1, 0, 0], sizes = [1, 16, 16], strides = [1, 1, 1]} : vector<2x16x16xf32> to vector<1x16x16xf32>
    %70 = vector.shape_cast %69 : vector<1x16x16xf32> to vector<16x16xf32>
    %71 = arith.addf %68, %70 : vector<16x16xf32>
    %cst_29 = arith.constant dense<0xFF800000> : vector<16xf32>
    %72 = vector.multi_reduction <maximumf>, %71, %cst_29 [1] : vector<16x16xf32> to vector<16xf32>
    %73 = vector.shape_cast %72 : vector<16xf32> to vector<16x1xf32>
    %74 = vector.broadcast %73 : vector<16x1xf32> to vector<16x16xf32>
    %75 = arith.subf %71, %74 : vector<16x16xf32>
    %76 = math.exp %75 : vector<16x16xf32>
    %cst_30 = arith.constant dense<0.000000e+00> : vector<16xf32>
    %77 = vector.multi_reduction <add>, %76, %cst_30 [1] : vector<16x16xf32> to vector<16xf32>
    %78 = vector.shape_cast %77 : vector<16xf32> to vector<16x1xf32>
    %79 = tpu.reciprocal %78 {approx = true} : vector<16x1xf32> -> vector<16x1xf32>
    %80 = vector.broadcast %79 : vector<16x1xf32> to vector<16x16xf32>
    %81 = arith.mulf %76, %80 : vector<16x16xf32>
    %82 = arith.truncf %81 : vector<16x16xf32> to vector<16x16xbf16>
    %83 = arith.truncf %63 : vector<16x8xf32> to vector<16x8xbf16>
    %cst_31 = arith.constant dense<0.000000e+00> : vector<16x8xf32>
    %84 = tpu.matmul %82, %83, %cst_31 {dimension_numbers = #tpu.dot_dimension_numbers<[1], [0], [0], [1], [0, 0, 1, 1], [], []>} : vector<16x16xbf16>, vector<16x8xbf16>, vector<16x8xf32> -> vector<16x8xf32>
    %85 = arith.truncf %84 : vector<16x8xf32> to vector<16x8xbf16>
    %86 = vector.extract_strided_slice %31 {offsets = [8, 0], sizes = [8, 16], strides = [1, 1]} : vector<16x16xbf16> to vector<8x16xbf16>
    %cst_32 = arith.constant dense<0.000000e+00> : vector<16x16xf32>
    %87 = tpu.matmul %85, %86, %cst_32 {dimension_numbers = #tpu.dot_dimension_numbers<[1], [0], [0], [1], [0, 0, 1, 1], [], []>} : vector<16x8xbf16>, vector<8x16xbf16>, vector<16x16xf32> -> vector<16x16xf32>
    %88 = arith.addf %60, %87 : vector<16x16xf32>
    %cst_33 = arith.constant 0.000000e+00 : f32
    %89 = vector.broadcast %cst_33 : f32 to vector<16x16xf32>
    %90 = vector.extract_strided_slice %29 {offsets = [16, 0], sizes = [16, 8], strides = [1, 1]} : vector<64x48xf32> to vector<16x8xf32>
    %91 = vector.extract_strided_slice %29 {offsets = [16, 16], sizes = [16, 8], strides = [1, 1]} : vector<64x48xf32> to vector<16x8xf32>
    %92 = vector.extract_strided_slice %29 {offsets = [16, 32], sizes = [16, 8], strides = [1, 1]} : vector<64x48xf32> to vector<16x8xf32>
    %93 = arith.truncf %90 : vector<16x8xf32> to vector<16x8xbf16>
    %94 = arith.truncf %91 : vector<16x8xf32> to vector<16x8xbf16>
    %cst_34 = arith.constant dense<0.000000e+00> : vector<16x16xf32>
    %95 = tpu.matmul %93, %94, %cst_34 {dimension_numbers = #tpu.dot_dimension_numbers<[1], [1], [0], [0], [0, 0, 1, 0], [], []>} : vector<16x8xbf16>, vector<16x8xbf16>, vector<16x16xf32> -> vector<16x16xf32>
    %cst_35 = arith.constant 0.353553385 : f32
    %96 = vector.broadcast %cst_35 : f32 to vector<16x16xf32>
    %97 = arith.mulf %95, %96 : vector<16x16xf32>
    %98 = vector.extract_strided_slice %30 {offsets = [0, 0, 0], sizes = [1, 16, 16], strides = [1, 1, 1]} : vector<2x16x16xf32> to vector<1x16x16xf32>
    %99 = vector.shape_cast %98 : vector<1x16x16xf32> to vector<16x16xf32>
    %100 = arith.addf %97, %99 : vector<16x16xf32>
    %cst_36 = arith.constant dense<0xFF800000> : vector<16xf32>
    %101 = vector.multi_reduction <maximumf>, %100, %cst_36 [1] : vector<16x16xf32> to vector<16xf32>
    %102 = vector.shape_cast %101 : vector<16xf32> to vector<16x1xf32>
    %103 = vector.broadcast %102 : vector<16x1xf32> to vector<16x16xf32>
    %104 = arith.subf %100, %103 : vector<16x16xf32>
    %105 = math.exp %104 : vector<16x16xf32>
    %cst_37 = arith.constant dense<0.000000e+00> : vector<16xf32>
    %106 = vector.multi_reduction <add>, %105, %cst_37 [1] : vector<16x16xf32> to vector<16xf32>
    %107 = vector.shape_cast %106 : vector<16xf32> to vector<16x1xf32>
    %108 = tpu.reciprocal %107 {approx = true} : vector<16x1xf32> -> vector<16x1xf32>
    %109 = vector.broadcast %108 : vector<16x1xf32> to vector<16x16xf32>
    %110 = arith.mulf %105, %109 : vector<16x16xf32>
    %111 = arith.truncf %110 : vector<16x16xf32> to vector<16x16xbf16>
    %112 = arith.truncf %92 : vector<16x8xf32> to vector<16x8xbf16>
    %cst_38 = arith.constant dense<0.000000e+00> : vector<16x8xf32>
    %113 = tpu.matmul %111, %112, %cst_38 {dimension_numbers = #tpu.dot_dimension_numbers<[1], [0], [0], [1], [0, 0, 1, 1], [], []>} : vector<16x16xbf16>, vector<16x8xbf16>, vector<16x8xf32> -> vector<16x8xf32>
    %114 = arith.truncf %113 : vector<16x8xf32> to vector<16x8xbf16>
    %115 = vector.extract_strided_slice %31 {offsets = [0, 0], sizes = [8, 16], strides = [1, 1]} : vector<16x16xbf16> to vector<8x16xbf16>
    %cst_39 = arith.constant dense<0.000000e+00> : vector<16x16xf32>
    %116 = tpu.matmul %114, %115, %cst_39 {dimension_numbers = #tpu.dot_dimension_numbers<[1], [0], [0], [1], [0, 0, 1, 1], [], []>} : vector<16x8xbf16>, vector<8x16xbf16>, vector<16x16xf32> -> vector<16x16xf32>
    %117 = arith.addf %89, %116 : vector<16x16xf32>
    %118 = vector.extract_strided_slice %29 {offsets = [16, 8], sizes = [16, 8], strides = [1, 1]} : vector<64x48xf32> to vector<16x8xf32>
    %119 = vector.extract_strided_slice %29 {offsets = [16, 24], sizes = [16, 8], strides = [1, 1]} : vector<64x48xf32> to vector<16x8xf32>
    %120 = vector.extract_strided_slice %29 {offsets = [16, 40], sizes = [16, 8], strides = [1, 1]} : vector<64x48xf32> to vector<16x8xf32>
    %121 = arith.truncf %118 : vector<16x8xf32> to vector<16x8xbf16>
    %122 = arith.truncf %119 : vector<16x8xf32> to vector<16x8xbf16>
    %cst_40 = arith.constant dense<0.000000e+00> : vector<16x16xf32>
    %123 = tpu.matmul %121, %122, %cst_40 {dimension_numbers = #tpu.dot_dimension_numbers<[1], [1], [0], [0], [0, 0, 1, 0], [], []>} : vector<16x8xbf16>, vector<16x8xbf16>, vector<16x16xf32> -> vector<16x16xf32>
    %cst_41 = arith.constant 0.353553385 : f32
    %124 = vector.broadcast %cst_41 : f32 to vector<16x16xf32>
    %125 = arith.mulf %123, %124 : vector<16x16xf32>
    %126 = vector.extract_strided_slice %30 {offsets = [1, 0, 0], sizes = [1, 16, 16], strides = [1, 1, 1]} : vector<2x16x16xf32> to vector<1x16x16xf32>
    %127 = vector.shape_cast %126 : vector<1x16x16xf32> to vector<16x16xf32>
    %128 = arith.addf %125, %127 : vector<16x16xf32>
    %cst_42 = arith.constant dense<0xFF800000> : vector<16xf32>
    %129 = vector.multi_reduction <maximumf>, %128, %cst_42 [1] : vector<16x16xf32> to vector<16xf32>
    %130 = vector.shape_cast %129 : vector<16xf32> to vector<16x1xf32>
    %131 = vector.broadcast %130 : vector<16x1xf32> to vector<16x16xf32>
    %132 = arith.subf %128, %131 : vector<16x16xf32>
    %133 = math.exp %132 : vector<16x16xf32>
    %cst_43 = arith.constant dense<0.000000e+00> : vector<16xf32>
    %134 = vector.multi_reduction <add>, %133, %cst_43 [1] : vector<16x16xf32> to vector<16xf32>
    %135 = vector.shape_cast %134 : vector<16xf32> to vector<16x1xf32>
    %136 = tpu.reciprocal %135 {approx = true} : vector<16x1xf32> -> vector<16x1xf32>
    %137 = vector.broadcast %136 : vector<16x1xf32> to vector<16x16xf32>
    %138 = arith.mulf %133, %137 : vector<16x16xf32>
    %139 = arith.truncf %138 : vector<16x16xf32> to vector<16x16xbf16>
    %140 = arith.truncf %120 : vector<16x8xf32> to vector<16x8xbf16>
    %cst_44 = arith.constant dense<0.000000e+00> : vector<16x8xf32>
    %141 = tpu.matmul %139, %140, %cst_44 {dimension_numbers = #tpu.dot_dimension_numbers<[1], [0], [0], [1], [0, 0, 1, 1], [], []>} : vector<16x16xbf16>, vector<16x8xbf16>, vector<16x8xf32> -> vector<16x8xf32>
    %142 = arith.truncf %141 : vector<16x8xf32> to vector<16x8xbf16>
    %143 = vector.extract_strided_slice %31 {offsets = [8, 0], sizes = [8, 16], strides = [1, 1]} : vector<16x16xbf16> to vector<8x16xbf16>
    %cst_45 = arith.constant dense<0.000000e+00> : vector<16x16xf32>
    %144 = tpu.matmul %142, %143, %cst_45 {dimension_numbers = #tpu.dot_dimension_numbers<[1], [0], [0], [1], [0, 0, 1, 1], [], []>} : vector<16x8xbf16>, vector<8x16xbf16>, vector<16x16xf32> -> vector<16x16xf32>
    %145 = arith.addf %117, %144 : vector<16x16xf32>
    %cst_46 = arith.constant 0.000000e+00 : f32
    %146 = vector.broadcast %cst_46 : f32 to vector<16x16xf32>
    %147 = vector.extract_strided_slice %29 {offsets = [32, 0], sizes = [16, 8], strides = [1, 1]} : vector<64x48xf32> to vector<16x8xf32>
    %148 = vector.extract_strided_slice %29 {offsets = [32, 16], sizes = [16, 8], strides = [1, 1]} : vector<64x48xf32> to vector<16x8xf32>
    %149 = vector.extract_strided_slice %29 {offsets = [32, 32], sizes = [16, 8], strides = [1, 1]} : vector<64x48xf32> to vector<16x8xf32>
    %150 = arith.truncf %147 : vector<16x8xf32> to vector<16x8xbf16>
    %151 = arith.truncf %148 : vector<16x8xf32> to vector<16x8xbf16>
    %cst_47 = arith.constant dense<0.000000e+00> : vector<16x16xf32>
    %152 = tpu.matmul %150, %151, %cst_47 {dimension_numbers = #tpu.dot_dimension_numbers<[1], [1], [0], [0], [0, 0, 1, 0], [], []>} : vector<16x8xbf16>, vector<16x8xbf16>, vector<16x16xf32> -> vector<16x16xf32>
    %cst_48 = arith.constant 0.353553385 : f32
    %153 = vector.broadcast %cst_48 : f32 to vector<16x16xf32>
    %154 = arith.mulf %152, %153 : vector<16x16xf32>
    %155 = vector.extract_strided_slice %30 {offsets = [0, 0, 0], sizes = [1, 16, 16], strides = [1, 1, 1]} : vector<2x16x16xf32> to vector<1x16x16xf32>
    %156 = vector.shape_cast %155 : vector<1x16x16xf32> to vector<16x16xf32>
    %157 = arith.addf %154, %156 : vector<16x16xf32>
    %cst_49 = arith.constant dense<0xFF800000> : vector<16xf32>
    %158 = vector.multi_reduction <maximumf>, %157, %cst_49 [1] : vector<16x16xf32> to vector<16xf32>
    %159 = vector.shape_cast %158 : vector<16xf32> to vector<16x1xf32>
    %160 = vector.broadcast %159 : vector<16x1xf32> to vector<16x16xf32>
    %161 = arith.subf %157, %160 : vector<16x16xf32>
    %162 = math.exp %161 : vector<16x16xf32>
    %cst_50 = arith.constant dense<0.000000e+00> : vector<16xf32>
    %163 = vector.multi_reduction <add>, %162, %cst_50 [1] : vector<16x16xf32> to vector<16xf32>
    %164 = vector.shape_cast %163 : vector<16xf32> to vector<16x1xf32>
    %165 = tpu.reciprocal %164 {approx = true} : vector<16x1xf32> -> vector<16x1xf32>
    %166 = vector.broadcast %165 : vector<16x1xf32> to vector<16x16xf32>
    %167 = arith.mulf %162, %166 : vector<16x16xf32>
    %168 = arith.truncf %167 : vector<16x16xf32> to vector<16x16xbf16>
    %169 = arith.truncf %149 : vector<16x8xf32> to vector<16x8xbf16>
    %cst_51 = arith.constant dense<0.000000e+00> : vector<16x8xf32>
    %170 = tpu.matmul %168, %169, %cst_51 {dimension_numbers = #tpu.dot_dimension_numbers<[1], [0], [0], [1], [0, 0, 1, 1], [], []>} : vector<16x16xbf16>, vector<16x8xbf16>, vector<16x8xf32> -> vector<16x8xf32>
    %171 = arith.truncf %170 : vector<16x8xf32> to vector<16x8xbf16>
    %172 = vector.extract_strided_slice %31 {offsets = [0, 0], sizes = [8, 16], strides = [1, 1]} : vector<16x16xbf16> to vector<8x16xbf16>
    %cst_52 = arith.constant dense<0.000000e+00> : vector<16x16xf32>
    %173 = tpu.matmul %171, %172, %cst_52 {dimension_numbers = #tpu.dot_dimension_numbers<[1], [0], [0], [1], [0, 0, 1, 1], [], []>} : vector<16x8xbf16>, vector<8x16xbf16>, vector<16x16xf32> -> vector<16x16xf32>
    %174 = arith.addf %146, %173 : vector<16x16xf32>
    %175 = vector.extract_strided_slice %29 {offsets = [32, 8], sizes = [16, 8], strides = [1, 1]} : vector<64x48xf32> to vector<16x8xf32>
    %176 = vector.extract_strided_slice %29 {offsets = [32, 24], sizes = [16, 8], strides = [1, 1]} : vector<64x48xf32> to vector<16x8xf32>
    %177 = vector.extract_strided_slice %29 {offsets = [32, 40], sizes = [16, 8], strides = [1, 1]} : vector<64x48xf32> to vector<16x8xf32>
    %178 = arith.truncf %175 : vector<16x8xf32> to vector<16x8xbf16>
    %179 = arith.truncf %176 : vector<16x8xf32> to vector<16x8xbf16>
    %cst_53 = arith.constant dense<0.000000e+00> : vector<16x16xf32>
    %180 = tpu.matmul %178, %179, %cst_53 {dimension_numbers = #tpu.dot_dimension_numbers<[1], [1], [0], [0], [0, 0, 1, 0], [], []>} : vector<16x8xbf16>, vector<16x8xbf16>, vector<16x16xf32> -> vector<16x16xf32>
    %cst_54 = arith.constant 0.353553385 : f32
    %181 = vector.broadcast %cst_54 : f32 to vector<16x16xf32>
    %182 = arith.mulf %180, %181 : vector<16x16xf32>
    %183 = vector.extract_strided_slice %30 {offsets = [1, 0, 0], sizes = [1, 16, 16], strides = [1, 1, 1]} : vector<2x16x16xf32> to vector<1x16x16xf32>
    %184 = vector.shape_cast %183 : vector<1x16x16xf32> to vector<16x16xf32>
    %185 = arith.addf %182, %184 : vector<16x16xf32>
    %cst_55 = arith.constant dense<0xFF800000> : vector<16xf32>
    %186 = vector.multi_reduction <maximumf>, %185, %cst_55 [1] : vector<16x16xf32> to vector<16xf32>
    %187 = vector.shape_cast %186 : vector<16xf32> to vector<16x1xf32>
    %188 = vector.broadcast %187 : vector<16x1xf32> to vector<16x16xf32>
    %189 = arith.subf %185, %188 : vector<16x16xf32>
    %190 = math.exp %189 : vector<16x16xf32>
    %cst_56 = arith.constant dense<0.000000e+00> : vector<16xf32>
    %191 = vector.multi_reduction <add>, %190, %cst_56 [1] : vector<16x16xf32> to vector<16xf32>
    %192 = vector.shape_cast %191 : vector<16xf32> to vector<16x1xf32>
    %193 = tpu.reciprocal %192 {approx = true} : vector<16x1xf32> -> vector<16x1xf32>
    %194 = vector.broadcast %193 : vector<16x1xf32> to vector<16x16xf32>
    %195 = arith.mulf %190, %194 : vector<16x16xf32>
    %196 = arith.truncf %195 : vector<16x16xf32> to vector<16x16xbf16>
    %197 = arith.truncf %177 : vector<16x8xf32> to vector<16x8xbf16>
    %cst_57 = arith.constant dense<0.000000e+00> : vector<16x8xf32>
    %198 = tpu.matmul %196, %197, %cst_57 {dimension_numbers = #tpu.dot_dimension_numbers<[1], [0], [0], [1], [0, 0, 1, 1], [], []>} : vector<16x16xbf16>, vector<16x8xbf16>, vector<16x8xf32> -> vector<16x8xf32>
    %199 = arith.truncf %198 : vector<16x8xf32> to vector<16x8xbf16>
    %200 = vector.extract_strided_slice %31 {offsets = [8, 0], sizes = [8, 16], strides = [1, 1]} : vector<16x16xbf16> to vector<8x16xbf16>
    %cst_58 = arith.constant dense<0.000000e+00> : vector<16x16xf32>
    %201 = tpu.matmul %199, %200, %cst_58 {dimension_numbers = #tpu.dot_dimension_numbers<[1], [0], [0], [1], [0, 0, 1, 1], [], []>} : vector<16x8xbf16>, vector<8x16xbf16>, vector<16x16xf32> -> vector<16x16xf32>
    %202 = arith.addf %174, %201 : vector<16x16xf32>
    %cst_59 = arith.constant 0.000000e+00 : f32
    %203 = vector.broadcast %cst_59 : f32 to vector<16x16xf32>
    %204 = vector.extract_strided_slice %29 {offsets = [48, 0], sizes = [16, 8], strides = [1, 1]} : vector<64x48xf32> to vector<16x8xf32>
    %205 = vector.extract_strided_slice %29 {offsets = [48, 16], sizes = [16, 8], strides = [1, 1]} : vector<64x48xf32> to vector<16x8xf32>
    %206 = vector.extract_strided_slice %29 {offsets = [48, 32], sizes = [16, 8], strides = [1, 1]} : vector<64x48xf32> to vector<16x8xf32>
    %207 = arith.truncf %204 : vector<16x8xf32> to vector<16x8xbf16>
    %208 = arith.truncf %205 : vector<16x8xf32> to vector<16x8xbf16>
    %cst_60 = arith.constant dense<0.000000e+00> : vector<16x16xf32>
    %209 = tpu.matmul %207, %208, %cst_60 {dimension_numbers = #tpu.dot_dimension_numbers<[1], [1], [0], [0], [0, 0, 1, 0], [], []>} : vector<16x8xbf16>, vector<16x8xbf16>, vector<16x16xf32> -> vector<16x16xf32>
    %cst_61 = arith.constant 0.353553385 : f32
    %210 = vector.broadcast %cst_61 : f32 to vector<16x16xf32>
    %211 = arith.mulf %209, %210 : vector<16x16xf32>
    %212 = vector.extract_strided_slice %30 {offsets = [0, 0, 0], sizes = [1, 16, 16], strides = [1, 1, 1]} : vector<2x16x16xf32> to vector<1x16x16xf32>
    %213 = vector.shape_cast %212 : vector<1x16x16xf32> to vector<16x16xf32>
    %214 = arith.addf %211, %213 : vector<16x16xf32>
    %cst_62 = arith.constant dense<0xFF800000> : vector<16xf32>
    %215 = vector.multi_reduction <maximumf>, %214, %cst_62 [1] : vector<16x16xf32> to vector<16xf32>
    %216 = vector.shape_cast %215 : vector<16xf32> to vector<16x1xf32>
    %217 = vector.broadcast %216 : vector<16x1xf32> to vector<16x16xf32>
    %218 = arith.subf %214, %217 : vector<16x16xf32>
    %219 = math.exp %218 : vector<16x16xf32>
    %cst_63 = arith.constant dense<0.000000e+00> : vector<16xf32>
    %220 = vector.multi_reduction <add>, %219, %cst_63 [1] : vector<16x16xf32> to vector<16xf32>
    %221 = vector.shape_cast %220 : vector<16xf32> to vector<16x1xf32>
    %222 = tpu.reciprocal %221 {approx = true} : vector<16x1xf32> -> vector<16x1xf32>
    %223 = vector.broadcast %222 : vector<16x1xf32> to vector<16x16xf32>
    %224 = arith.mulf %219, %223 : vector<16x16xf32>
    %225 = arith.truncf %224 : vector<16x16xf32> to vector<16x16xbf16>
    %226 = arith.truncf %206 : vector<16x8xf32> to vector<16x8xbf16>
    %cst_64 = arith.constant dense<0.000000e+00> : vector<16x8xf32>
    %227 = tpu.matmul %225, %226, %cst_64 {dimension_numbers = #tpu.dot_dimension_numbers<[1], [0], [0], [1], [0, 0, 1, 1], [], []>} : vector<16x16xbf16>, vector<16x8xbf16>, vector<16x8xf32> -> vector<16x8xf32>
    %228 = arith.truncf %227 : vector<16x8xf32> to vector<16x8xbf16>
    %229 = vector.extract_strided_slice %31 {offsets = [0, 0], sizes = [8, 16], strides = [1, 1]} : vector<16x16xbf16> to vector<8x16xbf16>
    %cst_65 = arith.constant dense<0.000000e+00> : vector<16x16xf32>
    %230 = tpu.matmul %228, %229, %cst_65 {dimension_numbers = #tpu.dot_dimension_numbers<[1], [0], [0], [1], [0, 0, 1, 1], [], []>} : vector<16x8xbf16>, vector<8x16xbf16>, vector<16x16xf32> -> vector<16x16xf32>
    %231 = arith.addf %203, %230 : vector<16x16xf32>
    %232 = vector.extract_strided_slice %29 {offsets = [48, 8], sizes = [16, 8], strides = [1, 1]} : vector<64x48xf32> to vector<16x8xf32>
    %233 = vector.extract_strided_slice %29 {offsets = [48, 24], sizes = [16, 8], strides = [1, 1]} : vector<64x48xf32> to vector<16x8xf32>
    %234 = vector.extract_strided_slice %29 {offsets = [48, 40], sizes = [16, 8], strides = [1, 1]} : vector<64x48xf32> to vector<16x8xf32>
    %235 = arith.truncf %232 : vector<16x8xf32> to vector<16x8xbf16>
    %236 = arith.truncf %233 : vector<16x8xf32> to vector<16x8xbf16>
    %cst_66 = arith.constant dense<0.000000e+00> : vector<16x16xf32>
    %237 = tpu.matmul %235, %236, %cst_66 {dimension_numbers = #tpu.dot_dimension_numbers<[1], [1], [0], [0], [0, 0, 1, 0], [], []>} : vector<16x8xbf16>, vector<16x8xbf16>, vector<16x16xf32> -> vector<16x16xf32>
    %cst_67 = arith.constant 0.353553385 : f32
    %238 = vector.broadcast %cst_67 : f32 to vector<16x16xf32>
    %239 = arith.mulf %237, %238 : vector<16x16xf32>
    %240 = vector.extract_strided_slice %30 {offsets = [1, 0, 0], sizes = [1, 16, 16], strides = [1, 1, 1]} : vector<2x16x16xf32> to vector<1x16x16xf32>
    %241 = vector.shape_cast %240 : vector<1x16x16xf32> to vector<16x16xf32>
    %242 = arith.addf %239, %241 : vector<16x16xf32>
    %cst_68 = arith.constant dense<0xFF800000> : vector<16xf32>
    %243 = vector.multi_reduction <maximumf>, %242, %cst_68 [1] : vector<16x16xf32> to vector<16xf32>
    %244 = vector.shape_cast %243 : vector<16xf32> to vector<16x1xf32>
    %245 = vector.broadcast %244 : vector<16x1xf32> to vector<16x16xf32>
    %246 = arith.subf %242, %245 : vector<16x16xf32>
    %247 = math.exp %246 : vector<16x16xf32>
    %cst_69 = arith.constant dense<0.000000e+00> : vector<16xf32>
    %248 = vector.multi_reduction <add>, %247, %cst_69 [1] : vector<16x16xf32> to vector<16xf32>
    %249 = vector.shape_cast %248 : vector<16xf32> to vector<16x1xf32>
    %250 = tpu.reciprocal %249 {approx = true} : vector<16x1xf32> -> vector<16x1xf32>
    %251 = vector.broadcast %250 : vector<16x1xf32> to vector<16x16xf32>
    %252 = arith.mulf %247, %251 : vector<16x16xf32>
    %253 = arith.truncf %252 : vector<16x16xf32> to vector<16x16xbf16>
    %254 = arith.truncf %234 : vector<16x8xf32> to vector<16x8xbf16>
    %cst_70 = arith.constant dense<0.000000e+00> : vector<16x8xf32>
    %255 = tpu.matmul %253, %254, %cst_70 {dimension_numbers = #tpu.dot_dimension_numbers<[1], [0], [0], [1], [0, 0, 1, 1], [], []>} : vector<16x16xbf16>, vector<16x8xbf16>, vector<16x8xf32> -> vector<16x8xf32>
    %256 = arith.truncf %255 : vector<16x8xf32> to vector<16x8xbf16>
    %257 = vector.extract_strided_slice %31 {offsets = [8, 0], sizes = [8, 16], strides = [1, 1]} : vector<16x16xbf16> to vector<8x16xbf16>
    %cst_71 = arith.constant dense<0.000000e+00> : vector<16x16xf32>
    %258 = tpu.matmul %256, %257, %cst_71 {dimension_numbers = #tpu.dot_dimension_numbers<[1], [0], [0], [1], [0, 0, 1, 1], [], []>} : vector<16x8xbf16>, vector<8x16xbf16>, vector<16x16xf32> -> vector<16x16xf32>
    %259 = arith.addf %231, %258 : vector<16x16xf32>
    %260 = tpu.concatenate %88, %145, %202, %259 in 0 : vector<16x16xf32>, vector<16x16xf32>, vector<16x16xf32>, vector<16x16xf32> -> vector<64x16xf32>
    %261 = arith.addf %1, %260 : vector<64x16xf32>
    %c0_72 = arith.constant 0 : index
    %c0_73 = arith.constant 0 : index
    %262 = vector.load %arg7[%c0_72, %c0_73] : memref<1x16xf32, #tpu.memory_space<vmem>>, vector<1x16xf32>
    %263 = vector.broadcast %262 : vector<1x16xf32> to vector<64x16xf32>
    %264 = arith.addf %261, %263 : vector<64x16xf32>
    %c0_74 = arith.constant 0 : index
    %c0_75 = arith.constant 0 : index
    %265 = vector.load %arg10[%c0_74, %c0_75] : memref<1x16xf32, #tpu.memory_space<vmem>>, vector<1x16xf32>
    %c0_76 = arith.constant 0 : index
    %c0_77 = arith.constant 0 : index
    %266 = vector.load %arg11[%c0_76, %c0_77] : memref<1x16xf32, #tpu.memory_space<vmem>>, vector<1x16xf32>
    %cst_78 = arith.constant dense<0.000000e+00> : vector<64xf32>
    %267 = vector.multi_reduction <add>, %264, %cst_78 [1] : vector<64x16xf32> to vector<64xf32>
    %268 = vector.shape_cast %267 : vector<64xf32> to vector<64x1xf32>
    %cst_79 = arith.constant 1.600000e+01 : f32
    %269 = vector.broadcast %cst_79 : f32 to vector<64x1xf32>
    %270 = arith.divf %268, %269 : vector<64x1xf32>
    %271 = vector.broadcast %270 : vector<64x1xf32> to vector<64x16xf32>
    %272 = arith.subf %264, %271 : vector<64x16xf32>
    %273 = arith.mulf %272, %272 : vector<64x16xf32>
    %cst_80 = arith.constant dense<0.000000e+00> : vector<64xf32>
    %274 = vector.multi_reduction <add>, %273, %cst_80 [1] : vector<64x16xf32> to vector<64xf32>
    %275 = vector.shape_cast %274 : vector<64xf32> to vector<64x1xf32>
    %cst_81 = arith.constant 1.600000e+01 : f32
    %276 = vector.broadcast %cst_81 : f32 to vector<64x1xf32>
    %277 = arith.divf %275, %276 : vector<64x1xf32>
    %cst_82 = arith.constant 9.99999974E-6 : f32
    %278 = vector.broadcast %cst_82 : f32 to vector<64x1xf32>
    %279 = arith.addf %277, %278 : vector<64x1xf32>
    %280 = math.rsqrt %279 : vector<64x1xf32>
    %281 = vector.broadcast %280 : vector<64x1xf32> to vector<64x16xf32>
    %282 = arith.mulf %272, %281 : vector<64x16xf32>
    %283 = vector.broadcast %265 : vector<1x16xf32> to vector<64x16xf32>
    %284 = arith.mulf %282, %283 : vector<64x16xf32>
    %285 = vector.broadcast %266 : vector<1x16xf32> to vector<64x16xf32>
    %286 = arith.addf %284, %285 : vector<64x16xf32>
    %287 = arith.truncf %286 : vector<64x16xf32> to vector<64x16xbf16>
    %c0_83 = arith.constant 0 : index
    %c0_84 = arith.constant 0 : index
    %288 = vector.load %arg12[%c0_83, %c0_84] : memref<16x64xbf16, #tpu.memory_space<vmem>>, vector<16x64xbf16>
    %cst_85 = arith.constant dense<0.000000e+00> : vector<64x64xf32>
    %289 = tpu.matmul %287, %288, %cst_85 {dimension_numbers = #tpu.dot_dimension_numbers<[1], [0], [0], [1], [0, 0, 1, 1], [], []>} : vector<64x16xbf16>, vector<16x64xbf16>, vector<64x64xf32> -> vector<64x64xf32>
    %c0_86 = arith.constant 0 : index
    %c0_87 = arith.constant 0 : index
    %290 = vector.load %arg13[%c0_86, %c0_87] : memref<1x64xf32, #tpu.memory_space<vmem>>, vector<1x64xf32>
    %291 = vector.broadcast %290 : vector<1x64xf32> to vector<64x64xf32>
    %292 = arith.addf %289, %291 : vector<64x64xf32>
    %cst_88 = arith.constant 5.000000e-01 : f32
    %293 = vector.broadcast %cst_88 : f32 to vector<64x64xf32>
    %294 = arith.mulf %293, %292 : vector<64x64xf32>
    %cst_89 = arith.constant 0.707106769 : f32
    %295 = vector.broadcast %cst_89 : f32 to vector<64x64xf32>
    %296 = arith.mulf %292, %295 : vector<64x64xf32>
    %cst_90 = arith.constant -4.000000e+00 : f32
    %cst_91 = arith.constant 4.000000e+00 : f32
    %297 = vector.broadcast %cst_90 : f32 to vector<64x64xf32>
    %298 = arith.maximumf %297, %296 : vector<64x64xf32>
    %299 = vector.broadcast %cst_91 : f32 to vector<64x64xf32>
    %300 = arith.minimumf %299, %298 : vector<64x64xf32>
    %301 = arith.mulf %300, %300 : vector<64x64xf32>
    %cst_92 = arith.constant 2.29050653E-4 : f32
    %302 = vector.broadcast %cst_92 : f32 to vector<64x64xf32>
    %303 = arith.mulf %302, %301 : vector<64x64xf32>
    %cst_93 = arith.constant 0.00340829091 : f32
    %304 = vector.broadcast %cst_93 : f32 to vector<64x64xf32>
    %305 = arith.addf %303, %304 : vector<64x64xf32>
    %306 = arith.mulf %305, %301 : vector<64x64xf32>
    %cst_94 = arith.constant 0.0509556942 : f32
    %307 = vector.broadcast %cst_94 : f32 to vector<64x64xf32>
    %308 = arith.addf %306, %307 : vector<64x64xf32>
    %309 = arith.mulf %308, %301 : vector<64x64xf32>
    %cst_95 = arith.constant 0.185208321 : f32
    %310 = vector.broadcast %cst_95 : f32 to vector<64x64xf32>
    %311 = arith.addf %309, %310 : vector<64x64xf32>
    %312 = arith.mulf %311, %301 : vector<64x64xf32>
    %cst_96 = arith.constant 1.12837911 : f32
    %313 = vector.broadcast %cst_96 : f32 to vector<64x64xf32>
    %314 = arith.addf %312, %313 : vector<64x64xf32>
    %cst_97 = arith.constant -1.17916031E-7 : f32
    %315 = vector.broadcast %cst_97 : f32 to vector<64x64xf32>
    %316 = arith.mulf %315, %301 : vector<64x64xf32>
    %cst_98 = arith.constant 2.35479656E-5 : f32
    %317 = vector.broadcast %cst_98 : f32 to vector<64x64xf32>
    %318 = arith.addf %316, %317 : vector<64x64xf32>
    %319 = arith.mulf %318, %301 : vector<64x64xf32>
    %cst_99 = arith.constant 0.00101796258 : f32
    %320 = vector.broadcast %cst_99 : f32 to vector<64x64xf32>
    %321 = arith.addf %319, %320 : vector<64x64xf32>
    %322 = arith.mulf %321, %301 : vector<64x64xf32>
    %cst_100 = arith.constant 0.0140704699 : f32
    %323 = vector.broadcast %cst_100 : f32 to vector<64x64xf32>
    %324 = arith.addf %322, %323 : vector<64x64xf32>
    %325 = arith.mulf %324, %301 : vector<64x64xf32>
    %cst_101 = arith.constant 0.110985048 : f32
    %326 = vector.broadcast %cst_101 : f32 to vector<64x64xf32>
    %327 = arith.addf %325, %326 : vector<64x64xf32>
    %328 = arith.mulf %327, %301 : vector<64x64xf32>
    %cst_102 = arith.constant 0.497469246 : f32
    %329 = vector.broadcast %cst_102 : f32 to vector<64x64xf32>
    %330 = arith.addf %328, %329 : vector<64x64xf32>
    %331 = arith.mulf %330, %301 : vector<64x64xf32>
    %cst_103 = arith.constant 1.000000e+00 : f32
    %332 = vector.broadcast %cst_103 : f32 to vector<64x64xf32>
    %333 = arith.addf %331, %332 : vector<64x64xf32>
    %334 = arith.mulf %300, %314 : vector<64x64xf32>
    %335 = tpu.reciprocal %333 {approx = true} : vector<64x64xf32> -> vector<64x64xf32>
    %336 = arith.mulf %334, %335 : vector<64x64xf32>
    %cst_104 = arith.constant 1.000000e+00 : f32
    %337 = vector.broadcast %cst_104 : f32 to vector<64x64xf32>
    %338 = arith.addf %337, %336 : vector<64x64xf32>
    %339 = arith.mulf %294, %338 : vector<64x64xf32>
    %340 = arith.truncf %339 : vector<64x64xf32> to vector<64x64xbf16>
    %c0_105 = arith.constant 0 : index
    %c0_106 = arith.constant 0 : index
    %341 = vector.load %arg14[%c0_105, %c0_106] : memref<64x16xbf16, #tpu.memory_space<vmem>>, vector<64x16xbf16>
    %cst_107 = arith.constant dense<0.000000e+00> : vector<64x16xf32>
    %342 = tpu.matmul %340, %341, %cst_107 {dimension_numbers = #tpu.dot_dimension_numbers<[1], [0], [0], [1], [0, 0, 1, 1], [], []>} : vector<64x64xbf16>, vector<64x16xbf16>, vector<64x16xf32> -> vector<64x16xf32>
    %c0_108 = arith.constant 0 : index
    %c0_109 = arith.constant 0 : index
    %343 = vector.load %arg15[%c0_108, %c0_109] : memref<1x16xf32, #tpu.memory_space<vmem>>, vector<1x16xf32>
    %344 = vector.broadcast %343 : vector<1x16xf32> to vector<64x16xf32>
    %345 = arith.addf %342, %344 : vector<64x16xf32>
    %346 = arith.addf %264, %345 : vector<64x16xf32>
    %c0_110 = arith.constant 0 : index
    %c0_111 = arith.constant 0 : index
    %c0_112 = arith.constant 0 : index
    %347 = vector.load %arg16[%c0_110, %c0_111, %c0_112] : memref<1x64x16xf32, #tpu.memory_space<vmem>>, vector<1x64x16xf32>
    %348 = vector.shape_cast %347 : vector<1x64x16xf32> to vector<64x16xf32>
    %349 = vector.shape_cast %346 : vector<64x16xf32> to vector<1x64x16xf32>
    tpu.vector_store %arg16[%c0_110, %c0_111, %c0_112], %349 {strides = array<i32>} : memref<1x64x16xf32, #tpu.memory_space<vmem>>, vector<1x64x16xf32>,
    return
  }
  func.func @transform_0(%arg0: i32) -> (i32, i32, i32) {
    %c0_i32 = arith.constant 0 : i32
    %c0_i32_0 = arith.constant 0 : i32
    %c0_i32_1 = arith.constant 0 : i32
    return %arg0, %c0_i32, %c0_i32_0 : i32, i32, i32
  }
  func.func @transform_1(%arg0: i32) -> (i32, i32) {
    %c0_i32 = arith.constant 0 : i32
    %c0_i32_0 = arith.constant 0 : i32
    %c0_i32_1 = arith.constant 0 : i32
    return %c0_i32, %c0_i32_0 : i32, i32
  }
  func.func @transform_2(%arg0: i32) -> (i32, i32) {
    %c0_i32 = arith.constant 0 : i32
    %c0_i32_0 = arith.constant 0 : i32
    %c0_i32_1 = arith.constant 0 : i32
    return %c0_i32, %c0_i32_0 : i32, i32
  }
  func.func @transform_3(%arg0: i32) -> (i32, i32) {
    %c0_i32 = arith.constant 0 : i32
    %c0_i32_0 = arith.constant 0 : i32
    %c0_i32_1 = arith.constant 0 : i32
    return %c0_i32, %c0_i32_0 : i32, i32
  }
  func.func @transform_4(%arg0: i32) -> (i32, i32) {
    %c0_i32 = arith.constant 0 : i32
    %c0_i32_0 = arith.constant 0 : i32
    %c0_i32_1 = arith.constant 0 : i32
    return %c0_i32, %c0_i32_0 : i32, i32
  }
  func.func @transform_5(%arg0: i32) -> (i32, i32) {
    %c0_i32 = arith.constant 0 : i32
    %c0_i32_0 = arith.constant 0 : i32
    %c0_i32_1 = arith.constant 0 : i32
    return %c0_i32, %c0_i32_0 : i32, i32
  }
  func.func @transform_6(%arg0: i32) -> (i32, i32) {
    %c0_i32 = arith.constant 0 : i32
    %c0_i32_0 = arith.constant 0 : i32
    %c0_i32_1 = arith.constant 0 : i32
    return %c0_i32, %c0_i32_0 : i32, i32
  }
  func.func @transform_7(%arg0: i32) -> (i32, i32, i32) {
    %c0_i32 = arith.constant 0 : i32
    %c0_i32_0 = arith.constant 0 : i32
    %c0_i32_1 = arith.constant 0 : i32
    %c0_i32_2 = arith.constant 0 : i32
    return %c0_i32, %c0_i32_0, %c0_i32_1 : i32, i32, i32
  }
  func.func @transform_8(%arg0: i32) -> (i32, i32, i32) {
    %c0_i32 = arith.constant 0 : i32
    %c0_i32_0 = arith.constant 0 : i32
    %c0_i32_1 = arith.constant 0 : i32
    %c0_i32_2 = arith.constant 0 : i32
    return %c0_i32, %c0_i32_0, %c0_i32_1 : i32, i32, i32
  }
  func.func @transform_9(%arg0: i32) -> (i32, i32) {
    %c0_i32 = arith.constant 0 : i32
    %c0_i32_0 = arith.constant 0 : i32
    %c0_i32_1 = arith.constant 0 : i32
    return %c0_i32, %c0_i32_0 : i32, i32
  }
  func.func @transform_10(%arg0: i32) -> (i32, i32) {
    %c0_i32 = arith.constant 0 : i32
    %c0_i32_0 = arith.constant 0 : i32
    %c0_i32_1 = arith.constant 0 : i32
    return %c0_i32, %c0_i32_0 : i32, i32
  }
  func.func @transform_11(%arg0: i32) -> (i32, i32) {
    %c0_i32 = arith.constant 0 : i32
    %c0_i32_0 = arith.constant 0 : i32
    %c0_i32_1 = arith.constant 0 : i32
    return %c0_i32, %c0_i32_0 : i32, i32
  }
  func.func @transform_12(%arg0: i32) -> (i32, i32) {
    %c0_i32 = arith.constant 0 : i32
    %c0_i32_0 = arith.constant 0 : i32
    %c0_i32_1 = arith.constant 0 : i32
    return %c0_i32, %c0_i32_0 : i32, i32
  }
  func.func @transform_13(%arg0: i32) -> (i32, i32) {
    %c0_i32 = arith.constant 0 : i32
    %c0_i32_0 = arith.constant 0 : i32
    %c0_i32_1 = arith.constant 0 : i32
    return %c0_i32, %c0_i32_0 : i32, i32
  }
  func.func @transform_14(%arg0: i32) -> (i32, i32) {
    %c0_i32 = arith.constant 0 : i32
    %c0_i32_0 = arith.constant 0 : i32
    %c0_i32_1 = arith.constant 0 : i32
    return %c0_i32, %c0_i32_0 : i32, i32
  }
  func.func @transform_15(%arg0: i32) -> (i32, i32, i32) {
    %c0_i32 = arith.constant 0 : i32
    %c0_i32_0 = arith.constant 0 : i32
    %c0_i32_1 = arith.constant 0 : i32
    return %arg0, %c0_i32, %c0_i32_0 : i32, i32, i32
  }
}

module attributes {stable_mosaic.version = 11 : i64} {
  func.func @_swin_block_kernel(%arg0: i32, %arg1: memref<1x64x16xf32, #tpu.memory_space<vmem>>, %arg2: memref<1x16xf32, #tpu.memory_space<vmem>>, %arg3: memref<1x16xf32, #tpu.memory_space<vmem>>, %arg4: memref<16x48xbf16, #tpu.memory_space<vmem>>, %arg5: memref<1x48xf32, #tpu.memory_space<vmem>>, %arg6: memref<16x16xbf16, #tpu.memory_space<vmem>>, %arg7: memref<1x16xf32, #tpu.memory_space<vmem>>, %arg8: memref<2x16x16xf32, #tpu.memory_space<vmem>>, %arg9: memref<4x16x16xf32, #tpu.memory_space<vmem>>, %arg10: memref<1x16xf32, #tpu.memory_space<vmem>>, %arg11: memref<1x16xf32, #tpu.memory_space<vmem>>, %arg12: memref<16x64xbf16, #tpu.memory_space<vmem>>, %arg13: memref<1x64xf32, #tpu.memory_space<vmem>>, %arg14: memref<64x16xbf16, #tpu.memory_space<vmem>>, %arg15: memref<1x16xf32, #tpu.memory_space<vmem>>, %arg16: memref<1x64x16xf32, #tpu.memory_space<vmem>>) attributes {dimension_semantics = [#tpu.dimension_semantics<parallel>], iteration_bounds = array<i64: 2>, scalar_prefetch = 0 : i64, scratch_operands = 0 : i64, tpu.core_type = #tpu.core_type<tc>, window_params = [{transform_indices = @transform_0, window_bounds = array<i64: 1, 64, 16>}, {pipeline_mode = #tpu.pipeline_mode<synchronous>, transform_indices = @transform_1, window_bounds = array<i64: 1, 16>}, {pipeline_mode = #tpu.pipeline_mode<synchronous>, transform_indices = @transform_2, window_bounds = array<i64: 1, 16>}, {pipeline_mode = #tpu.pipeline_mode<synchronous>, transform_indices = @transform_3, window_bounds = array<i64: 16, 48>}, {pipeline_mode = #tpu.pipeline_mode<synchronous>, transform_indices = @transform_4, window_bounds = array<i64: 1, 48>}, {pipeline_mode = #tpu.pipeline_mode<synchronous>, transform_indices = @transform_5, window_bounds = array<i64: 16, 16>}, {pipeline_mode = #tpu.pipeline_mode<synchronous>, transform_indices = @transform_6, window_bounds = array<i64: 1, 16>}, {pipeline_mode = #tpu.pipeline_mode<synchronous>, transform_indices = @transform_7, window_bounds = array<i64: 2, 16, 16>}, {pipeline_mode = #tpu.pipeline_mode<synchronous>, transform_indices = @transform_8, window_bounds = array<i64: 4, 16, 16>}, {pipeline_mode = #tpu.pipeline_mode<synchronous>, transform_indices = @transform_9, window_bounds = array<i64: 1, 16>}, {pipeline_mode = #tpu.pipeline_mode<synchronous>, transform_indices = @transform_10, window_bounds = array<i64: 1, 16>}, {pipeline_mode = #tpu.pipeline_mode<synchronous>, transform_indices = @transform_11, window_bounds = array<i64: 16, 64>}, {pipeline_mode = #tpu.pipeline_mode<synchronous>, transform_indices = @transform_12, window_bounds = array<i64: 1, 64>}, {pipeline_mode = #tpu.pipeline_mode<synchronous>, transform_indices = @transform_13, window_bounds = array<i64: 64, 16>}, {pipeline_mode = #tpu.pipeline_mode<synchronous>, transform_indices = @transform_14, window_bounds = array<i64: 1, 16>}, {transform_indices = @transform_15, window_bounds = array<i64: 1, 64, 16>}]} {
    %c0 = arith.constant 0 : index
    %c0_0 = arith.constant 0 : index
    %c0_1 = arith.constant 0 : index
    %0 = vector.load %arg1[%c0, %c0_0, %c0_1] : memref<1x64x16xf32, #tpu.memory_space<vmem>>, vector<1x64x16xf32>
    %1 = vector.shape_cast %0 : vector<1x64x16xf32> to vector<64x16xf32>
    %c0_2 = arith.constant 0 : index
    %c0_3 = arith.constant 0 : index
    %2 = vector.load %arg2[%c0_2, %c0_3] : memref<1x16xf32, #tpu.memory_space<vmem>>, vector<1x16xf32>
    %c0_4 = arith.constant 0 : index
    %c0_5 = arith.constant 0 : index
    %3 = vector.load %arg3[%c0_4, %c0_5] : memref<1x16xf32, #tpu.memory_space<vmem>>, vector<1x16xf32>
    %cst = arith.constant dense<0.000000e+00> : vector<64xf32>
    %4 = vector.multi_reduction <add>, %1, %cst [1] : vector<64x16xf32> to vector<64xf32>
    %5 = vector.shape_cast %4 : vector<64xf32> to vector<64x1xf32>
    %cst_6 = arith.constant 1.600000e+01 : f32
    %6 = vector.broadcast %cst_6 : f32 to vector<64x1xf32>
    %7 = arith.divf %5, %6 : vector<64x1xf32>
    %8 = vector.broadcast %7 : vector<64x1xf32> to vector<64x16xf32>
    %9 = arith.subf %1, %8 : vector<64x16xf32>
    %10 = arith.mulf %9, %9 : vector<64x16xf32>
    %cst_7 = arith.constant dense<0.000000e+00> : vector<64xf32>
    %11 = vector.multi_reduction <add>, %10, %cst_7 [1] : vector<64x16xf32> to vector<64xf32>
    %12 = vector.shape_cast %11 : vector<64xf32> to vector<64x1xf32>
    %cst_8 = arith.constant 1.600000e+01 : f32
    %13 = vector.broadcast %cst_8 : f32 to vector<64x1xf32>
    %14 = arith.divf %12, %13 : vector<64x1xf32>
    %cst_9 = arith.constant 9.99999974E-6 : f32
    %15 = vector.broadcast %cst_9 : f32 to vector<64x1xf32>
    %16 = arith.addf %14, %15 : vector<64x1xf32>
    %17 = math.rsqrt %16 : vector<64x1xf32>
    %18 = vector.broadcast %17 : vector<64x1xf32> to vector<64x16xf32>
    %19 = arith.mulf %9, %18 : vector<64x16xf32>
    %20 = vector.broadcast %2 : vector<1x16xf32> to vector<64x16xf32>
    %21 = arith.mulf %19, %20 : vector<64x16xf32>
    %22 = vector.broadcast %3 : vector<1x16xf32> to vector<64x16xf32>
    %23 = arith.addf %21, %22 : vector<64x16xf32>
    %24 = arith.truncf %23 : vector<64x16xf32> to vector<64x16xbf16>
    %c0_10 = arith.constant 0 : index
    %c0_11 = arith.constant 0 : index
    %25 = vector.load %arg4[%c0_10, %c0_11] : memref<16x48xbf16, #tpu.memory_space<vmem>>, vector<16x48xbf16>
    %cst_12 = arith.constant dense<0.000000e+00> : vector<64x48xf32>
    %26 = tpu.matmul %24, %25, %cst_12 {dimension_numbers = #tpu.dot_dimension_numbers<[1], [0], [0], [1], [0, 0, 1, 1], [], []>} : vector<64x16xbf16>, vector<16x48xbf16>, vector<64x48xf32> -> vector<64x48xf32>
    %c0_13 = arith.constant 0 : index
    %c0_14 = arith.constant 0 : index
    %27 = vector.load %arg5[%c0_13, %c0_14] : memref<1x48xf32, #tpu.memory_space<vmem>>, vector<1x48xf32>
    %28 = vector.broadcast %27 : vector<1x48xf32> to vector<64x48xf32>
    %29 = arith.addf %26, %28 : vector<64x48xf32>
    %c0_15 = arith.constant 0 : index
    %c0_16 = arith.constant 0 : index
    %c0_17 = arith.constant 0 : index
    %30 = vector.load %arg8[%c0_15, %c0_16, %c0_17] : memref<2x16x16xf32, #tpu.memory_space<vmem>>, vector<2x16x16xf32>
    %c0_18 = arith.constant 0 : index
    %c0_19 = arith.constant 0 : index
    %31 = vector.load %arg6[%c0_18, %c0_19] : memref<16x16xbf16, #tpu.memory_space<vmem>>, vector<16x16xbf16>
    %cst_20 = arith.constant 0.000000e+00 : f32
    %32 = vector.broadcast %cst_20 : f32 to vector<16x16xf32>
    %33 = vector.extract_strided_slice %29 {offsets = [0, 0], sizes = [16, 8], strides = [1, 1]} : vector<64x48xf32> to vector<16x8xf32>
    %34 = vector.extract_strided_slice %29 {offsets = [0, 16], sizes = [16, 8], strides = [1, 1]} : vector<64x48xf32> to vector<16x8xf32>
    %35 = vector.extract_strided_slice %29 {offsets = [0, 32], sizes = [16, 8], strides = [1, 1]} : vector<64x48xf32> to vector<16x8xf32>
    %36 = arith.truncf %33 : vector<16x8xf32> to vector<16x8xbf16>
    %37 = arith.truncf %34 : vector<16x8xf32> to vector<16x8xbf16>
    %cst_21 = arith.constant dense<0.000000e+00> : vector<16x16xf32>
    %38 = tpu.matmul %36, %37, %cst_21 {dimension_numbers = #tpu.dot_dimension_numbers<[1], [1], [0], [0], [0, 0, 1, 0], [], []>} : vector<16x8xbf16>, vector<16x8xbf16>, vector<16x16xf32> -> vector<16x16xf32>
    %cst_22 = arith.constant 0.353553385 : f32
    %39 = vector.broadcast %cst_22 : f32 to vector<16x16xf32>
    %40 = arith.mulf %38, %39 : vector<16x16xf32>
    %41 = vector.extract_strided_slice %30 {offsets = [0, 0, 0], sizes = [1, 16, 16], strides = [1, 1, 1]} : vector<2x16x16xf32> to vector<1x16x16xf32>
    %42 = vector.shape_cast %41 : vector<1x16x16xf32> to vector<16x16xf32>
    %43 = arith.addf %40, %42 : vector<16x16xf32>
    %c0_23 = arith.constant 0 : index
    %c0_24 = arith.constant 0 : index
    %c0_25 = arith.constant 0 : index
    %44 = vector.load %arg9[%c0_23, %c0_24, %c0_25] : memref<4x16x16xf32, #tpu.memory_space<vmem>>, vector<1x16x16xf32>
    %45 = vector.shape_cast %44 : vector<1x16x16xf32> to vector<16x16xf32>
    %46 = arith.addf %43, %45 : vector<16x16xf32>
    %cst_26 = arith.constant dense<0xFF800000> : vector<16xf32>
    %47 = vector.multi_reduction <maximumf>, %46, %cst_26 [1] : vector<16x16xf32> to vector<16xf32>
    %48 = vector.shape_cast %47 : vector<16xf32> to vector<16x1xf32>
    %49 = vector.broadcast %48 : vector<16x1xf32> to vector<16x16xf32>
    %50 = arith.subf %46, %49 : vector<16x16xf32>
    %51 = math.exp %50 : vector<16x16xf32>
    %cst_27 = arith.constant dense<0.000000e+00> : vector<16xf32>
    %52 = vector.multi_reduction <add>, %51, %cst_27 [1] : vector<16x16xf32> to vector<16xf32>
    %53 = vector.shape_cast %52 : vector<16xf32> to vector<16x1xf32>
    %54 = tpu.reciprocal %53 {approx = true} : vector<16x1xf32> -> vector<16x1xf32>
    %55 = vector.broadcast %54 : vector<16x1xf32> to vector<16x16xf32>
    %56 = arith.mulf %51, %55 : vector<16x16xf32>
    %57 = arith.truncf %56 : vector<16x16xf32> to vector<16x16xbf16>
    %58 = arith.truncf %35 : vector<16x8xf32> to vector<16x8xbf16>
    %cst_28 = arith.constant dense<0.000000e+00> : vector<16x8xf32>
    %59 = tpu.matmul %57, %58, %cst_28 {dimension_numbers = #tpu.dot_dimension_numbers<[1], [0], [0], [1], [0, 0, 1, 1], [], []>} : vector<16x16xbf16>, vector<16x8xbf16>, vector<16x8xf32> -> vector<16x8xf32>
    %60 = arith.truncf %59 : vector<16x8xf32> to vector<16x8xbf16>
    %61 = vector.extract_strided_slice %31 {offsets = [0, 0], sizes = [8, 16], strides = [1, 1]} : vector<16x16xbf16> to vector<8x16xbf16>
    %cst_29 = arith.constant dense<0.000000e+00> : vector<16x16xf32>
    %62 = tpu.matmul %60, %61, %cst_29 {dimension_numbers = #tpu.dot_dimension_numbers<[1], [0], [0], [1], [0, 0, 1, 1], [], []>} : vector<16x8xbf16>, vector<8x16xbf16>, vector<16x16xf32> -> vector<16x16xf32>
    %63 = arith.addf %32, %62 : vector<16x16xf32>
    %64 = vector.extract_strided_slice %29 {offsets = [0, 8], sizes = [16, 8], strides = [1, 1]} : vector<64x48xf32> to vector<16x8xf32>
    %65 = vector.extract_strided_slice %29 {offsets = [0, 24], sizes = [16, 8], strides = [1, 1]} : vector<64x48xf32> to vector<16x8xf32>
    %66 = vector.extract_strided_slice %29 {offsets = [0, 40], sizes = [16, 8], strides = [1, 1]} : vector<64x48xf32> to vector<16x8xf32>
    %67 = arith.truncf %64 : vector<16x8xf32> to vector<16x8xbf16>
    %68 = arith.truncf %65 : vector<16x8xf32> to vector<16x8xbf16>
    %cst_30 = arith.constant dense<0.000000e+00> : vector<16x16xf32>
    %69 = tpu.matmul %67, %68, %cst_30 {dimension_numbers = #tpu.dot_dimension_numbers<[1], [1], [0], [0], [0, 0, 1, 0], [], []>} : vector<16x8xbf16>, vector<16x8xbf16>, vector<16x16xf32> -> vector<16x16xf32>
    %cst_31 = arith.constant 0.353553385 : f32
    %70 = vector.broadcast %cst_31 : f32 to vector<16x16xf32>
    %71 = arith.mulf %69, %70 : vector<16x16xf32>
    %72 = vector.extract_strided_slice %30 {offsets = [1, 0, 0], sizes = [1, 16, 16], strides = [1, 1, 1]} : vector<2x16x16xf32> to vector<1x16x16xf32>
    %73 = vector.shape_cast %72 : vector<1x16x16xf32> to vector<16x16xf32>
    %74 = arith.addf %71, %73 : vector<16x16xf32>
    %c0_32 = arith.constant 0 : index
    %c0_33 = arith.constant 0 : index
    %c0_34 = arith.constant 0 : index
    %75 = vector.load %arg9[%c0_32, %c0_33, %c0_34] : memref<4x16x16xf32, #tpu.memory_space<vmem>>, vector<1x16x16xf32>
    %76 = vector.shape_cast %75 : vector<1x16x16xf32> to vector<16x16xf32>
    %77 = arith.addf %74, %76 : vector<16x16xf32>
    %cst_35 = arith.constant dense<0xFF800000> : vector<16xf32>
    %78 = vector.multi_reduction <maximumf>, %77, %cst_35 [1] : vector<16x16xf32> to vector<16xf32>
    %79 = vector.shape_cast %78 : vector<16xf32> to vector<16x1xf32>
    %80 = vector.broadcast %79 : vector<16x1xf32> to vector<16x16xf32>
    %81 = arith.subf %77, %80 : vector<16x16xf32>
    %82 = math.exp %81 : vector<16x16xf32>
    %cst_36 = arith.constant dense<0.000000e+00> : vector<16xf32>
    %83 = vector.multi_reduction <add>, %82, %cst_36 [1] : vector<16x16xf32> to vector<16xf32>
    %84 = vector.shape_cast %83 : vector<16xf32> to vector<16x1xf32>
    %85 = tpu.reciprocal %84 {approx = true} : vector<16x1xf32> -> vector<16x1xf32>
    %86 = vector.broadcast %85 : vector<16x1xf32> to vector<16x16xf32>
    %87 = arith.mulf %82, %86 : vector<16x16xf32>
    %88 = arith.truncf %87 : vector<16x16xf32> to vector<16x16xbf16>
    %89 = arith.truncf %66 : vector<16x8xf32> to vector<16x8xbf16>
    %cst_37 = arith.constant dense<0.000000e+00> : vector<16x8xf32>
    %90 = tpu.matmul %88, %89, %cst_37 {dimension_numbers = #tpu.dot_dimension_numbers<[1], [0], [0], [1], [0, 0, 1, 1], [], []>} : vector<16x16xbf16>, vector<16x8xbf16>, vector<16x8xf32> -> vector<16x8xf32>
    %91 = arith.truncf %90 : vector<16x8xf32> to vector<16x8xbf16>
    %92 = vector.extract_strided_slice %31 {offsets = [8, 0], sizes = [8, 16], strides = [1, 1]} : vector<16x16xbf16> to vector<8x16xbf16>
    %cst_38 = arith.constant dense<0.000000e+00> : vector<16x16xf32>
    %93 = tpu.matmul %91, %92, %cst_38 {dimension_numbers = #tpu.dot_dimension_numbers<[1], [0], [0], [1], [0, 0, 1, 1], [], []>} : vector<16x8xbf16>, vector<8x16xbf16>, vector<16x16xf32> -> vector<16x16xf32>
    %94 = arith.addf %63, %93 : vector<16x16xf32>
    %cst_39 = arith.constant 0.000000e+00 : f32
    %95 = vector.broadcast %cst_39 : f32 to vector<16x16xf32>
    %96 = vector.extract_strided_slice %29 {offsets = [16, 0], sizes = [16, 8], strides = [1, 1]} : vector<64x48xf32> to vector<16x8xf32>
    %97 = vector.extract_strided_slice %29 {offsets = [16, 16], sizes = [16, 8], strides = [1, 1]} : vector<64x48xf32> to vector<16x8xf32>
    %98 = vector.extract_strided_slice %29 {offsets = [16, 32], sizes = [16, 8], strides = [1, 1]} : vector<64x48xf32> to vector<16x8xf32>
    %99 = arith.truncf %96 : vector<16x8xf32> to vector<16x8xbf16>
    %100 = arith.truncf %97 : vector<16x8xf32> to vector<16x8xbf16>
    %cst_40 = arith.constant dense<0.000000e+00> : vector<16x16xf32>
    %101 = tpu.matmul %99, %100, %cst_40 {dimension_numbers = #tpu.dot_dimension_numbers<[1], [1], [0], [0], [0, 0, 1, 0], [], []>} : vector<16x8xbf16>, vector<16x8xbf16>, vector<16x16xf32> -> vector<16x16xf32>
    %cst_41 = arith.constant 0.353553385 : f32
    %102 = vector.broadcast %cst_41 : f32 to vector<16x16xf32>
    %103 = arith.mulf %101, %102 : vector<16x16xf32>
    %104 = vector.extract_strided_slice %30 {offsets = [0, 0, 0], sizes = [1, 16, 16], strides = [1, 1, 1]} : vector<2x16x16xf32> to vector<1x16x16xf32>
    %105 = vector.shape_cast %104 : vector<1x16x16xf32> to vector<16x16xf32>
    %106 = arith.addf %103, %105 : vector<16x16xf32>
    %c1 = arith.constant 1 : index
    %c0_42 = arith.constant 0 : index
    %c0_43 = arith.constant 0 : index
    %107 = vector.load %arg9[%c1, %c0_42, %c0_43] : memref<4x16x16xf32, #tpu.memory_space<vmem>>, vector<1x16x16xf32>
    %108 = vector.shape_cast %107 : vector<1x16x16xf32> to vector<16x16xf32>
    %109 = arith.addf %106, %108 : vector<16x16xf32>
    %cst_44 = arith.constant dense<0xFF800000> : vector<16xf32>
    %110 = vector.multi_reduction <maximumf>, %109, %cst_44 [1] : vector<16x16xf32> to vector<16xf32>
    %111 = vector.shape_cast %110 : vector<16xf32> to vector<16x1xf32>
    %112 = vector.broadcast %111 : vector<16x1xf32> to vector<16x16xf32>
    %113 = arith.subf %109, %112 : vector<16x16xf32>
    %114 = math.exp %113 : vector<16x16xf32>
    %cst_45 = arith.constant dense<0.000000e+00> : vector<16xf32>
    %115 = vector.multi_reduction <add>, %114, %cst_45 [1] : vector<16x16xf32> to vector<16xf32>
    %116 = vector.shape_cast %115 : vector<16xf32> to vector<16x1xf32>
    %117 = tpu.reciprocal %116 {approx = true} : vector<16x1xf32> -> vector<16x1xf32>
    %118 = vector.broadcast %117 : vector<16x1xf32> to vector<16x16xf32>
    %119 = arith.mulf %114, %118 : vector<16x16xf32>
    %120 = arith.truncf %119 : vector<16x16xf32> to vector<16x16xbf16>
    %121 = arith.truncf %98 : vector<16x8xf32> to vector<16x8xbf16>
    %cst_46 = arith.constant dense<0.000000e+00> : vector<16x8xf32>
    %122 = tpu.matmul %120, %121, %cst_46 {dimension_numbers = #tpu.dot_dimension_numbers<[1], [0], [0], [1], [0, 0, 1, 1], [], []>} : vector<16x16xbf16>, vector<16x8xbf16>, vector<16x8xf32> -> vector<16x8xf32>
    %123 = arith.truncf %122 : vector<16x8xf32> to vector<16x8xbf16>
    %124 = vector.extract_strided_slice %31 {offsets = [0, 0], sizes = [8, 16], strides = [1, 1]} : vector<16x16xbf16> to vector<8x16xbf16>
    %cst_47 = arith.constant dense<0.000000e+00> : vector<16x16xf32>
    %125 = tpu.matmul %123, %124, %cst_47 {dimension_numbers = #tpu.dot_dimension_numbers<[1], [0], [0], [1], [0, 0, 1, 1], [], []>} : vector<16x8xbf16>, vector<8x16xbf16>, vector<16x16xf32> -> vector<16x16xf32>
    %126 = arith.addf %95, %125 : vector<16x16xf32>
    %127 = vector.extract_strided_slice %29 {offsets = [16, 8], sizes = [16, 8], strides = [1, 1]} : vector<64x48xf32> to vector<16x8xf32>
    %128 = vector.extract_strided_slice %29 {offsets = [16, 24], sizes = [16, 8], strides = [1, 1]} : vector<64x48xf32> to vector<16x8xf32>
    %129 = vector.extract_strided_slice %29 {offsets = [16, 40], sizes = [16, 8], strides = [1, 1]} : vector<64x48xf32> to vector<16x8xf32>
    %130 = arith.truncf %127 : vector<16x8xf32> to vector<16x8xbf16>
    %131 = arith.truncf %128 : vector<16x8xf32> to vector<16x8xbf16>
    %cst_48 = arith.constant dense<0.000000e+00> : vector<16x16xf32>
    %132 = tpu.matmul %130, %131, %cst_48 {dimension_numbers = #tpu.dot_dimension_numbers<[1], [1], [0], [0], [0, 0, 1, 0], [], []>} : vector<16x8xbf16>, vector<16x8xbf16>, vector<16x16xf32> -> vector<16x16xf32>
    %cst_49 = arith.constant 0.353553385 : f32
    %133 = vector.broadcast %cst_49 : f32 to vector<16x16xf32>
    %134 = arith.mulf %132, %133 : vector<16x16xf32>
    %135 = vector.extract_strided_slice %30 {offsets = [1, 0, 0], sizes = [1, 16, 16], strides = [1, 1, 1]} : vector<2x16x16xf32> to vector<1x16x16xf32>
    %136 = vector.shape_cast %135 : vector<1x16x16xf32> to vector<16x16xf32>
    %137 = arith.addf %134, %136 : vector<16x16xf32>
    %c1_50 = arith.constant 1 : index
    %c0_51 = arith.constant 0 : index
    %c0_52 = arith.constant 0 : index
    %138 = vector.load %arg9[%c1_50, %c0_51, %c0_52] : memref<4x16x16xf32, #tpu.memory_space<vmem>>, vector<1x16x16xf32>
    %139 = vector.shape_cast %138 : vector<1x16x16xf32> to vector<16x16xf32>
    %140 = arith.addf %137, %139 : vector<16x16xf32>
    %cst_53 = arith.constant dense<0xFF800000> : vector<16xf32>
    %141 = vector.multi_reduction <maximumf>, %140, %cst_53 [1] : vector<16x16xf32> to vector<16xf32>
    %142 = vector.shape_cast %141 : vector<16xf32> to vector<16x1xf32>
    %143 = vector.broadcast %142 : vector<16x1xf32> to vector<16x16xf32>
    %144 = arith.subf %140, %143 : vector<16x16xf32>
    %145 = math.exp %144 : vector<16x16xf32>
    %cst_54 = arith.constant dense<0.000000e+00> : vector<16xf32>
    %146 = vector.multi_reduction <add>, %145, %cst_54 [1] : vector<16x16xf32> to vector<16xf32>
    %147 = vector.shape_cast %146 : vector<16xf32> to vector<16x1xf32>
    %148 = tpu.reciprocal %147 {approx = true} : vector<16x1xf32> -> vector<16x1xf32>
    %149 = vector.broadcast %148 : vector<16x1xf32> to vector<16x16xf32>
    %150 = arith.mulf %145, %149 : vector<16x16xf32>
    %151 = arith.truncf %150 : vector<16x16xf32> to vector<16x16xbf16>
    %152 = arith.truncf %129 : vector<16x8xf32> to vector<16x8xbf16>
    %cst_55 = arith.constant dense<0.000000e+00> : vector<16x8xf32>
    %153 = tpu.matmul %151, %152, %cst_55 {dimension_numbers = #tpu.dot_dimension_numbers<[1], [0], [0], [1], [0, 0, 1, 1], [], []>} : vector<16x16xbf16>, vector<16x8xbf16>, vector<16x8xf32> -> vector<16x8xf32>
    %154 = arith.truncf %153 : vector<16x8xf32> to vector<16x8xbf16>
    %155 = vector.extract_strided_slice %31 {offsets = [8, 0], sizes = [8, 16], strides = [1, 1]} : vector<16x16xbf16> to vector<8x16xbf16>
    %cst_56 = arith.constant dense<0.000000e+00> : vector<16x16xf32>
    %156 = tpu.matmul %154, %155, %cst_56 {dimension_numbers = #tpu.dot_dimension_numbers<[1], [0], [0], [1], [0, 0, 1, 1], [], []>} : vector<16x8xbf16>, vector<8x16xbf16>, vector<16x16xf32> -> vector<16x16xf32>
    %157 = arith.addf %126, %156 : vector<16x16xf32>
    %cst_57 = arith.constant 0.000000e+00 : f32
    %158 = vector.broadcast %cst_57 : f32 to vector<16x16xf32>
    %159 = vector.extract_strided_slice %29 {offsets = [32, 0], sizes = [16, 8], strides = [1, 1]} : vector<64x48xf32> to vector<16x8xf32>
    %160 = vector.extract_strided_slice %29 {offsets = [32, 16], sizes = [16, 8], strides = [1, 1]} : vector<64x48xf32> to vector<16x8xf32>
    %161 = vector.extract_strided_slice %29 {offsets = [32, 32], sizes = [16, 8], strides = [1, 1]} : vector<64x48xf32> to vector<16x8xf32>
    %162 = arith.truncf %159 : vector<16x8xf32> to vector<16x8xbf16>
    %163 = arith.truncf %160 : vector<16x8xf32> to vector<16x8xbf16>
    %cst_58 = arith.constant dense<0.000000e+00> : vector<16x16xf32>
    %164 = tpu.matmul %162, %163, %cst_58 {dimension_numbers = #tpu.dot_dimension_numbers<[1], [1], [0], [0], [0, 0, 1, 0], [], []>} : vector<16x8xbf16>, vector<16x8xbf16>, vector<16x16xf32> -> vector<16x16xf32>
    %cst_59 = arith.constant 0.353553385 : f32
    %165 = vector.broadcast %cst_59 : f32 to vector<16x16xf32>
    %166 = arith.mulf %164, %165 : vector<16x16xf32>
    %167 = vector.extract_strided_slice %30 {offsets = [0, 0, 0], sizes = [1, 16, 16], strides = [1, 1, 1]} : vector<2x16x16xf32> to vector<1x16x16xf32>
    %168 = vector.shape_cast %167 : vector<1x16x16xf32> to vector<16x16xf32>
    %169 = arith.addf %166, %168 : vector<16x16xf32>
    %c2 = arith.constant 2 : index
    %c0_60 = arith.constant 0 : index
    %c0_61 = arith.constant 0 : index
    %170 = vector.load %arg9[%c2, %c0_60, %c0_61] : memref<4x16x16xf32, #tpu.memory_space<vmem>>, vector<1x16x16xf32>
    %171 = vector.shape_cast %170 : vector<1x16x16xf32> to vector<16x16xf32>
    %172 = arith.addf %169, %171 : vector<16x16xf32>
    %cst_62 = arith.constant dense<0xFF800000> : vector<16xf32>
    %173 = vector.multi_reduction <maximumf>, %172, %cst_62 [1] : vector<16x16xf32> to vector<16xf32>
    %174 = vector.shape_cast %173 : vector<16xf32> to vector<16x1xf32>
    %175 = vector.broadcast %174 : vector<16x1xf32> to vector<16x16xf32>
    %176 = arith.subf %172, %175 : vector<16x16xf32>
    %177 = math.exp %176 : vector<16x16xf32>
    %cst_63 = arith.constant dense<0.000000e+00> : vector<16xf32>
    %178 = vector.multi_reduction <add>, %177, %cst_63 [1] : vector<16x16xf32> to vector<16xf32>
    %179 = vector.shape_cast %178 : vector<16xf32> to vector<16x1xf32>
    %180 = tpu.reciprocal %179 {approx = true} : vector<16x1xf32> -> vector<16x1xf32>
    %181 = vector.broadcast %180 : vector<16x1xf32> to vector<16x16xf32>
    %182 = arith.mulf %177, %181 : vector<16x16xf32>
    %183 = arith.truncf %182 : vector<16x16xf32> to vector<16x16xbf16>
    %184 = arith.truncf %161 : vector<16x8xf32> to vector<16x8xbf16>
    %cst_64 = arith.constant dense<0.000000e+00> : vector<16x8xf32>
    %185 = tpu.matmul %183, %184, %cst_64 {dimension_numbers = #tpu.dot_dimension_numbers<[1], [0], [0], [1], [0, 0, 1, 1], [], []>} : vector<16x16xbf16>, vector<16x8xbf16>, vector<16x8xf32> -> vector<16x8xf32>
    %186 = arith.truncf %185 : vector<16x8xf32> to vector<16x8xbf16>
    %187 = vector.extract_strided_slice %31 {offsets = [0, 0], sizes = [8, 16], strides = [1, 1]} : vector<16x16xbf16> to vector<8x16xbf16>
    %cst_65 = arith.constant dense<0.000000e+00> : vector<16x16xf32>
    %188 = tpu.matmul %186, %187, %cst_65 {dimension_numbers = #tpu.dot_dimension_numbers<[1], [0], [0], [1], [0, 0, 1, 1], [], []>} : vector<16x8xbf16>, vector<8x16xbf16>, vector<16x16xf32> -> vector<16x16xf32>
    %189 = arith.addf %158, %188 : vector<16x16xf32>
    %190 = vector.extract_strided_slice %29 {offsets = [32, 8], sizes = [16, 8], strides = [1, 1]} : vector<64x48xf32> to vector<16x8xf32>
    %191 = vector.extract_strided_slice %29 {offsets = [32, 24], sizes = [16, 8], strides = [1, 1]} : vector<64x48xf32> to vector<16x8xf32>
    %192 = vector.extract_strided_slice %29 {offsets = [32, 40], sizes = [16, 8], strides = [1, 1]} : vector<64x48xf32> to vector<16x8xf32>
    %193 = arith.truncf %190 : vector<16x8xf32> to vector<16x8xbf16>
    %194 = arith.truncf %191 : vector<16x8xf32> to vector<16x8xbf16>
    %cst_66 = arith.constant dense<0.000000e+00> : vector<16x16xf32>
    %195 = tpu.matmul %193, %194, %cst_66 {dimension_numbers = #tpu.dot_dimension_numbers<[1], [1], [0], [0], [0, 0, 1, 0], [], []>} : vector<16x8xbf16>, vector<16x8xbf16>, vector<16x16xf32> -> vector<16x16xf32>
    %cst_67 = arith.constant 0.353553385 : f32
    %196 = vector.broadcast %cst_67 : f32 to vector<16x16xf32>
    %197 = arith.mulf %195, %196 : vector<16x16xf32>
    %198 = vector.extract_strided_slice %30 {offsets = [1, 0, 0], sizes = [1, 16, 16], strides = [1, 1, 1]} : vector<2x16x16xf32> to vector<1x16x16xf32>
    %199 = vector.shape_cast %198 : vector<1x16x16xf32> to vector<16x16xf32>
    %200 = arith.addf %197, %199 : vector<16x16xf32>
    %c2_68 = arith.constant 2 : index
    %c0_69 = arith.constant 0 : index
    %c0_70 = arith.constant 0 : index
    %201 = vector.load %arg9[%c2_68, %c0_69, %c0_70] : memref<4x16x16xf32, #tpu.memory_space<vmem>>, vector<1x16x16xf32>
    %202 = vector.shape_cast %201 : vector<1x16x16xf32> to vector<16x16xf32>
    %203 = arith.addf %200, %202 : vector<16x16xf32>
    %cst_71 = arith.constant dense<0xFF800000> : vector<16xf32>
    %204 = vector.multi_reduction <maximumf>, %203, %cst_71 [1] : vector<16x16xf32> to vector<16xf32>
    %205 = vector.shape_cast %204 : vector<16xf32> to vector<16x1xf32>
    %206 = vector.broadcast %205 : vector<16x1xf32> to vector<16x16xf32>
    %207 = arith.subf %203, %206 : vector<16x16xf32>
    %208 = math.exp %207 : vector<16x16xf32>
    %cst_72 = arith.constant dense<0.000000e+00> : vector<16xf32>
    %209 = vector.multi_reduction <add>, %208, %cst_72 [1] : vector<16x16xf32> to vector<16xf32>
    %210 = vector.shape_cast %209 : vector<16xf32> to vector<16x1xf32>
    %211 = tpu.reciprocal %210 {approx = true} : vector<16x1xf32> -> vector<16x1xf32>
    %212 = vector.broadcast %211 : vector<16x1xf32> to vector<16x16xf32>
    %213 = arith.mulf %208, %212 : vector<16x16xf32>
    %214 = arith.truncf %213 : vector<16x16xf32> to vector<16x16xbf16>
    %215 = arith.truncf %192 : vector<16x8xf32> to vector<16x8xbf16>
    %cst_73 = arith.constant dense<0.000000e+00> : vector<16x8xf32>
    %216 = tpu.matmul %214, %215, %cst_73 {dimension_numbers = #tpu.dot_dimension_numbers<[1], [0], [0], [1], [0, 0, 1, 1], [], []>} : vector<16x16xbf16>, vector<16x8xbf16>, vector<16x8xf32> -> vector<16x8xf32>
    %217 = arith.truncf %216 : vector<16x8xf32> to vector<16x8xbf16>
    %218 = vector.extract_strided_slice %31 {offsets = [8, 0], sizes = [8, 16], strides = [1, 1]} : vector<16x16xbf16> to vector<8x16xbf16>
    %cst_74 = arith.constant dense<0.000000e+00> : vector<16x16xf32>
    %219 = tpu.matmul %217, %218, %cst_74 {dimension_numbers = #tpu.dot_dimension_numbers<[1], [0], [0], [1], [0, 0, 1, 1], [], []>} : vector<16x8xbf16>, vector<8x16xbf16>, vector<16x16xf32> -> vector<16x16xf32>
    %220 = arith.addf %189, %219 : vector<16x16xf32>
    %cst_75 = arith.constant 0.000000e+00 : f32
    %221 = vector.broadcast %cst_75 : f32 to vector<16x16xf32>
    %222 = vector.extract_strided_slice %29 {offsets = [48, 0], sizes = [16, 8], strides = [1, 1]} : vector<64x48xf32> to vector<16x8xf32>
    %223 = vector.extract_strided_slice %29 {offsets = [48, 16], sizes = [16, 8], strides = [1, 1]} : vector<64x48xf32> to vector<16x8xf32>
    %224 = vector.extract_strided_slice %29 {offsets = [48, 32], sizes = [16, 8], strides = [1, 1]} : vector<64x48xf32> to vector<16x8xf32>
    %225 = arith.truncf %222 : vector<16x8xf32> to vector<16x8xbf16>
    %226 = arith.truncf %223 : vector<16x8xf32> to vector<16x8xbf16>
    %cst_76 = arith.constant dense<0.000000e+00> : vector<16x16xf32>
    %227 = tpu.matmul %225, %226, %cst_76 {dimension_numbers = #tpu.dot_dimension_numbers<[1], [1], [0], [0], [0, 0, 1, 0], [], []>} : vector<16x8xbf16>, vector<16x8xbf16>, vector<16x16xf32> -> vector<16x16xf32>
    %cst_77 = arith.constant 0.353553385 : f32
    %228 = vector.broadcast %cst_77 : f32 to vector<16x16xf32>
    %229 = arith.mulf %227, %228 : vector<16x16xf32>
    %230 = vector.extract_strided_slice %30 {offsets = [0, 0, 0], sizes = [1, 16, 16], strides = [1, 1, 1]} : vector<2x16x16xf32> to vector<1x16x16xf32>
    %231 = vector.shape_cast %230 : vector<1x16x16xf32> to vector<16x16xf32>
    %232 = arith.addf %229, %231 : vector<16x16xf32>
    %c3 = arith.constant 3 : index
    %c0_78 = arith.constant 0 : index
    %c0_79 = arith.constant 0 : index
    %233 = vector.load %arg9[%c3, %c0_78, %c0_79] : memref<4x16x16xf32, #tpu.memory_space<vmem>>, vector<1x16x16xf32>
    %234 = vector.shape_cast %233 : vector<1x16x16xf32> to vector<16x16xf32>
    %235 = arith.addf %232, %234 : vector<16x16xf32>
    %cst_80 = arith.constant dense<0xFF800000> : vector<16xf32>
    %236 = vector.multi_reduction <maximumf>, %235, %cst_80 [1] : vector<16x16xf32> to vector<16xf32>
    %237 = vector.shape_cast %236 : vector<16xf32> to vector<16x1xf32>
    %238 = vector.broadcast %237 : vector<16x1xf32> to vector<16x16xf32>
    %239 = arith.subf %235, %238 : vector<16x16xf32>
    %240 = math.exp %239 : vector<16x16xf32>
    %cst_81 = arith.constant dense<0.000000e+00> : vector<16xf32>
    %241 = vector.multi_reduction <add>, %240, %cst_81 [1] : vector<16x16xf32> to vector<16xf32>
    %242 = vector.shape_cast %241 : vector<16xf32> to vector<16x1xf32>
    %243 = tpu.reciprocal %242 {approx = true} : vector<16x1xf32> -> vector<16x1xf32>
    %244 = vector.broadcast %243 : vector<16x1xf32> to vector<16x16xf32>
    %245 = arith.mulf %240, %244 : vector<16x16xf32>
    %246 = arith.truncf %245 : vector<16x16xf32> to vector<16x16xbf16>
    %247 = arith.truncf %224 : vector<16x8xf32> to vector<16x8xbf16>
    %cst_82 = arith.constant dense<0.000000e+00> : vector<16x8xf32>
    %248 = tpu.matmul %246, %247, %cst_82 {dimension_numbers = #tpu.dot_dimension_numbers<[1], [0], [0], [1], [0, 0, 1, 1], [], []>} : vector<16x16xbf16>, vector<16x8xbf16>, vector<16x8xf32> -> vector<16x8xf32>
    %249 = arith.truncf %248 : vector<16x8xf32> to vector<16x8xbf16>
    %250 = vector.extract_strided_slice %31 {offsets = [0, 0], sizes = [8, 16], strides = [1, 1]} : vector<16x16xbf16> to vector<8x16xbf16>
    %cst_83 = arith.constant dense<0.000000e+00> : vector<16x16xf32>
    %251 = tpu.matmul %249, %250, %cst_83 {dimension_numbers = #tpu.dot_dimension_numbers<[1], [0], [0], [1], [0, 0, 1, 1], [], []>} : vector<16x8xbf16>, vector<8x16xbf16>, vector<16x16xf32> -> vector<16x16xf32>
    %252 = arith.addf %221, %251 : vector<16x16xf32>
    %253 = vector.extract_strided_slice %29 {offsets = [48, 8], sizes = [16, 8], strides = [1, 1]} : vector<64x48xf32> to vector<16x8xf32>
    %254 = vector.extract_strided_slice %29 {offsets = [48, 24], sizes = [16, 8], strides = [1, 1]} : vector<64x48xf32> to vector<16x8xf32>
    %255 = vector.extract_strided_slice %29 {offsets = [48, 40], sizes = [16, 8], strides = [1, 1]} : vector<64x48xf32> to vector<16x8xf32>
    %256 = arith.truncf %253 : vector<16x8xf32> to vector<16x8xbf16>
    %257 = arith.truncf %254 : vector<16x8xf32> to vector<16x8xbf16>
    %cst_84 = arith.constant dense<0.000000e+00> : vector<16x16xf32>
    %258 = tpu.matmul %256, %257, %cst_84 {dimension_numbers = #tpu.dot_dimension_numbers<[1], [1], [0], [0], [0, 0, 1, 0], [], []>} : vector<16x8xbf16>, vector<16x8xbf16>, vector<16x16xf32> -> vector<16x16xf32>
    %cst_85 = arith.constant 0.353553385 : f32
    %259 = vector.broadcast %cst_85 : f32 to vector<16x16xf32>
    %260 = arith.mulf %258, %259 : vector<16x16xf32>
    %261 = vector.extract_strided_slice %30 {offsets = [1, 0, 0], sizes = [1, 16, 16], strides = [1, 1, 1]} : vector<2x16x16xf32> to vector<1x16x16xf32>
    %262 = vector.shape_cast %261 : vector<1x16x16xf32> to vector<16x16xf32>
    %263 = arith.addf %260, %262 : vector<16x16xf32>
    %c3_86 = arith.constant 3 : index
    %c0_87 = arith.constant 0 : index
    %c0_88 = arith.constant 0 : index
    %264 = vector.load %arg9[%c3_86, %c0_87, %c0_88] : memref<4x16x16xf32, #tpu.memory_space<vmem>>, vector<1x16x16xf32>
    %265 = vector.shape_cast %264 : vector<1x16x16xf32> to vector<16x16xf32>
    %266 = arith.addf %263, %265 : vector<16x16xf32>
    %cst_89 = arith.constant dense<0xFF800000> : vector<16xf32>
    %267 = vector.multi_reduction <maximumf>, %266, %cst_89 [1] : vector<16x16xf32> to vector<16xf32>
    %268 = vector.shape_cast %267 : vector<16xf32> to vector<16x1xf32>
    %269 = vector.broadcast %268 : vector<16x1xf32> to vector<16x16xf32>
    %270 = arith.subf %266, %269 : vector<16x16xf32>
    %271 = math.exp %270 : vector<16x16xf32>
    %cst_90 = arith.constant dense<0.000000e+00> : vector<16xf32>
    %272 = vector.multi_reduction <add>, %271, %cst_90 [1] : vector<16x16xf32> to vector<16xf32>
    %273 = vector.shape_cast %272 : vector<16xf32> to vector<16x1xf32>
    %274 = tpu.reciprocal %273 {approx = true} : vector<16x1xf32> -> vector<16x1xf32>
    %275 = vector.broadcast %274 : vector<16x1xf32> to vector<16x16xf32>
    %276 = arith.mulf %271, %275 : vector<16x16xf32>
    %277 = arith.truncf %276 : vector<16x16xf32> to vector<16x16xbf16>
    %278 = arith.truncf %255 : vector<16x8xf32> to vector<16x8xbf16>
    %cst_91 = arith.constant dense<0.000000e+00> : vector<16x8xf32>
    %279 = tpu.matmul %277, %278, %cst_91 {dimension_numbers = #tpu.dot_dimension_numbers<[1], [0], [0], [1], [0, 0, 1, 1], [], []>} : vector<16x16xbf16>, vector<16x8xbf16>, vector<16x8xf32> -> vector<16x8xf32>
    %280 = arith.truncf %279 : vector<16x8xf32> to vector<16x8xbf16>
    %281 = vector.extract_strided_slice %31 {offsets = [8, 0], sizes = [8, 16], strides = [1, 1]} : vector<16x16xbf16> to vector<8x16xbf16>
    %cst_92 = arith.constant dense<0.000000e+00> : vector<16x16xf32>
    %282 = tpu.matmul %280, %281, %cst_92 {dimension_numbers = #tpu.dot_dimension_numbers<[1], [0], [0], [1], [0, 0, 1, 1], [], []>} : vector<16x8xbf16>, vector<8x16xbf16>, vector<16x16xf32> -> vector<16x16xf32>
    %283 = arith.addf %252, %282 : vector<16x16xf32>
    %284 = tpu.concatenate %94, %157, %220, %283 in 0 : vector<16x16xf32>, vector<16x16xf32>, vector<16x16xf32>, vector<16x16xf32> -> vector<64x16xf32>
    %285 = arith.addf %1, %284 : vector<64x16xf32>
    %c0_93 = arith.constant 0 : index
    %c0_94 = arith.constant 0 : index
    %286 = vector.load %arg7[%c0_93, %c0_94] : memref<1x16xf32, #tpu.memory_space<vmem>>, vector<1x16xf32>
    %287 = vector.broadcast %286 : vector<1x16xf32> to vector<64x16xf32>
    %288 = arith.addf %285, %287 : vector<64x16xf32>
    %c0_95 = arith.constant 0 : index
    %c0_96 = arith.constant 0 : index
    %289 = vector.load %arg10[%c0_95, %c0_96] : memref<1x16xf32, #tpu.memory_space<vmem>>, vector<1x16xf32>
    %c0_97 = arith.constant 0 : index
    %c0_98 = arith.constant 0 : index
    %290 = vector.load %arg11[%c0_97, %c0_98] : memref<1x16xf32, #tpu.memory_space<vmem>>, vector<1x16xf32>
    %cst_99 = arith.constant dense<0.000000e+00> : vector<64xf32>
    %291 = vector.multi_reduction <add>, %288, %cst_99 [1] : vector<64x16xf32> to vector<64xf32>
    %292 = vector.shape_cast %291 : vector<64xf32> to vector<64x1xf32>
    %cst_100 = arith.constant 1.600000e+01 : f32
    %293 = vector.broadcast %cst_100 : f32 to vector<64x1xf32>
    %294 = arith.divf %292, %293 : vector<64x1xf32>
    %295 = vector.broadcast %294 : vector<64x1xf32> to vector<64x16xf32>
    %296 = arith.subf %288, %295 : vector<64x16xf32>
    %297 = arith.mulf %296, %296 : vector<64x16xf32>
    %cst_101 = arith.constant dense<0.000000e+00> : vector<64xf32>
    %298 = vector.multi_reduction <add>, %297, %cst_101 [1] : vector<64x16xf32> to vector<64xf32>
    %299 = vector.shape_cast %298 : vector<64xf32> to vector<64x1xf32>
    %cst_102 = arith.constant 1.600000e+01 : f32
    %300 = vector.broadcast %cst_102 : f32 to vector<64x1xf32>
    %301 = arith.divf %299, %300 : vector<64x1xf32>
    %cst_103 = arith.constant 9.99999974E-6 : f32
    %302 = vector.broadcast %cst_103 : f32 to vector<64x1xf32>
    %303 = arith.addf %301, %302 : vector<64x1xf32>
    %304 = math.rsqrt %303 : vector<64x1xf32>
    %305 = vector.broadcast %304 : vector<64x1xf32> to vector<64x16xf32>
    %306 = arith.mulf %296, %305 : vector<64x16xf32>
    %307 = vector.broadcast %289 : vector<1x16xf32> to vector<64x16xf32>
    %308 = arith.mulf %306, %307 : vector<64x16xf32>
    %309 = vector.broadcast %290 : vector<1x16xf32> to vector<64x16xf32>
    %310 = arith.addf %308, %309 : vector<64x16xf32>
    %311 = arith.truncf %310 : vector<64x16xf32> to vector<64x16xbf16>
    %c0_104 = arith.constant 0 : index
    %c0_105 = arith.constant 0 : index
    %312 = vector.load %arg12[%c0_104, %c0_105] : memref<16x64xbf16, #tpu.memory_space<vmem>>, vector<16x64xbf16>
    %cst_106 = arith.constant dense<0.000000e+00> : vector<64x64xf32>
    %313 = tpu.matmul %311, %312, %cst_106 {dimension_numbers = #tpu.dot_dimension_numbers<[1], [0], [0], [1], [0, 0, 1, 1], [], []>} : vector<64x16xbf16>, vector<16x64xbf16>, vector<64x64xf32> -> vector<64x64xf32>
    %c0_107 = arith.constant 0 : index
    %c0_108 = arith.constant 0 : index
    %314 = vector.load %arg13[%c0_107, %c0_108] : memref<1x64xf32, #tpu.memory_space<vmem>>, vector<1x64xf32>
    %315 = vector.broadcast %314 : vector<1x64xf32> to vector<64x64xf32>
    %316 = arith.addf %313, %315 : vector<64x64xf32>
    %cst_109 = arith.constant 5.000000e-01 : f32
    %317 = vector.broadcast %cst_109 : f32 to vector<64x64xf32>
    %318 = arith.mulf %317, %316 : vector<64x64xf32>
    %cst_110 = arith.constant 0.707106769 : f32
    %319 = vector.broadcast %cst_110 : f32 to vector<64x64xf32>
    %320 = arith.mulf %316, %319 : vector<64x64xf32>
    %cst_111 = arith.constant -4.000000e+00 : f32
    %cst_112 = arith.constant 4.000000e+00 : f32
    %321 = vector.broadcast %cst_111 : f32 to vector<64x64xf32>
    %322 = arith.maximumf %321, %320 : vector<64x64xf32>
    %323 = vector.broadcast %cst_112 : f32 to vector<64x64xf32>
    %324 = arith.minimumf %323, %322 : vector<64x64xf32>
    %325 = arith.mulf %324, %324 : vector<64x64xf32>
    %cst_113 = arith.constant 2.29050653E-4 : f32
    %326 = vector.broadcast %cst_113 : f32 to vector<64x64xf32>
    %327 = arith.mulf %326, %325 : vector<64x64xf32>
    %cst_114 = arith.constant 0.00340829091 : f32
    %328 = vector.broadcast %cst_114 : f32 to vector<64x64xf32>
    %329 = arith.addf %327, %328 : vector<64x64xf32>
    %330 = arith.mulf %329, %325 : vector<64x64xf32>
    %cst_115 = arith.constant 0.0509556942 : f32
    %331 = vector.broadcast %cst_115 : f32 to vector<64x64xf32>
    %332 = arith.addf %330, %331 : vector<64x64xf32>
    %333 = arith.mulf %332, %325 : vector<64x64xf32>
    %cst_116 = arith.constant 0.185208321 : f32
    %334 = vector.broadcast %cst_116 : f32 to vector<64x64xf32>
    %335 = arith.addf %333, %334 : vector<64x64xf32>
    %336 = arith.mulf %335, %325 : vector<64x64xf32>
    %cst_117 = arith.constant 1.12837911 : f32
    %337 = vector.broadcast %cst_117 : f32 to vector<64x64xf32>
    %338 = arith.addf %336, %337 : vector<64x64xf32>
    %cst_118 = arith.constant -1.17916031E-7 : f32
    %339 = vector.broadcast %cst_118 : f32 to vector<64x64xf32>
    %340 = arith.mulf %339, %325 : vector<64x64xf32>
    %cst_119 = arith.constant 2.35479656E-5 : f32
    %341 = vector.broadcast %cst_119 : f32 to vector<64x64xf32>
    %342 = arith.addf %340, %341 : vector<64x64xf32>
    %343 = arith.mulf %342, %325 : vector<64x64xf32>
    %cst_120 = arith.constant 0.00101796258 : f32
    %344 = vector.broadcast %cst_120 : f32 to vector<64x64xf32>
    %345 = arith.addf %343, %344 : vector<64x64xf32>
    %346 = arith.mulf %345, %325 : vector<64x64xf32>
    %cst_121 = arith.constant 0.0140704699 : f32
    %347 = vector.broadcast %cst_121 : f32 to vector<64x64xf32>
    %348 = arith.addf %346, %347 : vector<64x64xf32>
    %349 = arith.mulf %348, %325 : vector<64x64xf32>
    %cst_122 = arith.constant 0.110985048 : f32
    %350 = vector.broadcast %cst_122 : f32 to vector<64x64xf32>
    %351 = arith.addf %349, %350 : vector<64x64xf32>
    %352 = arith.mulf %351, %325 : vector<64x64xf32>
    %cst_123 = arith.constant 0.497469246 : f32
    %353 = vector.broadcast %cst_123 : f32 to vector<64x64xf32>
    %354 = arith.addf %352, %353 : vector<64x64xf32>
    %355 = arith.mulf %354, %325 : vector<64x64xf32>
    %cst_124 = arith.constant 1.000000e+00 : f32
    %356 = vector.broadcast %cst_124 : f32 to vector<64x64xf32>
    %357 = arith.addf %355, %356 : vector<64x64xf32>
    %358 = arith.mulf %324, %338 : vector<64x64xf32>
    %359 = tpu.reciprocal %357 {approx = true} : vector<64x64xf32> -> vector<64x64xf32>
    %360 = arith.mulf %358, %359 : vector<64x64xf32>
    %cst_125 = arith.constant 1.000000e+00 : f32
    %361 = vector.broadcast %cst_125 : f32 to vector<64x64xf32>
    %362 = arith.addf %361, %360 : vector<64x64xf32>
    %363 = arith.mulf %318, %362 : vector<64x64xf32>
    %364 = arith.truncf %363 : vector<64x64xf32> to vector<64x64xbf16>
    %c0_126 = arith.constant 0 : index
    %c0_127 = arith.constant 0 : index
    %365 = vector.load %arg14[%c0_126, %c0_127] : memref<64x16xbf16, #tpu.memory_space<vmem>>, vector<64x16xbf16>
    %cst_128 = arith.constant dense<0.000000e+00> : vector<64x16xf32>
    %366 = tpu.matmul %364, %365, %cst_128 {dimension_numbers = #tpu.dot_dimension_numbers<[1], [0], [0], [1], [0, 0, 1, 1], [], []>} : vector<64x64xbf16>, vector<64x16xbf16>, vector<64x16xf32> -> vector<64x16xf32>
    %c0_129 = arith.constant 0 : index
    %c0_130 = arith.constant 0 : index
    %367 = vector.load %arg15[%c0_129, %c0_130] : memref<1x16xf32, #tpu.memory_space<vmem>>, vector<1x16xf32>
    %368 = vector.broadcast %367 : vector<1x16xf32> to vector<64x16xf32>
    %369 = arith.addf %366, %368 : vector<64x16xf32>
    %370 = arith.addf %288, %369 : vector<64x16xf32>
    %c0_131 = arith.constant 0 : index
    %c0_132 = arith.constant 0 : index
    %c0_133 = arith.constant 0 : index
    %371 = vector.load %arg16[%c0_131, %c0_132, %c0_133] : memref<1x64x16xf32, #tpu.memory_space<vmem>>, vector<1x64x16xf32>
    %372 = vector.shape_cast %371 : vector<1x64x16xf32> to vector<64x16xf32>
    %373 = vector.shape_cast %370 : vector<64x16xf32> to vector<1x64x16xf32>
    tpu.vector_store %arg16[%c0_131, %c0_132, %c0_133], %373 {strides = array<i32>} : memref<1x64x16xf32, #tpu.memory_space<vmem>>, vector<1x64x16xf32>,
    return
  }
  func.func @transform_0(%arg0: i32) -> (i32, i32, i32) {
    %c0_i32 = arith.constant 0 : i32
    %c0_i32_0 = arith.constant 0 : i32
    %c0_i32_1 = arith.constant 0 : i32
    return %arg0, %c0_i32, %c0_i32_0 : i32, i32, i32
  }
  func.func @transform_1(%arg0: i32) -> (i32, i32) {
    %c0_i32 = arith.constant 0 : i32
    %c0_i32_0 = arith.constant 0 : i32
    %c0_i32_1 = arith.constant 0 : i32
    return %c0_i32, %c0_i32_0 : i32, i32
  }
  func.func @transform_2(%arg0: i32) -> (i32, i32) {
    %c0_i32 = arith.constant 0 : i32
    %c0_i32_0 = arith.constant 0 : i32
    %c0_i32_1 = arith.constant 0 : i32
    return %c0_i32, %c0_i32_0 : i32, i32
  }
  func.func @transform_3(%arg0: i32) -> (i32, i32) {
    %c0_i32 = arith.constant 0 : i32
    %c0_i32_0 = arith.constant 0 : i32
    %c0_i32_1 = arith.constant 0 : i32
    return %c0_i32, %c0_i32_0 : i32, i32
  }
  func.func @transform_4(%arg0: i32) -> (i32, i32) {
    %c0_i32 = arith.constant 0 : i32
    %c0_i32_0 = arith.constant 0 : i32
    %c0_i32_1 = arith.constant 0 : i32
    return %c0_i32, %c0_i32_0 : i32, i32
  }
  func.func @transform_5(%arg0: i32) -> (i32, i32) {
    %c0_i32 = arith.constant 0 : i32
    %c0_i32_0 = arith.constant 0 : i32
    %c0_i32_1 = arith.constant 0 : i32
    return %c0_i32, %c0_i32_0 : i32, i32
  }
  func.func @transform_6(%arg0: i32) -> (i32, i32) {
    %c0_i32 = arith.constant 0 : i32
    %c0_i32_0 = arith.constant 0 : i32
    %c0_i32_1 = arith.constant 0 : i32
    return %c0_i32, %c0_i32_0 : i32, i32
  }
  func.func @transform_7(%arg0: i32) -> (i32, i32, i32) {
    %c0_i32 = arith.constant 0 : i32
    %c0_i32_0 = arith.constant 0 : i32
    %c0_i32_1 = arith.constant 0 : i32
    %c0_i32_2 = arith.constant 0 : i32
    return %c0_i32, %c0_i32_0, %c0_i32_1 : i32, i32, i32
  }
  func.func @transform_8(%arg0: i32) -> (i32, i32, i32) {
    %c0_i32 = arith.constant 0 : i32
    %c0_i32_0 = arith.constant 0 : i32
    %c0_i32_1 = arith.constant 0 : i32
    %c0_i32_2 = arith.constant 0 : i32
    return %c0_i32, %c0_i32_0, %c0_i32_1 : i32, i32, i32
  }
  func.func @transform_9(%arg0: i32) -> (i32, i32) {
    %c0_i32 = arith.constant 0 : i32
    %c0_i32_0 = arith.constant 0 : i32
    %c0_i32_1 = arith.constant 0 : i32
    return %c0_i32, %c0_i32_0 : i32, i32
  }
  func.func @transform_10(%arg0: i32) -> (i32, i32) {
    %c0_i32 = arith.constant 0 : i32
    %c0_i32_0 = arith.constant 0 : i32
    %c0_i32_1 = arith.constant 0 : i32
    return %c0_i32, %c0_i32_0 : i32, i32
  }
  func.func @transform_11(%arg0: i32) -> (i32, i32) {
    %c0_i32 = arith.constant 0 : i32
    %c0_i32_0 = arith.constant 0 : i32
    %c0_i32_1 = arith.constant 0 : i32
    return %c0_i32, %c0_i32_0 : i32, i32
  }
  func.func @transform_12(%arg0: i32) -> (i32, i32) {
    %c0_i32 = arith.constant 0 : i32
    %c0_i32_0 = arith.constant 0 : i32
    %c0_i32_1 = arith.constant 0 : i32
    return %c0_i32, %c0_i32_0 : i32, i32
  }
  func.func @transform_13(%arg0: i32) -> (i32, i32) {
    %c0_i32 = arith.constant 0 : i32
    %c0_i32_0 = arith.constant 0 : i32
    %c0_i32_1 = arith.constant 0 : i32
    return %c0_i32, %c0_i32_0 : i32, i32
  }
  func.func @transform_14(%arg0: i32) -> (i32, i32) {
    %c0_i32 = arith.constant 0 : i32
    %c0_i32_0 = arith.constant 0 : i32
    %c0_i32_1 = arith.constant 0 : i32
    return %c0_i32, %c0_i32_0 : i32, i32
  }
  func.func @transform_15(%arg0: i32) -> (i32, i32, i32) {
    %c0_i32 = arith.constant 0 : i32
    %c0_i32_0 = arith.constant 0 : i32
    %c0_i32_1 = arith.constant 0 : i32
    return %arg0, %c0_i32, %c0_i32_0 : i32, i32, i32
  }
}

module attributes {stable_mosaic.version = 11 : i64} {
  func.func @_merge_kernel(%arg0: i32, %arg1: memref<32x64xf32, #tpu.memory_space<vmem>>, %arg2: memref<1x64xf32, #tpu.memory_space<vmem>>, %arg3: memref<1x64xf32, #tpu.memory_space<vmem>>, %arg4: memref<64x32xbf16, #tpu.memory_space<vmem>>, %arg5: memref<32x32xf32, #tpu.memory_space<vmem>>) attributes {dimension_semantics = [#tpu.dimension_semantics<parallel>], iteration_bounds = array<i64: 1>, scalar_prefetch = 0 : i64, scratch_operands = 0 : i64, tpu.core_type = #tpu.core_type<tc>, window_params = [{transform_indices = @transform_0, window_bounds = array<i64: 32, 64>}, {pipeline_mode = #tpu.pipeline_mode<synchronous>, transform_indices = @transform_1, window_bounds = array<i64: 1, 64>}, {pipeline_mode = #tpu.pipeline_mode<synchronous>, transform_indices = @transform_2, window_bounds = array<i64: 1, 64>}, {pipeline_mode = #tpu.pipeline_mode<synchronous>, transform_indices = @transform_3, window_bounds = array<i64: 64, 32>}, {transform_indices = @transform_4, window_bounds = array<i64: 32, 32>}]} {
    %c0 = arith.constant 0 : index
    %c0_0 = arith.constant 0 : index
    %0 = vector.load %arg1[%c0, %c0_0] : memref<32x64xf32, #tpu.memory_space<vmem>>, vector<32x64xf32>
    %c0_1 = arith.constant 0 : index
    %c0_2 = arith.constant 0 : index
    %1 = vector.load %arg2[%c0_1, %c0_2] : memref<1x64xf32, #tpu.memory_space<vmem>>, vector<1x64xf32>
    %c0_3 = arith.constant 0 : index
    %c0_4 = arith.constant 0 : index
    %2 = vector.load %arg3[%c0_3, %c0_4] : memref<1x64xf32, #tpu.memory_space<vmem>>, vector<1x64xf32>
    %cst = arith.constant dense<0.000000e+00> : vector<32xf32>
    %3 = vector.multi_reduction <add>, %0, %cst [1] : vector<32x64xf32> to vector<32xf32>
    %4 = vector.shape_cast %3 : vector<32xf32> to vector<32x1xf32>
    %cst_5 = arith.constant 6.400000e+01 : f32
    %5 = vector.broadcast %cst_5 : f32 to vector<32x1xf32>
    %6 = arith.divf %4, %5 : vector<32x1xf32>
    %7 = vector.broadcast %6 : vector<32x1xf32> to vector<32x64xf32>
    %8 = arith.subf %0, %7 : vector<32x64xf32>
    %9 = arith.mulf %8, %8 : vector<32x64xf32>
    %cst_6 = arith.constant dense<0.000000e+00> : vector<32xf32>
    %10 = vector.multi_reduction <add>, %9, %cst_6 [1] : vector<32x64xf32> to vector<32xf32>
    %11 = vector.shape_cast %10 : vector<32xf32> to vector<32x1xf32>
    %cst_7 = arith.constant 6.400000e+01 : f32
    %12 = vector.broadcast %cst_7 : f32 to vector<32x1xf32>
    %13 = arith.divf %11, %12 : vector<32x1xf32>
    %cst_8 = arith.constant 9.99999974E-6 : f32
    %14 = vector.broadcast %cst_8 : f32 to vector<32x1xf32>
    %15 = arith.addf %13, %14 : vector<32x1xf32>
    %16 = math.rsqrt %15 : vector<32x1xf32>
    %17 = vector.broadcast %16 : vector<32x1xf32> to vector<32x64xf32>
    %18 = arith.mulf %8, %17 : vector<32x64xf32>
    %19 = vector.broadcast %1 : vector<1x64xf32> to vector<32x64xf32>
    %20 = arith.mulf %18, %19 : vector<32x64xf32>
    %21 = vector.broadcast %2 : vector<1x64xf32> to vector<32x64xf32>
    %22 = arith.addf %20, %21 : vector<32x64xf32>
    %23 = arith.truncf %22 : vector<32x64xf32> to vector<32x64xbf16>
    %c0_9 = arith.constant 0 : index
    %c0_10 = arith.constant 0 : index
    %24 = vector.load %arg4[%c0_9, %c0_10] : memref<64x32xbf16, #tpu.memory_space<vmem>>, vector<64x32xbf16>
    %cst_11 = arith.constant dense<0.000000e+00> : vector<32x32xf32>
    %25 = tpu.matmul %23, %24, %cst_11 {dimension_numbers = #tpu.dot_dimension_numbers<[1], [0], [0], [1], [0, 0, 1, 1], [], []>} : vector<32x64xbf16>, vector<64x32xbf16>, vector<32x32xf32> -> vector<32x32xf32>
    %c0_12 = arith.constant 0 : index
    %c0_13 = arith.constant 0 : index
    %26 = vector.load %arg5[%c0_12, %c0_13] : memref<32x32xf32, #tpu.memory_space<vmem>>, vector<32x32xf32>
    tpu.vector_store %arg5[%c0_12, %c0_13], %25 {strides = array<i32>} : memref<32x32xf32, #tpu.memory_space<vmem>>, vector<32x32xf32>,
    return
  }
  func.func @transform_0(%arg0: i32) -> (i32, i32) {
    %c0_i32 = arith.constant 0 : i32
    %c0_i32_0 = arith.constant 0 : i32
    return %arg0, %c0_i32 : i32, i32
  }
  func.func @transform_1(%arg0: i32) -> (i32, i32) {
    %c0_i32 = arith.constant 0 : i32
    %c0_i32_0 = arith.constant 0 : i32
    %c0_i32_1 = arith.constant 0 : i32
    return %c0_i32, %c0_i32_0 : i32, i32
  }
  func.func @transform_2(%arg0: i32) -> (i32, i32) {
    %c0_i32 = arith.constant 0 : i32
    %c0_i32_0 = arith.constant 0 : i32
    %c0_i32_1 = arith.constant 0 : i32
    return %c0_i32, %c0_i32_0 : i32, i32
  }
  func.func @transform_3(%arg0: i32) -> (i32, i32) {
    %c0_i32 = arith.constant 0 : i32
    %c0_i32_0 = arith.constant 0 : i32
    %c0_i32_1 = arith.constant 0 : i32
    return %c0_i32, %c0_i32_0 : i32, i32
  }
  func.func @transform_4(%arg0: i32) -> (i32, i32) {
    %c0_i32 = arith.constant 0 : i32
    %c0_i32_0 = arith.constant 0 : i32
    return %arg0, %c0_i32 : i32, i32
  }
}

module attributes {stable_mosaic.version = 11 : i64} {
  func.func @_swin_block_kernel(%arg0: i32, %arg1: memref<1x16x32xf32, #tpu.memory_space<vmem>>, %arg2: memref<1x32xf32, #tpu.memory_space<vmem>>, %arg3: memref<1x32xf32, #tpu.memory_space<vmem>>, %arg4: memref<32x96xbf16, #tpu.memory_space<vmem>>, %arg5: memref<1x96xf32, #tpu.memory_space<vmem>>, %arg6: memref<32x32xbf16, #tpu.memory_space<vmem>>, %arg7: memref<1x32xf32, #tpu.memory_space<vmem>>, %arg8: memref<4x16x16xf32, #tpu.memory_space<vmem>>, %arg9: memref<1x16x16xf32, #tpu.memory_space<vmem>>, %arg10: memref<1x32xf32, #tpu.memory_space<vmem>>, %arg11: memref<1x32xf32, #tpu.memory_space<vmem>>, %arg12: memref<32x128xbf16, #tpu.memory_space<vmem>>, %arg13: memref<1x128xf32, #tpu.memory_space<vmem>>, %arg14: memref<128x32xbf16, #tpu.memory_space<vmem>>, %arg15: memref<1x32xf32, #tpu.memory_space<vmem>>, %arg16: memref<1x16x32xf32, #tpu.memory_space<vmem>>) attributes {dimension_semantics = [#tpu.dimension_semantics<parallel>], iteration_bounds = array<i64: 2>, scalar_prefetch = 0 : i64, scratch_operands = 0 : i64, tpu.core_type = #tpu.core_type<tc>, window_params = [{transform_indices = @transform_0, window_bounds = array<i64: 1, 16, 32>}, {pipeline_mode = #tpu.pipeline_mode<synchronous>, transform_indices = @transform_1, window_bounds = array<i64: 1, 32>}, {pipeline_mode = #tpu.pipeline_mode<synchronous>, transform_indices = @transform_2, window_bounds = array<i64: 1, 32>}, {pipeline_mode = #tpu.pipeline_mode<synchronous>, transform_indices = @transform_3, window_bounds = array<i64: 32, 96>}, {pipeline_mode = #tpu.pipeline_mode<synchronous>, transform_indices = @transform_4, window_bounds = array<i64: 1, 96>}, {pipeline_mode = #tpu.pipeline_mode<synchronous>, transform_indices = @transform_5, window_bounds = array<i64: 32, 32>}, {pipeline_mode = #tpu.pipeline_mode<synchronous>, transform_indices = @transform_6, window_bounds = array<i64: 1, 32>}, {pipeline_mode = #tpu.pipeline_mode<synchronous>, transform_indices = @transform_7, window_bounds = array<i64: 4, 16, 16>}, {pipeline_mode = #tpu.pipeline_mode<synchronous>, transform_indices = @transform_8, window_bounds = array<i64: 1, 16, 16>}, {pipeline_mode = #tpu.pipeline_mode<synchronous>, transform_indices = @transform_9, window_bounds = array<i64: 1, 32>}, {pipeline_mode = #tpu.pipeline_mode<synchronous>, transform_indices = @transform_10, window_bounds = array<i64: 1, 32>}, {pipeline_mode = #tpu.pipeline_mode<synchronous>, transform_indices = @transform_11, window_bounds = array<i64: 32, 128>}, {pipeline_mode = #tpu.pipeline_mode<synchronous>, transform_indices = @transform_12, window_bounds = array<i64: 1, 128>}, {pipeline_mode = #tpu.pipeline_mode<synchronous>, transform_indices = @transform_13, window_bounds = array<i64: 128, 32>}, {pipeline_mode = #tpu.pipeline_mode<synchronous>, transform_indices = @transform_14, window_bounds = array<i64: 1, 32>}, {transform_indices = @transform_15, window_bounds = array<i64: 1, 16, 32>}]} {
    %c0 = arith.constant 0 : index
    %c0_0 = arith.constant 0 : index
    %c0_1 = arith.constant 0 : index
    %0 = vector.load %arg1[%c0, %c0_0, %c0_1] : memref<1x16x32xf32, #tpu.memory_space<vmem>>, vector<1x16x32xf32>
    %1 = vector.shape_cast %0 : vector<1x16x32xf32> to vector<16x32xf32>
    %c0_2 = arith.constant 0 : index
    %c0_3 = arith.constant 0 : index
    %2 = vector.load %arg2[%c0_2, %c0_3] : memref<1x32xf32, #tpu.memory_space<vmem>>, vector<1x32xf32>
    %c0_4 = arith.constant 0 : index
    %c0_5 = arith.constant 0 : index
    %3 = vector.load %arg3[%c0_4, %c0_5] : memref<1x32xf32, #tpu.memory_space<vmem>>, vector<1x32xf32>
    %cst = arith.constant dense<0.000000e+00> : vector<16xf32>
    %4 = vector.multi_reduction <add>, %1, %cst [1] : vector<16x32xf32> to vector<16xf32>
    %5 = vector.shape_cast %4 : vector<16xf32> to vector<16x1xf32>
    %cst_6 = arith.constant 3.200000e+01 : f32
    %6 = vector.broadcast %cst_6 : f32 to vector<16x1xf32>
    %7 = arith.divf %5, %6 : vector<16x1xf32>
    %8 = vector.broadcast %7 : vector<16x1xf32> to vector<16x32xf32>
    %9 = arith.subf %1, %8 : vector<16x32xf32>
    %10 = arith.mulf %9, %9 : vector<16x32xf32>
    %cst_7 = arith.constant dense<0.000000e+00> : vector<16xf32>
    %11 = vector.multi_reduction <add>, %10, %cst_7 [1] : vector<16x32xf32> to vector<16xf32>
    %12 = vector.shape_cast %11 : vector<16xf32> to vector<16x1xf32>
    %cst_8 = arith.constant 3.200000e+01 : f32
    %13 = vector.broadcast %cst_8 : f32 to vector<16x1xf32>
    %14 = arith.divf %12, %13 : vector<16x1xf32>
    %cst_9 = arith.constant 9.99999974E-6 : f32
    %15 = vector.broadcast %cst_9 : f32 to vector<16x1xf32>
    %16 = arith.addf %14, %15 : vector<16x1xf32>
    %17 = math.rsqrt %16 : vector<16x1xf32>
    %18 = vector.broadcast %17 : vector<16x1xf32> to vector<16x32xf32>
    %19 = arith.mulf %9, %18 : vector<16x32xf32>
    %20 = vector.broadcast %2 : vector<1x32xf32> to vector<16x32xf32>
    %21 = arith.mulf %19, %20 : vector<16x32xf32>
    %22 = vector.broadcast %3 : vector<1x32xf32> to vector<16x32xf32>
    %23 = arith.addf %21, %22 : vector<16x32xf32>
    %24 = arith.truncf %23 : vector<16x32xf32> to vector<16x32xbf16>
    %c0_10 = arith.constant 0 : index
    %c0_11 = arith.constant 0 : index
    %25 = vector.load %arg4[%c0_10, %c0_11] : memref<32x96xbf16, #tpu.memory_space<vmem>>, vector<32x96xbf16>
    %cst_12 = arith.constant dense<0.000000e+00> : vector<16x96xf32>
    %26 = tpu.matmul %24, %25, %cst_12 {dimension_numbers = #tpu.dot_dimension_numbers<[1], [0], [0], [1], [0, 0, 1, 1], [], []>} : vector<16x32xbf16>, vector<32x96xbf16>, vector<16x96xf32> -> vector<16x96xf32>
    %c0_13 = arith.constant 0 : index
    %c0_14 = arith.constant 0 : index
    %27 = vector.load %arg5[%c0_13, %c0_14] : memref<1x96xf32, #tpu.memory_space<vmem>>, vector<1x96xf32>
    %28 = vector.broadcast %27 : vector<1x96xf32> to vector<16x96xf32>
    %29 = arith.addf %26, %28 : vector<16x96xf32>
    %c0_15 = arith.constant 0 : index
    %c0_16 = arith.constant 0 : index
    %c0_17 = arith.constant 0 : index
    %30 = vector.load %arg8[%c0_15, %c0_16, %c0_17] : memref<4x16x16xf32, #tpu.memory_space<vmem>>, vector<4x16x16xf32>
    %c0_18 = arith.constant 0 : index
    %c0_19 = arith.constant 0 : index
    %31 = vector.load %arg6[%c0_18, %c0_19] : memref<32x32xbf16, #tpu.memory_space<vmem>>, vector<32x32xbf16>
    %cst_20 = arith.constant 0.000000e+00 : f32
    %32 = vector.broadcast %cst_20 : f32 to vector<16x32xf32>
    %33 = vector.extract_strided_slice %29 {offsets = [0, 0], sizes = [16, 8], strides = [1, 1]} : vector<16x96xf32> to vector<16x8xf32>
    %34 = vector.extract_strided_slice %29 {offsets = [0, 32], sizes = [16, 8], strides = [1, 1]} : vector<16x96xf32> to vector<16x8xf32>
    %35 = vector.extract_strided_slice %29 {offsets = [0, 64], sizes = [16, 8], strides = [1, 1]} : vector<16x96xf32> to vector<16x8xf32>
    %36 = arith.truncf %33 : vector<16x8xf32> to vector<16x8xbf16>
    %37 = arith.truncf %34 : vector<16x8xf32> to vector<16x8xbf16>
    %cst_21 = arith.constant dense<0.000000e+00> : vector<16x16xf32>
    %38 = tpu.matmul %36, %37, %cst_21 {dimension_numbers = #tpu.dot_dimension_numbers<[1], [1], [0], [0], [0, 0, 1, 0], [], []>} : vector<16x8xbf16>, vector<16x8xbf16>, vector<16x16xf32> -> vector<16x16xf32>
    %cst_22 = arith.constant 0.353553385 : f32
    %39 = vector.broadcast %cst_22 : f32 to vector<16x16xf32>
    %40 = arith.mulf %38, %39 : vector<16x16xf32>
    %41 = vector.extract_strided_slice %30 {offsets = [0, 0, 0], sizes = [1, 16, 16], strides = [1, 1, 1]} : vector<4x16x16xf32> to vector<1x16x16xf32>
    %42 = vector.shape_cast %41 : vector<1x16x16xf32> to vector<16x16xf32>
    %43 = arith.addf %40, %42 : vector<16x16xf32>
    %cst_23 = arith.constant dense<0xFF800000> : vector<16xf32>
    %44 = vector.multi_reduction <maximumf>, %43, %cst_23 [1] : vector<16x16xf32> to vector<16xf32>
    %45 = vector.shape_cast %44 : vector<16xf32> to vector<16x1xf32>
    %46 = vector.broadcast %45 : vector<16x1xf32> to vector<16x16xf32>
    %47 = arith.subf %43, %46 : vector<16x16xf32>
    %48 = math.exp %47 : vector<16x16xf32>
    %cst_24 = arith.constant dense<0.000000e+00> : vector<16xf32>
    %49 = vector.multi_reduction <add>, %48, %cst_24 [1] : vector<16x16xf32> to vector<16xf32>
    %50 = vector.shape_cast %49 : vector<16xf32> to vector<16x1xf32>
    %51 = tpu.reciprocal %50 {approx = true} : vector<16x1xf32> -> vector<16x1xf32>
    %52 = vector.broadcast %51 : vector<16x1xf32> to vector<16x16xf32>
    %53 = arith.mulf %48, %52 : vector<16x16xf32>
    %54 = arith.truncf %53 : vector<16x16xf32> to vector<16x16xbf16>
    %55 = arith.truncf %35 : vector<16x8xf32> to vector<16x8xbf16>
    %cst_25 = arith.constant dense<0.000000e+00> : vector<16x8xf32>
    %56 = tpu.matmul %54, %55, %cst_25 {dimension_numbers = #tpu.dot_dimension_numbers<[1], [0], [0], [1], [0, 0, 1, 1], [], []>} : vector<16x16xbf16>, vector<16x8xbf16>, vector<16x8xf32> -> vector<16x8xf32>
    %57 = arith.truncf %56 : vector<16x8xf32> to vector<16x8xbf16>
    %58 = vector.extract_strided_slice %31 {offsets = [0, 0], sizes = [8, 32], strides = [1, 1]} : vector<32x32xbf16> to vector<8x32xbf16>
    %cst_26 = arith.constant dense<0.000000e+00> : vector<16x32xf32>
    %59 = tpu.matmul %57, %58, %cst_26 {dimension_numbers = #tpu.dot_dimension_numbers<[1], [0], [0], [1], [0, 0, 1, 1], [], []>} : vector<16x8xbf16>, vector<8x32xbf16>, vector<16x32xf32> -> vector<16x32xf32>
    %60 = arith.addf %32, %59 : vector<16x32xf32>
    %61 = vector.extract_strided_slice %29 {offsets = [0, 8], sizes = [16, 8], strides = [1, 1]} : vector<16x96xf32> to vector<16x8xf32>
    %62 = vector.extract_strided_slice %29 {offsets = [0, 40], sizes = [16, 8], strides = [1, 1]} : vector<16x96xf32> to vector<16x8xf32>
    %63 = vector.extract_strided_slice %29 {offsets = [0, 72], sizes = [16, 8], strides = [1, 1]} : vector<16x96xf32> to vector<16x8xf32>
    %64 = arith.truncf %61 : vector<16x8xf32> to vector<16x8xbf16>
    %65 = arith.truncf %62 : vector<16x8xf32> to vector<16x8xbf16>
    %cst_27 = arith.constant dense<0.000000e+00> : vector<16x16xf32>
    %66 = tpu.matmul %64, %65, %cst_27 {dimension_numbers = #tpu.dot_dimension_numbers<[1], [1], [0], [0], [0, 0, 1, 0], [], []>} : vector<16x8xbf16>, vector<16x8xbf16>, vector<16x16xf32> -> vector<16x16xf32>
    %cst_28 = arith.constant 0.353553385 : f32
    %67 = vector.broadcast %cst_28 : f32 to vector<16x16xf32>
    %68 = arith.mulf %66, %67 : vector<16x16xf32>
    %69 = vector.extract_strided_slice %30 {offsets = [1, 0, 0], sizes = [1, 16, 16], strides = [1, 1, 1]} : vector<4x16x16xf32> to vector<1x16x16xf32>
    %70 = vector.shape_cast %69 : vector<1x16x16xf32> to vector<16x16xf32>
    %71 = arith.addf %68, %70 : vector<16x16xf32>
    %cst_29 = arith.constant dense<0xFF800000> : vector<16xf32>
    %72 = vector.multi_reduction <maximumf>, %71, %cst_29 [1] : vector<16x16xf32> to vector<16xf32>
    %73 = vector.shape_cast %72 : vector<16xf32> to vector<16x1xf32>
    %74 = vector.broadcast %73 : vector<16x1xf32> to vector<16x16xf32>
    %75 = arith.subf %71, %74 : vector<16x16xf32>
    %76 = math.exp %75 : vector<16x16xf32>
    %cst_30 = arith.constant dense<0.000000e+00> : vector<16xf32>
    %77 = vector.multi_reduction <add>, %76, %cst_30 [1] : vector<16x16xf32> to vector<16xf32>
    %78 = vector.shape_cast %77 : vector<16xf32> to vector<16x1xf32>
    %79 = tpu.reciprocal %78 {approx = true} : vector<16x1xf32> -> vector<16x1xf32>
    %80 = vector.broadcast %79 : vector<16x1xf32> to vector<16x16xf32>
    %81 = arith.mulf %76, %80 : vector<16x16xf32>
    %82 = arith.truncf %81 : vector<16x16xf32> to vector<16x16xbf16>
    %83 = arith.truncf %63 : vector<16x8xf32> to vector<16x8xbf16>
    %cst_31 = arith.constant dense<0.000000e+00> : vector<16x8xf32>
    %84 = tpu.matmul %82, %83, %cst_31 {dimension_numbers = #tpu.dot_dimension_numbers<[1], [0], [0], [1], [0, 0, 1, 1], [], []>} : vector<16x16xbf16>, vector<16x8xbf16>, vector<16x8xf32> -> vector<16x8xf32>
    %85 = arith.truncf %84 : vector<16x8xf32> to vector<16x8xbf16>
    %86 = vector.extract_strided_slice %31 {offsets = [8, 0], sizes = [8, 32], strides = [1, 1]} : vector<32x32xbf16> to vector<8x32xbf16>
    %cst_32 = arith.constant dense<0.000000e+00> : vector<16x32xf32>
    %87 = tpu.matmul %85, %86, %cst_32 {dimension_numbers = #tpu.dot_dimension_numbers<[1], [0], [0], [1], [0, 0, 1, 1], [], []>} : vector<16x8xbf16>, vector<8x32xbf16>, vector<16x32xf32> -> vector<16x32xf32>
    %88 = arith.addf %60, %87 : vector<16x32xf32>
    %89 = vector.extract_strided_slice %29 {offsets = [0, 16], sizes = [16, 8], strides = [1, 1]} : vector<16x96xf32> to vector<16x8xf32>
    %90 = vector.extract_strided_slice %29 {offsets = [0, 48], sizes = [16, 8], strides = [1, 1]} : vector<16x96xf32> to vector<16x8xf32>
    %91 = vector.extract_strided_slice %29 {offsets = [0, 80], sizes = [16, 8], strides = [1, 1]} : vector<16x96xf32> to vector<16x8xf32>
    %92 = arith.truncf %89 : vector<16x8xf32> to vector<16x8xbf16>
    %93 = arith.truncf %90 : vector<16x8xf32> to vector<16x8xbf16>
    %cst_33 = arith.constant dense<0.000000e+00> : vector<16x16xf32>
    %94 = tpu.matmul %92, %93, %cst_33 {dimension_numbers = #tpu.dot_dimension_numbers<[1], [1], [0], [0], [0, 0, 1, 0], [], []>} : vector<16x8xbf16>, vector<16x8xbf16>, vector<16x16xf32> -> vector<16x16xf32>
    %cst_34 = arith.constant 0.353553385 : f32
    %95 = vector.broadcast %cst_34 : f32 to vector<16x16xf32>
    %96 = arith.mulf %94, %95 : vector<16x16xf32>
    %97 = vector.extract_strided_slice %30 {offsets = [2, 0, 0], sizes = [1, 16, 16], strides = [1, 1, 1]} : vector<4x16x16xf32> to vector<1x16x16xf32>
    %98 = vector.shape_cast %97 : vector<1x16x16xf32> to vector<16x16xf32>
    %99 = arith.addf %96, %98 : vector<16x16xf32>
    %cst_35 = arith.constant dense<0xFF800000> : vector<16xf32>
    %100 = vector.multi_reduction <maximumf>, %99, %cst_35 [1] : vector<16x16xf32> to vector<16xf32>
    %101 = vector.shape_cast %100 : vector<16xf32> to vector<16x1xf32>
    %102 = vector.broadcast %101 : vector<16x1xf32> to vector<16x16xf32>
    %103 = arith.subf %99, %102 : vector<16x16xf32>
    %104 = math.exp %103 : vector<16x16xf32>
    %cst_36 = arith.constant dense<0.000000e+00> : vector<16xf32>
    %105 = vector.multi_reduction <add>, %104, %cst_36 [1] : vector<16x16xf32> to vector<16xf32>
    %106 = vector.shape_cast %105 : vector<16xf32> to vector<16x1xf32>
    %107 = tpu.reciprocal %106 {approx = true} : vector<16x1xf32> -> vector<16x1xf32>
    %108 = vector.broadcast %107 : vector<16x1xf32> to vector<16x16xf32>
    %109 = arith.mulf %104, %108 : vector<16x16xf32>
    %110 = arith.truncf %109 : vector<16x16xf32> to vector<16x16xbf16>
    %111 = arith.truncf %91 : vector<16x8xf32> to vector<16x8xbf16>
    %cst_37 = arith.constant dense<0.000000e+00> : vector<16x8xf32>
    %112 = tpu.matmul %110, %111, %cst_37 {dimension_numbers = #tpu.dot_dimension_numbers<[1], [0], [0], [1], [0, 0, 1, 1], [], []>} : vector<16x16xbf16>, vector<16x8xbf16>, vector<16x8xf32> -> vector<16x8xf32>
    %113 = arith.truncf %112 : vector<16x8xf32> to vector<16x8xbf16>
    %114 = vector.extract_strided_slice %31 {offsets = [16, 0], sizes = [8, 32], strides = [1, 1]} : vector<32x32xbf16> to vector<8x32xbf16>
    %cst_38 = arith.constant dense<0.000000e+00> : vector<16x32xf32>
    %115 = tpu.matmul %113, %114, %cst_38 {dimension_numbers = #tpu.dot_dimension_numbers<[1], [0], [0], [1], [0, 0, 1, 1], [], []>} : vector<16x8xbf16>, vector<8x32xbf16>, vector<16x32xf32> -> vector<16x32xf32>
    %116 = arith.addf %88, %115 : vector<16x32xf32>
    %117 = vector.extract_strided_slice %29 {offsets = [0, 24], sizes = [16, 8], strides = [1, 1]} : vector<16x96xf32> to vector<16x8xf32>
    %118 = vector.extract_strided_slice %29 {offsets = [0, 56], sizes = [16, 8], strides = [1, 1]} : vector<16x96xf32> to vector<16x8xf32>
    %119 = vector.extract_strided_slice %29 {offsets = [0, 88], sizes = [16, 8], strides = [1, 1]} : vector<16x96xf32> to vector<16x8xf32>
    %120 = arith.truncf %117 : vector<16x8xf32> to vector<16x8xbf16>
    %121 = arith.truncf %118 : vector<16x8xf32> to vector<16x8xbf16>
    %cst_39 = arith.constant dense<0.000000e+00> : vector<16x16xf32>
    %122 = tpu.matmul %120, %121, %cst_39 {dimension_numbers = #tpu.dot_dimension_numbers<[1], [1], [0], [0], [0, 0, 1, 0], [], []>} : vector<16x8xbf16>, vector<16x8xbf16>, vector<16x16xf32> -> vector<16x16xf32>
    %cst_40 = arith.constant 0.353553385 : f32
    %123 = vector.broadcast %cst_40 : f32 to vector<16x16xf32>
    %124 = arith.mulf %122, %123 : vector<16x16xf32>
    %125 = vector.extract_strided_slice %30 {offsets = [3, 0, 0], sizes = [1, 16, 16], strides = [1, 1, 1]} : vector<4x16x16xf32> to vector<1x16x16xf32>
    %126 = vector.shape_cast %125 : vector<1x16x16xf32> to vector<16x16xf32>
    %127 = arith.addf %124, %126 : vector<16x16xf32>
    %cst_41 = arith.constant dense<0xFF800000> : vector<16xf32>
    %128 = vector.multi_reduction <maximumf>, %127, %cst_41 [1] : vector<16x16xf32> to vector<16xf32>
    %129 = vector.shape_cast %128 : vector<16xf32> to vector<16x1xf32>
    %130 = vector.broadcast %129 : vector<16x1xf32> to vector<16x16xf32>
    %131 = arith.subf %127, %130 : vector<16x16xf32>
    %132 = math.exp %131 : vector<16x16xf32>
    %cst_42 = arith.constant dense<0.000000e+00> : vector<16xf32>
    %133 = vector.multi_reduction <add>, %132, %cst_42 [1] : vector<16x16xf32> to vector<16xf32>
    %134 = vector.shape_cast %133 : vector<16xf32> to vector<16x1xf32>
    %135 = tpu.reciprocal %134 {approx = true} : vector<16x1xf32> -> vector<16x1xf32>
    %136 = vector.broadcast %135 : vector<16x1xf32> to vector<16x16xf32>
    %137 = arith.mulf %132, %136 : vector<16x16xf32>
    %138 = arith.truncf %137 : vector<16x16xf32> to vector<16x16xbf16>
    %139 = arith.truncf %119 : vector<16x8xf32> to vector<16x8xbf16>
    %cst_43 = arith.constant dense<0.000000e+00> : vector<16x8xf32>
    %140 = tpu.matmul %138, %139, %cst_43 {dimension_numbers = #tpu.dot_dimension_numbers<[1], [0], [0], [1], [0, 0, 1, 1], [], []>} : vector<16x16xbf16>, vector<16x8xbf16>, vector<16x8xf32> -> vector<16x8xf32>
    %141 = arith.truncf %140 : vector<16x8xf32> to vector<16x8xbf16>
    %142 = vector.extract_strided_slice %31 {offsets = [24, 0], sizes = [8, 32], strides = [1, 1]} : vector<32x32xbf16> to vector<8x32xbf16>
    %cst_44 = arith.constant dense<0.000000e+00> : vector<16x32xf32>
    %143 = tpu.matmul %141, %142, %cst_44 {dimension_numbers = #tpu.dot_dimension_numbers<[1], [0], [0], [1], [0, 0, 1, 1], [], []>} : vector<16x8xbf16>, vector<8x32xbf16>, vector<16x32xf32> -> vector<16x32xf32>
    %144 = arith.addf %116, %143 : vector<16x32xf32>
    %145 = arith.addf %1, %144 : vector<16x32xf32>
    %c0_45 = arith.constant 0 : index
    %c0_46 = arith.constant 0 : index
    %146 = vector.load %arg7[%c0_45, %c0_46] : memref<1x32xf32, #tpu.memory_space<vmem>>, vector<1x32xf32>
    %147 = vector.broadcast %146 : vector<1x32xf32> to vector<16x32xf32>
    %148 = arith.addf %145, %147 : vector<16x32xf32>
    %c0_47 = arith.constant 0 : index
    %c0_48 = arith.constant 0 : index
    %149 = vector.load %arg10[%c0_47, %c0_48] : memref<1x32xf32, #tpu.memory_space<vmem>>, vector<1x32xf32>
    %c0_49 = arith.constant 0 : index
    %c0_50 = arith.constant 0 : index
    %150 = vector.load %arg11[%c0_49, %c0_50] : memref<1x32xf32, #tpu.memory_space<vmem>>, vector<1x32xf32>
    %cst_51 = arith.constant dense<0.000000e+00> : vector<16xf32>
    %151 = vector.multi_reduction <add>, %148, %cst_51 [1] : vector<16x32xf32> to vector<16xf32>
    %152 = vector.shape_cast %151 : vector<16xf32> to vector<16x1xf32>
    %cst_52 = arith.constant 3.200000e+01 : f32
    %153 = vector.broadcast %cst_52 : f32 to vector<16x1xf32>
    %154 = arith.divf %152, %153 : vector<16x1xf32>
    %155 = vector.broadcast %154 : vector<16x1xf32> to vector<16x32xf32>
    %156 = arith.subf %148, %155 : vector<16x32xf32>
    %157 = arith.mulf %156, %156 : vector<16x32xf32>
    %cst_53 = arith.constant dense<0.000000e+00> : vector<16xf32>
    %158 = vector.multi_reduction <add>, %157, %cst_53 [1] : vector<16x32xf32> to vector<16xf32>
    %159 = vector.shape_cast %158 : vector<16xf32> to vector<16x1xf32>
    %cst_54 = arith.constant 3.200000e+01 : f32
    %160 = vector.broadcast %cst_54 : f32 to vector<16x1xf32>
    %161 = arith.divf %159, %160 : vector<16x1xf32>
    %cst_55 = arith.constant 9.99999974E-6 : f32
    %162 = vector.broadcast %cst_55 : f32 to vector<16x1xf32>
    %163 = arith.addf %161, %162 : vector<16x1xf32>
    %164 = math.rsqrt %163 : vector<16x1xf32>
    %165 = vector.broadcast %164 : vector<16x1xf32> to vector<16x32xf32>
    %166 = arith.mulf %156, %165 : vector<16x32xf32>
    %167 = vector.broadcast %149 : vector<1x32xf32> to vector<16x32xf32>
    %168 = arith.mulf %166, %167 : vector<16x32xf32>
    %169 = vector.broadcast %150 : vector<1x32xf32> to vector<16x32xf32>
    %170 = arith.addf %168, %169 : vector<16x32xf32>
    %171 = arith.truncf %170 : vector<16x32xf32> to vector<16x32xbf16>
    %c0_56 = arith.constant 0 : index
    %c0_57 = arith.constant 0 : index
    %172 = vector.load %arg12[%c0_56, %c0_57] : memref<32x128xbf16, #tpu.memory_space<vmem>>, vector<32x128xbf16>
    %cst_58 = arith.constant dense<0.000000e+00> : vector<16x128xf32>
    %173 = tpu.matmul %171, %172, %cst_58 {dimension_numbers = #tpu.dot_dimension_numbers<[1], [0], [0], [1], [0, 0, 1, 1], [], []>} : vector<16x32xbf16>, vector<32x128xbf16>, vector<16x128xf32> -> vector<16x128xf32>
    %c0_59 = arith.constant 0 : index
    %c0_60 = arith.constant 0 : index
    %174 = vector.load %arg13[%c0_59, %c0_60] : memref<1x128xf32, #tpu.memory_space<vmem>>, vector<1x128xf32>
    %175 = vector.broadcast %174 : vector<1x128xf32> to vector<16x128xf32>
    %176 = arith.addf %173, %175 : vector<16x128xf32>
    %cst_61 = arith.constant 5.000000e-01 : f32
    %177 = vector.broadcast %cst_61 : f32 to vector<16x128xf32>
    %178 = arith.mulf %177, %176 : vector<16x128xf32>
    %cst_62 = arith.constant 0.707106769 : f32
    %179 = vector.broadcast %cst_62 : f32 to vector<16x128xf32>
    %180 = arith.mulf %176, %179 : vector<16x128xf32>
    %cst_63 = arith.constant -4.000000e+00 : f32
    %cst_64 = arith.constant 4.000000e+00 : f32
    %181 = vector.broadcast %cst_63 : f32 to vector<16x128xf32>
    %182 = arith.maximumf %181, %180 : vector<16x128xf32>
    %183 = vector.broadcast %cst_64 : f32 to vector<16x128xf32>
    %184 = arith.minimumf %183, %182 : vector<16x128xf32>
    %185 = arith.mulf %184, %184 : vector<16x128xf32>
    %cst_65 = arith.constant 2.29050653E-4 : f32
    %186 = vector.broadcast %cst_65 : f32 to vector<16x128xf32>
    %187 = arith.mulf %186, %185 : vector<16x128xf32>
    %cst_66 = arith.constant 0.00340829091 : f32
    %188 = vector.broadcast %cst_66 : f32 to vector<16x128xf32>
    %189 = arith.addf %187, %188 : vector<16x128xf32>
    %190 = arith.mulf %189, %185 : vector<16x128xf32>
    %cst_67 = arith.constant 0.0509556942 : f32
    %191 = vector.broadcast %cst_67 : f32 to vector<16x128xf32>
    %192 = arith.addf %190, %191 : vector<16x128xf32>
    %193 = arith.mulf %192, %185 : vector<16x128xf32>
    %cst_68 = arith.constant 0.185208321 : f32
    %194 = vector.broadcast %cst_68 : f32 to vector<16x128xf32>
    %195 = arith.addf %193, %194 : vector<16x128xf32>
    %196 = arith.mulf %195, %185 : vector<16x128xf32>
    %cst_69 = arith.constant 1.12837911 : f32
    %197 = vector.broadcast %cst_69 : f32 to vector<16x128xf32>
    %198 = arith.addf %196, %197 : vector<16x128xf32>
    %cst_70 = arith.constant -1.17916031E-7 : f32
    %199 = vector.broadcast %cst_70 : f32 to vector<16x128xf32>
    %200 = arith.mulf %199, %185 : vector<16x128xf32>
    %cst_71 = arith.constant 2.35479656E-5 : f32
    %201 = vector.broadcast %cst_71 : f32 to vector<16x128xf32>
    %202 = arith.addf %200, %201 : vector<16x128xf32>
    %203 = arith.mulf %202, %185 : vector<16x128xf32>
    %cst_72 = arith.constant 0.00101796258 : f32
    %204 = vector.broadcast %cst_72 : f32 to vector<16x128xf32>
    %205 = arith.addf %203, %204 : vector<16x128xf32>
    %206 = arith.mulf %205, %185 : vector<16x128xf32>
    %cst_73 = arith.constant 0.0140704699 : f32
    %207 = vector.broadcast %cst_73 : f32 to vector<16x128xf32>
    %208 = arith.addf %206, %207 : vector<16x128xf32>
    %209 = arith.mulf %208, %185 : vector<16x128xf32>
    %cst_74 = arith.constant 0.110985048 : f32
    %210 = vector.broadcast %cst_74 : f32 to vector<16x128xf32>
    %211 = arith.addf %209, %210 : vector<16x128xf32>
    %212 = arith.mulf %211, %185 : vector<16x128xf32>
    %cst_75 = arith.constant 0.497469246 : f32
    %213 = vector.broadcast %cst_75 : f32 to vector<16x128xf32>
    %214 = arith.addf %212, %213 : vector<16x128xf32>
    %215 = arith.mulf %214, %185 : vector<16x128xf32>
    %cst_76 = arith.constant 1.000000e+00 : f32
    %216 = vector.broadcast %cst_76 : f32 to vector<16x128xf32>
    %217 = arith.addf %215, %216 : vector<16x128xf32>
    %218 = arith.mulf %184, %198 : vector<16x128xf32>
    %219 = tpu.reciprocal %217 {approx = true} : vector<16x128xf32> -> vector<16x128xf32>
    %220 = arith.mulf %218, %219 : vector<16x128xf32>
    %cst_77 = arith.constant 1.000000e+00 : f32
    %221 = vector.broadcast %cst_77 : f32 to vector<16x128xf32>
    %222 = arith.addf %221, %220 : vector<16x128xf32>
    %223 = arith.mulf %178, %222 : vector<16x128xf32>
    %224 = arith.truncf %223 : vector<16x128xf32> to vector<16x128xbf16>
    %c0_78 = arith.constant 0 : index
    %c0_79 = arith.constant 0 : index
    %225 = vector.load %arg14[%c0_78, %c0_79] : memref<128x32xbf16, #tpu.memory_space<vmem>>, vector<128x32xbf16>
    %cst_80 = arith.constant dense<0.000000e+00> : vector<16x32xf32>
    %226 = tpu.matmul %224, %225, %cst_80 {dimension_numbers = #tpu.dot_dimension_numbers<[1], [0], [0], [1], [0, 0, 1, 1], [], []>} : vector<16x128xbf16>, vector<128x32xbf16>, vector<16x32xf32> -> vector<16x32xf32>
    %c0_81 = arith.constant 0 : index
    %c0_82 = arith.constant 0 : index
    %227 = vector.load %arg15[%c0_81, %c0_82] : memref<1x32xf32, #tpu.memory_space<vmem>>, vector<1x32xf32>
    %228 = vector.broadcast %227 : vector<1x32xf32> to vector<16x32xf32>
    %229 = arith.addf %226, %228 : vector<16x32xf32>
    %230 = arith.addf %148, %229 : vector<16x32xf32>
    %c0_83 = arith.constant 0 : index
    %c0_84 = arith.constant 0 : index
    %c0_85 = arith.constant 0 : index
    %231 = vector.load %arg16[%c0_83, %c0_84, %c0_85] : memref<1x16x32xf32, #tpu.memory_space<vmem>>, vector<1x16x32xf32>
    %232 = vector.shape_cast %231 : vector<1x16x32xf32> to vector<16x32xf32>
    %233 = vector.shape_cast %230 : vector<16x32xf32> to vector<1x16x32xf32>
    tpu.vector_store %arg16[%c0_83, %c0_84, %c0_85], %233 {strides = array<i32>} : memref<1x16x32xf32, #tpu.memory_space<vmem>>, vector<1x16x32xf32>,
    return
  }
  func.func @transform_0(%arg0: i32) -> (i32, i32, i32) {
    %c0_i32 = arith.constant 0 : i32
    %c0_i32_0 = arith.constant 0 : i32
    %c0_i32_1 = arith.constant 0 : i32
    return %arg0, %c0_i32, %c0_i32_0 : i32, i32, i32
  }
  func.func @transform_1(%arg0: i32) -> (i32, i32) {
    %c0_i32 = arith.constant 0 : i32
    %c0_i32_0 = arith.constant 0 : i32
    %c0_i32_1 = arith.constant 0 : i32
    return %c0_i32, %c0_i32_0 : i32, i32
  }
  func.func @transform_2(%arg0: i32) -> (i32, i32) {
    %c0_i32 = arith.constant 0 : i32
    %c0_i32_0 = arith.constant 0 : i32
    %c0_i32_1 = arith.constant 0 : i32
    return %c0_i32, %c0_i32_0 : i32, i32
  }
  func.func @transform_3(%arg0: i32) -> (i32, i32) {
    %c0_i32 = arith.constant 0 : i32
    %c0_i32_0 = arith.constant 0 : i32
    %c0_i32_1 = arith.constant 0 : i32
    return %c0_i32, %c0_i32_0 : i32, i32
  }
  func.func @transform_4(%arg0: i32) -> (i32, i32) {
    %c0_i32 = arith.constant 0 : i32
    %c0_i32_0 = arith.constant 0 : i32
    %c0_i32_1 = arith.constant 0 : i32
    return %c0_i32, %c0_i32_0 : i32, i32
  }
  func.func @transform_5(%arg0: i32) -> (i32, i32) {
    %c0_i32 = arith.constant 0 : i32
    %c0_i32_0 = arith.constant 0 : i32
    %c0_i32_1 = arith.constant 0 : i32
    return %c0_i32, %c0_i32_0 : i32, i32
  }
  func.func @transform_6(%arg0: i32) -> (i32, i32) {
    %c0_i32 = arith.constant 0 : i32
    %c0_i32_0 = arith.constant 0 : i32
    %c0_i32_1 = arith.constant 0 : i32
    return %c0_i32, %c0_i32_0 : i32, i32
  }
  func.func @transform_7(%arg0: i32) -> (i32, i32, i32) {
    %c0_i32 = arith.constant 0 : i32
    %c0_i32_0 = arith.constant 0 : i32
    %c0_i32_1 = arith.constant 0 : i32
    %c0_i32_2 = arith.constant 0 : i32
    return %c0_i32, %c0_i32_0, %c0_i32_1 : i32, i32, i32
  }
  func.func @transform_8(%arg0: i32) -> (i32, i32, i32) {
    %c0_i32 = arith.constant 0 : i32
    %c0_i32_0 = arith.constant 0 : i32
    %c0_i32_1 = arith.constant 0 : i32
    %c0_i32_2 = arith.constant 0 : i32
    return %c0_i32, %c0_i32_0, %c0_i32_1 : i32, i32, i32
  }
  func.func @transform_9(%arg0: i32) -> (i32, i32) {
    %c0_i32 = arith.constant 0 : i32
    %c0_i32_0 = arith.constant 0 : i32
    %c0_i32_1 = arith.constant 0 : i32
    return %c0_i32, %c0_i32_0 : i32, i32
  }
  func.func @transform_10(%arg0: i32) -> (i32, i32) {
    %c0_i32 = arith.constant 0 : i32
    %c0_i32_0 = arith.constant 0 : i32
    %c0_i32_1 = arith.constant 0 : i32
    return %c0_i32, %c0_i32_0 : i32, i32
  }
  func.func @transform_11(%arg0: i32) -> (i32, i32) {
    %c0_i32 = arith.constant 0 : i32
    %c0_i32_0 = arith.constant 0 : i32
    %c0_i32_1 = arith.constant 0 : i32
    return %c0_i32, %c0_i32_0 : i32, i32
  }
  func.func @transform_12(%arg0: i32) -> (i32, i32) {
    %c0_i32 = arith.constant 0 : i32
    %c0_i32_0 = arith.constant 0 : i32
    %c0_i32_1 = arith.constant 0 : i32
    return %c0_i32, %c0_i32_0 : i32, i32
  }
  func.func @transform_13(%arg0: i32) -> (i32, i32) {
    %c0_i32 = arith.constant 0 : i32
    %c0_i32_0 = arith.constant 0 : i32
    %c0_i32_1 = arith.constant 0 : i32
    return %c0_i32, %c0_i32_0 : i32, i32
  }
  func.func @transform_14(%arg0: i32) -> (i32, i32) {
    %c0_i32 = arith.constant 0 : i32
    %c0_i32_0 = arith.constant 0 : i32
    %c0_i32_1 = arith.constant 0 : i32
    return %c0_i32, %c0_i32_0 : i32, i32
  }
  func.func @transform_15(%arg0: i32) -> (i32, i32, i32) {
    %c0_i32 = arith.constant 0 : i32
    %c0_i32_0 = arith.constant 0 : i32
    %c0_i32_1 = arith.constant 0 : i32
    return %arg0, %c0_i32, %c0_i32_0 : i32, i32, i32
  }
}

module attributes {stable_mosaic.version = 11 : i64} {
  func.func @_head_kernel(%arg0: memref<2x16x32xf32, #tpu.memory_space<vmem>>, %arg1: memref<1x32xf32, #tpu.memory_space<vmem>>, %arg2: memref<1x32xf32, #tpu.memory_space<vmem>>, %arg3: memref<32x10xbf16, #tpu.memory_space<vmem>>, %arg4: memref<1x10xf32, #tpu.memory_space<vmem>>, %arg5: memref<2x10xf32, #tpu.memory_space<vmem>>) attributes {dimension_semantics = [], scalar_prefetch = 0 : i64, scratch_operands = 0 : i64, tpu.core_type = #tpu.core_type<tc>} {
    %c0 = arith.constant 0 : index
    %c0_0 = arith.constant 0 : index
    %c0_1 = arith.constant 0 : index
    %0 = vector.load %arg0[%c0, %c0_0, %c0_1] : memref<2x16x32xf32, #tpu.memory_space<vmem>>, vector<2x16x32xf32>
    %c0_2 = arith.constant 0 : index
    %c0_3 = arith.constant 0 : index
    %1 = vector.load %arg1[%c0_2, %c0_3] : memref<1x32xf32, #tpu.memory_space<vmem>>, vector<1x32xf32>
    %c0_4 = arith.constant 0 : index
    %c0_5 = arith.constant 0 : index
    %2 = vector.load %arg2[%c0_4, %c0_5] : memref<1x32xf32, #tpu.memory_space<vmem>>, vector<1x32xf32>
    %cst = arith.constant dense<0.000000e+00> : vector<2x16xf32>
    %3 = vector.multi_reduction <add>, %0, %cst [2] : vector<2x16x32xf32> to vector<2x16xf32>
    %4 = vector.shape_cast %3 : vector<2x16xf32> to vector<2x16x1xf32>
    %cst_6 = arith.constant 3.200000e+01 : f32
    %5 = vector.broadcast %cst_6 : f32 to vector<2x16x1xf32>
    %6 = arith.divf %4, %5 : vector<2x16x1xf32>
    %7 = vector.broadcast %6 : vector<2x16x1xf32> to vector<2x16x32xf32>
    %8 = arith.subf %0, %7 : vector<2x16x32xf32>
    %9 = arith.mulf %8, %8 : vector<2x16x32xf32>
    %cst_7 = arith.constant dense<0.000000e+00> : vector<2x16xf32>
    %10 = vector.multi_reduction <add>, %9, %cst_7 [2] : vector<2x16x32xf32> to vector<2x16xf32>
    %11 = vector.shape_cast %10 : vector<2x16xf32> to vector<2x16x1xf32>
    %cst_8 = arith.constant 3.200000e+01 : f32
    %12 = vector.broadcast %cst_8 : f32 to vector<2x16x1xf32>
    %13 = arith.divf %11, %12 : vector<2x16x1xf32>
    %cst_9 = arith.constant 9.99999974E-6 : f32
    %14 = vector.broadcast %cst_9 : f32 to vector<2x16x1xf32>
    %15 = arith.addf %13, %14 : vector<2x16x1xf32>
    %16 = math.rsqrt %15 : vector<2x16x1xf32>
    %17 = vector.broadcast %16 : vector<2x16x1xf32> to vector<2x16x32xf32>
    %18 = arith.mulf %8, %17 : vector<2x16x32xf32>
    %19 = vector.shape_cast %1 : vector<1x32xf32> to vector<1x1x32xf32>
    %20 = vector.broadcast %19 : vector<1x1x32xf32> to vector<2x16x32xf32>
    %21 = arith.mulf %18, %20 : vector<2x16x32xf32>
    %22 = vector.shape_cast %2 : vector<1x32xf32> to vector<1x1x32xf32>
    %23 = vector.broadcast %22 : vector<1x1x32xf32> to vector<2x16x32xf32>
    %24 = arith.addf %21, %23 : vector<2x16x32xf32>
    %cst_10 = arith.constant dense<0.000000e+00> : vector<2x32xf32>
    %25 = vector.multi_reduction <add>, %24, %cst_10 [1] : vector<2x16x32xf32> to vector<2x32xf32>
    %cst_11 = arith.constant 1.600000e+01 : f32
    %26 = vector.broadcast %cst_11 : f32 to vector<2x32xf32>
    %27 = arith.divf %25, %26 : vector<2x32xf32>
    %28 = arith.truncf %27 : vector<2x32xf32> to vector<2x32xbf16>
    %c0_12 = arith.constant 0 : index
    %c0_13 = arith.constant 0 : index
    %29 = vector.load %arg3[%c0_12, %c0_13] : memref<32x10xbf16, #tpu.memory_space<vmem>>, vector<32x10xbf16>
    %cst_14 = arith.constant dense<0.000000e+00> : vector<2x10xf32>
    %30 = tpu.matmul %28, %29, %cst_14 {dimension_numbers = #tpu.dot_dimension_numbers<[1], [0], [0], [1], [0, 0, 1, 1], [], []>} : vector<2x32xbf16>, vector<32x10xbf16>, vector<2x10xf32> -> vector<2x10xf32>
    %c0_15 = arith.constant 0 : index
    %c0_16 = arith.constant 0 : index
    %31 = vector.load %arg4[%c0_15, %c0_16] : memref<1x10xf32, #tpu.memory_space<vmem>>, vector<1x10xf32>
    %32 = vector.broadcast %31 : vector<1x10xf32> to vector<2x10xf32>
    %33 = arith.addf %30, %32 : vector<2x10xf32>
    %c0_17 = arith.constant 0 : index
    %c0_18 = arith.constant 0 : index
    %34 = vector.load %arg5[%c0_17, %c0_18] : memref<2x10xf32, #tpu.memory_space<vmem>>, vector<2x10xf32>
    tpu.vector_store %arg5[%c0_17, %c0_18], %33 {strides = array<i32>} : memref<2x10xf32, #tpu.memory_space<vmem>>, vector<2x10xf32>,
    return
  }
}

</mosaic_0001>

<llo_original>
// kernel: swin_forward.7
$region0: #{swin_forward.7}
  #allocation0 [shape = 'u32[]', space=smem, size = 0x4, offset = 0x4, fixed_abs, tag = 'smem constant byte address 0x4 - core index']
  #allocation1 [shape = 'u32[144,128]{1,0:T(1,128)}', space=vmem, size = 0x12000, scoped, tag = 'internal scratch']
  %s0 = inlined_call_operand.vmem [shape: f32[128,48], index: 0, kind: input, shape index: {}]
  %s1 = inlined_call_operand.vmem [shape: bf16[48,16], index: 1, kind: input, shape index: {}]
  %s2 = inlined_call_operand.vmem [shape: f32[1,16], index: 2, kind: input, shape index: {}]
  %s3 = inlined_call_operand.vmem [shape: f32[1,16], index: 3, kind: input, shape index: {}]
  %s4 = inlined_call_operand.vmem [shape: f32[1,16], index: 4, kind: input, shape index: {}]
  %s5 = inlined_call_operand.vmem [shape: f32[128,16], index: 5, kind: output, shape index: {}]
  %s6 = sld [smem:[#allocation0]]
  $region30: #{swin_forward.7} parent=0
    _
  %s8 = ssub.s32 1, %s6
  %s9 = scalar_select 0, %s8, %s6
  // Predicated region
  $region2: #{swin_forward.7} parent=0 // pred_check
    _
  $region3: #{swin_forward.7} parent=0 // pred_check_branch
    %11 = sbr.rel (0) target = $region5
  $region4: #{swin_forward.7} parent=0 // pred_region
    _
  $region5: #{swin_forward.7} parent=0 // pred_fallthru
    _
  // Predicated region
  $region6: #{swin_forward.7} parent=0 // pred_check
    _
  $region7: #{swin_forward.7} parent=0 // pred_check_branch
    %13 = sbr.rel (0) target = $region9
  $region8: #{swin_forward.7} parent=0 // pred_region
    _
  $region9: #{swin_forward.7} parent=0 // pred_fallthru
    _
  // Predicated region
  $region10: #{swin_forward.7} parent=0 // pred_check
    _
  $region11: #{swin_forward.7} parent=0 // pred_check_branch
    %15 = sbr.rel (0) target = $region13
  $region12: #{swin_forward.7} parent=0 // pred_region
    _
  $region13: #{swin_forward.7} parent=0 // pred_fallthru
    _
  // Predicated region
  $region14: #{swin_forward.7} parent=0 // pred_check
    _
  $region15: #{swin_forward.7} parent=0 // pred_check_branch
    %17 = sbr.rel (0) target = $region17
  $region16: #{swin_forward.7} parent=0 // pred_region
    _
  $region17: #{swin_forward.7} parent=0 // pred_fallthru
    _
  // Predicated region
  $region18: #{swin_forward.7} parent=0 // pred_check
    _
  $region19: #{swin_forward.7} parent=0 // pred_check_branch
    %19 = sbr.rel (0) target = $region21
  $region20: #{swin_forward.7} parent=0 // pred_region
    _
  $region21: #{swin_forward.7} parent=0 // pred_fallthru
    _
  %v21 = vld [vmem:[%s0] sm:$0xff]
  %v22 = vld [vmem:[%s0 + $0x8] sm:$0xff]
  %v23 = vld [vmem:[%s0 + $0x10] sm:$0xff]
  %v24 = vld [vmem:[%s0 + $0x18] sm:$0xff]
  %v25 = vld [vmem:[%s0 + $0x20] sm:$0xff]
  %v26 = vld [vmem:[%s0 + $0x28] sm:$0xff]
  %v27 = vld [vmem:[%s0 + $0x30] sm:$0xff]
  %v28 = vld [vmem:[%s0 + $0x38] sm:$0xff]
  %v29 = vld [vmem:[%s0 + $0x40] sm:$0xff]
  %v30 = vld [vmem:[%s0 + $0x48] sm:$0xff]
  %v31 = vld [vmem:[%s0 + $0x50] sm:$0xff]
  %v32 = vld [vmem:[%s0 + $0x58] sm:$0xff]
  %v33 = vld [vmem:[%s0 + $0x60] sm:$0xff]
  %v34 = vld [vmem:[%s0 + $0x68] sm:$0xff]
  %v35 = vld [vmem:[%s0 + $0x70] sm:$0xff]
  %v36 = vld [vmem:[%s0 + $0x78] sm:$0xff]
  %v37 = vpack.c.bf16 %v22, %v21
  %v38 = vpack.c.bf16 %v24, %v23
  %v39 = vpack.c.bf16 %v26, %v25
  %v40 = vpack.c.bf16 %v28, %v27
  %v41 = vpack.c.bf16 %v30, %v29
  %v42 = vpack.c.bf16 %v32, %v31
  %v43 = vpack.c.bf16 %v34, %v33
  %v44 = vpack.c.bf16 %v36, %v35
  %v45 = vld [vmem:[%s1] sm:$0xf]
  %v46 = vld [vmem:[%s1 + $0x4] sm:$0xf]
  %v47 = vld [vmem:[%s1 + $0x8] sm:$0xf]
  %v48 = vld [vmem:[%s1 + $0xc] sm:$0xf]
  %v49 = vld [vmem:[%s1 + $0x10] sm:$0xf]
  %v50 = vld [vmem:[%s1 + $0x14] sm:$0xf]
  %v51 = vld [vmem:[%s2] sm:$0x1]
  %v53 = vlaneseq
  %v54 = vshrl.u32 %v53, 7
  %v55 = vsub.s32 0, %v54
  %v56 = vrot.slane %v51, %v55
  %v64 = vunpack.c.l.b16 %v45
  %v65 = vunpack.c.l.b16 %v46
  %v66 = vunpack.c.l.b16 %v47
  %v67 = vunpack.c.l.b16 %v48
  %v68 = vunpack.c.l.b16 %v49
  %v69 = vunpack.c.l.b16 %v50
  %v70 = vpack.c.b16 %v65, %v64
  %v71 = vpack.c.b16 %v67, %v66
  %v72 = vpack.c.b16 %v69, %v68
  %vm76 = vcmask 392192
  %v78 = vsel %vm76, %v37, 0
  %v81 = vsel %vm76, %v38, 0
  %v84 = vsel %vm76, %v39, 0
  %v87 = vsel %vm76, %v40, 0
  %v90 = vsel %vm76, %v41, 0
  %v93 = vsel %vm76, %v42, 0
  %v96 = vsel %vm76, %v43, 0
  %v99 = vsel %vm76, %v44, 0
  %101 = vmatprep.subr.bf16.mxu0 0
  %102 = vmatpush1.bf16.msra.mxu0 %v70
  %103 = vmatprep.subr.bf16.mxu0 0
  %104 = vmatpush1.bf16.msra.mxu0 %v71
  %105 = vmatprep.subr.bf16.mxu0 0
  %106 = vmatpush1.bf16.msra.mxu0 %v72
  %107 = vmatprep.subr.bf16.mxu0 0
  %108 = vmatpush1.bf16.msra.mxu0 0
  %109 = vmatprep.subr.bf16.mxu0 0
  %110 = vmatpush1.bf16.msra.mxu0 0
  %111 = vmatprep.subr.bf16.mxu0 0
  %112 = vmatpush1.bf16.msra.mxu0 0
  %113 = vmatprep.subr.bf16.mxu0 0
  %114 = vmatpush1.bf16.msra.mxu0 0
  %115 = vmatprep.subr.bf16.mxu0 0
  %116 = vmatpush1.bf16.msra.mxu0 0
  %117 = vmatprep.subr.bf16.mxu0 0
  %118 = vmatpush1.bf16.msra.mxu0 0
  %119 = vmatprep.subr.bf16.mxu0 0
  %120 = vmatpush1.bf16.msra.mxu0 0
  %121 = vmatprep.subr.bf16.mxu0 0
  %122 = vmatpush1.bf16.msra.mxu0 0
  %123 = vmatprep.subr.bf16.mxu0 0
  %124 = vmatpush1.bf16.msra.mxu0 0
  %125 = vmatprep.subr.bf16.mxu0 0
  %126 = vmatpush1.bf16.msra.mxu0 0
  %127 = vmatprep.subr.bf16.mxu0 0
  %128 = vmatpush1.bf16.msra.mxu0 0
  %129 = vmatprep.subr.bf16.mxu0 0
  %130 = vmatpush1.bf16.msra.mxu0 0
  %131 = vmatprep.subr.bf16.mxu0 0
  %132 = vmatpush1.bf16.msra.mxu0 0
  %133 = vmatprep.mubr.bf16.mxu0 0
  %134 = vmatmul.mubr.bf16.gmra.mrb[0].mxu0 %v78
  %v135 = vpop.f32.mrb[0].mxu0
  %v136 = vadd.f32 %v56, %v135
  %v137 = vpop.f32.mrb[0].mxu0
  %v138 = vpop.f32.mrb[0].mxu0
  %v139 = vadd.f32 %v56, %v138
  %v140 = vpop.f32.mrb[0].mxu0
  %141 = vmatprep.mubr.bf16.mxu0 0
  %142 = vmatmul.mubr.bf16.gmra.mrb[0].mxu0 %v81
  %v143 = vpop.f32.mrb[0].mxu0
  %v144 = vadd.f32 %v56, %v143
  %v145 = vpop.f32.mrb[0].mxu0
  %v146 = vpop.f32.mrb[0].mxu0
  %v147 = vadd.f32 %v56, %v146
  %v148 = vpop.f32.mrb[0].mxu0
  %149 = vmatprep.mubr.bf16.mxu0 0
  %150 = vmatmul.mubr.bf16.gmra.mrb[0].mxu0 %v84
  %v151 = vpop.f32.mrb[0].mxu0
  %v152 = vadd.f32 %v56, %v151
  %v153 = vpop.f32.mrb[0].mxu0
  %v154 = vpop.f32.mrb[0].mxu0
  %v155 = vadd.f32 %v56, %v154
  %v156 = vpop.f32.mrb[0].mxu0
  %157 = vmatprep.mubr.bf16.mxu0 0
  %158 = vmatmul.mubr.bf16.gmra.mrb[0].mxu0 %v87
  %v159 = vpop.f32.mrb[0].mxu0
  %v160 = vadd.f32 %v56, %v159
  %v161 = vpop.f32.mrb[0].mxu0
  %v162 = vpop.f32.mrb[0].mxu0
  %v163 = vadd.f32 %v56, %v162
  %v164 = vpop.f32.mrb[0].mxu0
  %165 = vmatprep.mubr.bf16.mxu0 0
  %166 = vmatmul.mubr.bf16.gmra.mrb[0].mxu0 %v90
  %v167 = vpop.f32.mrb[0].mxu0
  %v168 = vadd.f32 %v56, %v167
  %v169 = vpop.f32.mrb[0].mxu0
  %v170 = vpop.f32.mrb[0].mxu0
  %v171 = vadd.f32 %v56, %v170
  %v172 = vpop.f32.mrb[0].mxu0
  %173 = vmatprep.mubr.bf16.mxu0 0
  %174 = vmatmul.mubr.bf16.gmra.mrb[0].mxu0 %v93
  %v175 = vpop.f32.mrb[0].mxu0
  %v176 = vadd.f32 %v56, %v175
  %v177 = vpop.f32.mrb[0].mxu0
  %v178 = vpop.f32.mrb[0].mxu0
  %v179 = vadd.f32 %v56, %v178
  %v180 = vpop.f32.mrb[0].mxu0
  %181 = vmatprep.mubr.bf16.mxu0 0
  %182 = vmatmul.mubr.bf16.gmra.mrb[0].mxu0 %v96
  %v183 = vpop.f32.mrb[0].mxu0
  %v184 = vadd.f32 %v56, %v183
  %v185 = vpop.f32.mrb[0].mxu0
  %v186 = vpop.f32.mrb[0].mxu0
  %v187 = vadd.f32 %v56, %v186
  %v188 = vpop.f32.mrb[0].mxu0
  %189 = vmatprep.mubr.bf16.mxu0 0
  %190 = vmatmul.mubr.bf16.gmra.mrb[0].mxu0 %v99
  %v191 = vpop.f32.mrb[0].mxu0
  %v192 = vadd.f32 %v56, %v191
  %v193 = vpop.f32.mrb[0].mxu0
  %v194 = vpop.f32.mrb[0].mxu0
  %v195 = vadd.f32 %v56, %v194
  %v196 = vpop.f32.mrb[0].mxu0
  %197 = vdwg.mxu0
  %v198 = vld [vmem:[%s3] sm:$0x1]
  %v199 = vld [vmem:[%s4] sm:$0x1]
  %vm200 = vcmask 130048
  %v201 = vsel %vm200, %v136, 0.0
  %202 = vadd.xlane.f32.xlu0 %v201
  %v203 = vpop.xlane.xlu0 %202
  %v204 = vsel %vm200, %v139, 0.0
  %205 = vadd.xlane.f32.xlu0 %v204
  %v206 = vpop.xlane.xlu0 %205
  %v207 = vsel %vm200, %v144, 0.0
  %208 = vadd.xlane.f32.xlu0 %v207
  %v209 = vpop.xlane.xlu0 %208
  %v210 = vsel %vm200, %v147, 0.0
  %211 = vadd.xlane.f32.xlu0 %v210
  %v212 = vpop.xlane.xlu0 %211
  %v213 = vsel %vm200, %v152, 0.0
  %214 = vadd.xlane.f32.xlu0 %v213
  %v215 = vpop.xlane.xlu0 %214
  %v216 = vsel %vm200, %v155, 0.0
  %217 = vadd.xlane.f32.xlu0 %v216
  %v218 = vpop.xlane.xlu0 %217
  %v219 = vsel %vm200, %v160, 0.0
  %220 = vadd.xlane.f32.xlu0 %v219
  %v221 = vpop.xlane.xlu0 %220
  %v222 = vsel %vm200, %v163, 0.0
  %223 = vadd.xlane.f32.xlu0 %v222
  %v224 = vpop.xlane.xlu0 %223
  %v225 = vsel %vm200, %v168, 0.0
  %226 = vadd.xlane.f32.xlu0 %v225
  %v227 = vpop.xlane.xlu0 %226
  %v228 = vsel %vm200, %v171, 0.0
  %229 = vadd.xlane.f32.xlu0 %v228
  %v230 = vpop.xlane.xlu0 %229
  %v231 = vsel %vm200, %v176, 0.0
  %232 = vadd.xlane.f32.xlu0 %v231
  %v233 = vpop.xlane.xlu0 %232
  %v234 = vsel %vm200, %v179, 0.0
  %235 = vadd.xlane.f32.xlu0 %v234
  %v236 = vpop.xlane.xlu0 %235
  %v237 = vsel %vm200, %v184, 0.0
  %238 = vadd.xlane.f32.xlu0 %v237
  %v239 = vpop.xlane.xlu0 %238
  %v240 = vsel %vm200, %v187, 0.0
  %241 = vadd.xlane.f32.xlu0 %v240
  %v242 = vpop.xlane.xlu0 %241
  %v243 = vsel %vm200, %v192, 0.0
  %244 = vadd.xlane.f32.xlu0 %v243
  %v245 = vpop.xlane.xlu0 %244
  %v246 = vsel %vm200, %v195, 0.0
  %247 = vadd.xlane.f32.xlu0 %v246
  %v248 = vpop.xlane.xlu0 %247
  %v249 = vrcp.pop 16.0
  %v250 = vmul.f32 %v203, %v249
  %v251 = vmul.f32 %v206, %v249
  %v252 = vmul.f32 %v209, %v249
  %v253 = vmul.f32 %v212, %v249
  %v254 = vmul.f32 %v215, %v249
  %v255 = vmul.f32 %v218, %v249
  %v256 = vmul.f32 %v221, %v249
  %v257 = vmul.f32 %v224, %v249
  %v258 = vmul.f32 %v227, %v249
  %v259 = vmul.f32 %v230, %v249
  %v260 = vmul.f32 %v233, %v249
  %v261 = vmul.f32 %v236, %v249
  %v262 = vmul.f32 %v239, %v249
  %v263 = vmul.f32 %v242, %v249
  %v264 = vmul.f32 %v245, %v249
  %v265 = vmul.f32 %v248, %v249
  %v266 = vsub.f32 %v136, %v250
  %v267 = vsub.f32 %v139, %v251
  %v268 = vsub.f32 %v144, %v252
  %v269 = vsub.f32 %v147, %v253
  %v270 = vsub.f32 %v152, %v254
  %v271 = vsub.f32 %v155, %v255
  %v272 = vsub.f32 %v160, %v256
  %v273 = vsub.f32 %v163, %v257
  %v274 = vsub.f32 %v168, %v258
  %v275 = vsub.f32 %v171, %v259
  %v276 = vsub.f32 %v176, %v260
  %v277 = vsub.f32 %v179, %v261
  %v278 = vsub.f32 %v184, %v262
  %v279 = vsub.f32 %v187, %v263
  %v280 = vsub.f32 %v192, %v264
  %v281 = vsub.f32 %v195, %v265
  %v282 = vmul.f32 %v266, %v266
  %v283 = vmul.f32 %v267, %v267
  %v284 = vmul.f32 %v268, %v268
  %v285 = vmul.f32 %v269, %v269
  %v286 = vmul.f32 %v270, %v270
  %v287 = vmul.f32 %v271, %v271
  %v288 = vmul.f32 %v272, %v272
  %v289 = vmul.f32 %v273, %v273
  %v290 = vmul.f32 %v274, %v274
  %v291 = vmul.f32 %v275, %v275
  %v292 = vmul.f32 %v276, %v276
  %v293 = vmul.f32 %v277, %v277
  %v294 = vmul.f32 %v278, %v278
  %v295 = vmul.f32 %v279, %v279
  %v296 = vmul.f32 %v280, %v280
  %v297 = vmul.f32 %v281, %v281
  %v298 = vsel %vm200, %v282, 0.0
  %299 = vadd.xlane.f32.xlu0 %v298
  %v300 = vpop.xlane.xlu0 %299
  %v301 = vsel %vm200, %v283, 0.0
  %302 = vadd.xlane.f32.xlu0 %v301
  %v303 = vpop.xlane.xlu0 %302
  %v304 = vsel %vm200, %v284, 0.0
  %305 = vadd.xlane.f32.xlu0 %v304
  %v306 = vpop.xlane.xlu0 %305
  %v307 = vsel %vm200, %v285, 0.0
  %308 = vadd.xlane.f32.xlu0 %v307
  %v309 = vpop.xlane.xlu0 %308
  %v310 = vsel %vm200, %v286, 0.0
  %311 = vadd.xlane.f32.xlu0 %v310
  %v312 = vpop.xlane.xlu0 %311
  %v313 = vsel %vm200, %v287, 0.0
  %314 = vadd.xlane.f32.xlu0 %v313
  %v315 = vpop.xlane.xlu0 %314
  %v316 = vsel %vm200, %v288, 0.0
  %317 = vadd.xlane.f32.xlu0 %v316
  %v318 = vpop.xlane.xlu0 %317
  %v319 = vsel %vm200, %v289, 0.0
  %320 = vadd.xlane.f32.xlu0 %v319
  %v321 = vpop.xlane.xlu0 %320
  %v322 = vsel %vm200, %v290, 0.0
  %323 = vadd.xlane.f32.xlu0 %v322
  %v324 = vpop.xlane.xlu0 %323
  %v325 = vsel %vm200, %v291, 0.0
  %326 = vadd.xlane.f32.xlu0 %v325
  %v327 = vpop.xlane.xlu0 %326
  %v328 = vsel %vm200, %v292, 0.0
  %329 = vadd.xlane.f32.xlu0 %v328
  %v330 = vpop.xlane.xlu0 %329
  %v331 = vsel %vm200, %v293, 0.0
  %332 = vadd.xlane.f32.xlu0 %v331
  %v333 = vpop.xlane.xlu0 %332
  %v334 = vsel %vm200, %v294, 0.0
  %335 = vadd.xlane.f32.xlu0 %v334
  %v336 = vpop.xlane.xlu0 %335
  %v337 = vsel %vm200, %v295, 0.0
  %338 = vadd.xlane.f32.xlu0 %v337
  %v339 = vpop.xlane.xlu0 %338
  %v340 = vsel %vm200, %v296, 0.0
  %341 = vadd.xlane.f32.xlu0 %v340
  %v342 = vpop.xlane.xlu0 %341
  %v343 = vsel %vm200, %v297, 0.0
  %344 = vadd.xlane.f32.xlu0 %v343
  %v345 = vpop.xlane.xlu0 %344
  %v346 = vmul.f32 %v300, %v249
  %v347 = vmul.f32 %v303, %v249
  %v348 = vmul.f32 %v306, %v249
  %v349 = vmul.f32 %v309, %v249
  %v350 = vmul.f32 %v312, %v249
  %v351 = vmul.f32 %v315, %v249
  %v352 = vmul.f32 %v318, %v249
  %v353 = vmul.f32 %v321, %v249
  %v354 = vmul.f32 %v324, %v249
  %v355 = vmul.f32 %v327, %v249
  %v356 = vmul.f32 %v330, %v249
  %v357 = vmul.f32 %v333, %v249
  %v358 = vmul.f32 %v336, %v249
  %v359 = vmul.f32 %v339, %v249
  %v360 = vmul.f32 %v342, %v249
  %v361 = vmul.f32 %v345, %v249
  %v362 = vadd.f32 %v346, 1e-05
  %v363 = vadd.f32 %v347, 1e-05
  %v364 = vadd.f32 %v348, 1e-05
  %v365 = vadd.f32 %v349, 1e-05
  %v366 = vadd.f32 %v350, 1e-05
  %v367 = vadd.f32 %v351, 1e-05
  %v368 = vadd.f32 %v352, 1e-05
  %v369 = vadd.f32 %v353, 1e-05
  %v370 = vadd.f32 %v354, 1e-05
  %v371 = vadd.f32 %v355, 1e-05
  %v372 = vadd.f32 %v356, 1e-05
  %v373 = vadd.f32 %v357, 1e-05
  %v374 = vadd.f32 %v358, 1e-05
  %v375 = vadd.f32 %v359, 1e-05
  %v376 = vadd.f32 %v360, 1e-05
  %v377 = vadd.f32 %v361, 1e-05
  %v378 = vrsqrt.pop %v362
  %v379 = vrsqrt.pop %v363
  %v380 = vrsqrt.pop %v364
  %v381 = vrsqrt.pop %v365
  %v382 = vrsqrt.pop %v366
  %v383 = vrsqrt.pop %v367
  %v384 = vrsqrt.pop %v368
  %v385 = vrsqrt.pop %v369
  %v386 = vrsqrt.pop %v370
  %v387 = vrsqrt.pop %v371
  %v388 = vrsqrt.pop %v372
  %v389 = vrsqrt.pop %v373
  %v390 = vrsqrt.pop %v374
  %v391 = vrsqrt.pop %v375
  %v392 = vrsqrt.pop %v376
  %v393 = vrsqrt.pop %v377
  %v394 = vmul.f32 %v266, %v378
  %v395 = vmul.f32 %v267, %v379
  %v396 = vmul.f32 %v268, %v380
  %v397 = vmul.f32 %v269, %v381
  %v398 = vmul.f32 %v270, %v382
  %v399 = vmul.f32 %v271, %v383
  %v400 = vmul.f32 %v272, %v384
  %v401 = vmul.f32 %v273, %v385
  %v402 = vmul.f32 %v274, %v386
  %v403 = vmul.f32 %v275, %v387
  %v404 = vmul.f32 %v276, %v388
  %v405 = vmul.f32 %v277, %v389
  %v406 = vmul.f32 %v278, %v390
  %v407 = vmul.f32 %v279, %v391
  %v408 = vmul.f32 %v280, %v392
  %v409 = vmul.f32 %v281, %v393
  %v411 = vlaneseq
  %v412 = vshrl.u32 %v411, 7
  %v413 = vsub.s32 0, %v412
  %v414 = vrot.slane %v198, %v413
  %v416 = vmul.f32 %v394, %v414
  %v417 = vmul.f32 %v395, %v414
  %v418 = vmul.f32 %v396, %v414
  %v419 = vmul.f32 %v397, %v414
  %v420 = vmul.f32 %v398, %v414
  %v421 = vmul.f32 %v399, %v414
  %v422 = vmul.f32 %v400, %v414
  %v423 = vmul.f32 %v401, %v414
  %v424 = vmul.f32 %v402, %v414
  %v425 = vmul.f32 %v403, %v414
  %v426 = vmul.f32 %v404, %v414
  %v427 = vmul.f32 %v405, %v414
  %v428 = vmul.f32 %v406, %v414
  %v429 = vmul.f32 %v407, %v414
  %v430 = vmul.f32 %v408, %v414
  %v431 = vmul.f32 %v409, %v414
  %v433 = vlaneseq
  %v434 = vshrl.u32 %v433, 7
  %v435 = vsub.s32 0, %v434
  %v436 = vrot.slane %v199, %v435
  %v438 = vadd.f32 %v416, %v436
  %v439 = vadd.f32 %v417, %v436
  %v440 = vadd.f32 %v418, %v436
  %v441 = vadd.f32 %v419, %v436
  %v442 = vadd.f32 %v420, %v436
  %v443 = vadd.f32 %v421, %v436
  %v444 = vadd.f32 %v422, %v436
  %v445 = vadd.f32 %v423, %v436
  %v446 = vadd.f32 %v424, %v436
  %v447 = vadd.f32 %v425, %v436
  %v448 = vadd.f32 %v426, %v436
  %v449 = vadd.f32 %v427, %v436
  %v450 = vadd.f32 %v428, %v436
  %v451 = vadd.f32 %v429, %v436
  %v452 = vadd.f32 %v430, %v436
  %v453 = vadd.f32 %v431, %v436
  %454 = vst.msk [vmem:[%s5] sm:$0xff] %vm200, %v438
  %455 = vst.msk [vmem:[%s5 + $0x8] sm:$0xff] %vm200, %v439
  %456 = vst.msk [vmem:[%s5 + $0x10] sm:$0xff] %vm200, %v440
  %457 = vst.msk [vmem:[%s5 + $0x18] sm:$0xff] %vm200, %v441
  %458 = vst.msk [vmem:[%s5 + $0x20] sm:$0xff] %vm200, %v442
  %459 = vst.msk [vmem:[%s5 + $0x28] sm:$0xff] %vm200, %v443
  %460 = vst.msk [vmem:[%s5 + $0x30] sm:$0xff] %vm200, %v444
  %461 = vst.msk [vmem:[%s5 + $0x38] sm:$0xff] %vm200, %v445
  %462 = vst.msk [vmem:[%s5 + $0x40] sm:$0xff] %vm200, %v446
  %463 = vst.msk [vmem:[%s5 + $0x48] sm:$0xff] %vm200, %v447
  %464 = vst.msk [vmem:[%s5 + $0x50] sm:$0xff] %vm200, %v448
  %465 = vst.msk [vmem:[%s5 + $0x58] sm:$0xff] %vm200, %v449
  %466 = vst.msk [vmem:[%s5 + $0x60] sm:$0xff] %vm200, %v450
  %467 = vst.msk [vmem:[%s5 + $0x68] sm:$0xff] %vm200, %v451
  %468 = vst.msk [vmem:[%s5 + $0x70] sm:$0xff] %vm200, %v452
  %469 = vst.msk [vmem:[%s5 + $0x78] sm:$0xff] %vm200, %v453
  // Predicated region
  $region22: #{swin_forward.7} parent=0 // pred_check
    _
  $region23: #{swin_forward.7} parent=0 // pred_check_branch
    %471 = sbr.rel (0) target = $region25
  $region24: #{swin_forward.7} parent=0 // pred_region
    _
  $region25: #{swin_forward.7} parent=0 // pred_fallthru
    _
  // Predicated region
  $region26: #{swin_forward.7} parent=0 // pred_check
    _
  $region27: #{swin_forward.7} parent=0 // pred_check_branch
    %473 = sbr.rel (0) target = $region29
  $region28: #{swin_forward.7} parent=0 // pred_region
    _
  $region29: #{swin_forward.7} parent=0 // pred_fallthru
    _

// kernel: swin_forward.8
$region0: #{swin_forward.8}
  #allocation0 [shape = 'u32[]', space=smem, size = 0x4, offset = 0x4, fixed_abs, tag = 'smem constant byte address 0x4 - core index']
  #allocation1 [shape = 'u32[144,128]{1,0:T(1,128)}', space=vmem, size = 0x12000, scoped, tag = 'internal scratch']
  %s0 = inlined_call_operand.vmem [shape: f32[2,64,16], index: 0, kind: input, shape index: {}]
  %s1 = inlined_call_operand.vmem [shape: f32[1,16], index: 1, kind: input, shape index: {}]
  %s2 = inlined_call_operand.vmem [shape: f32[1,16], index: 2, kind: input, shape index: {}]
  %s3 = inlined_call_operand.vmem [shape: bf16[16,48], index: 3, kind: input, shape index: {}]
  %s4 = inlined_call_operand.vmem [shape: f32[1,48], index: 4, kind: input, shape index: {}]
  %s5 = inlined_call_operand.vmem [shape: bf16[16,16], index: 5, kind: input, shape index: {}]
  %s6 = inlined_call_operand.vmem [shape: f32[1,16], index: 6, kind: input, shape index: {}]
  %s7 = inlined_call_operand.vmem [shape: f32[2,16,16], index: 7, kind: input, shape index: {}]
  %s8 = inlined_call_operand.vmem [shape: f32[1,16,16], index: 8, kind: input, shape index: {}]
  %s9 = inlined_call_operand.vmem [shape: f32[1,16], index: 9, kind: input, shape index: {}]
  %s10 = inlined_call_operand.vmem [shape: f32[1,16], index: 10, kind: input, shape index: {}]
  %s11 = inlined_call_operand.vmem [shape: bf16[16,64], index: 11, kind: input, shape index: {}]
  %s12 = inlined_call_operand.vmem [shape: f32[1,64], index: 12, kind: input, shape index: {}]
  %s13 = inlined_call_operand.vmem [shape: bf16[64,16], index: 13, kind: input, shape index: {}]
  %s14 = inlined_call_operand.vmem [shape: f32[1,16], index: 14, kind: input, shape index: {}]
  %s15 = inlined_call_operand.vmem [shape: f32[2,64,16], index: 15, kind: output, shape index: {}]
  %s16 = sld [smem:[#allocation0]]
  $region93: #{swin_forward.8} parent=0
    _
  %s18 = ssub.s32 1, %s16
  %s19 = scalar_select 0, %s18, %s16
  loop: start=0, step=1, limit=4
  $region2: #{swin_forward.8} parent=0 // loop_pre_header
    _
  $region3: #{swin_forward.8} parent=0 // loop_header
    %s21 = sphi 0, %s25
    %p22 = scmp.ge.s32.totalorder %s21, 4
    %s31 = sphi 0, %s33
    %s34 = sphi 0, %s31
    %s35 = sphi 0, %s34
    %s51 = sphi 0, %s35
    %s55 = sphi 0, %s55
    %s57 = sphi 0, %s55
    %s58 = sphi 0, %s57
    %s72 = sphi 0, %s58
    %s76 = sphi 0, %s76
    %s78 = sphi 0, %s76
    %s79 = sphi 0, %s78
    %s93 = sphi 0, %s79
    %s97 = sphi 0, %s97
    %s99 = sphi 0, %s97
    %s100 = sphi 0, %s99
    %s114 = sphi 0, %s100
    %s118 = sphi 0, %s118
    %s120 = sphi 0, %s118
    %s121 = sphi 0, %s120
    %s135 = sphi 0, %s121
    %s139 = sphi 0, %s139
    %s141 = sphi 0, %s139
    %s142 = sphi 0, %s141
    %s156 = sphi 0, %s142
    %s160 = sphi 0, %s160
    %s162 = sphi 0, %s160
    %s163 = sphi 0, %s162
    %s177 = sphi 0, %s163
    %s181 = sphi 0, %s181
    %s183 = sphi 0, %s181
    %s184 = sphi 0, %s183
    %s198 = sphi 0, %s184
    %s202 = sphi 0, %s202
    %s204 = sphi 0, %s202
    %s205 = sphi 0, %s204
    %s219 = sphi 0, %s205
    %s223 = sphi 0, %s223
    %s225 = sphi 0, %s223
    %s226 = sphi 0, %s225
    %s240 = sphi 0, %s226
    %s244 = sphi 0, %s244
    %s246 = sphi 0, %s244
    %s247 = sphi 0, %s246
    %s261 = sphi 0, %s247
    %s265 = sphi 0, %s265
    %s267 = sphi 0, %s265
    %s268 = sphi 0, %s267
    %s282 = sphi 0, %s268
    %s286 = sphi 0, %s286
    %s288 = sphi 0, %s286
    %s289 = sphi 0, %s288
    %s303 = sphi 0, %s289
    %s307 = sphi 0, %s307
    %s309 = sphi 0, %s307
    %s310 = sphi 0, %s309
    %s324 = sphi 0, %s310
    %s328 = sphi 0, %s328
    %s330 = sphi 0, %s328
    %s331 = sphi 0, %s330
    %s345 = sphi 0, %s331
    %s351 = sphi 0, %s353
    %s354 = sphi 0, %s351
    %s355 = sphi 0, %s354
    %s371 = sphi 0, %s355
  $region4: #{swin_forward.8} parent=0 // loop_header_branch
    %24 = sbr.rel (%p22) target = $region8
  $region5: #{swin_forward.8} parent=0 // loop_body
    %s26 = ssub.s32 %s21, 1
    %s27 = ssub.s32 %s21, 2
    %s28 = sadd.s32 %s21, 1
    %s29 = ssub.s32 %s21, %s28
    %p30 = scmp.eq.s32.totalorder %s29, 0
    %s32 = sadd.s32 %s31, 1
    %s33 = scalar_select %p30, %s31, %s32
    %p36 = pneg %p30
    %p37 = scmp.eq.s32.totalorder %s21, 1
    %p38 = por %p36, %p37
    %p39 = scmp.ne.s32.totalorder %s31, %s34
    %p40 = scmp.eq.s32.totalorder %s21, 0
    %p41 = por %p39, %p40
    %p42 = scmp.ne.s32.totalorder %s31, %s34
    %p43 = scmp.eq.s32.totalorder %s26, 1
    %p44 = por %p42, %p43
    %p45 = scmp.ne.s32.totalorder %s34, %s35
    %p46 = scmp.eq.s32.totalorder %s26, 0
    %p47 = por %p45, %p46
    %p48 = scmp.ne.s32.totalorder %s34, %s35
    %p49 = scmp.eq.s32.totalorder %s27, 1
    %p50 = por %p48, %p49
    %p52 = scmp.ne.s32.totalorder %s35, %s51
    %p53 = scmp.eq.s32.totalorder %s27, 0
    %p54 = por %p52, %p53
    %s56 = sadd.s32 %s55, 1
    %p59 = scmp.eq.s32.totalorder %s21, 1
    %p60 = scmp.ne.s32.totalorder %s55, %s57
    %p61 = scmp.eq.s32.totalorder %s21, 0
    %p62 = por %p60, %p61
    %p63 = scmp.ne.s32.totalorder %s55, %s57
    %p64 = scmp.eq.s32.totalorder %s26, 1
    %p65 = por %p63, %p64
    %p66 = scmp.ne.s32.totalorder %s57, %s58
    %p67 = scmp.eq.s32.totalorder %s26, 0
    %p68 = por %p66, %p67
    %p69 = scmp.ne.s32.totalorder %s57, %s58
    %p70 = scmp.eq.s32.totalorder %s27, 1
    %p71 = por %p69, %p70
    %p73 = scmp.ne.s32.totalorder %s58, %s72
    %p74 = scmp.eq.s32.totalorder %s27, 0
    %p75 = por %p73, %p74
    %s77 = sadd.s32 %s76, 1
    %p80 = scmp.eq.s32.totalorder %s21, 1
    %p81 = scmp.ne.s32.totalorder %s76, %s78
    %p82 = scmp.eq.s32.totalorder %s21, 0
    %p83 = por %p81, %p82
    %p84 = scmp.ne.s32.totalorder %s76, %s78
    %p85 = scmp.eq.s32.totalorder %s26, 1
    %p86 = por %p84, %p85
    %p87 = scmp.ne.s32.totalorder %s78, %s79
    %p88 = scmp.eq.s32.totalorder %s26, 0
    %p89 = por %p87, %p88
    %p90 = scmp.ne.s32.totalorder %s78, %s79
    %p91 = scmp.eq.s32.totalorder %s27, 1
    %p92 = por %p90, %p91
    %p94 = scmp.ne.s32.totalorder %s79, %s93
    %p95 = scmp.eq.s32.totalorder %s27, 0
    %p96 = por %p94, %p95
    %s98 = sadd.s32 %s97, 1
    %p101 = scmp.eq.s32.totalorder %s21, 1
    %p102 = scmp.ne.s32.totalorder %s97, %s99
    %p103 = scmp.eq.s32.totalorder %s21, 0
    %p104 = por %p102, %p103
    %p105 = scmp.ne.s32.totalorder %s97, %s99
    %p106 = scmp.eq.s32.totalorder %s26, 1
    %p107 = por %p105, %p106
    %p108 = scmp.ne.s32.totalorder %s99, %s100
    %p109 = scmp.eq.s32.totalorder %s26, 0
    %p110 = por %p108, %p109
    %p111 = scmp.ne.s32.totalorder %s99, %s100
    %p112 = scmp.eq.s32.totalorder %s27, 1
    %p113 = por %p111, %p112
    %p115 = scmp.ne.s32.totalorder %s100, %s114
    %p116 = scmp.eq.s32.totalorder %s27, 0
    %p117 = por %p115, %p116
    %s119 = sadd.s32 %s118, 1
    %p122 = scmp.eq.s32.totalorder %s21, 1
    %p123 = scmp.ne.s32.totalorder %s118, %s120
    %p124 = scmp.eq.s32.totalorder %s21, 0
    %p125 = por %p123, %p124
    %p126 = scmp.ne.s32.totalorder %s118, %s120
    %p127 = scmp.eq.s32.totalorder %s26, 1
    %p128 = por %p126, %p127
    %p129 = scmp.ne.s32.totalorder %s120, %s121
    %p130 = scmp.eq.s32.totalorder %s26, 0
    %p131 = por %p129, %p130
    %p132 = scmp.ne.s32.totalorder %s120, %s121
    %p133 = scmp.eq.s32.totalorder %s27, 1
    %p134 = por %p132, %p133
    %p136 = scmp.ne.s32.totalorder %s121, %s135
    %p137 = scmp.eq.s32.totalorder %s27, 0
    %p138 = por %p136, %p137
    %s140 = sadd.s32 %s139, 1
    %p143 = scmp.eq.s32.totalorder %s21, 1
    %p144 = scmp.ne.s32.totalorder %s139, %s141
    %p145 = scmp.eq.s32.totalorder %s21, 0
    %p146 = por %p144, %p145
    %p147 = scmp.ne.s32.totalorder %s139, %s141
    %p148 = scmp.eq.s32.totalorder %s26, 1
    %p149 = por %p147, %p148
    %p150 = scmp.ne.s32.totalorder %s141, %s142
    %p151 = scmp.eq.s32.totalorder %s26, 0
    %p152 = por %p150, %p151
    %p153 = scmp.ne.s32.totalorder %s141, %s142
    %p154 = scmp.eq.s32.totalorder %s27, 1
    %p155 = por %p153, %p154
    %p157 = scmp.ne.s32.totalorder %s142, %s156
    %p158 = scmp.eq.s32.totalorder %s27, 0
    %p159 = por %p157, %p158
    %s161 = sadd.s32 %s160, 1
    %p164 = scmp.eq.s32.totalorder %s21, 1
    %p165 = scmp.ne.s32.totalorder %s160, %s162
    %p166 = scmp.eq.s32.totalorder %s21, 0
    %p167 = por %p165, %p166
    %p168 = scmp.ne.s32.totalorder %s160, %s162
    %p169 = scmp.eq.s32.totalorder %s26, 1
    %p170 = por %p168, %p169
    %p171 = scmp.ne.s32.totalorder %s162, %s163
    %p172 = scmp.eq.s32.totalorder %s26, 0
    %p173 = por %p171, %p172
    %p174 = scmp.ne.s32.totalorder %s162, %s163
    %p175 = scmp.eq.s32.totalorder %s27, 1
    %p176 = por %p174, %p175
    %p178 = scmp.ne.s32.totalorder %s163, %s177
    %p179 = scmp.eq.s32.totalorder %s27, 0
    %p180 = por %p178, %p179
    %s182 = sadd.s32 %s181, 1
    %p185 = scmp.eq.s32.totalorder %s21, 1
    %p186 = scmp.ne.s32.totalorder %s181, %s183
    %p187 = scmp.eq.s32.totalorder %s21, 0
    %p188 = por %p186, %p187
    %p189 = scmp.ne.s32.totalorder %s181, %s183
    %p190 = scmp.eq.s32.totalorder %s26, 1
    %p191 = por %p189, %p190
    %p192 = scmp.ne.s32.totalorder %s183, %s184
    %p193 = scmp.eq.s32.totalorder %s26, 0
    %p194 = por %p192, %p193
    %p195 = scmp.ne.s32.totalorder %s183, %s184
    %p196 = scmp.eq.s32.totalorder %s27, 1
    %p197 = por %p195, %p196
    %p199 = scmp.ne.s32.totalorder %s184, %s198
    %p200 = scmp.eq.s32.totalorder %s27, 0
    %p201 = por %p199, %p200
    %s203 = sadd.s32 %s202, 1
    %p206 = scmp.eq.s32.totalorder %s21, 1
    %p207 = scmp.ne.s32.totalorder %s202, %s204
    %p208 = scmp.eq.s32.totalorder %s21, 0
    %p209 = por %p207, %p208
    %p210 = scmp.ne.s32.totalorder %s202, %s204
    %p211 = scmp.eq.s32.totalorder %s26, 1
    %p212 = por %p210, %p211
    %p213 = scmp.ne.s32.totalorder %s204, %s205
    %p214 = scmp.eq.s32.totalorder %s26, 0
    %p215 = por %p213, %p214
    %p216 = scmp.ne.s32.totalorder %s204, %s205
    %p217 = scmp.eq.s32.totalorder %s27, 1
    %p218 = por %p216, %p217
    %p220 = scmp.ne.s32.totalorder %s205, %s219
    %p221 = scmp.eq.s32.totalorder %s27, 0
    %p222 = por %p220, %p221
    %s224 = sadd.s32 %s223, 1
    %p227 = scmp.eq.s32.totalorder %s21, 1
    %p228 = scmp.ne.s32.totalorder %s223, %s225
    %p229 = scmp.eq.s32.totalorder %s21, 0
    %p230 = por %p228, %p229
    %p231 = scmp.ne.s32.totalorder %s223, %s225
    %p232 = scmp.eq.s32.totalorder %s26, 1
    %p233 = por %p231, %p232
    %p234 = scmp.ne.s32.totalorder %s225, %s226
    %p235 = scmp.eq.s32.totalorder %s26, 0
    %p236 = por %p234, %p235
    %p237 = scmp.ne.s32.totalorder %s225, %s226
    %p238 = scmp.eq.s32.totalorder %s27, 1
    %p239 = por %p237, %p238
    %p241 = scmp.ne.s32.totalorder %s226, %s240
    %p242 = scmp.eq.s32.totalorder %s27, 0
    %p243 = por %p241, %p242
    %s245 = sadd.s32 %s244, 1
    %p248 = scmp.eq.s32.totalorder %s21, 1
    %p249 = scmp.ne.s32.totalorder %s244, %s246
    %p250 = scmp.eq.s32.totalorder %s21, 0
    %p251 = por %p249, %p250
    %p252 = scmp.ne.s32.totalorder %s244, %s246
    %p253 = scmp.eq.s32.totalorder %s26, 1
    %p254 = por %p252, %p253
    %p255 = scmp.ne.s32.totalorder %s246, %s247
    %p256 = scmp.eq.s32.totalorder %s26, 0
    %p257 = por %p255, %p256
    %p258 = scmp.ne.s32.totalorder %s246, %s247
    %p259 = scmp.eq.s32.totalorder %s27, 1
    %p260 = por %p258, %p259
    %p262 = scmp.ne.s32.totalorder %s247, %s261
    %p263 = scmp.eq.s32.totalorder %s27, 0
    %p264 = por %p262, %p263
    %s266 = sadd.s32 %s265, 1
    %p269 = scmp.eq.s32.totalorder %s21, 1
    %p270 = scmp.ne.s32.totalorder %s265, %s267
    %p271 = scmp.eq.s32.totalorder %s21, 0
    %p272 = por %p270, %p271
    %p273 = scmp.ne.s32.totalorder %s265, %s267
    %p274 = scmp.eq.s32.totalorder %s26, 1
    %p275 = por %p273, %p274
    %p276 = scmp.ne.s32.totalorder %s267, %s268
    %p277 = scmp.eq.s32.totalorder %s26, 0
    %p278 = por %p276, %p277
    %p279 = scmp.ne.s32.totalorder %s267, %s268
    %p280 = scmp.eq.s32.totalorder %s27, 1
    %p281 = por %p279, %p280
    %p283 = scmp.ne.s32.totalorder %s268, %s282
    %p284 = scmp.eq.s32.totalorder %s27, 0
    %p285 = por %p283, %p284
    %s287 = sadd.s32 %s286, 1
    %p290 = scmp.eq.s32.totalorder %s21, 1
    %p291 = scmp.ne.s32.totalorder %s286, %s288
    %p292 = scmp.eq.s32.totalorder %s21, 0
    %p293 = por %p291, %p292
    %p294 = scmp.ne.s32.totalorder %s286, %s288
    %p295 = scmp.eq.s32.totalorder %s26, 1
    %p296 = por %p294, %p295
    %p297 = scmp.ne.s32.totalorder %s288, %s289
    %p298 = scmp.eq.s32.totalorder %s26, 0
    %p299 = por %p297, %p298
    %p300 = scmp.ne.s32.totalorder %s288, %s289
    %p301 = scmp.eq.s32.totalorder %s27, 1
    %p302 = por %p300, %p301
    %p304 = scmp.ne.s32.totalorder %s289, %s303
    %p305 = scmp.eq.s32.totalorder %s27, 0
    %p306 = por %p304, %p305
    %s308 = sadd.s32 %s307, 1
    %p311 = scmp.eq.s32.totalorder %s21, 1
    %p312 = scmp.ne.s32.totalorder %s307, %s309
    %p313 = scmp.eq.s32.totalorder %s21, 0
    %p314 = por %p312, %p313
    %p315 = scmp.ne.s32.totalorder %s307, %s309
    %p316 = scmp.eq.s32.totalorder %s26, 1
    %p317 = por %p315, %p316
    %p318 = scmp.ne.s32.totalorder %s309, %s310
    %p319 = scmp.eq.s32.totalorder %s26, 0
    %p320 = por %p318, %p319
    %p321 = scmp.ne.s32.totalorder %s309, %s310
    %p322 = scmp.eq.s32.totalorder %s27, 1
    %p323 = por %p321, %p322
    %p325 = scmp.ne.s32.totalorder %s310, %s324
    %p326 = scmp.eq.s32.totalorder %s27, 0
    %p327 = por %p325, %p326
    %s329 = sadd.s32 %s328, 1
    %p332 = scmp.eq.s32.totalorder %s21, 1
    %p333 = scmp.ne.s32.totalorder %s328, %s330
    %p334 = scmp.eq.s32.totalorder %s21, 0
    %p335 = por %p333, %p334
    %p336 = scmp.ne.s32.totalorder %s328, %s330
    %p337 = scmp.eq.s32.totalorder %s26, 1
    %p338 = por %p336, %p337
    %p339 = scmp.ne.s32.totalorder %s330, %s331
    %p340 = scmp.eq.s32.totalorder %s26, 0
    %p341 = por %p339, %p340
    %p342 = scmp.ne.s32.totalorder %s330, %s331
    %p343 = scmp.eq.s32.totalorder %s27, 1
    %p344 = por %p342, %p343
    %p346 = scmp.ne.s32.totalorder %s331, %s345
    %p347 = scmp.eq.s32.totalorder %s27, 0
    %p348 = por %p346, %p347
    %s349 = ssub.s32 %s21, %s28
    %p350 = scmp.eq.s32.totalorder %s349, 0
    %s352 = sadd.s32 %s351, 1
    %s353 = scalar_select %p350, %s351, %s352
    %p356 = pneg %p350
    %p357 = scmp.eq.s32.totalorder %s21, 1
    %p358 = por %p356, %p357
    %p359 = scmp.ne.s32.totalorder %s351, %s354
    %p360 = scmp.eq.s32.totalorder %s21, 0
    %p361 = por %p359, %p360
    %p362 = scmp.ne.s32.totalorder %s351, %s354
    %p363 = scmp.eq.s32.totalorder %s26, 1
    %p364 = por %p362, %p363
    %p365 = scmp.ne.s32.totalorder %s354, %s355
    %p366 = scmp.eq.s32.totalorder %s26, 0
    %p367 = por %p365, %p366
    %p368 = scmp.ne.s32.totalorder %s354, %s355
    %p369 = scmp.eq.s32.totalorder %s27, 1
    %p370 = por %p368, %p369
    %p372 = scmp.ne.s32.totalorder %s355, %s371
    %p373 = scmp.eq.s32.totalorder %s27, 0
    %p374 = por %p372, %p373
    %p375 = scmp.le.s32.totalorder 1, %s21
    %p376 = scmp.lt.s32.totalorder %s21, 3
    %p377 = pnand %p375, %p376
    %p378 = pneg %p377
    // Predicated region
    $region9: #{swin_forward.8} parent=5 // pred_check
      _
    $region10: #{swin_forward.8} parent=5 // pred_check_branch
      %380 = sbr.rel (%p377) target = $region12
    $region11: #{swin_forward.8} parent=5 // pred_region
      %s381 = ssub.s32 %s21, 1
      // Predicated region
      $region13: #{swin_forward.8} parent=11 // pred_check
        %p382 = pneg %p68
      $region14: #{swin_forward.8} parent=11 // pred_check_branch
        %384 = sbr.rel (%p382) target = $region16
      $region15: #{swin_forward.8} parent=11 // pred_region
        _
      $region16: #{swin_forward.8} parent=11 // pred_fallthru
        _
      // Predicated region
      $region17: #{swin_forward.8} parent=11 // pred_check
        %p385 = pneg %p89
      $region18: #{swin_forward.8} parent=11 // pred_check_branch
        %387 = sbr.rel (%p385) target = $region20
      $region19: #{swin_forward.8} parent=11 // pred_region
        _
      $region20: #{swin_forward.8} parent=11 // pred_fallthru
        _
      // Predicated region
      $region21: #{swin_forward.8} parent=11 // pred_check
        %p388 = pneg %p110
      $region22: #{swin_forward.8} parent=11 // pred_check_branch
        %390 = sbr.rel (%p388) target = $region24
      $region23: #{swin_forward.8} parent=11 // pred_region
        _
      $region24: #{swin_forward.8} parent=11 // pred_fallthru
        _
      // Predicated region
      $region25: #{swin_forward.8} parent=11 // pred_check
        %p391 = pneg %p131
      $region26: #{swin_forward.8} parent=11 // pred_check_branch
        %393 = sbr.rel (%p391) target = $region28
      $region27: #{swin_forward.8} parent=11 // pred_region
        _
      $region28: #{swin_forward.8} parent=11 // pred_fallthru
        _
      // Predicated region
      $region29: #{swin_forward.8} parent=11 // pred_check
        %p394 = pneg %p152
      $region30: #{swin_forward.8} parent=11 // pred_check_branch
        %396 = sbr.rel (%p394) target = $region32
      $region31: #{swin_forward.8} parent=11 // pred_region
        _
      $region32: #{swin_forward.8} parent=11 // pred_fallthru
        _
      // Predicated region
      $region33: #{swin_forward.8} parent=11 // pred_check
        %p397 = pneg %p173
      $region34: #{swin_forward.8} parent=11 // pred_check_branch
        %399 = sbr.rel (%p397) target = $region36
      $region35: #{swin_forward.8} parent=11 // pred_region
        _
      $region36: #{swin_forward.8} parent=11 // pred_fallthru
        _
      // Predicated region
      $region37: #{swin_forward.8} parent=11 // pred_check
        %p400 = pneg %p194
      $region38: #{swin_forward.8} parent=11 // pred_check_branch
        %402 = sbr.rel (%p400) target = $region40
      $region39: #{swin_forward.8} parent=11 // pred_region
        _
      $region40: #{swin_forward.8} parent=11 // pred_fallthru
        _
      // Predicated region
      $region41: #{swin_forward.8} parent=11 // pred_check
        %p403 = pneg %p215
      $region42: #{swin_forward.8} parent=11 // pred_check_branch
        %405 = sbr.rel (%p403) target = $region44
      $region43: #{swin_forward.8} parent=11 // pred_region
        _
      $region44: #{swin_forward.8} parent=11 // pred_fallthru
        _
      // Predicated region
      $region45: #{swin_forward.8} parent=11 // pred_check
        %p406 = pneg %p236
      $region46: #{swin_forward.8} parent=11 // pred_check_branch
        %408 = sbr.rel (%p406) target = $region48
      $region47: #{swin_forward.8} parent=11 // pred_region
        _
      $region48: #{swin_forward.8} parent=11 // pred_fallthru
        _
      // Predicated region
      $region49: #{swin_forward.8} parent=11 // pred_check
        %p409 = pneg %p257
      $region50: #{swin_forward.8} parent=11 // pred_check_branch
        %411 = sbr.rel (%p409) target = $region52
      $region51: #{swin_forward.8} parent=11 // pred_region
        _
      $region52: #{swin_forward.8} parent=11 // pred_fallthru
        _
      // Predicated region
      $region53: #{swin_forward.8} parent=11 // pred_check
        %p412 = pneg %p278
      $region54: #{swin_forward.8} parent=11 // pred_check_branch
        %414 = sbr.rel (%p412) target = $region56
      $region55: #{swin_forward.8} parent=11 // pred_region
        _
      $region56: #{swin_forward.8} parent=11 // pred_fallthru
        _
      // Predicated region
      $region57: #{swin_forward.8} parent=11 // pred_check
        %p415 = pneg %p299
      $region58: #{swin_forward.8} parent=11 // pred_check_branch
        %417 = sbr.rel (%p415) target = $region60
      $region59: #{swin_forward.8} parent=11 // pred_region
        _
      $region60: #{swin_forward.8} parent=11 // pred_fallthru
        _
      // Predicated region
      $region61: #{swin_forward.8} parent=11 // pred_check
        %p418 = pneg %p320
      $region62: #{swin_forward.8} parent=11 // pred_check_branch
        %420 = sbr.rel (%p418) target = $region64
      $region63: #{swin_forward.8} parent=11 // pred_region
        _
      $region64: #{swin_forward.8} parent=11 // pred_fallthru
        _
      // Predicated region
      $region65: #{swin_forward.8} parent=11 // pred_check
        %p421 = pneg %p341
      $region66: #{swin_forward.8} parent=11 // pred_check_branch
        %423 = sbr.rel (%p421) target = $region68
      $region67: #{swin_forward.8} parent=11 // pred_region
        _
      $region68: #{swin_forward.8} parent=11 // pred_fallthru
        _
    $region12: #{swin_forward.8} parent=5 // pred_fallthru
      _
    %p424 = scmp.lt.s32.totalorder %s21, 2
    // Predicated region
    $region69: #{swin_forward.8} parent=5 // pred_check
      %p425 = pneg %p424
    $region70: #{swin_forward.8} parent=5 // pred_check_branch
      %427 = sbr.rel (%p425) target = $region72
    $region71: #{swin_forward.8} parent=5 // pred_region
      // Predicated region
      $region73: #{swin_forward.8} parent=71 // pred_check
        %p428 = pneg %p41
      $region74: #{swin_forward.8} parent=71 // pred_check_branch
        %430 = sbr.rel (%p428) target = $region76
      $region75: #{swin_forward.8} parent=71 // pred_region
        %p431 = scmp.lt.s32.totalorder %s21, 1
        %s432 = scalar_select %p431, %s21, 1
        %s433 = smul.addr %s432, 8
        %s434 = smul.addr %s433, 8
        %s435 = scalar_lea.vmem %s0, %s434
      $region76: #{swin_forward.8} parent=71 // pred_fallthru
        _
    $region72: #{swin_forward.8} parent=5 // pred_fallthru
      _
    %p436 = scmp.le.s32.totalorder 1, %s21
    %p437 = scmp.lt.s32.totalorder %s21, 3
    %p438 = pnand %p436, %p437
    %p439 = pneg %p438
    // Predicated region
    $region77: #{swin_forward.8} parent=5 // pred_check
      _
    $region78: #{swin_forward.8} parent=5 // pred_check_branch
      %441 = sbr.rel (%p438) target = $region80
    $region79: #{swin_forward.8} parent=5 // pred_region
      %s442 = ssub.s32 %s21, 1
      %p443 = scmp.lt.s32.totalorder %s26, 1
      %s444 = scalar_select %p443, %s26, 1
      %s445 = smul.addr %s444, 8
      %s446 = smul.addr %s445, 8
      %s447 = scalar_lea.vmem %s0, %s446
      %p448 = pneg %p47
      %p449 = pneg %p44
      %p450 = pneg %p68
      %p451 = pneg %p65
      %p452 = pneg %p89
      %p453 = pneg %p86
      %p454 = pneg %p110
      %p455 = pneg %p107
      %p456 = pneg %p131
      %p457 = pneg %p128
      %p458 = pneg %p152
      %p459 = pneg %p149
      %p460 = pneg %p173
      %p461 = pneg %p170
      %p462 = pneg %p194
      %p463 = pneg %p191
      %p464 = pneg %p215
      %p465 = pneg %p212
      %p466 = pneg %p236
      %p467 = pneg %p233
      %p468 = pneg %p257
      %p469 = pneg %p254
      %p470 = pneg %p278
      %p471 = pneg %p275
      %p472 = pneg %p299
      %p473 = pneg %p296
      %p474 = pneg %p320
      %p475 = pneg %p317
      %p476 = pneg %p341
      %p477 = pneg %p338
      %p478 = pneg %p367
      %p479 = pneg %p364
      %p480 = scmp.lt.s32.totalorder %s26, 1
      %s481 = scalar_select %p480, %s26, 1
      %s482 = smul.addr %s481, 8
      %s483 = smul.addr %s482, 8
      %s484 = scalar_lea.vmem %s15, %s483
      %p485 = scmp.lt.s32.totalorder %s26, 1
      %s486 = scalar_select %p485, %s26, 1
      %s487 = smul.addr %s486, 8
      %s488 = smul.addr %s487, 8
      %s489 = scalar_lea.vmem %s0, %s488
      %p490 = scmp.lt.s32.totalorder %s26, 1
      %s491 = scalar_select %p490, %s26, 1
      %s492 = smul.addr %s491, 8
      %s493 = smul.addr %s492, 8
      %s494 = scalar_lea.vmem %s15, %s493
      %v496 = vld [vmem:[%s489] sm:$0xff]
      %v497 = vld [vmem:[%s489 + $0x8] sm:$0xff]
      %v498 = vld [vmem:[%s489 + $0x10] sm:$0xff]
      %v499 = vld [vmem:[%s489 + $0x18] sm:$0xff]
      %v500 = vld [vmem:[%s489 + $0x20] sm:$0xff]
      %v501 = vld [vmem:[%s489 + $0x28] sm:$0xff]
      %v502 = vld [vmem:[%s489 + $0x30] sm:$0xff]
      %v503 = vld [vmem:[%s489 + $0x38] sm:$0xff]
      %v504 = vld [vmem:[%s1] sm:$0x1]
      %v505 = vld [vmem:[%s2] sm:$0x1]
      %vm506 = vcmask 130048
      %v507 = vsel %vm506, %v496, 0.0
      %508 = vadd.xlane.f32.xlu0 %v507
      %v509 = vpop.xlane.xlu0 %508
      %v510 = vsel %vm506, %v497, 0.0
      %511 = vadd.xlane.f32.xlu0 %v510
      %v512 = vpop.xlane.xlu0 %511
      %v513 = vsel %vm506, %v498, 0.0
      %514 = vadd.xlane.f32.xlu0 %v513
      %v515 = vpop.xlane.xlu0 %514
      %v516 = vsel %vm506, %v499, 0.0
      %517 = vadd.xlane.f32.xlu0 %v516
      %v518 = vpop.xlane.xlu0 %517
      %v519 = vsel %vm506, %v500, 0.0
      %520 = vadd.xlane.f32.xlu0 %v519
      %v521 = vpop.xlane.xlu0 %520
      %v522 = vsel %vm506, %v501, 0.0
      %523 = vadd.xlane.f32.xlu0 %v522
      %v524 = vpop.xlane.xlu0 %523
      %v525 = vsel %vm506, %v502, 0.0
      %526 = vadd.xlane.f32.xlu0 %v525
      %v527 = vpop.xlane.xlu0 %526
      %v528 = vsel %vm506, %v503, 0.0
      %529 = vadd.xlane.f32.xlu0 %v528
      %v530 = vpop.xlane.xlu0 %529
      %v531 = vrcp.pop 16.0
      %v532 = vmul.f32 %v509, %v531
      %v533 = vmul.f32 %v512, %v531
      %v534 = vmul.f32 %v515, %v531
      %v535 = vmul.f32 %v518, %v531
      %v536 = vmul.f32 %v521, %v531
      %v537 = vmul.f32 %v524, %v531
      %v538 = vmul.f32 %v527, %v531
      %v539 = vmul.f32 %v530, %v531
      %v540 = vsub.f32 %v496, %v532
      %v541 = vsub.f32 %v497, %v533
      %v542 = vsub.f32 %v498, %v534
      %v543 = vsub.f32 %v499, %v535
      %v544 = vsub.f32 %v500, %v536
      %v545 = vsub.f32 %v501, %v537
      %v546 = vsub.f32 %v502, %v538
      %v547 = vsub.f32 %v503, %v539
      %v548 = vmul.f32 %v540, %v540
      %v549 = vmul.f32 %v541, %v541
      %v550 = vmul.f32 %v542, %v542
      %v551 = vmul.f32 %v543, %v543
      %v552 = vmul.f32 %v544, %v544
      %v553 = vmul.f32 %v545, %v545
      %v554 = vmul.f32 %v546, %v546
      %v555 = vmul.f32 %v547, %v547
      %v556 = vsel %vm506, %v548, 0.0
      %557 = vadd.xlane.f32.xlu0 %v556
      %v558 = vpop.xlane.xlu0 %557
      %v559 = vsel %vm506, %v549, 0.0
      %560 = vadd.xlane.f32.xlu0 %v559
      %v561 = vpop.xlane.xlu0 %560
      %v562 = vsel %vm506, %v550, 0.0
      %563 = vadd.xlane.f32.xlu0 %v562
      %v564 = vpop.xlane.xlu0 %563
      %v565 = vsel %vm506, %v551, 0.0
      %566 = vadd.xlane.f32.xlu0 %v565
      %v567 = vpop.xlane.xlu0 %566
      %v568 = vsel %vm506, %v552, 0.0
      %569 = vadd.xlane.f32.xlu0 %v568
      %v570 = vpop.xlane.xlu0 %569
      %v571 = vsel %vm506, %v553, 0.0
      %572 = vadd.xlane.f32.xlu0 %v571
      %v573 = vpop.xlane.xlu0 %572
      %v574 = vsel %vm506, %v554, 0.0
      %575 = vadd.xlane.f32.xlu0 %v574
      %v576 = vpop.xlane.xlu0 %575
      %v577 = vsel %vm506, %v555, 0.0
      %578 = vadd.xlane.f32.xlu0 %v577
      %v579 = vpop.xlane.xlu0 %578
      %v580 = vmul.f32 %v558, %v531
      %v581 = vmul.f32 %v561, %v531
      %v582 = vmul.f32 %v564, %v531
      %v583 = vmul.f32 %v567, %v531
      %v584 = vmul.f32 %v570, %v531
      %v585 = vmul.f32 %v573, %v531
      %v586 = vmul.f32 %v576, %v531
      %v587 = vmul.f32 %v579, %v531
      %v588 = vadd.f32 %v580, 1e-05
      %v589 = vadd.f32 %v581, 1e-05
      %v590 = vadd.f32 %v582, 1e-05
      %v591 = vadd.f32 %v583, 1e-05
      %v592 = vadd.f32 %v584, 1e-05
      %v593 = vadd.f32 %v585, 1e-05
      %v594 = vadd.f32 %v586, 1e-05
      %v595 = vadd.f32 %v587, 1e-05
      %v596 = vrsqrt.pop %v588
      %v597 = vrsqrt.pop %v589
      %v598 = vrsqrt.pop %v590
      %v599 = vrsqrt.pop %v591
      %v600 = vrsqrt.pop %v592
      %v601 = vrsqrt.pop %v593
      %v602 = vrsqrt.pop %v594
      %v603 = vrsqrt.pop %v595
      %v604 = vmul.f32 %v540, %v596
      %v605 = vmul.f32 %v541, %v597
      %v606 = vmul.f32 %v542, %v598
      %v607 = vmul.f32 %v543, %v599
      %v608 = vmul.f32 %v544, %v600
      %v609 = vmul.f32 %v545, %v601
      %v610 = vmul.f32 %v546, %v602
      %v611 = vmul.f32 %v547, %v603
      %v613 = vlaneseq
      %v614 = vshrl.u32 %v613, 7
      %v615 = vsub.s32 0, %v614
      %v616 = vrot.slane %v504, %v615
      %v618 = vmul.f32 %v604, %v616
      %v619 = vmul.f32 %v605, %v616
      %v620 = vmul.f32 %v606, %v616
      %v621 = vmul.f32 %v607, %v616
      %v622 = vmul.f32 %v608, %v616
      %v623 = vmul.f32 %v609, %v616
      %v624 = vmul.f32 %v610, %v616
      %v625 = vmul.f32 %v611, %v616
      %v627 = vlaneseq
      %v628 = vshrl.u32 %v627, 7
      %v629 = vsub.s32 0, %v628
      %v630 = vrot.slane %v505, %v629
      %v632 = vadd.f32 %v618, %v630
      %v633 = vadd.f32 %v619, %v630
      %v634 = vadd.f32 %v620, %v630
      %v635 = vadd.f32 %v621, %v630
      %v636 = vadd.f32 %v622, %v630
      %v637 = vadd.f32 %v623, %v630
      %v638 = vadd.f32 %v624, %v630
      %v639 = vadd.f32 %v625, %v630
      %v640 = vpack.c.bf16 %v633, %v632
      %v641 = vpack.c.bf16 %v635, %v634
      %v642 = vpack.c.bf16 %v637, %v636
      %v643 = vpack.c.bf16 %v639, %v638
      %v644 = vld [vmem:[%s3] sm:$0xf]
      %v645 = vld [vmem:[%s3 + $0x4] sm:$0xf]
      %v646 = vld [vmem:[%s4] sm:$0x1]
      %v648 = vlaneseq
      %v649 = vshrl.u32 %v648, 7
      %v650 = vsub.s32 0, %v649
      %v651 = vrot.slane %v646, %v650
      %v655 = vunpack.c.l.b16 %v644
      %v656 = vunpack.c.l.b16 %v645
      %v657 = vpack.c.b16 %v656, %v655
      %v660 = vsel %vm506, %v640, 0
      %v663 = vsel %vm506, %v641, 0
      %v666 = vsel %vm506, %v642, 0
      %v669 = vsel %vm506, %v643, 0
      %671 = vmatprep.subr.bf16.mxu0 0
      %672 = vmatpush1.bf16.msra.mxu0 %v657
      %673 = vmatprep.subr.bf16.mxu0 0
      %674 = vmatpush1.bf16.msra.mxu0 0
      %675 = vmatprep.subr.bf16.mxu0 0
      %676 = vmatpush1.bf16.msra.mxu0 0
      %677 = vmatprep.subr.bf16.mxu0 0
      %678 = vmatpush1.bf16.msra.mxu0 0
      %679 = vmatprep.subr.bf16.mxu0 0
      %680 = vmatpush1.bf16.msra.mxu0 0
      %681 = vmatprep.subr.bf16.mxu0 0
      %682 = vmatpush1.bf16.msra.mxu0 0
      %683 = vmatprep.subr.bf16.mxu0 0
      %684 = vmatpush1.bf16.msra.mxu0 0
      %685 = vmatprep.subr.bf16.mxu0 0
      %686 = vmatpush1.bf16.msra.mxu0 0
      %687 = vmatprep.subr.bf16.mxu0 0
      %688 = vmatpush1.bf16.msra.mxu0 0
      %689 = vmatprep.subr.bf16.mxu0 0
      %690 = vmatpush1.bf16.msra.mxu0 0
      %691 = vmatprep.subr.bf16.mxu0 0
      %692 = vmatpush1.bf16.msra.mxu0 0
      %693 = vmatprep.subr.bf16.mxu0 0
      %694 = vmatpush1.bf16.msra.mxu0 0
      %695 = vmatprep.subr.bf16.mxu0 0
      %696 = vmatpush1.bf16.msra.mxu0 0
      %697 = vmatprep.subr.bf16.mxu0 0
      %698 = vmatpush1.bf16.msra.mxu0 0
      %699 = vmatprep.subr.bf16.mxu0 0
      %700 = vmatpush1.bf16.msra.mxu0 0
      %701 = vmatprep.subr.bf16.mxu0 0
      %702 = vmatpush1.bf16.msra.mxu0 0
      %703 = vmatprep.mubr.bf16.mxu0 0
      %704 = vmatmul.mubr.bf16.gmra.mrb[0].mxu0 %v660
      %v705 = vpop.f32.mrb[0].mxu0
      %v706 = vadd.f32 %v651, %v705
      %v707 = vpop.f32.mrb[0].mxu0
      %v708 = vpop.f32.mrb[0].mxu0
      %v709 = vadd.f32 %v651, %v708
      %v710 = vpop.f32.mrb[0].mxu0
      %711 = vmatprep.mubr.bf16.mxu0 0
      %712 = vmatmul.mubr.bf16.gmra.mrb[0].mxu0 %v663
      %v713 = vpop.f32.mrb[0].mxu0
      %v714 = vadd.f32 %v651, %v713
      %v715 = vpop.f32.mrb[0].mxu0
      %v716 = vpop.f32.mrb[0].mxu0
      %v717 = vadd.f32 %v651, %v716
      %v718 = vpop.f32.mrb[0].mxu0
      %719 = vmatprep.mubr.bf16.mxu0 0
      %720 = vmatmul.mubr.bf16.gmra.mrb[0].mxu0 %v666
      %v721 = vpop.f32.mrb[0].mxu0
      %v722 = vadd.f32 %v651, %v721
      %v723 = vpop.f32.mrb[0].mxu0
      %v724 = vpop.f32.mrb[0].mxu0
      %v725 = vadd.f32 %v651, %v724
      %v726 = vpop.f32.mrb[0].mxu0
      %727 = vmatprep.mubr.bf16.mxu0 0
      %728 = vmatmul.mubr.bf16.gmra.mrb[0].mxu0 %v669
      %v729 = vpop.f32.mrb[0].mxu0
      %v730 = vadd.f32 %v651, %v729
      %v731 = vpop.f32.mrb[0].mxu0
      %v732 = vpop.f32.mrb[0].mxu0
      %v733 = vadd.f32 %v651, %v732
      %v734 = vpop.f32.mrb[0].mxu0
      %735 = vdwg.mxu0
      %v736 = vld [vmem:[%s7] sm:$0xff]
      %v737 = vld [vmem:[%s7 + $0x8] sm:$0xff]
      %v738 = vld [vmem:[%s7 + $0x10] sm:$0xff]
      %v739 = vld [vmem:[%s7 + $0x18] sm:$0xff]
      %v740 = vld [vmem:[%s5] sm:$0xf]
      %v741 = vld [vmem:[%s5 + $0x4] sm:$0xf]
      %v742 = vpack.c.bf16 %v709, %v706
      %744 = vrot.lane.b32.xlu0 %v742, 112
      %v745 = vpop.permute.xlu0 %744
      %vm746 = vcmask 64512
      %v748 = vsel %vm746, %v742, 0
      %v751 = vsel %vm746, %v745, 0
      %753 = vmatprep.subr.bf16.mxu0 0
      %754 = vmatpush1.bf16.xpose.msra.mxu0 %v751
      %755 = vmatprep.subr.bf16.mxu0 0
      %756 = vmatpush1.bf16.xpose.msra.mxu0 0
      %757 = vmatprep.subr.bf16.mxu0 0
      %758 = vmatpush1.bf16.xpose.msra.mxu0 0
      %759 = vmatprep.subr.bf16.mxu0 0
      %760 = vmatpush1.bf16.xpose.msra.mxu0 0
      %761 = vmatprep.subr.bf16.mxu0 0
      %762 = vmatpush1.bf16.xpose.msra.mxu0 0
      %763 = vmatprep.subr.bf16.mxu0 0
      %764 = vmatpush1.bf16.xpose.msra.mxu0 0
      %765 = vmatprep.subr.bf16.mxu0 0
      %766 = vmatpush1.bf16.xpose.msra.mxu0 0
      %767 = vmatprep.subr.bf16.mxu0 0
      %768 = vmatpush1.bf16.xpose.msra.mxu0 0
      %769 = vmatprep.subr.bf16.mxu0 0
      %770 = vmatpush1.bf16.xpose.msra.mxu0 0
      %771 = vmatprep.subr.bf16.mxu0 0
      %772 = vmatpush1.bf16.xpose.msra.mxu0 0
      %773 = vmatprep.subr.bf16.mxu0 0
      %774 = vmatpush1.bf16.xpose.msra.mxu0 0
      %775 = vmatprep.subr.bf16.mxu0 0
      %776 = vmatpush1.bf16.xpose.msra.mxu0 0
      %777 = vmatprep.subr.bf16.mxu0 0
      %778 = vmatpush1.bf16.xpose.msra.mxu0 0
      %779 = vmatprep.subr.bf16.mxu0 0
      %780 = vmatpush1.bf16.xpose.msra.mxu0 0
      %781 = vmatprep.subr.bf16.mxu0 0
      %782 = vmatpush1.bf16.xpose.msra.mxu0 0
      %783 = vmatprep.subr.bf16.mxu0 0
      %784 = vmatpush1.bf16.xpose.msra.mxu0 0
      %785 = vmatprep.mubr.bf16.mxu0 0
      %786 = vmatmul.mubr.bf16.gmra.mrb[0].mxu0 %v748
      %v787 = vpop.f32.mrb[0].mxu0
      %v788 = vadd.f32 0.0, %v787
      %v789 = vpop.f32.mrb[0].mxu0
      %v790 = vpop.f32.mrb[0].mxu0
      %v791 = vadd.f32 0.0, %v790
      %v792 = vpop.f32.mrb[0].mxu0
      %793 = vdwg.mxu0
      %v794 = vmul.f32 %v788, 0.35355338
      %v795 = vmul.f32 %v791, 0.35355338
      %v796 = vadd.f32 %v794, %v736
      %v797 = vadd.f32 %v795, %v737
      %v798 = vsel %vm506, %v796, -inf
      %799 = vmax.xlane.f32.xlu0 %v798
      %v800 = vpop.xlane.xlu0 %799
      %v801 = vsel %vm506, %v797, -inf
      %802 = vmax.xlane.f32.xlu0 %v801
      %v803 = vpop.xlane.xlu0 %802
      %v804 = vsub.f32 %v796, %v800
      %v805 = vsub.f32 %v797, %v803
      %v806 = vmul.f32 %v804, 1.442695
      %v807 = vpow.pop %v806
      %v808 = vmul.f32 %v805, 1.442695
      %v809 = vpow.pop %v808
      %v810 = vsel %vm506, %v807, 0.0
      %811 = vadd.xlane.f32.xlu0 %v810
      %v812 = vpop.xlane.xlu0 %811
      %v813 = vsel %vm506, %v809, 0.0
      %814 = vadd.xlane.f32.xlu0 %v813
      %v815 = vpop.xlane.xlu0 %814
      %v816 = vrcp.pop %v812
      %v817 = vrcp.pop %v815
      %v818 = vmul.f32 %v807, %v816
      %v819 = vmul.f32 %v809, %v817
      %v820 = vpack.c.bf16 %v819, %v818
      %821 = vrot.lane.b32.xlu0 %v742, 96
      %v822 = vpop.permute.xlu0 %821
      %v825 = vsel %vm506, %v820, 0
      %827 = vmatprep.subr.bf16.mxu0 0
      %828 = vmatpush1.bf16.msra.mxu0 %v822
      %829 = vmatprep.subr.bf16.mxu0 0
      %830 = vmatpush1.bf16.msra.mxu0 0
      %831 = vmatprep.subr.bf16.mxu0 0
      %832 = vmatpush1.bf16.msra.mxu0 0
      %833 = vmatprep.subr.bf16.mxu0 0
      %834 = vmatpush1.bf16.msra.mxu0 0
      %835 = vmatprep.subr.bf16.mxu0 0
      %836 = vmatpush1.bf16.msra.mxu0 0
      %837 = vmatprep.subr.bf16.mxu0 0
      %838 = vmatpush1.bf16.msra.mxu0 0
      %839 = vmatprep.subr.bf16.mxu0 0
      %840 = vmatpush1.bf16.msra.mxu0 0
      %841 = vmatprep.subr.bf16.mxu0 0
      %842 = vmatpush1.bf16.msra.mxu0 0
      %843 = vmatprep.subr.bf16.mxu0 0
      %844 = vmatpush1.bf16.msra.mxu0 0
      %845 = vmatprep.subr.bf16.mxu0 0
      %846 = vmatpush1.bf16.msra.mxu0 0
      %847 = vmatprep.subr.bf16.mxu0 0
      %848 = vmatpush1.bf16.msra.mxu0 0
      %849 = vmatprep.subr.bf16.mxu0 0
      %850 = vmatpush1.bf16.msra.mxu0 0
      %851 = vmatprep.subr.bf16.mxu0 0
      %852 = vmatpush1.bf16.msra.mxu0 0
      %853 = vmatprep.subr.bf16.mxu0 0
      %854 = vmatpush1.bf16.msra.mxu0 0
      %855 = vmatprep.subr.bf16.mxu0 0
      %856 = vmatpush1.bf16.msra.mxu0 0
      %857 = vmatprep.subr.bf16.mxu0 0
      %858 = vmatpush1.bf16.msra.mxu0 0
      %859 = vmatprep.mubr.bf16.mxu0 0
      %860 = vmatmul.mubr.bf16.gmra.mrb[0].mxu0 %v825
      %v861 = vpop.f32.mrb[0].mxu0
      %v862 = vadd.f32 0.0, %v861
      %v863 = vpop.f32.mrb[0].mxu0
      %v864 = vpop.f32.mrb[0].mxu0
      %v865 = vadd.f32 0.0, %v864
      %v866 = vpop.f32.mrb[0].mxu0
      %867 = vdwg.mxu0
      %v868 = vpack.c.bf16 %v865, %v862
      %869 = vrot.lane.b32.xlu0 %v742, 120
      %v870 = vpop.permute.xlu0 %869
      %871 = vrot.lane.b32.xlu0 %v742, 104
      %v872 = vpop.permute.xlu0 %871
      %v874 = vsel %vm746, %v870, 0
      %v877 = vsel %vm746, %v872, 0
      %879 = vmatprep.subr.bf16.mxu0 0
      %880 = vmatpush1.bf16.xpose.msra.mxu0 %v877
      %881 = vmatprep.subr.bf16.mxu0 0
      %882 = vmatpush1.bf16.xpose.msra.mxu0 0
      %883 = vmatprep.subr.bf16.mxu0 0
      %884 = vmatpush1.bf16.xpose.msra.mxu0 0
      %885 = vmatprep.subr.bf16.mxu0 0
      %886 = vmatpush1.bf16.xpose.msra.mxu0 0
      %887 = vmatprep.subr.bf16.mxu0 0
      %888 = vmatpush1.bf16.xpose.msra.mxu0 0
      %889 = vmatprep.subr.bf16.mxu0 0
      %890 = vmatpush1.bf16.xpose.msra.mxu0 0
      %891 = vmatprep.subr.bf16.mxu0 0
      %892 = vmatpush1.bf16.xpose.msra.mxu0 0
      %893 = vmatprep.subr.bf16.mxu0 0
      %894 = vmatpush1.bf16.xpose.msra.mxu0 0
      %895 = vmatprep.subr.bf16.mxu0 0
      %896 = vmatpush1.bf16.xpose.msra.mxu0 0
      %897 = vmatprep.subr.bf16.mxu0 0
      %898 = vmatpush1.bf16.xpose.msra.mxu0 0
      %899 = vmatprep.subr.bf16.mxu0 0
      %900 = vmatpush1.bf16.xpose.msra.mxu0 0
      %901 = vmatprep.subr.bf16.mxu0 0
      %902 = vmatpush1.bf16.xpose.msra.mxu0 0
      %903 = vmatprep.subr.bf16.mxu0 0
      %904 = vmatpush1.bf16.xpose.msra.mxu0 0
      %905 = vmatprep.subr.bf16.mxu0 0
      %906 = vmatpush1.bf16.xpose.msra.mxu0 0
      %907 = vmatprep.subr.bf16.mxu0 0
      %908 = vmatpush1.bf16.xpose.msra.mxu0 0
      %909 = vmatprep.subr.bf16.mxu0 0
      %910 = vmatpush1.bf16.xpose.msra.mxu0 0
      %911 = vmatprep.mubr.bf16.mxu0 0
      %912 = vmatmul.mubr.bf16.gmra.mrb[0].mxu0 %v874
      %v913 = vpop.f32.mrb[0].mxu0
      %v914 = vadd.f32 0.0, %v913
      %v915 = vpop.f32.mrb[0].mxu0
      %v916 = vpop.f32.mrb[0].mxu0
      %v917 = vadd.f32 0.0, %v916
      %v918 = vpop.f32.mrb[0].mxu0
      %919 = vdwg.mxu0
      %v920 = vmul.f32 %v914, 0.35355338
      %v921 = vmul.f32 %v917, 0.35355338
      %v922 = vadd.f32 %v920, %v738
      %v923 = vadd.f32 %v921, %v739
      %v924 = vsel %vm506, %v922, -inf
      %925 = vmax.xlane.f32.xlu0 %v924
      %v926 = vpop.xlane.xlu0 %925
      %v927 = vsel %vm506, %v923, -inf
      %928 = vmax.xlane.f32.xlu0 %v927
      %v929 = vpop.xlane.xlu0 %928
      %v930 = vsub.f32 %v922, %v926
      %v931 = vsub.f32 %v923, %v929
      %v932 = vmul.f32 %v930, 1.442695
      %v933 = vpow.pop %v932
      %v934 = vmul.f32 %v931, 1.442695
      %v935 = vpow.pop %v934
      %v936 = vsel %vm506, %v933, 0.0
      %937 = vadd.xlane.f32.xlu0 %v936
      %v938 = vpop.xlane.xlu0 %937
      %v939 = vsel %vm506, %v935, 0.0
      %940 = vadd.xlane.f32.xlu0 %v939
      %v941 = vpop.xlane.xlu0 %940
      %v942 = vrcp.pop %v938
      %v943 = vrcp.pop %v941
      %v944 = vmul.f32 %v933, %v942
      %v945 = vmul.f32 %v935, %v943
      %v946 = vpack.c.bf16 %v945, %v944
      %947 = vrot.lane.b32.xlu0 %v742, 88
      %v948 = vpop.permute.xlu0 %947
      %v951 = vsel %vm506, %v946, 0
      %953 = vmatprep.subr.bf16.mxu0 0
      %954 = vmatpush1.bf16.msra.mxu0 %v948
      %955 = vmatprep.subr.bf16.mxu0 0
      %956 = vmatpush1.bf16.msra.mxu0 0
      %957 = vmatprep.subr.bf16.mxu0 0
      %958 = vmatpush1.bf16.msra.mxu0 0
      %959 = vmatprep.subr.bf16.mxu0 0
      %960 = vmatpush1.bf16.msra.mxu0 0
      %961 = vmatprep.subr.bf16.mxu0 0
      %962 = vmatpush1.bf16.msra.mxu0 0
      %963 = vmatprep.subr.bf16.mxu0 0
      %964 = vmatpush1.bf16.msra.mxu0 0
      %965 = vmatprep.subr.bf16.mxu0 0
      %966 = vmatpush1.bf16.msra.mxu0 0
      %967 = vmatprep.subr.bf16.mxu0 0
      %968 = vmatpush1.bf16.msra.mxu0 0
      %969 = vmatprep.subr.bf16.mxu0 0
      %970 = vmatpush1.bf16.msra.mxu0 0
      %971 = vmatprep.subr.bf16.mxu0 0
      %972 = vmatpush1.bf16.msra.mxu0 0
      %973 = vmatprep.subr.bf16.mxu0 0
      %974 = vmatpush1.bf16.msra.mxu0 0
      %975 = vmatprep.subr.bf16.mxu0 0
      %976 = vmatpush1.bf16.msra.mxu0 0
      %977 = vmatprep.subr.bf16.mxu0 0
      %978 = vmatpush1.bf16.msra.mxu0 0
      %979 = vmatprep.subr.bf16.mxu0 0
      %980 = vmatpush1.bf16.msra.mxu0 0
      %981 = vmatprep.subr.bf16.mxu0 0
      %982 = vmatpush1.bf16.msra.mxu0 0
      %983 = vmatprep.subr.bf16.mxu0 0
      %984 = vmatpush1.bf16.msra.mxu0 0
      %985 = vmatprep.mubr.bf16.mxu0 0
      %986 = vmatmul.mubr.bf16.gmra.mrb[0].mxu0 %v951
      %v987 = vpop.f32.mrb[0].mxu0
      %v988 = vadd.f32 0.0, %v987
      %v989 = vpop.f32.mrb[0].mxu0
      %v990 = vpop.f32.mrb[0].mxu0
      %v991 = vadd.f32 0.0, %v990
      %v992 = vpop.f32.mrb[0].mxu0
      %993 = vdwg.mxu0
      %v994 = vpack.c.bf16 %v991, %v988
      %v996 = vsel %vm746, %v994, 0
      %vm998 = vcmask 1043456
      %v1000 = vsel %vm998, %v741, 0
      %1002 = vmatprep.subr.bf16.mxu0 0
      %1003 = vmatpush1.bf16.msra.mxu0 %v1000
      %1004 = vmatprep.subr.bf16.mxu0 0
      %1005 = vmatpush1.bf16.msra.mxu0 0
      %1006 = vmatprep.subr.bf16.mxu0 0
      %1007 = vmatpush1.bf16.msra.mxu0 0
      %1008 = vmatprep.subr.bf16.mxu0 0
      %1009 = vmatpush1.bf16.msra.mxu0 0
      %1010 = vmatprep.subr.bf16.mxu0 0
      %1011 = vmatpush1.bf16.msra.mxu0 0
      %1012 = vmatprep.subr.bf16.mxu0 0
      %1013 = vmatpush1.bf16.msra.mxu0 0
      %1014 = vmatprep.subr.bf16.mxu0 0
      %1015 = vmatpush1.bf16.msra.mxu0 0
      %1016 = vmatprep.subr.bf16.mxu0 0
      %1017 = vmatpush1.bf16.msra.mxu0 0
      %1018 = vmatprep.subr.bf16.mxu0 0
      %1019 = vmatpush1.bf16.msra.mxu0 0
      %1020 = vmatprep.subr.bf16.mxu0 0
      %1021 = vmatpush1.bf16.msra.mxu0 0
      %1022 = vmatprep.subr.bf16.mxu0 0
      %1023 = vmatpush1.bf16.msra.mxu0 0
      %1024 = vmatprep.subr.bf16.mxu0 0
      %1025 = vmatpush1.bf16.msra.mxu0 0
      %1026 = vmatprep.subr.bf16.mxu0 0
      %1027 = vmatpush1.bf16.msra.mxu0 0
      %1028 = vmatprep.subr.bf16.mxu0 0
      %1029 = vmatpush1.bf16.msra.mxu0 0
      %1030 = vmatprep.subr.bf16.mxu0 0
      %1031 = vmatpush1.bf16.msra.mxu0 0
      %1032 = vmatprep.subr.bf16.mxu0 0
      %1033 = vmatpush1.bf16.msra.mxu0 0
      %1034 = vmatprep.mubr.bf16.mxu0 0
      %1035 = vmatmul.mubr.bf16.gmra.mrb[0].mxu0 %v996
      %v1036 = vpop.f32.mrb[0].mxu0
      %v1037 = vadd.f32 0.0, %v1036
      %v1038 = vpop.f32.mrb[0].mxu0
      %v1039 = vpop.f32.mrb[0].mxu0
      %v1040 = vadd.f32 0.0, %v1039
      %v1041 = vpop.f32.mrb[0].mxu0
      %1042 = vdwg.mxu0
      %v1044 = vsel %vm746, %v868, 0
      %v1047 = vsel %vm998, %v740, 0
      %1049 = vmatprep.subr.bf16.mxu0 0
      %1050 = vmatpush1.bf16.msra.mxu0 %v1047
      %1051 = vmatprep.subr.bf16.mxu0 0
      %1052 = vmatpush1.bf16.msra.mxu0 0
      %1053 = vmatprep.subr.bf16.mxu0 0
      %1054 = vmatpush1.bf16.msra.mxu0 0
      %1055 = vmatprep.subr.bf16.mxu0 0
      %1056 = vmatpush1.bf16.msra.mxu0 0
      %1057 = vmatprep.subr.bf16.mxu0 0
      %1058 = vmatpush1.bf16.msra.mxu0 0
      %1059 = vmatprep.subr.bf16.mxu0 0
      %1060 = vmatpush1.bf16.msra.mxu0 0
      %1061 = vmatprep.subr.bf16.mxu0 0
      %1062 = vmatpush1.bf16.msra.mxu0 0
      %1063 = vmatprep.subr.bf16.mxu0 0
      %1064 = vmatpush1.bf16.msra.mxu0 0
      %1065 = vmatprep.subr.bf16.mxu0 0
      %1066 = vmatpush1.bf16.msra.mxu0 0
      %1067 = vmatprep.subr.bf16.mxu0 0
      %1068 = vmatpush1.bf16.msra.mxu0 0
      %1069 = vmatprep.subr.bf16.mxu0 0
      %1070 = vmatpush1.bf16.msra.mxu0 0
      %1071 = vmatprep.subr.bf16.mxu0 0
      %1072 = vmatpush1.bf16.msra.mxu0 0
      %1073 = vmatprep.subr.bf16.mxu0 0
      %1074 = vmatpush1.bf16.msra.mxu0 0
      %1075 = vmatprep.subr.bf16.mxu0 0
      %1076 = vmatpush1.bf16.msra.mxu0 0
      %1077 = vmatprep.subr.bf16.mxu0 0
      %1078 = vmatpush1.bf16.msra.mxu0 0
      %1079 = vmatprep.subr.bf16.mxu0 0
      %1080 = vmatpush1.bf16.msra.mxu0 0
      %1081 = vmatprep.mubr.bf16.mxu0 0
      %1082 = vmatmul.mubr.bf16.gmra.mrb[0].mxu0 %v1044
      %v1083 = vpop.f32.mrb[0].mxu0
      %v1084 = vadd.f32 %v1037, %v1083
      %v1085 = vpop.f32.mrb[0].mxu0
      %v1086 = vpop.f32.mrb[0].mxu0
      %v1087 = vadd.f32 %v1040, %v1086
      %v1088 = vpop.f32.mrb[0].mxu0
      %1089 = vdwg.mxu0
      %v1090 = vpack.c.bf16 %v717, %v714
      %1092 = vrot.lane.b32.xlu0 %v1090, 112
      %v1093 = vpop.permute.xlu0 %1092
      %v1095 = vsel %vm746, %v1090, 0
      %v1098 = vsel %vm746, %v1093, 0
      %1100 = vmatprep.subr.bf16.mxu0 0
      %1101 = vmatpush1.bf16.xpose.msra.mxu0 %v1098
      %1102 = vmatprep.subr.bf16.mxu0 0
      %1103 = vmatpush1.bf16.xpose.msra.mxu0 0
      %1104 = vmatprep.subr.bf16.mxu0 0
      %1105 = vmatpush1.bf16.xpose.msra.mxu0 0
      %1106 = vmatprep.subr.bf16.mxu0 0
      %1107 = vmatpush1.bf16.xpose.msra.mxu0 0
      %1108 = vmatprep.subr.bf16.mxu0 0
      %1109 = vmatpush1.bf16.xpose.msra.mxu0 0
      %1110 = vmatprep.subr.bf16.mxu0 0
      %1111 = vmatpush1.bf16.xpose.msra.mxu0 0
      %1112 = vmatprep.subr.bf16.mxu0 0
      %1113 = vmatpush1.bf16.xpose.msra.mxu0 0
      %1114 = vmatprep.subr.bf16.mxu0 0
      %1115 = vmatpush1.bf16.xpose.msra.mxu0 0
      %1116 = vmatprep.subr.bf16.mxu0 0
      %1117 = vmatpush1.bf16.xpose.msra.mxu0 0
      %1118 = vmatprep.subr.bf16.mxu0 0
      %1119 = vmatpush1.bf16.xpose.msra.mxu0 0
      %1120 = vmatprep.subr.bf16.mxu0 0
      %1121 = vmatpush1.bf16.xpose.msra.mxu0 0
      %1122 = vmatprep.subr.bf16.mxu0 0
      %1123 = vmatpush1.bf16.xpose.msra.mxu0 0
      %1124 = vmatprep.subr.bf16.mxu0 0
      %1125 = vmatpush1.bf16.xpose.msra.mxu0 0
      %1126 = vmatprep.subr.bf16.mxu0 0
      %1127 = vmatpush1.bf16.xpose.msra.mxu0 0
      %1128 = vmatprep.subr.bf16.mxu0 0
      %1129 = vmatpush1.bf16.xpose.msra.mxu0 0
      %1130 = vmatprep.subr.bf16.mxu0 0
      %1131 = vmatpush1.bf16.xpose.msra.mxu0 0
      %1132 = vmatprep.mubr.bf16.mxu0 0
      %1133 = vmatmul.mubr.bf16.gmra.mrb[0].mxu0 %v1095
      %v1134 = vpop.f32.mrb[0].mxu0
      %v1135 = vadd.f32 0.0, %v1134
      %v1136 = vpop.f32.mrb[0].mxu0
      %v1137 = vpop.f32.mrb[0].mxu0
      %v1138 = vadd.f32 0.0, %v1137
      %v1139 = vpop.f32.mrb[0].mxu0
      %1140 = vdwg.mxu0
      %v1141 = vmul.f32 %v1135, 0.35355338
      %v1142 = vmul.f32 %v1138, 0.35355338
      %v1143 = vadd.f32 %v1141, %v736
      %v1144 = vadd.f32 %v1142, %v737
      %v1145 = vsel %vm506, %v1143, -inf
      %1146 = vmax.xlane.f32.xlu0 %v1145
      %v1147 = vpop.xlane.xlu0 %1146
      %v1148 = vsel %vm506, %v1144, -inf
      %1149 = vmax.xlane.f32.xlu0 %v1148
      %v1150 = vpop.xlane.xlu0 %1149
      %v1151 = vsub.f32 %v1143, %v1147
      %v1152 = vsub.f32 %v1144, %v1150
      %v1153 = vmul.f32 %v1151, 1.442695
      %v1154 = vpow.pop %v1153
      %v1155 = vmul.f32 %v1152, 1.442695
      %v1156 = vpow.pop %v1155
      %v1157 = vsel %vm506, %v1154, 0.0
      %1158 = vadd.xlane.f32.xlu0 %v1157
      %v1159 = vpop.xlane.xlu0 %1158
      %v1160 = vsel %vm506, %v1156, 0.0
      %1161 = vadd.xlane.f32.xlu0 %v1160
      %v1162 = vpop.xlane.xlu0 %1161
      %v1163 = vrcp.pop %v1159
      %v1164 = vrcp.pop %v1162
      %v1165 = vmul.f32 %v1154, %v1163
      %v1166 = vmul.f32 %v1156, %v1164
      %v1167 = vpack.c.bf16 %v1166, %v1165
      %1168 = vrot.lane.b32.xlu0 %v1090, 96
      %v1169 = vpop.permute.xlu0 %1168
      %v1172 = vsel %vm506, %v1167, 0
      %1174 = vmatprep.subr.bf16.mxu0 0
      %1175 = vmatpush1.bf16.msra.mxu0 %v1169
      %1176 = vmatprep.subr.bf16.mxu0 0
      %1177 = vmatpush1.bf16.msra.mxu0 0
      %1178 = vmatprep.subr.bf16.mxu0 0
      %1179 = vmatpush1.bf16.msra.mxu0 0
      %1180 = vmatprep.subr.bf16.mxu0 0
      %1181 = vmatpush1.bf16.msra.mxu0 0
      %1182 = vmatprep.subr.bf16.mxu0 0
      %1183 = vmatpush1.bf16.msra.mxu0 0
      %1184 = vmatprep.subr.bf16.mxu0 0
      %1185 = vmatpush1.bf16.msra.mxu0 0
      %1186 = vmatprep.subr.bf16.mxu0 0
      %1187 = vmatpush1.bf16.msra.mxu0 0
      %1188 = vmatprep.subr.bf16.mxu0 0
      %1189 = vmatpush1.bf16.msra.mxu0 0
      %1190 = vmatprep.subr.bf16.mxu0 0
      %1191 = vmatpush1.bf16.msra.mxu0 0
      %1192 = vmatprep.subr.bf16.mxu0 0
      %1193 = vmatpush1.bf16.msra.mxu0 0
      %1194 = vmatprep.subr.bf16.mxu0 0
      %1195 = vmatpush1.bf16.msra.mxu0 0
      %1196 = vmatprep.subr.bf16.mxu0 0
      %1197 = vmatpush1.bf16.msra.mxu0 0
      %1198 = vmatprep.subr.bf16.mxu0 0
      %1199 = vmatpush1.bf16.msra.mxu0 0
      %1200 = vmatprep.subr.bf16.mxu0 0
      %1201 = vmatpush1.bf16.msra.mxu0 0
      %1202 = vmatprep.subr.bf16.mxu0 0
      %1203 = vmatpush1.bf16.msra.mxu0 0
      %1204 = vmatprep.subr.bf16.mxu0 0
      %1205 = vmatpush1.bf16.msra.mxu0 0
      %1206 = vmatprep.mubr.bf16.mxu0 0
      %1207 = vmatmul.mubr.bf16.gmra.mrb[0].mxu0 %v1172
      %v1208 = vpop.f32.mrb[0].mxu0
      %v1209 = vadd.f32 0.0, %v1208
      %v1210 = vpop.f32.mrb[0].mxu0
      %v1211 = vpop.f32.mrb[0].mxu0
      %v1212 = vadd.f32 0.0, %v1211
      %v1213 = vpop.f32.mrb[0].mxu0
      %1214 = vdwg.mxu0
      %v1215 = vpack.c.bf16 %v1212, %v1209
      %1216 = vrot.lane.b32.xlu0 %v1090, 120
      %v1217 = vpop.permute.xlu0 %1216
      %1218 = vrot.lane.b32.xlu0 %v1090, 104
      %v1219 = vpop.permute.xlu0 %1218
      %v1221 = vsel %vm746, %v1217, 0
      %v1224 = vsel %vm746, %v1219, 0
      %1226 = vmatprep.subr.bf16.mxu0 0
      %1227 = vmatpush1.bf16.xpose.msra.mxu0 %v1224
      %1228 = vmatprep.subr.bf16.mxu0 0
      %1229 = vmatpush1.bf16.xpose.msra.mxu0 0
      %1230 = vmatprep.subr.bf16.mxu0 0
      %1231 = vmatpush1.bf16.xpose.msra.mxu0 0
      %1232 = vmatprep.subr.bf16.mxu0 0
      %1233 = vmatpush1.bf16.xpose.msra.mxu0 0
      %1234 = vmatprep.subr.bf16.mxu0 0
      %1235 = vmatpush1.bf16.xpose.msra.mxu0 0
      %1236 = vmatprep.subr.bf16.mxu0 0
      %1237 = vmatpush1.bf16.xpose.msra.mxu0 0
      %1238 = vmatprep.subr.bf16.mxu0 0
      %1239 = vmatpush1.bf16.xpose.msra.mxu0 0
      %1240 = vmatprep.subr.bf16.mxu0 0
      %1241 = vmatpush1.bf16.xpose.msra.mxu0 0
      %1242 = vmatprep.subr.bf16.mxu0 0
      %1243 = vmatpush1.bf16.xpose.msra.mxu0 0
      %1244 = vmatprep.subr.bf16.mxu0 0
      %1245 = vmatpush1.bf16.xpose.msra.mxu0 0
      %1246 = vmatprep.subr.bf16.mxu0 0
      %1247 = vmatpush1.bf16.xpose.msra.mxu0 0
      %1248 = vmatprep.subr.bf16.mxu0 0
      %1249 = vmatpush1.bf16.xpose.msra.mxu0 0
      %1250 = vmatprep.subr.bf16.mxu0 0
      %1251 = vmatpush1.bf16.xpose.msra.mxu0 0
      %1252 = vmatprep.subr.bf16.mxu0 0
      %1253 = vmatpush1.bf16.xpose.msra.mxu0 0
      %1254 = vmatprep.subr.bf16.mxu0 0
      %1255 = vmatpush1.bf16.xpose.msra.mxu0 0
      %1256 = vmatprep.subr.bf16.mxu0 0
      %1257 = vmatpush1.bf16.xpose.msra.mxu0 0
      %1258 = vmatprep.mubr.bf16.mxu0 0
      %1259 = vmatmul.mubr.bf16.gmra.mrb[0].mxu0 %v1221
      %v1260 = vpop.f32.mrb[0].mxu0
      %v1261 = vadd.f32 0.0, %v1260
      %v1262 = vpop.f32.mrb[0].mxu0
      %v1263 = vpop.f32.mrb[0].mxu0
      %v1264 = vadd.f32 0.0, %v1263
      %v1265 = vpop.f32.mrb[0].mxu0
      %1266 = vdwg.mxu0
      %v1267 = vmul.f32 %v1261, 0.35355338
      %v1268 = vmul.f32 %v1264, 0.35355338
      %v1269 = vadd.f32 %v1267, %v738
      %v1270 = vadd.f32 %v1268, %v739
      %v1271 = vsel %vm506, %v1269, -inf
      %1272 = vmax.xlane.f32.xlu0 %v1271
      %v1273 = vpop.xlane.xlu0 %1272
      %v1274 = vsel %vm506, %v1270, -inf
      %1275 = vmax.xlane.f32.xlu0 %v1274
      %v1276 = vpop.xlane.xlu0 %1275
      %v1277 = vsub.f32 %v1269, %v1273
      %v1278 = vsub.f32 %v1270, %v1276
      %v1279 = vmul.f32 %v1277, 1.442695
      %v1280 = vpow.pop %v1279
      %v1281 = vmul.f32 %v1278, 1.442695
      %v1282 = vpow.pop %v1281
      %v1283 = vsel %vm506, %v1280, 0.0
      %1284 = vadd.xlane.f32.xlu0 %v1283
      %v1285 = vpop.xlane.xlu0 %1284
      %v1286 = vsel %vm506, %v1282, 0.0
      %1287 = vadd.xlane.f32.xlu0 %v1286
      %v1288 = vpop.xlane.xlu0 %1287
      %v1289 = vrcp.pop %v1285
      %v1290 = vrcp.pop %v1288
      %v1291 = vmul.f32 %v1280, %v1289
      %v1292 = vmul.f32 %v1282, %v1290
      %v1293 = vpack.c.bf16 %v1292, %v1291
      %1294 = vrot.lane.b32.xlu0 %v1090, 88
      %v1295 = vpop.permute.xlu0 %1294
      %v1298 = vsel %vm506, %v1293, 0
      %1300 = vmatprep.subr.bf16.mxu0 0
      %1301 = vmatpush1.bf16.msra.mxu0 %v1295
      %1302 = vmatprep.subr.bf16.mxu0 0
      %1303 = vmatpush1.bf16.msra.mxu0 0
      %1304 = vmatprep.subr.bf16.mxu0 0
      %1305 = vmatpush1.bf16.msra.mxu0 0
      %1306 = vmatprep.subr.bf16.mxu0 0
      %1307 = vmatpush1.bf16.msra.mxu0 0
      %1308 = vmatprep.subr.bf16.mxu0 0
      %1309 = vmatpush1.bf16.msra.mxu0 0
      %1310 = vmatprep.subr.bf16.mxu0 0
      %1311 = vmatpush1.bf16.msra.mxu0 0
      %1312 = vmatprep.subr.bf16.mxu0 0
      %1313 = vmatpush1.bf16.msra.mxu0 0
      %1314 = vmatprep.subr.bf16.mxu0 0
      %1315 = vmatpush1.bf16.msra.mxu0 0
      %1316 = vmatprep.subr.bf16.mxu0 0
      %1317 = vmatpush1.bf16.msra.mxu0 0
      %1318 = vmatprep.subr.bf16.mxu0 0
      %1319 = vmatpush1.bf16.msra.mxu0 0
      %1320 = vmatprep.subr.bf16.mxu0 0
      %1321 = vmatpush1.bf16.msra.mxu0 0
      %1322 = vmatprep.subr.bf16.mxu0 0
      %1323 = vmatpush1.bf16.msra.mxu0 0
      %1324 = vmatprep.subr.bf16.mxu0 0
      %1325 = vmatpush1.bf16.msra.mxu0 0
      %1326 = vmatprep.subr.bf16.mxu0 0
      %1327 = vmatpush1.bf16.msra.mxu0 0
      %1328 = vmatprep.subr.bf16.mxu0 0
      %1329 = vmatpush1.bf16.msra.mxu0 0
      %1330 = vmatprep.subr.bf16.mxu0 0
      %1331 = vmatpush1.bf16.msra.mxu0 0
      %1332 = vmatprep.mubr.bf16.mxu0 0
      %1333 = vmatmul.mubr.bf16.gmra.mrb[0].mxu0 %v1298
      %v1334 = vpop.f32.mrb[0].mxu0
      %v1335 = vadd.f32 0.0, %v1334
      %v1336 = vpop.f32.mrb[0].mxu0
      %v1337 = vpop.f32.mrb[0].mxu0
      %v1338 = vadd.f32 0.0, %v1337
      %v1339 = vpop.f32.mrb[0].mxu0
      %1340 = vdwg.mxu0
      %v1341 = vpack.c.bf16 %v1338, %v1335
      %v1343 = vsel %vm746, %v1341, 0
      %1345 = vmatprep.subr.bf16.mxu0 0
      %1346 = vmatpush1.bf16.msra.mxu0 %v1000
      %1347 = vmatprep.subr.bf16.mxu0 0
      %1348 = vmatpush1.bf16.msra.mxu0 0
      %1349 = vmatprep.subr.bf16.mxu0 0
      %1350 = vmatpush1.bf16.msra.mxu0 0
      %1351 = vmatprep.subr.bf16.mxu0 0
      %1352 = vmatpush1.bf16.msra.mxu0 0
      %1353 = vmatprep.subr.bf16.mxu0 0
      %1354 = vmatpush1.bf16.msra.mxu0 0
      %1355 = vmatprep.subr.bf16.mxu0 0
      %1356 = vmatpush1.bf16.msra.mxu0 0
      %1357 = vmatprep.subr.bf16.mxu0 0
      %1358 = vmatpush1.bf16.msra.mxu0 0
      %1359 = vmatprep.subr.bf16.mxu0 0
      %1360 = vmatpush1.bf16.msra.mxu0 0
      %1361 = vmatprep.subr.bf16.mxu0 0
      %1362 = vmatpush1.bf16.msra.mxu0 0
      %1363 = vmatprep.subr.bf16.mxu0 0
      %1364 = vmatpush1.bf16.msra.mxu0 0
      %1365 = vmatprep.subr.bf16.mxu0 0
      %1366 = vmatpush1.bf16.msra.mxu0 0
      %1367 = vmatprep.subr.bf16.mxu0 0
      %1368 = vmatpush1.bf16.msra.mxu0 0
      %1369 = vmatprep.subr.bf16.mxu0 0
      %1370 = vmatpush1.bf16.msra.mxu0 0
      %1371 = vmatprep.subr.bf16.mxu0 0
      %1372 = vmatpush1.bf16.msra.mxu0 0
      %1373 = vmatprep.subr.bf16.mxu0 0
      %1374 = vmatpush1.bf16.msra.mxu0 0
      %1375 = vmatprep.subr.bf16.mxu0 0
      %1376 = vmatpush1.bf16.msra.mxu0 0
      %1377 = vmatprep.mubr.bf16.mxu0 0
      %1378 = vmatmul.mubr.bf16.gmra.mrb[0].mxu0 %v1343
      %v1379 = vpop.f32.mrb[0].mxu0
      %v1380 = vadd.f32 0.0, %v1379
      %v1381 = vpop.f32.mrb[0].mxu0
      %v1382 = vpop.f32.mrb[0].mxu0
      %v1383 = vadd.f32 0.0, %v1382
      %v1384 = vpop.f32.mrb[0].mxu0
      %1385 = vdwg.mxu0
      %v1387 = vsel %vm746, %v1215, 0
      %1389 = vmatprep.subr.bf16.mxu0 0
      %1390 = vmatpush1.bf16.msra.mxu0 %v1047
      %1391 = vmatprep.subr.bf16.mxu0 0
      %1392 = vmatpush1.bf16.msra.mxu0 0
      %1393 = vmatprep.subr.bf16.mxu0 0
      %1394 = vmatpush1.bf16.msra.mxu0 0
      %1395 = vmatprep.subr.bf16.mxu0 0
      %1396 = vmatpush1.bf16.msra.mxu0 0
      %1397 = vmatprep.subr.bf16.mxu0 0
      %1398 = vmatpush1.bf16.msra.mxu0 0
      %1399 = vmatprep.subr.bf16.mxu0 0
      %1400 = vmatpush1.bf16.msra.mxu0 0
      %1401 = vmatprep.subr.bf16.mxu0 0
      %1402 = vmatpush1.bf16.msra.mxu0 0
      %1403 = vmatprep.subr.bf16.mxu0 0
      %1404 = vmatpush1.bf16.msra.mxu0 0
      %1405 = vmatprep.subr.bf16.mxu0 0
      %1406 = vmatpush1.bf16.msra.mxu0 0
      %1407 = vmatprep.subr.bf16.mxu0 0
      %1408 = vmatpush1.bf16.msra.mxu0 0
      %1409 = vmatprep.subr.bf16.mxu0 0
      %1410 = vmatpush1.bf16.msra.mxu0 0
      %1411 = vmatprep.subr.bf16.mxu0 0
      %1412 = vmatpush1.bf16.msra.mxu0 0
      %1413 = vmatprep.subr.bf16.mxu0 0
      %1414 = vmatpush1.bf16.msra.mxu0 0
      %1415 = vmatprep.subr.bf16.mxu0 0
      %1416 = vmatpush1.bf16.msra.mxu0 0
      %1417 = vmatprep.subr.bf16.mxu0 0
      %1418 = vmatpush1.bf16.msra.mxu0 0
      %1419 = vmatprep.subr.bf16.mxu0 0
      %1420 = vmatpush1.bf16.msra.mxu0 0
      %1421 = vmatprep.mubr.bf16.mxu0 0
      %1422 = vmatmul.mubr.bf16.gmra.mrb[0].mxu0 %v1387
      %v1423 = vpop.f32.mrb[0].mxu0
      %v1424 = vadd.f32 %v1380, %v1423
      %v1425 = vpop.f32.mrb[0].mxu0
      %v1426 = vpop.f32.mrb[0].mxu0
      %v1427 = vadd.f32 %v1383, %v1426
      %v1428 = vpop.f32.mrb[0].mxu0
      %1429 = vdwg.mxu0
      %v1430 = vpack.c.bf16 %v725, %v722
      %1432 = vrot.lane.b32.xlu0 %v1430, 112
      %v1433 = vpop.permute.xlu0 %1432
      %v1435 = vsel %vm746, %v1430, 0
      %v1438 = vsel %vm746, %v1433, 0
      %1440 = vmatprep.subr.bf16.mxu0 0
      %1441 = vmatpush1.bf16.xpose.msra.mxu0 %v1438
      %1442 = vmatprep.subr.bf16.mxu0 0
      %1443 = vmatpush1.bf16.xpose.msra.mxu0 0
      %1444 = vmatprep.subr.bf16.mxu0 0
      %1445 = vmatpush1.bf16.xpose.msra.mxu0 0
      %1446 = vmatprep.subr.bf16.mxu0 0
      %1447 = vmatpush1.bf16.xpose.msra.mxu0 0
      %1448 = vmatprep.subr.bf16.mxu0 0
      %1449 = vmatpush1.bf16.xpose.msra.mxu0 0
      %1450 = vmatprep.subr.bf16.mxu0 0
      %1451 = vmatpush1.bf16.xpose.msra.mxu0 0
      %1452 = vmatprep.subr.bf16.mxu0 0
      %1453 = vmatpush1.bf16.xpose.msra.mxu0 0
      %1454 = vmatprep.subr.bf16.mxu0 0
      %1455 = vmatpush1.bf16.xpose.msra.mxu0 0
      %1456 = vmatprep.subr.bf16.mxu0 0
      %1457 = vmatpush1.bf16.xpose.msra.mxu0 0
      %1458 = vmatprep.subr.bf16.mxu0 0
      %1459 = vmatpush1.bf16.xpose.msra.mxu0 0
      %1460 = vmatprep.subr.bf16.mxu0 0
      %1461 = vmatpush1.bf16.xpose.msra.mxu0 0
      %1462 = vmatprep.subr.bf16.mxu0 0
      %1463 = vmatpush1.bf16.xpose.msra.mxu0 0
      %1464 = vmatprep.subr.bf16.mxu0 0
      %1465 = vmatpush1.bf16.xpose.msra.mxu0 0
      %1466 = vmatprep.subr.bf16.mxu0 0
      %1467 = vmatpush1.bf16.xpose.msra.mxu0 0
      %1468 = vmatprep.subr.bf16.mxu0 0
      %1469 = vmatpush1.bf16.xpose.msra.mxu0 0
      %1470 = vmatprep.subr.bf16.mxu0 0
      %1471 = vmatpush1.bf16.xpose.msra.mxu0 0
      %1472 = vmatprep.mubr.bf16.mxu0 0
      %1473 = vmatmul.mubr.bf16.gmra.mrb[0].mxu0 %v1435
      %v1474 = vpop.f32.mrb[0].mxu0
      %v1475 = vadd.f32 0.0, %v1474
      %v1476 = vpop.f32.mrb[0].mxu0
      %v1477 = vpop.f32.mrb[0].mxu0
      %v1478 = vadd.f32 0.0, %v1477
      %v1479 = vpop.f32.mrb[0].mxu0
      %1480 = vdwg.mxu0
      %v1481 = vmul.f32 %v1475, 0.35355338
      %v1482 = vmul.f32 %v1478, 0.35355338
      %v1483 = vadd.f32 %v1481, %v736
      %v1484 = vadd.f32 %v1482, %v737
      %v1485 = vsel %vm506, %v1483, -inf
      %1486 = vmax.xlane.f32.xlu0 %v1485
      %v1487 = vpop.xlane.xlu0 %1486
      %v1488 = vsel %vm506, %v1484, -inf
      %1489 = vmax.xlane.f32.xlu0 %v1488
      %v1490 = vpop.xlane.xlu0 %1489
      %v1491 = vsub.f32 %v1483, %v1487
      %v1492 = vsub.f32 %v1484, %v1490
      %v1493 = vmul.f32 %v1491, 1.442695
      %v1494 = vpow.pop %v1493
      %v1495 = vmul.f32 %v1492, 1.442695
      %v1496 = vpow.pop %v1495
      %v1497 = vsel %vm506, %v1494, 0.0
      %1498 = vadd.xlane.f32.xlu0 %v1497
      %v1499 = vpop.xlane.xlu0 %1498
      %v1500 = vsel %vm506, %v1496, 0.0
      %1501 = vadd.xlane.f32.xlu0 %v1500
      %v1502 = vpop.xlane.xlu0 %1501
      %v1503 = vrcp.pop %v1499
      %v1504 = vrcp.pop %v1502
      %v1505 = vmul.f32 %v1494, %v1503
      %v1506 = vmul.f32 %v1496, %v1504
      %v1507 = vpack.c.bf16 %v1506, %v1505
      %1508 = vrot.lane.b32.xlu0 %v1430, 96
      %v1509 = vpop.permute.xlu0 %1508
      %v1512 = vsel %vm506, %v1507, 0
      %1514 = vmatprep.subr.bf16.mxu0 0
      %1515 = vmatpush1.bf16.msra.mxu0 %v1509
      %1516 = vmatprep.subr.bf16.mxu0 0
      %1517 = vmatpush1.bf16.msra.mxu0 0
      %1518 = vmatprep.subr.bf16.mxu0 0
      %1519 = vmatpush1.bf16.msra.mxu0 0
      %1520 = vmatprep.subr.bf16.mxu0 0
      %1521 = vmatpush1.bf16.msra.mxu0 0
      %1522 = vmatprep.subr.bf16.mxu0 0
      %1523 = vmatpush1.bf16.msra.mxu0 0
      %1524 = vmatprep.subr.bf16.mxu0 0
      %1525 = vmatpush1.bf16.msra.mxu0 0
      %1526 = vmatprep.subr.bf16.mxu0 0
      %1527 = vmatpush1.bf16.msra.mxu0 0
      %1528 = vmatprep.subr.bf16.mxu0 0
      %1529 = vmatpush1.bf16.msra.mxu0 0
      %1530 = vmatprep.subr.bf16.mxu0 0
      %1531 = vmatpush1.bf16.msra.mxu0 0
      %1532 = vmatprep.subr.bf16.mxu0 0
      %1533 = vmatpush1.bf16.msra.mxu0 0
      %1534 = vmatprep.subr.bf16.mxu0 0
      %1535 = vmatpush1.bf16.msra.mxu0 0
      %1536 = vmatprep.subr.bf16.mxu0 0
      %1537 = vmatpush1.bf16.msra.mxu0 0
      %1538 = vmatprep.subr.bf16.mxu0 0
      %1539 = vmatpush1.bf16.msra.mxu0 0
      %1540 = vmatprep.subr.bf16.mxu0 0
      %1541 = vmatpush1.bf16.msra.mxu0 0
      %1542 = vmatprep.subr.bf16.mxu0 0
      %1543 = vmatpush1.bf16.msra.mxu0 0
      %1544 = vmatprep.subr.bf16.mxu0 0
      %1545 = vmatpush1.bf16.msra.mxu0 0
      %1546 = vmatprep.mubr.bf16.mxu0 0
      %1547 = vmatmul.mubr.bf16.gmra.mrb[0].mxu0 %v1512
      %v1548 = vpop.f32.mrb[0].mxu0
      %v1549 = vadd.f32 0.0, %v1548
      %v1550 = vpop.f32.mrb[0].mxu0
      %v1551 = vpop.f32.mrb[0].mxu0
      %v1552 = vadd.f32 0.0, %v1551
      %v1553 = vpop.f32.mrb[0].mxu0
      %1554 = vdwg.mxu0
      %v1555 = vpack.c.bf16 %v1552, %v1549
      %1556 = vrot.lane.b32.xlu0 %v1430, 120
      %v1557 = vpop.permute.xlu0 %1556
      %1558 = vrot.lane.b32.xlu0 %v1430, 104
      %v1559 = vpop.permute.xlu0 %1558
      %v1561 = vsel %vm746, %v1557, 0
      %v1564 = vsel %vm746, %v1559, 0
      %1566 = vmatprep.subr.bf16.mxu0 0
      %1567 = vmatpush1.bf16.xpose.msra.mxu0 %v1564
      %1568 = vmatprep.subr.bf16.mxu0 0
      %1569 = vmatpush1.bf16.xpose.msra.mxu0 0
      %1570 = vmatprep.subr.bf16.mxu0 0
      %1571 = vmatpush1.bf16.xpose.msra.mxu0 0
      %1572 = vmatprep.subr.bf16.mxu0 0
      %1573 = vmatpush1.bf16.xpose.msra.mxu0 0
      %1574 = vmatprep.subr.bf16.mxu0 0
      %1575 = vmatpush1.bf16.xpose.msra.mxu0 0
      %1576 = vmatprep.subr.bf16.mxu0 0
      %1577 = vmatpush1.bf16.xpose.msra.mxu0 0
      %1578 = vmatprep.subr.bf16.mxu0 0
      %1579 = vmatpush1.bf16.xpose.msra.mxu0 0
      %1580 = vmatprep.subr.bf16.mxu0 0
      %1581 = vmatpush1.bf16.xpose.msra.mxu0 0
      %1582 = vmatprep.subr.bf16.mxu0 0
      %1583 = vmatpush1.bf16.xpose.msra.mxu0 0
      %1584 = vmatprep.subr.bf16.mxu0 0
      %1585 = vmatpush1.bf16.xpose.msra.mxu0 0
      %1586 = vmatprep.subr.bf16.mxu0 0
      %1587 = vmatpush1.bf16.xpose.msra.mxu0 0
      %1588 = vmatprep.subr.bf16.mxu0 0
      %1589 = vmatpush1.bf16.xpose.msra.mxu0 0
      %1590 = vmatprep.subr.bf16.mxu0 0
      %1591 = vmatpush1.bf16.xpose.msra.mxu0 0
      %1592 = vmatprep.subr.bf16.mxu0 0
      %1593 = vmatpush1.bf16.xpose.msra.mxu0 0
      %1594 = vmatprep.subr.bf16.mxu0 0
      %1595 = vmatpush1.bf16.xpose.msra.mxu0 0
      %1596 = vmatprep.subr.bf16.mxu0 0
      %1597 = vmatpush1.bf16.xpose.msra.mxu0 0
      %1598 = vmatprep.mubr.bf16.mxu0 0
      %1599 = vmatmul.mubr.bf16.gmra.mrb[0].mxu0 %v1561
      %v1600 = vpop.f32.mrb[0].mxu0
      %v1601 = vadd.f32 0.0, %v1600
      %v1602 = vpop.f32.mrb[0].mxu0
      %v1603 = vpop.f32.mrb[0].mxu0
      %v1604 = vadd.f32 0.0, %v1603
      %v1605 = vpop.f32.mrb[0].mxu0
      %1606 = vdwg.mxu0
      %v1607 = vmul.f32 %v1601, 0.35355338
      %v1608 = vmul.f32 %v1604, 0.35355338
      %v1609 = vadd.f32 %v1607, %v738
      %v1610 = vadd.f32 %v1608, %v739
      %v1611 = vsel %vm506, %v1609, -inf
      %1612 = vmax.xlane.f32.xlu0 %v1611
      %v1613 = vpop.xlane.xlu0 %1612
      %v1614 = vsel %vm506, %v1610, -inf
      %1615 = vmax.xlane.f32.xlu0 %v1614
      %v1616 = vpop.xlane.xlu0 %1615
      %v1617 = vsub.f32 %v1609, %v1613
      %v1618 = vsub.f32 %v1610, %v1616
      %v1619 = vmul.f32 %v1617, 1.442695
      %v1620 = vpow.pop %v1619
      %v1621 = vmul.f32 %v1618, 1.442695
      %v1622 = vpow.pop %v1621
      %v1623 = vsel %vm506, %v1620, 0.0
      %1624 = vadd.xlane.f32.xlu0 %v1623
      %v1625 = vpop.xlane.xlu0 %1624
      %v1626 = vsel %vm506, %v1622, 0.0
      %1627 = vadd.xlane.f32.xlu0 %v1626
      %v1628 = vpop.xlane.xlu0 %1627
      %v1629 = vrcp.pop %v1625
      %v1630 = vrcp.pop %v1628
      %v1631 = vmul.f32 %v1620, %v1629
      %v1632 = vmul.f32 %v1622, %v1630
      %v1633 = vpack.c.bf16 %v1632, %v1631
      %1634 = vrot.lane.b32.xlu0 %v1430, 88
      %v1635 = vpop.permute.xlu0 %1634
      %v1638 = vsel %vm506, %v1633, 0
      %1640 = vmatprep.subr.bf16.mxu0 0
      %1641 = vmatpush1.bf16.msra.mxu0 %v1635
      %1642 = vmatprep.subr.bf16.mxu0 0
      %1643 = vmatpush1.bf16.msra.mxu0 0
      %1644 = vmatprep.subr.bf16.mxu0 0
      %1645 = vmatpush1.bf16.msra.mxu0 0
      %1646 = vmatprep.subr.bf16.mxu0 0
      %1647 = vmatpush1.bf16.msra.mxu0 0
      %1648 = vmatprep.subr.bf16.mxu0 0
      %1649 = vmatpush1.bf16.msra.mxu0 0
      %1650 = vmatprep.subr.bf16.mxu0 0
      %1651 = vmatpush1.bf16.msra.mxu0 0
      %1652 = vmatprep.subr.bf16.mxu0 0
      %1653 = vmatpush1.bf16.msra.mxu0 0
      %1654 = vmatprep.subr.bf16.mxu0 0
      %1655 = vmatpush1.bf16.msra.mxu0 0
      %1656 = vmatprep.subr.bf16.mxu0 0
      %1657 = vmatpush1.bf16.msra.mxu0 0
      %1658 = vmatprep.subr.bf16.mxu0 0
      %1659 = vmatpush1.bf16.msra.mxu0 0
      %1660 = vmatprep.subr.bf16.mxu0 0
      %1661 = vmatpush1.bf16.msra.mxu0 0
      %1662 = vmatprep.subr.bf16.mxu0 0
      %1663 = vmatpush1.bf16.msra.mxu0 0
      %1664 = vmatprep.subr.bf16.mxu0 0
      %1665 = vmatpush1.bf16.msra.mxu0 0
      %1666 = vmatprep.subr.bf16.mxu0 0
      %1667 = vmatpush1.bf16.msra.mxu0 0
      %1668 = vmatprep.subr.bf16.mxu0 0
      %1669 = vmatpush1.bf16.msra.mxu0 0
      %1670 = vmatprep.subr.bf16.mxu0 0
      %1671 = vmatpush1.bf16.msra.mxu0 0
      %1672 = vmatprep.mubr.bf16.mxu0 0
      %1673 = vmatmul.mubr.bf16.gmra.mrb[0].mxu0 %v1638
      %v1674 = vpop.f32.mrb[0].mxu0
      %v1675 = vadd.f32 0.0, %v1674
      %v1676 = vpop.f32.mrb[0].mxu0
      %v1677 = vpop.f32.mrb[0].mxu0
      %v1678 = vadd.f32 0.0, %v1677
      %v1679 = vpop.f32.mrb[0].mxu0
      %1680 = vdwg.mxu0
      %v1681 = vpack.c.bf16 %v1678, %v1675
      %v1683 = vsel %vm746, %v1681, 0
      %1685 = vmatprep.subr.bf16.mxu0 0
      %1686 = vmatpush1.bf16.msra.mxu0 %v1000
      %1687 = vmatprep.subr.bf16.mxu0 0
      %1688 = vmatpush1.bf16.msra.mxu0 0
      %1689 = vmatprep.subr.bf16.mxu0 0
      %1690 = vmatpush1.bf16.msra.mxu0 0
      %1691 = vmatprep.subr.bf16.mxu0 0
      %1692 = vmatpush1.bf16.msra.mxu0 0
      %1693 = vmatprep.subr.bf16.mxu0 0
      %1694 = vmatpush1.bf16.msra.mxu0 0
      %1695 = vmatprep.subr.bf16.mxu0 0
      %1696 = vmatpush1.bf16.msra.mxu0 0
      %1697 = vmatprep.subr.bf16.mxu0 0
      %1698 = vmatpush1.bf16.msra.mxu0 0
      %1699 = vmatprep.subr.bf16.mxu0 0
      %1700 = vmatpush1.bf16.msra.mxu0 0
      %1701 = vmatprep.subr.bf16.mxu0 0
      %1702 = vmatpush1.bf16.msra.mxu0 0
      %1703 = vmatprep.subr.bf16.mxu0 0
      %1704 = vmatpush1.bf16.msra.mxu0 0
      %1705 = vmatprep.subr.bf16.mxu0 0
      %1706 = vmatpush1.bf16.msra.mxu0 0
      %1707 = vmatprep.subr.bf16.mxu0 0
      %1708 = vmatpush1.bf16.msra.mxu0 0
      %1709 = vmatprep.subr.bf16.mxu0 0
      %1710 = vmatpush1.bf16.msra.mxu0 0
      %1711 = vmatprep.subr.bf16.mxu0 0
      %1712 = vmatpush1.bf16.msra.mxu0 0
      %1713 = vmatprep.subr.bf16.mxu0 0
      %1714 = vmatpush1.bf16.msra.mxu0 0
      %1715 = vmatprep.subr.bf16.mxu0 0
      %1716 = vmatpush1.bf16.msra.mxu0 0
      %1717 = vmatprep.mubr.bf16.mxu0 0
      %1718 = vmatmul.mubr.bf16.gmra.mrb[0].mxu0 %v1683
      %v1719 = vpop.f32.mrb[0].mxu0
      %v1720 = vadd.f32 0.0, %v1719
      %v1721 = vpop.f32.mrb[0].mxu0
      %v1722 = vpop.f32.mrb[0].mxu0
      %v1723 = vadd.f32 0.0, %v1722
      %v1724 = vpop.f32.mrb[0].mxu0
      %1725 = vdwg.mxu0
      %v1727 = vsel %vm746, %v1555, 0
      %1729 = vmatprep.subr.bf16.mxu0 0
      %1730 = vmatpush1.bf16.msra.mxu0 %v1047
      %1731 = vmatprep.subr.bf16.mxu0 0
      %1732 = vmatpush1.bf16.msra.mxu0 0
      %1733 = vmatprep.subr.bf16.mxu0 0
      %1734 = vmatpush1.bf16.msra.mxu0 0
      %1735 = vmatprep.subr.bf16.mxu0 0
      %1736 = vmatpush1.bf16.msra.mxu0 0
      %1737 = vmatprep.subr.bf16.mxu0 0
      %1738 = vmatpush1.bf16.msra.mxu0 0
      %1739 = vmatprep.subr.bf16.mxu0 0
      %1740 = vmatpush1.bf16.msra.mxu0 0
      %1741 = vmatprep.subr.bf16.mxu0 0
      %1742 = vmatpush1.bf16.msra.mxu0 0
      %1743 = vmatprep.subr.bf16.mxu0 0
      %1744 = vmatpush1.bf16.msra.mxu0 0
      %1745 = vmatprep.subr.bf16.mxu0 0
      %1746 = vmatpush1.bf16.msra.mxu0 0
      %1747 = vmatprep.subr.bf16.mxu0 0
      %1748 = vmatpush1.bf16.msra.mxu0 0
      %1749 = vmatprep.subr.bf16.mxu0 0
      %1750 = vmatpush1.bf16.msra.mxu0 0
      %1751 = vmatprep.subr.bf16.mxu0 0
      %1752 = vmatpush1.bf16.msra.mxu0 0
      %1753 = vmatprep.subr.bf16.mxu0 0
      %1754 = vmatpush1.bf16.msra.mxu0 0
      %1755 = vmatprep.subr.bf16.mxu0 0
      %1756 = vmatpush1.bf16.msra.mxu0 0
      %1757 = vmatprep.subr.bf16.mxu0 0
      %1758 = vmatpush1.bf16.msra.mxu0 0
      %1759 = vmatprep.subr.bf16.mxu0 0
      %1760 = vmatpush1.bf16.msra.mxu0 0
      %1761 = vmatprep.mubr.bf16.mxu0 0
      %1762 = vmatmul.mubr.bf16.gmra.mrb[0].mxu0 %v1727
      %v1763 = vpop.f32.mrb[0].mxu0
      %v1764 = vadd.f32 %v1720, %v1763
      %v1765 = vpop.f32.mrb[0].mxu0
      %v1766 = vpop.f32.mrb[0].mxu0
      %v1767 = vadd.f32 %v1723, %v1766
      %v1768 = vpop.f32.mrb[0].mxu0
      %1769 = vdwg.mxu0
      %v1770 = vpack.c.bf16 %v733, %v730
      %1772 = vrot.lane.b32.xlu0 %v1770, 112
      %v1773 = vpop.permute.xlu0 %1772
      %v1775 = vsel %vm746, %v1770, 0
      %v1778 = vsel %vm746, %v1773, 0
      %1780 = vmatprep.subr.bf16.mxu0 0
      %1781 = vmatpush1.bf16.xpose.msra.mxu0 %v1778
      %1782 = vmatprep.subr.bf16.mxu0 0
      %1783 = vmatpush1.bf16.xpose.msra.mxu0 0
      %1784 = vmatprep.subr.bf16.mxu0 0
      %1785 = vmatpush1.bf16.xpose.msra.mxu0 0
      %1786 = vmatprep.subr.bf16.mxu0 0
      %1787 = vmatpush1.bf16.xpose.msra.mxu0 0
      %1788 = vmatprep.subr.bf16.mxu0 0
      %1789 = vmatpush1.bf16.xpose.msra.mxu0 0
      %1790 = vmatprep.subr.bf16.mxu0 0
      %1791 = vmatpush1.bf16.xpose.msra.mxu0 0
      %1792 = vmatprep.subr.bf16.mxu0 0
      %1793 = vmatpush1.bf16.xpose.msra.mxu0 0
      %1794 = vmatprep.subr.bf16.mxu0 0
      %1795 = vmatpush1.bf16.xpose.msra.mxu0 0
      %1796 = vmatprep.subr.bf16.mxu0 0
      %1797 = vmatpush1.bf16.xpose.msra.mxu0 0
      %1798 = vmatprep.subr.bf16.mxu0 0
      %1799 = vmatpush1.bf16.xpose.msra.mxu0 0
      %1800 = vmatprep.subr.bf16.mxu0 0
      %1801 = vmatpush1.bf16.xpose.msra.mxu0 0
      %1802 = vmatprep.subr.bf16.mxu0 0
      %1803 = vmatpush1.bf16.xpose.msra.mxu0 0
      %1804 = vmatprep.subr.bf16.mxu0 0
      %1805 = vmatpush1.bf16.xpose.msra.mxu0 0
      %1806 = vmatprep.subr.bf16.mxu0 0
      %1807 = vmatpush1.bf16.xpose.msra.mxu0 0
      %1808 = vmatprep.subr.bf16.mxu0 0
      %1809 = vmatpush1.bf16.xpose.msra.mxu0 0
      %1810 = vmatprep.subr.bf16.mxu0 0
      %1811 = vmatpush1.bf16.xpose.msra.mxu0 0
      %1812 = vmatprep.mubr.bf16.mxu0 0
      %1813 = vmatmul.mubr.bf16.gmra.mrb[0].mxu0 %v1775
      %v1814 = vpop.f32.mrb[0].mxu0
      %v1815 = vadd.f32 0.0, %v1814
      %v1816 = vpop.f32.mrb[0].mxu0
      %v1817 = vpop.f32.mrb[0].mxu0
      %v1818 = vadd.f32 0.0, %v1817
      %v1819 = vpop.f32.mrb[0].mxu0
      %1820 = vdwg.mxu0
      %v1821 = vmul.f32 %v1815, 0.35355338
      %v1822 = vmul.f32 %v1818, 0.35355338
      %v1823 = vadd.f32 %v1821, %v736
      %v1824 = vadd.f32 %v1822, %v737
      %v1825 = vsel %vm506, %v1823, -inf
      %1826 = vmax.xlane.f32.xlu0 %v1825
      %v1827 = vpop.xlane.xlu0 %1826
      %v1828 = vsel %vm506, %v1824, -inf
      %1829 = vmax.xlane.f32.xlu0 %v1828
      %v1830 = vpop.xlane.xlu0 %1829
      %v1831 = vsub.f32 %v1823, %v1827
      %v1832 = vsub.f32 %v1824, %v1830
      %v1833 = vmul.f32 %v1831, 1.442695
      %v1834 = vpow.pop %v1833
      %v1835 = vmul.f32 %v1832, 1.442695
      %v1836 = vpow.pop %v1835
      %v1837 = vsel %vm506, %v1834, 0.0
      %1838 = vadd.xlane.f32.xlu0 %v1837
      %v1839 = vpop.xlane.xlu0 %1838
      %v1840 = vsel %vm506, %v1836, 0.0
      %1841 = vadd.xlane.f32.xlu0 %v1840
      %v1842 = vpop.xlane.xlu0 %1841
      %v1843 = vrcp.pop %v1839
      %v1844 = vrcp.pop %v1842
      %v1845 = vmul.f32 %v1834, %v1843
      %v1846 = vmul.f32 %v1836, %v1844
      %v1847 = vpack.c.bf16 %v1846, %v1845
      %1848 = vrot.lane.b32.xlu0 %v1770, 96
      %v1849 = vpop.permute.xlu0 %1848
      %v1852 = vsel %vm506, %v1847, 0
      %1854 = vmatprep.subr.bf16.mxu0 0
      %1855 = vmatpush1.bf16.msra.mxu0 %v1849
      %1856 = vmatprep.subr.bf16.mxu0 0
      %1857 = vmatpush1.bf16.msra.mxu0 0
      %1858 = vmatprep.subr.bf16.mxu0 0
      %1859 = vmatpush1.bf16.msra.mxu0 0
      %1860 = vmatprep.subr.bf16.mxu0 0
      %1861 = vmatpush1.bf16.msra.mxu0 0
      %1862 = vmatprep.subr.bf16.mxu0 0
      %1863 = vmatpush1.bf16.msra.mxu0 0
      %1864 = vmatprep.subr.bf16.mxu0 0
      %1865 = vmatpush1.bf16.msra.mxu0 0
      %1866 = vmatprep.subr.bf16.mxu0 0
      %1867 = vmatpush1.bf16.msra.mxu0 0
      %1868 = vmatprep.subr.bf16.mxu0 0
      %1869 = vmatpush1.bf16.msra.mxu0 0
      %1870 = vmatprep.subr.bf16.mxu0 0
      %1871 = vmatpush1.bf16.msra.mxu0 0
      %1872 = vmatprep.subr.bf16.mxu0 0
      %1873 = vmatpush1.bf16.msra.mxu0 0
      %1874 = vmatprep.subr.bf16.mxu0 0
      %1875 = vmatpush1.bf16.msra.mxu0 0
      %1876 = vmatprep.subr.bf16.mxu0 0
      %1877 = vmatpush1.bf16.msra.mxu0 0
      %1878 = vmatprep.subr.bf16.mxu0 0
      %1879 = vmatpush1.bf16.msra.mxu0 0
      %1880 = vmatprep.subr.bf16.mxu0 0
      %1881 = vmatpush1.bf16.msra.mxu0 0
      %1882 = vmatprep.subr.bf16.mxu0 0
      %1883 = vmatpush1.bf16.msra.mxu0 0
      %1884 = vmatprep.subr.bf16.mxu0 0
      %1885 = vmatpush1.bf16.msra.mxu0 0
      %1886 = vmatprep.mubr.bf16.mxu0 0
      %1887 = vmatmul.mubr.bf16.gmra.mrb[0].mxu0 %v1852
      %v1888 = vpop.f32.mrb[0].mxu0
      %v1889 = vadd.f32 0.0, %v1888
      %v1890 = vpop.f32.mrb[0].mxu0
      %v1891 = vpop.f32.mrb[0].mxu0
      %v1892 = vadd.f32 0.0, %v1891
      %v1893 = vpop.f32.mrb[0].mxu0
      %1894 = vdwg.mxu0
      %v1895 = vpack.c.bf16 %v1892, %v1889
      %1896 = vrot.lane.b32.xlu0 %v1770, 120
      %v1897 = vpop.permute.xlu0 %1896
      %1898 = vrot.lane.b32.xlu0 %v1770, 104
      %v1899 = vpop.permute.xlu0 %1898
      %v1901 = vsel %vm746, %v1897, 0
      %v1904 = vsel %vm746, %v1899, 0
      %1906 = vmatprep.subr.bf16.mxu0 0
      %1907 = vmatpush1.bf16.xpose.msra.mxu0 %v1904
      %1908 = vmatprep.subr.bf16.mxu0 0
      %1909 = vmatpush1.bf16.xpose.msra.mxu0 0
      %1910 = vmatprep.subr.bf16.mxu0 0
      %1911 = vmatpush1.bf16.xpose.msra.mxu0 0
      %1912 = vmatprep.subr.bf16.mxu0 0
      %1913 = vmatpush1.bf16.xpose.msra.mxu0 0
      %1914 = vmatprep.subr.bf16.mxu0 0
      %1915 = vmatpush1.bf16.xpose.msra.mxu0 0
      %1916 = vmatprep.subr.bf16.mxu0 0
      %1917 = vmatpush1.bf16.xpose.msra.mxu0 0
      %1918 = vmatprep.subr.bf16.mxu0 0
      %1919 = vmatpush1.bf16.xpose.msra.mxu0 0
      %1920 = vmatprep.subr.bf16.mxu0 0
      %1921 = vmatpush1.bf16.xpose.msra.mxu0 0
      %1922 = vmatprep.subr.bf16.mxu0 0
      %1923 = vmatpush1.bf16.xpose.msra.mxu0 0
      %1924 = vmatprep.subr.bf16.mxu0 0
      %1925 = vmatpush1.bf16.xpose.msra.mxu0 0
      %1926 = vmatprep.subr.bf16.mxu0 0
      %1927 = vmatpush1.bf16.xpose.msra.mxu0 0
      %1928 = vmatprep.subr.bf16.mxu0 0
      %1929 = vmatpush1.bf16.xpose.msra.mxu0 0
      %1930 = vmatprep.subr.bf16.mxu0 0
      %1931 = vmatpush1.bf16.xpose.msra.mxu0 0
      %1932 = vmatprep.subr.bf16.mxu0 0
      %1933 = vmatpush1.bf16.xpose.msra.mxu0 0
      %1934 = vmatprep.subr.bf16.mxu0 0
      %1935 = vmatpush1.bf16.xpose.msra.mxu0 0
      %1936 = vmatprep.subr.bf16.mxu0 0
      %1937 = vmatpush1.bf16.xpose.msra.mxu0 0
      %1938 = vmatprep.mubr.bf16.mxu0 0
      %1939 = vmatmul.mubr.bf16.gmra.mrb[0].mxu0 %v1901
      %v1940 = vpop.f32.mrb[0].mxu0
      %v1941 = vadd.f32 0.0, %v1940
      %v1942 = vpop.f32.mrb[0].mxu0
      %v1943 = vpop.f32.mrb[0].mxu0
      %v1944 = vadd.f32 0.0, %v1943
      %v1945 = vpop.f32.mrb[0].mxu0
      %1946 = vdwg.mxu0
      %v1947 = vmul.f32 %v1941, 0.35355338
      %v1948 = vmul.f32 %v1944, 0.35355338
      %v1949 = vadd.f32 %v1947, %v738
      %v1950 = vadd.f32 %v1948, %v739
      %v1951 = vsel %vm506, %v1949, -inf
      %1952 = vmax.xlane.f32.xlu0 %v1951
      %v1953 = vpop.xlane.xlu0 %1952
      %v1954 = vsel %vm506, %v1950, -inf
      %1955 = vmax.xlane.f32.xlu0 %v1954
      %v1956 = vpop.xlane.xlu0 %1955
      %v1957 = vsub.f32 %v1949, %v1953
      %v1958 = vsub.f32 %v1950, %v1956
      %v1959 = vmul.f32 %v1957, 1.442695
      %v1960 = vpow.pop %v1959
      %v1961 = vmul.f32 %v1958, 1.442695
      %v1962 = vpow.pop %v1961
      %v1963 = vsel %vm506, %v1960, 0.0
      %1964 = vadd.xlane.f32.xlu0 %v1963
      %v1965 = vpop.xlane.xlu0 %1964
      %v1966 = vsel %vm506, %v1962, 0.0
      %1967 = vadd.xlane.f32.xlu0 %v1966
      %v1968 = vpop.xlane.xlu0 %1967
      %v1969 = vrcp.pop %v1965
      %v1970 = vrcp.pop %v1968
      %v1971 = vmul.f32 %v1960, %v1969
      %v1972 = vmul.f32 %v1962, %v1970
      %v1973 = vpack.c.bf16 %v1972, %v1971
      %1974 = vrot.lane.b32.xlu0 %v1770, 88
      %v1975 = vpop.permute.xlu0 %1974
      %v1978 = vsel %vm506, %v1973, 0
      %1980 = vmatprep.subr.bf16.mxu0 0
      %1981 = vmatpush1.bf16.msra.mxu0 %v1975
      %1982 = vmatprep.subr.bf16.mxu0 0
      %1983 = vmatpush1.bf16.msra.mxu0 0
      %1984 = vmatprep.subr.bf16.mxu0 0
      %1985 = vmatpush1.bf16.msra.mxu0 0
      %1986 = vmatprep.subr.bf16.mxu0 0
      %1987 = vmatpush1.bf16.msra.mxu0 0
      %1988 = vmatprep.subr.bf16.mxu0 0
      %1989 = vmatpush1.bf16.msra.mxu0 0
      %1990 = vmatprep.subr.bf16.mxu0 0
      %1991 = vmatpush1.bf16.msra.mxu0 0
      %1992 = vmatprep.subr.bf16.mxu0 0
      %1993 = vmatpush1.bf16.msra.mxu0 0
      %1994 = vmatprep.subr.bf16.mxu0 0
      %1995 = vmatpush1.bf16.msra.mxu0 0
      %1996 = vmatprep.subr.bf16.mxu0 0
      %1997 = vmatpush1.bf16.msra.mxu0 0
      %1998 = vmatprep.subr.bf16.mxu0 0
      %1999 = vmatpush1.bf16.msra.mxu0 0
      %2000 = vmatprep.subr.bf16.mxu0 0
      %2001 = vmatpush1.bf16.msra.mxu0 0
      %2002 = vmatprep.subr.bf16.mxu0 0
      %2003 = vmatpush1.bf16.msra.mxu0 0
      %2004 = vmatprep.subr.bf16.mxu0 0
      %2005 = vmatpush1.bf16.msra.mxu0 0
      %2006 = vmatprep.subr.bf16.mxu0 0
      %2007 = vmatpush1.bf16.msra.mxu0 0
      %2008 = vmatprep.subr.bf16.mxu0 0
      %2009 = vmatpush1.bf16.msra.mxu0 0
      %2010 = vmatprep.subr.bf16.mxu0 0
      %2011 = vmatpush1.bf16.msra.mxu0 0
      %2012 = vmatprep.mubr.bf16.mxu0 0
      %2013 = vmatmul.mubr.bf16.gmra.mrb[0].mxu0 %v1978
      %v2014 = vpop.f32.mrb[0].mxu0
      %v2015 = vadd.f32 0.0, %v2014
      %v2016 = vpop.f32.mrb[0].mxu0
      %v2017 = vpop.f32.mrb[0].mxu0
      %v2018 = vadd.f32 0.0, %v2017
      %v2019 = vpop.f32.mrb[0].mxu0
      %2020 = vdwg.mxu0
      %v2021 = vpack.c.bf16 %v2018, %v2015
      %v2023 = vsel %vm746, %v2021, 0
      %2025 = vmatprep.subr.bf16.mxu0 0
      %2026 = vmatpush1.bf16.msra.mxu0 %v1000
      %2027 = vmatprep.subr.bf16.mxu0 0
      %2028 = vmatpush1.bf16.msra.mxu0 0
      %2029 = vmatprep.subr.bf16.mxu0 0
      %2030 = vmatpush1.bf16.msra.mxu0 0
      %2031 = vmatprep.subr.bf16.mxu0 0
      %2032 = vmatpush1.bf16.msra.mxu0 0
      %2033 = vmatprep.subr.bf16.mxu0 0
      %2034 = vmatpush1.bf16.msra.mxu0 0
      %2035 = vmatprep.subr.bf16.mxu0 0
      %2036 = vmatpush1.bf16.msra.mxu0 0
      %2037 = vmatprep.subr.bf16.mxu0 0
      %2038 = vmatpush1.bf16.msra.mxu0 0
      %2039 = vmatprep.subr.bf16.mxu0 0
      %2040 = vmatpush1.bf16.msra.mxu0 0
      %2041 = vmatprep.subr.bf16.mxu0 0
      %2042 = vmatpush1.bf16.msra.mxu0 0
      %2043 = vmatprep.subr.bf16.mxu0 0
      %2044 = vmatpush1.bf16.msra.mxu0 0
      %2045 = vmatprep.subr.bf16.mxu0 0
      %2046 = vmatpush1.bf16.msra.mxu0 0
      %2047 = vmatprep.subr.bf16.mxu0 0
      %2048 = vmatpush1.bf16.msra.mxu0 0
      %2049 = vmatprep.subr.bf16.mxu0 0
      %2050 = vmatpush1.bf16.msra.mxu0 0
      %2051 = vmatprep.subr.bf16.mxu0 0
      %2052 = vmatpush1.bf16.msra.mxu0 0
      %2053 = vmatprep.subr.bf16.mxu0 0
      %2054 = vmatpush1.bf16.msra.mxu0 0
      %2055 = vmatprep.subr.bf16.mxu0 0
      %2056 = vmatpush1.bf16.msra.mxu0 0
      %2057 = vmatprep.mubr.bf16.mxu0 0
      %2058 = vmatmul.mubr.bf16.gmra.mrb[0].mxu0 %v2023
      %v2059 = vpop.f32.mrb[0].mxu0
      %v2060 = vadd.f32 0.0, %v2059
      %v2061 = vpop.f32.mrb[0].mxu0
      %v2062 = vpop.f32.mrb[0].mxu0
      %v2063 = vadd.f32 0.0, %v2062
      %v2064 = vpop.f32.mrb[0].mxu0
      %2065 = vdwg.mxu0
      %v2067 = vsel %vm746, %v1895, 0
      %2069 = vmatprep.subr.bf16.mxu0 0
      %2070 = vmatpush1.bf16.msra.mxu0 %v1047
      %2071 = vmatprep.subr.bf16.mxu0 0
      %2072 = vmatpush1.bf16.msra.mxu0 0
      %2073 = vmatprep.subr.bf16.mxu0 0
      %2074 = vmatpush1.bf16.msra.mxu0 0
      %2075 = vmatprep.subr.bf16.mxu0 0
      %2076 = vmatpush1.bf16.msra.mxu0 0
      %2077 = vmatprep.subr.bf16.mxu0 0
      %2078 = vmatpush1.bf16.msra.mxu0 0
      %2079 = vmatprep.subr.bf16.mxu0 0
      %2080 = vmatpush1.bf16.msra.mxu0 0
      %2081 = vmatprep.subr.bf16.mxu0 0
      %2082 = vmatpush1.bf16.msra.mxu0 0
      %2083 = vmatprep.subr.bf16.mxu0 0
      %2084 = vmatpush1.bf16.msra.mxu0 0
      %2085 = vmatprep.subr.bf16.mxu0 0
      %2086 = vmatpush1.bf16.msra.mxu0 0
      %2087 = vmatprep.subr.bf16.mxu0 0
      %2088 = vmatpush1.bf16.msra.mxu0 0
      %2089 = vmatprep.subr.bf16.mxu0 0
      %2090 = vmatpush1.bf16.msra.mxu0 0
      %2091 = vmatprep.subr.bf16.mxu0 0
      %2092 = vmatpush1.bf16.msra.mxu0 0
      %2093 = vmatprep.subr.bf16.mxu0 0
      %2094 = vmatpush1.bf16.msra.mxu0 0
      %2095 = vmatprep.subr.bf16.mxu0 0
      %2096 = vmatpush1.bf16.msra.mxu0 0
      %2097 = vmatprep.subr.bf16.mxu0 0
      %2098 = vmatpush1.bf16.msra.mxu0 0
      %2099 = vmatprep.subr.bf16.mxu0 0
      %2100 = vmatpush1.bf16.msra.mxu0 0
      %2101 = vmatprep.mubr.bf16.mxu0 0
      %2102 = vmatmul.mubr.bf16.gmra.mrb[0].mxu0 %v2067
      %v2103 = vpop.f32.mrb[0].mxu0
      %v2104 = vadd.f32 %v2060, %v2103
      %v2105 = vpop.f32.mrb[0].mxu0
      %v2106 = vpop.f32.mrb[0].mxu0
      %v2107 = vadd.f32 %v2063, %v2106
      %v2108 = vpop.f32.mrb[0].mxu0
      %2109 = vdwg.mxu0
      %v2110 = vadd.f32 %v496, %v1084
      %v2111 = vadd.f32 %v497, %v1087
      %v2112 = vadd.f32 %v498, %v1424
      %v2113 = vadd.f32 %v499, %v1427
      %v2114 = vadd.f32 %v500, %v1764
      %v2115 = vadd.f32 %v501, %v1767
      %v2116 = vadd.f32 %v502, %v2104
      %v2117 = vadd.f32 %v503, %v2107
      %v2118 = vld [vmem:[%s6] sm:$0x1]
      %v2120 = vlaneseq
      %v2121 = vshrl.u32 %v2120, 7
      %v2122 = vsub.s32 0, %v2121
      %v2123 = vrot.slane %v2118, %v2122
      %v2125 = vadd.f32 %v2110, %v2123
      %v2126 = vadd.f32 %v2111, %v2123
      %v2127 = vadd.f32 %v2112, %v2123
      %v2128 = vadd.f32 %v2113, %v2123
      %v2129 = vadd.f32 %v2114, %v2123
      %v2130 = vadd.f32 %v2115, %v2123
      %v2131 = vadd.f32 %v2116, %v2123
      %v2132 = vadd.f32 %v2117, %v2123
      %v2133 = vld [vmem:[%s9] sm:$0x1]
      %v2134 = vld [vmem:[%s10] sm:$0x1]
      %v2135 = vsel %vm506, %v2125, 0.0
      %2136 = vadd.xlane.f32.xlu0 %v2135
      %v2137 = vpop.xlane.xlu0 %2136
      %v2138 = vsel %vm506, %v2126, 0.0
      %2139 = vadd.xlane.f32.xlu0 %v2138
      %v2140 = vpop.xlane.xlu0 %2139
      %v2141 = vsel %vm506, %v2127, 0.0
      %2142 = vadd.xlane.f32.xlu0 %v2141
      %v2143 = vpop.xlane.xlu0 %2142
      %v2144 = vsel %vm506, %v2128, 0.0
      %2145 = vadd.xlane.f32.xlu0 %v2144
      %v2146 = vpop.xlane.xlu0 %2145
      %v2147 = vsel %vm506, %v2129, 0.0
      %2148 = vadd.xlane.f32.xlu0 %v2147
      %v2149 = vpop.xlane.xlu0 %2148
      %v2150 = vsel %vm506, %v2130, 0.0
      %2151 = vadd.xlane.f32.xlu0 %v2150
      %v2152 = vpop.xlane.xlu0 %2151
      %v2153 = vsel %vm506, %v2131, 0.0
      %2154 = vadd.xlane.f32.xlu0 %v2153
      %v2155 = vpop.xlane.xlu0 %2154
      %v2156 = vsel %vm506, %v2132, 0.0
      %2157 = vadd.xlane.f32.xlu0 %v2156
      %v2158 = vpop.xlane.xlu0 %2157
      %v2159 = vmul.f32 %v2137, %v531
      %v2160 = vmul.f32 %v2140, %v531
      %v2161 = vmul.f32 %v2143, %v531
      %v2162 = vmul.f32 %v2146, %v531
      %v2163 = vmul.f32 %v2149, %v531
      %v2164 = vmul.f32 %v2152, %v531
      %v2165 = vmul.f32 %v2155, %v531
      %v2166 = vmul.f32 %v2158, %v531
      %v2167 = vsub.f32 %v2125, %v2159
      %v2168 = vsub.f32 %v2126, %v2160
      %v2169 = vsub.f32 %v2127, %v2161
      %v2170 = vsub.f32 %v2128, %v2162
      %v2171 = vsub.f32 %v2129, %v2163
      %v2172 = vsub.f32 %v2130, %v2164
      %v2173 = vsub.f32 %v2131, %v2165
      %v2174 = vsub.f32 %v2132, %v2166
      %v2175 = vmul.f32 %v2167, %v2167
      %v2176 = vmul.f32 %v2168, %v2168
      %v2177 = vmul.f32 %v2169, %v2169
      %v2178 = vmul.f32 %v2170, %v2170
      %v2179 = vmul.f32 %v2171, %v2171
      %v2180 = vmul.f32 %v2172, %v2172
      %v2181 = vmul.f32 %v2173, %v2173
      %v2182 = vmul.f32 %v2174, %v2174
      %v2183 = vsel %vm506, %v2175, 0.0
      %2184 = vadd.xlane.f32.xlu0 %v2183
      %v2185 = vpop.xlane.xlu0 %2184
      %v2186 = vsel %vm506, %v2176, 0.0
      %2187 = vadd.xlane.f32.xlu0 %v2186
      %v2188 = vpop.xlane.xlu0 %2187
      %v2189 = vsel %vm506, %v2177, 0.0
      %2190 = vadd.xlane.f32.xlu0 %v2189
      %v2191 = vpop.xlane.xlu0 %2190
      %v2192 = vsel %vm506, %v2178, 0.0
      %2193 = vadd.xlane.f32.xlu0 %v2192
      %v2194 = vpop.xlane.xlu0 %2193
      %v2195 = vsel %vm506, %v2179, 0.0
      %2196 = vadd.xlane.f32.xlu0 %v2195
      %v2197 = vpop.xlane.xlu0 %2196
      %v2198 = vsel %vm506, %v2180, 0.0
      %2199 = vadd.xlane.f32.xlu0 %v2198
      %v2200 = vpop.xlane.xlu0 %2199
      %v2201 = vsel %vm506, %v2181, 0.0
      %2202 = vadd.xlane.f32.xlu0 %v2201
      %v2203 = vpop.xlane.xlu0 %2202
      %v2204 = vsel %vm506, %v2182, 0.0
      %2205 = vadd.xlane.f32.xlu0 %v2204
      %v2206 = vpop.xlane.xlu0 %2205
      %v2207 = vmul.f32 %v2185, %v531
      %v2208 = vmul.f32 %v2188, %v531
      %v2209 = vmul.f32 %v2191, %v531
      %v2210 = vmul.f32 %v2194, %v531
      %v2211 = vmul.f32 %v2197, %v531
      %v2212 = vmul.f32 %v2200, %v531
      %v2213 = vmul.f32 %v2203, %v531
      %v2214 = vmul.f32 %v2206, %v531
      %v2215 = vadd.f32 %v2207, 1e-05
      %v2216 = vadd.f32 %v2208, 1e-05
      %v2217 = vadd.f32 %v2209, 1e-05
      %v2218 = vadd.f32 %v2210, 1e-05
      %v2219 = vadd.f32 %v2211, 1e-05
      %v2220 = vadd.f32 %v2212, 1e-05
      %v2221 = vadd.f32 %v2213, 1e-05
      %v2222 = vadd.f32 %v2214, 1e-05
      %v2223 = vrsqrt.pop %v2215
      %v2224 = vrsqrt.pop %v2216
      %v2225 = vrsqrt.pop %v2217
      %v2226 = vrsqrt.pop %v2218
      %v2227 = vrsqrt.pop %v2219
      %v2228 = vrsqrt.pop %v2220
      %v2229 = vrsqrt.pop %v2221
      %v2230 = vrsqrt.pop %v2222
      %v2231 = vmul.f32 %v2167, %v2223
      %v2232 = vmul.f32 %v2168, %v2224
      %v2233 = vmul.f32 %v2169, %v2225
      %v2234 = vmul.f32 %v2170, %v2226
      %v2235 = vmul.f32 %v2171, %v2227
      %v2236 = vmul.f32 %v2172, %v2228
      %v2237 = vmul.f32 %v2173, %v2229
      %v2238 = vmul.f32 %v2174, %v2230
      %v2240 = vlaneseq
      %v2241 = vshrl.u32 %v2240, 7
      %v2242 = vsub.s32 0, %v2241
      %v2243 = vrot.slane %v2133, %v2242
      %v2245 = vmul.f32 %v2231, %v2243
      %v2246 = vmul.f32 %v2232, %v2243
      %v2247 = vmul.f32 %v2233, %v2243
      %v2248 = vmul.f32 %v2234, %v2243
      %v2249 = vmul.f32 %v2235, %v2243
      %v2250 = vmul.f32 %v2236, %v2243
      %v2251 = vmul.f32 %v2237, %v2243
      %v2252 = vmul.f32 %v2238, %v2243
      %v2254 = vlaneseq
      %v2255 = vshrl.u32 %v2254, 7
      %v2256 = vsub.s32 0, %v2255
      %v2257 = vrot.slane %v2134, %v2256
      %v2259 = vadd.f32 %v2245, %v2257
      %v2260 = vadd.f32 %v2246, %v2257
      %v2261 = vadd.f32 %v2247, %v2257
      %v2262 = vadd.f32 %v2248, %v2257
      %v2263 = vadd.f32 %v2249, %v2257
      %v2264 = vadd.f32 %v2250, %v2257
      %v2265 = vadd.f32 %v2251, %v2257
      %v2266 = vadd.f32 %v2252, %v2257
      %v2267 = vpack.c.bf16 %v2260, %v2259
      %v2268 = vpack.c.bf16 %v2262, %v2261
      %v2269 = vpack.c.bf16 %v2264, %v2263
      %v2270 = vpack.c.bf16 %v2266, %v2265
      %v2271 = vld [vmem:[%s11] sm:$0xf]
      %v2272 = vld [vmem:[%s11 + $0x4] sm:$0xf]
      %v2273 = vld [vmem:[%s12] sm:$0x1]
      %v2275 = vlaneseq
      %v2276 = vshrl.u32 %v2275, 7
      %v2277 = vsub.s32 0, %v2276
      %v2278 = vrot.slane %v2273, %v2277
      %v2282 = vunpack.c.l.b16 %v2271
      %v2283 = vunpack.c.l.b16 %v2272
      %v2284 = vpack.c.b16 %v2283, %v2282
      %v2287 = vsel %vm506, %v2267, 0
      %v2290 = vsel %vm506, %v2268, 0
      %v2293 = vsel %vm506, %v2269, 0
      %v2296 = vsel %vm506, %v2270, 0
      %2298 = vmatprep.subr.bf16.mxu0 0
      %2299 = vmatpush1.bf16.msra.mxu0 %v2284
      %2300 = vmatprep.subr.bf16.mxu0 0
      %2301 = vmatpush1.bf16.msra.mxu0 0
      %2302 = vmatprep.subr.bf16.mxu0 0
      %2303 = vmatpush1.bf16.msra.mxu0 0
      %2304 = vmatprep.subr.bf16.mxu0 0
      %2305 = vmatpush1.bf16.msra.mxu0 0
      %2306 = vmatprep.subr.bf16.mxu0 0
      %2307 = vmatpush1.bf16.msra.mxu0 0
      %2308 = vmatprep.subr.bf16.mxu0 0
      %2309 = vmatpush1.bf16.msra.mxu0 0
      %2310 = vmatprep.subr.bf16.mxu0 0
      %2311 = vmatpush1.bf16.msra.mxu0 0
      %2312 = vmatprep.subr.bf16.mxu0 0
      %2313 = vmatpush1.bf16.msra.mxu0 0
      %2314 = vmatprep.subr.bf16.mxu0 0
      %2315 = vmatpush1.bf16.msra.mxu0 0
      %2316 = vmatprep.subr.bf16.mxu0 0
      %2317 = vmatpush1.bf16.msra.mxu0 0
      %2318 = vmatprep.subr.bf16.mxu0 0
      %2319 = vmatpush1.bf16.msra.mxu0 0
      %2320 = vmatprep.subr.bf16.mxu0 0
      %2321 = vmatpush1.bf16.msra.mxu0 0
      %2322 = vmatprep.subr.bf16.mxu0 0
      %2323 = vmatpush1.bf16.msra.mxu0 0
      %2324 = vmatprep.subr.bf16.mxu0 0
      %2325 = vmatpush1.bf16.msra.mxu0 0
      %2326 = vmatprep.subr.bf16.mxu0 0
      %2327 = vmatpush1.bf16.msra.mxu0 0
      %2328 = vmatprep.subr.bf16.mxu0 0
      %2329 = vmatpush1.bf16.msra.mxu0 0
      %2330 = vmatprep.mubr.bf16.mxu0 0
      %2331 = vmatmul.mubr.bf16.gmra.mrb[0].mxu0 %v2287
      %v2332 = vpop.f32.mrb[0].mxu0
      %v2333 = vadd.f32 %v2278, %v2332
      %v2334 = vpop.f32.mrb[0].mxu0
      %v2335 = vpop.f32.mrb[0].mxu0
      %v2336 = vadd.f32 %v2278, %v2335
      %v2337 = vpop.f32.mrb[0].mxu0
      %2338 = vmatprep.mubr.bf16.mxu0 0
      %2339 = vmatmul.mubr.bf16.gmra.mrb[0].mxu0 %v2290
      %v2340 = vpop.f32.mrb[0].mxu0
      %v2341 = vadd.f32 %v2278, %v2340
      %v2342 = vpop.f32.mrb[0].mxu0
      %v2343 = vpop.f32.mrb[0].mxu0
      %v2344 = vadd.f32 %v2278, %v2343
      %v2345 = vpop.f32.mrb[0].mxu0
      %2346 = vmatprep.mubr.bf16.mxu0 0
      %2347 = vmatmul.mubr.bf16.gmra.mrb[0].mxu0 %v2293
      %v2348 = vpop.f32.mrb[0].mxu0
      %v2349 = vadd.f32 %v2278, %v2348
      %v2350 = vpop.f32.mrb[0].mxu0
      %v2351 = vpop.f32.mrb[0].mxu0
      %v2352 = vadd.f32 %v2278, %v2351
      %v2353 = vpop.f32.mrb[0].mxu0
      %2354 = vmatprep.mubr.bf16.mxu0 0
      %2355 = vmatmul.mubr.bf16.gmra.mrb[0].mxu0 %v2296
      %v2356 = vpop.f32.mrb[0].mxu0
      %v2357 = vadd.f32 %v2278, %v2356
      %v2358 = vpop.f32.mrb[0].mxu0
      %v2359 = vpop.f32.mrb[0].mxu0
      %v2360 = vadd.f32 %v2278, %v2359
      %v2361 = vpop.f32.mrb[0].mxu0
      %2362 = vdwg.mxu0
      %v2363 = vmul.f32 %v2333, 0.5
      %v2364 = vmul.f32 %v2336, 0.5
      %v2365 = vmul.f32 %v2341, 0.5
      %v2366 = vmul.f32 %v2344, 0.5
      %v2367 = vmul.f32 %v2349, 0.5
      %v2368 = vmul.f32 %v2352, 0.5
      %v2369 = vmul.f32 %v2357, 0.5
      %v2370 = vmul.f32 %v2360, 0.5
      %v2371 = vmul.f32 %v2333, 0.70710677
      %v2372 = vmul.f32 %v2336, 0.70710677
      %v2373 = vmul.f32 %v2341, 0.70710677
      %v2374 = vmul.f32 %v2344, 0.70710677
      %v2375 = vmul.f32 %v2349, 0.70710677
      %v2376 = vmul.f32 %v2352, 0.70710677
      %v2377 = vmul.f32 %v2357, 0.70710677
      %v2378 = vmul.f32 %v2360, 0.70710677
      %v2379 = vmax.f32 %v2371, -4.0
      %v2380 = vmax.f32 %v2372, -4.0
      %v2381 = vmax.f32 %v2373, -4.0
      %v2382 = vmax.f32 %v2374, -4.0
      %v2383 = vmax.f32 %v2375, -4.0
      %v2384 = vmax.f32 %v2376, -4.0
      %v2385 = vmax.f32 %v2377, -4.0
      %v2386 = vmax.f32 %v2378, -4.0
      %v2387 = vmin.f32 %v2379, 4.0
      %v2388 = vmin.f32 %v2380, 4.0
      %v2389 = vmin.f32 %v2381, 4.0
      %v2390 = vmin.f32 %v2382, 4.0
      %v2391 = vmin.f32 %v2383, 4.0
      %v2392 = vmin.f32 %v2384, 4.0
      %v2393 = vmin.f32 %v2385, 4.0
      %v2394 = vmin.f32 %v2386, 4.0
      %v2395 = vmul.f32 %v2387, %v2387
      %v2396 = vmul.f32 %v2388, %v2388
      %v2397 = vmul.f32 %v2389, %v2389
      %v2398 = vmul.f32 %v2390, %v2390
      %v2399 = vmul.f32 %v2391, %v2391
      %v2400 = vmul.f32 %v2392, %v2392
      %v2401 = vmul.f32 %v2393, %v2393
      %v2402 = vmul.f32 %v2394, %v2394
      %v2403 = vmul.f32 %v2395, 0.00022905065
      %v2404 = vmul.f32 %v2396, 0.00022905065
      %v2405 = vmul.f32 %v2397, 0.00022905065
      %v2406 = vmul.f32 %v2398, 0.00022905065
      %v2407 = vmul.f32 %v2399, 0.00022905065
      %v2408 = vmul.f32 %v2400, 0.00022905065
      %v2409 = vmul.f32 %v2401, 0.00022905065
      %v2410 = vmul.f32 %v2402, 0.00022905065
      %v2411 = vadd.f32 %v2403, 0.003408291
      %v2412 = vadd.f32 %v2404, 0.003408291
      %v2413 = vadd.f32 %v2405, 0.003408291
      %v2414 = vadd.f32 %v2406, 0.003408291
      %v2415 = vadd.f32 %v2407, 0.003408291
      %v2416 = vadd.f32 %v2408, 0.003408291
      %v2417 = vadd.f32 %v2409, 0.003408291
      %v2418 = vadd.f32 %v2410, 0.003408291
      %v2419 = vmul.f32 %v2411, %v2395
      %v2420 = vmul.f32 %v2412, %v2396
      %v2421 = vmul.f32 %v2413, %v2397
      %v2422 = vmul.f32 %v2414, %v2398
      %v2423 = vmul.f32 %v2415, %v2399
      %v2424 = vmul.f32 %v2416, %v2400
      %v2425 = vmul.f32 %v2417, %v2401
      %v2426 = vmul.f32 %v2418, %v2402
      %v2427 = vadd.f32 %v2419, 0.050955694
      %v2428 = vadd.f32 %v2420, 0.050955694
      %v2429 = vadd.f32 %v2421, 0.050955694
      %v2430 = vadd.f32 %v2422, 0.050955694
      %v2431 = vadd.f32 %v2423, 0.050955694
      %v2432 = vadd.f32 %v2424, 0.050955694
      %v2433 = vadd.f32 %v2425, 0.050955694
      %v2434 = vadd.f32 %v2426, 0.050955694
      %v2435 = vmul.f32 %v2427, %v2395
      %v2436 = vmul.f32 %v2428, %v2396
      %v2437 = vmul.f32 %v2429, %v2397
      %v2438 = vmul.f32 %v2430, %v2398
      %v2439 = vmul.f32 %v2431, %v2399
      %v2440 = vmul.f32 %v2432, %v2400
      %v2441 = vmul.f32 %v2433, %v2401
      %v2442 = vmul.f32 %v2434, %v2402
      %v2443 = vadd.f32 %v2435, 0.18520832
      %v2444 = vadd.f32 %v2436, 0.18520832
      %v2445 = vadd.f32 %v2437, 0.18520832
      %v2446 = vadd.f32 %v2438, 0.18520832
      %v2447 = vadd.f32 %v2439, 0.18520832
      %v2448 = vadd.f32 %v2440, 0.18520832
      %v2449 = vadd.f32 %v2441, 0.18520832
      %v2450 = vadd.f32 %v2442, 0.18520832
      %v2451 = vmul.f32 %v2443, %v2395
      %v2452 = vmul.f32 %v2444, %v2396
      %v2453 = vmul.f32 %v2445, %v2397
      %v2454 = vmul.f32 %v2446, %v2398
      %v2455 = vmul.f32 %v2447, %v2399
      %v2456 = vmul.f32 %v2448, %v2400
      %v2457 = vmul.f32 %v2449, %v2401
      %v2458 = vmul.f32 %v2450, %v2402
      %v2459 = vadd.f32 %v2451, 1.1283791
      %v2460 = vadd.f32 %v2452, 1.1283791
      %v2461 = vadd.f32 %v2453, 1.1283791
      %v2462 = vadd.f32 %v2454, 1.1283791
      %v2463 = vadd.f32 %v2455, 1.1283791
      %v2464 = vadd.f32 %v2456, 1.1283791
      %v2465 = vadd.f32 %v2457, 1.1283791
      %v2466 = vadd.f32 %v2458, 1.1283791
      %v2467 = vmul.f32 %v2395, -1.1791603e-07
      %v2468 = vmul.f32 %v2396, -1.1791603e-07
      %v2469 = vmul.f32 %v2397, -1.1791603e-07
      %v2470 = vmul.f32 %v2398, -1.1791603e-07
      %v2471 = vmul.f32 %v2399, -1.1791603e-07
      %v2472 = vmul.f32 %v2400, -1.1791603e-07
      %v2473 = vmul.f32 %v2401, -1.1791603e-07
      %v2474 = vmul.f32 %v2402, -1.1791603e-07
      %v2475 = vadd.f32 %v2467, 2.3547966e-05
      %v2476 = vadd.f32 %v2468, 2.3547966e-05
      %v2477 = vadd.f32 %v2469, 2.3547966e-05
      %v2478 = vadd.f32 %v2470, 2.3547966e-05
      %v2479 = vadd.f32 %v2471, 2.3547966e-05
      %v2480 = vadd.f32 %v2472, 2.3547966e-05
      %v2481 = vadd.f32 %v2473, 2.3547966e-05
      %v2482 = vadd.f32 %v2474, 2.3547966e-05
      %v2483 = vmul.f32 %v2475, %v2395
      %v2484 = vmul.f32 %v2476, %v2396
      %v2485 = vmul.f32 %v2477, %v2397
      %v2486 = vmul.f32 %v2478, %v2398
      %v2487 = vmul.f32 %v2479, %v2399
      %v2488 = vmul.f32 %v2480, %v2400
      %v2489 = vmul.f32 %v2481, %v2401
      %v2490 = vmul.f32 %v2482, %v2402
      %v2491 = vadd.f32 %v2483, 0.0010179626
      %v2492 = vadd.f32 %v2484, 0.0010179626
      %v2493 = vadd.f32 %v2485, 0.0010179626
      %v2494 = vadd.f32 %v2486, 0.0010179626
      %v2495 = vadd.f32 %v2487, 0.0010179626
      %v2496 = vadd.f32 %v2488, 0.0010179626
      %v2497 = vadd.f32 %v2489, 0.0010179626
      %v2498 = vadd.f32 %v2490, 0.0010179626
      %v2499 = vmul.f32 %v2491, %v2395
      %v2500 = vmul.f32 %v2492, %v2396
      %v2501 = vmul.f32 %v2493, %v2397
      %v2502 = vmul.f32 %v2494, %v2398
      %v2503 = vmul.f32 %v2495, %v2399
      %v2504 = vmul.f32 %v2496, %v2400
      %v2505 = vmul.f32 %v2497, %v2401
      %v2506 = vmul.f32 %v2498, %v2402
      %v2507 = vadd.f32 %v2499, 0.01407047
      %v2508 = vadd.f32 %v2500, 0.01407047
      %v2509 = vadd.f32 %v2501, 0.01407047
      %v2510 = vadd.f32 %v2502, 0.01407047
      %v2511 = vadd.f32 %v2503, 0.01407047
      %v2512 = vadd.f32 %v2504, 0.01407047
      %v2513 = vadd.f32 %v2505, 0.01407047
      %v2514 = vadd.f32 %v2506, 0.01407047
      %v2515 = vmul.f32 %v2507, %v2395
      %v2516 = vmul.f32 %v2508, %v2396
      %v2517 = vmul.f32 %v2509, %v2397
      %v2518 = vmul.f32 %v2510, %v2398
      %v2519 = vmul.f32 %v2511, %v2399
      %v2520 = vmul.f32 %v2512, %v2400
      %v2521 = vmul.f32 %v2513, %v2401
      %v2522 = vmul.f32 %v2514, %v2402
      %v2523 = vadd.f32 %v2515, 0.11098505
      %v2524 = vadd.f32 %v2516, 0.11098505
      %v2525 = vadd.f32 %v2517, 0.11098505
      %v2526 = vadd.f32 %v2518, 0.11098505
      %v2527 = vadd.f32 %v2519, 0.11098505
      %v2528 = vadd.f32 %v2520, 0.11098505
      %v2529 = vadd.f32 %v2521, 0.11098505
      %v2530 = vadd.f32 %v2522, 0.11098505
      %v2531 = vmul.f32 %v2523, %v2395
      %v2532 = vmul.f32 %v2524, %v2396
      %v2533 = vmul.f32 %v2525, %v2397
      %v2534 = vmul.f32 %v2526, %v2398
      %v2535 = vmul.f32 %v2527, %v2399
      %v2536 = vmul.f32 %v2528, %v2400
      %v2537 = vmul.f32 %v2529, %v2401
      %v2538 = vmul.f32 %v2530, %v2402
      %v2539 = vadd.f32 %v2531, 0.49746925
      %v2540 = vadd.f32 %v2532, 0.49746925
      %v2541 = vadd.f32 %v2533, 0.49746925
      %v2542 = vadd.f32 %v2534, 0.49746925
      %v2543 = vadd.f32 %v2535, 0.49746925
      %v2544 = vadd.f32 %v2536, 0.49746925
      %v2545 = vadd.f32 %v2537, 0.49746925
      %v2546 = vadd.f32 %v2538, 0.49746925
      %v2547 = vmul.f32 %v2539, %v2395
      %v2548 = vmul.f32 %v2540, %v2396
      %v2549 = vmul.f32 %v2541, %v2397
      %v2550 = vmul.f32 %v2542, %v2398
      %v2551 = vmul.f32 %v2543, %v2399
      %v2552 = vmul.f32 %v2544, %v2400
      %v2553 = vmul.f32 %v2545, %v2401
      %v2554 = vmul.f32 %v2546, %v2402
      %v2555 = vadd.f32 %v2547, 1.0
      %v2556 = vadd.f32 %v2548, 1.0
      %v2557 = vadd.f32 %v2549, 1.0
      %v2558 = vadd.f32 %v2550, 1.0
      %v2559 = vadd.f32 %v2551, 1.0
      %v2560 = vadd.f32 %v2552, 1.0
      %v2561 = vadd.f32 %v2553, 1.0
      %v2562 = vadd.f32 %v2554, 1.0
      %v2563 = vmul.f32 %v2387, %v2459
      %v2564 = vmul.f32 %v2388, %v2460
      %v2565 = vmul.f32 %v2389, %v2461
      %v2566 = vmul.f32 %v2390, %v2462
      %v2567 = vmul.f32 %v2391, %v2463
      %v2568 = vmul.f32 %v2392, %v2464
      %v2569 = vmul.f32 %v2393, %v2465
      %v2570 = vmul.f32 %v2394, %v2466
      %v2571 = vrcp.pop %v2555
      %v2572 = vrcp.pop %v2556
      %v2573 = vrcp.pop %v2557
      %v2574 = vrcp.pop %v2558
      %v2575 = vrcp.pop %v2559
      %v2576 = vrcp.pop %v2560
      %v2577 = vrcp.pop %v2561
      %v2578 = vrcp.pop %v2562
      %v2579 = vmul.f32 %v2563, %v2571
      %v2580 = vmul.f32 %v2564, %v2572
      %v2581 = vmul.f32 %v2565, %v2573
      %v2582 = vmul.f32 %v2566, %v2574
      %v2583 = vmul.f32 %v2567, %v2575
      %v2584 = vmul.f32 %v2568, %v2576
      %v2585 = vmul.f32 %v2569, %v2577
      %v2586 = vmul.f32 %v2570, %v2578
      %v2587 = vadd.f32 %v2579, 1.0
      %v2588 = vadd.f32 %v2580, 1.0
      %v2589 = vadd.f32 %v2581, 1.0
      %v2590 = vadd.f32 %v2582, 1.0
      %v2591 = vadd.f32 %v2583, 1.0
      %v2592 = vadd.f32 %v2584, 1.0
      %v2593 = vadd.f32 %v2585, 1.0
      %v2594 = vadd.f32 %v2586, 1.0
      %v2595 = vmul.f32 %v2363, %v2587
      %v2596 = vmul.f32 %v2364, %v2588
      %v2597 = vmul.f32 %v2365, %v2589
      %v2598 = vmul.f32 %v2366, %v2590
      %v2599 = vmul.f32 %v2367, %v2591
      %v2600 = vmul.f32 %v2368, %v2592
      %v2601 = vmul.f32 %v2369, %v2593
      %v2602 = vmul.f32 %v2370, %v2594
      %v2603 = vpack.c.bf16 %v2596, %v2595
      %v2604 = vpack.c.bf16 %v2598, %v2597
      %v2605 = vpack.c.bf16 %v2600, %v2599
      %v2606 = vpack.c.bf16 %v2602, %v2601
      %v2607 = vld [vmem:[%s13] sm:$0xf]
      %v2608 = vld [vmem:[%s13 + $0x4] sm:$0xf]
      %v2609 = vld [vmem:[%s13 + $0x8] sm:$0xf]
      %v2610 = vld [vmem:[%s13 + $0xc] sm:$0xf]
      %v2611 = vld [vmem:[%s13 + $0x10] sm:$0xf]
      %v2612 = vld [vmem:[%s13 + $0x14] sm:$0xf]
      %v2613 = vld [vmem:[%s13 + $0x18] sm:$0xf]
      %v2614 = vld [vmem:[%s13 + $0x1c] sm:$0xf]
      %v2615 = vld [vmem:[%s14] sm:$0x1]
      %v2617 = vlaneseq
      %v2618 = vshrl.u32 %v2617, 7
      %v2619 = vsub.s32 0, %v2618
      %v2620 = vrot.slane %v2615, %v2619
      %v2630 = vunpack.c.l.b16 %v2607
      %v2631 = vunpack.c.l.b16 %v2608
      %v2632 = vunpack.c.l.b16 %v2609
      %v2633 = vunpack.c.l.b16 %v2610
      %v2634 = vunpack.c.l.b16 %v2611
      %v2635 = vunpack.c.l.b16 %v2612
      %v2636 = vunpack.c.l.b16 %v2613
      %v2637 = vunpack.c.l.b16 %v2614
      %v2638 = vpack.c.b16 %v2631, %v2630
      %v2639 = vpack.c.b16 %v2633, %v2632
      %v2640 = vpack.c.b16 %v2635, %v2634
      %v2641 = vpack.c.b16 %v2637, %v2636
      %vm2646 = vcmask 523264
      %v2648 = vsel %vm2646, %v2603, 0
      %v2651 = vsel %vm2646, %v2604, 0
      %v2654 = vsel %vm2646, %v2605, 0
      %v2657 = vsel %vm2646, %v2606, 0
      %2659 = vmatprep.subr.bf16.mxu0 0
      %2660 = vmatpush1.bf16.msra.mxu0 %v2638
      %2661 = vmatprep.subr.bf16.mxu0 0
      %2662 = vmatpush1.bf16.msra.mxu0 %v2639
      %2663 = vmatprep.subr.bf16.mxu0 0
      %2664 = vmatpush1.bf16.msra.mxu0 %v2640
      %2665 = vmatprep.subr.bf16.mxu0 0
      %2666 = vmatpush1.bf16.msra.mxu0 %v2641
      %2667 = vmatprep.subr.bf16.mxu0 0
      %2668 = vmatpush1.bf16.msra.mxu0 0
      %2669 = vmatprep.subr.bf16.mxu0 0
      %2670 = vmatpush1.bf16.msra.mxu0 0
      %2671 = vmatprep.subr.bf16.mxu0 0
      %2672 = vmatpush1.bf16.msra.mxu0 0
      %2673 = vmatprep.subr.bf16.mxu0 0
      %2674 = vmatpush1.bf16.msra.mxu0 0
      %2675 = vmatprep.subr.bf16.mxu0 0
      %2676 = vmatpush1.bf16.msra.mxu0 0
      %2677 = vmatprep.subr.bf16.mxu0 0
      %2678 = vmatpush1.bf16.msra.mxu0 0
      %2679 = vmatprep.subr.bf16.mxu0 0
      %2680 = vmatpush1.bf16.msra.mxu0 0
      %2681 = vmatprep.subr.bf16.mxu0 0
      %2682 = vmatpush1.bf16.msra.mxu0 0
      %2683 = vmatprep.subr.bf16.mxu0 0
      %2684 = vmatpush1.bf16.msra.mxu0 0
      %2685 = vmatprep.subr.bf16.mxu0 0
      %2686 = vmatpush1.bf16.msra.mxu0 0
      %2687 = vmatprep.subr.bf16.mxu0 0
      %2688 = vmatpush1.bf16.msra.mxu0 0
      %2689 = vmatprep.subr.bf16.mxu0 0
      %2690 = vmatpush1.bf16.msra.mxu0 0
      %2691 = vmatprep.mubr.bf16.mxu0 0
      %2692 = vmatmul.mubr.bf16.gmra.mrb[0].mxu0 %v2648
      %v2693 = vpop.f32.mrb[0].mxu0
      %v2694 = vadd.f32 %v2620, %v2693
      %v2695 = vpop.f32.mrb[0].mxu0
      %v2696 = vpop.f32.mrb[0].mxu0
      %v2697 = vadd.f32 %v2620, %v2696
      %v2698 = vpop.f32.mrb[0].mxu0
      %2699 = vmatprep.mubr.bf16.mxu0 0
      %2700 = vmatmul.mubr.bf16.gmra.mrb[0].mxu0 %v2651
      %v2701 = vpop.f32.mrb[0].mxu0
      %v2702 = vadd.f32 %v2620, %v2701
      %v2703 = vpop.f32.mrb[0].mxu0
      %v2704 = vpop.f32.mrb[0].mxu0
      %v2705 = vadd.f32 %v2620, %v2704
      %v2706 = vpop.f32.mrb[0].mxu0
      %2707 = vmatprep.mubr.bf16.mxu0 0
      %2708 = vmatmul.mubr.bf16.gmra.mrb[0].mxu0 %v2654
      %v2709 = vpop.f32.mrb[0].mxu0
      %v2710 = vadd.f32 %v2620, %v2709
      %v2711 = vpop.f32.mrb[0].mxu0
      %v2712 = vpop.f32.mrb[0].mxu0
      %v2713 = vadd.f32 %v2620, %v2712
      %v2714 = vpop.f32.mrb[0].mxu0
      %2715 = vmatprep.mubr.bf16.mxu0 0
      %2716 = vmatmul.mubr.bf16.gmra.mrb[0].mxu0 %v2657
      %v2717 = vpop.f32.mrb[0].mxu0
      %v2718 = vadd.f32 %v2620, %v2717
      %v2719 = vpop.f32.mrb[0].mxu0
      %v2720 = vpop.f32.mrb[0].mxu0
      %v2721 = vadd.f32 %v2620, %v2720
      %v2722 = vpop.f32.mrb[0].mxu0
      %2723 = vdwg.mxu0
      %v2724 = vadd.f32 %v2125, %v2694
      %v2725 = vadd.f32 %v2126, %v2697
      %v2726 = vadd.f32 %v2127, %v2702
      %v2727 = vadd.f32 %v2128, %v2705
      %v2728 = vadd.f32 %v2129, %v2710
      %v2729 = vadd.f32 %v2130, %v2713
      %v2730 = vadd.f32 %v2131, %v2718
      %v2731 = vadd.f32 %v2132, %v2721
      %2732 = vst.msk [vmem:[%s494] sm:$0xff] %vm506, %v2724
      %2733 = vst.msk [vmem:[%s494 + $0x8] sm:$0xff] %vm506, %v2725
      %2734 = vst.msk [vmem:[%s494 + $0x10] sm:$0xff] %vm506, %v2726
      %2735 = vst.msk [vmem:[%s494 + $0x18] sm:$0xff] %vm506, %v2727
      %2736 = vst.msk [vmem:[%s494 + $0x20] sm:$0xff] %vm506, %v2728
      %2737 = vst.msk [vmem:[%s494 + $0x28] sm:$0xff] %vm506, %v2729
      %2738 = vst.msk [vmem:[%s494 + $0x30] sm:$0xff] %vm506, %v2730
      %2739 = vst.msk [vmem:[%s494 + $0x38] sm:$0xff] %vm506, %v2731
      %p2740 = scmp.lt.s32.totalorder %s26, 1
      %s2741 = scalar_select %p2740, %s26, 1
      %s2742 = smul.addr %s2741, 8
      %s2743 = smul.addr %s2742, 8
      %s2744 = scalar_lea.vmem %s15, %s2743
      // Predicated region
      $region81: #{swin_forward.8} parent=79 // pred_check
        %p2745 = pneg %p364
      $region82: #{swin_forward.8} parent=79 // pred_check_branch
        %2747 = sbr.rel (%p2745) target = $region84
      $region83: #{swin_forward.8} parent=79 // pred_region
        _
      $region84: #{swin_forward.8} parent=79 // pred_fallthru
        _
    $region80: #{swin_forward.8} parent=5 // pred_fallthru
      _
    %p2748 = scmp.le.s32.totalorder 2, %s21
    // Predicated region
    $region85: #{swin_forward.8} parent=5 // pred_check
      %p2749 = pneg %p2748
    $region86: #{swin_forward.8} parent=5 // pred_check_branch
      %2751 = sbr.rel (%p2749) target = $region88
    $region87: #{swin_forward.8} parent=5 // pred_region
      %s2752 = ssub.s32 %s21, 2
      // Predicated region
      $region89: #{swin_forward.8} parent=87 // pred_check
        %p2753 = pneg %p370
      $region90: #{swin_forward.8} parent=87 // pred_check_branch
        %2755 = sbr.rel (%p2753) target = $region92
      $region91: #{swin_forward.8} parent=87 // pred_region
        %p2756 = scmp.lt.s32.totalorder %s27, 1
        %s2757 = scalar_select %p2756, %s27, 1
        %s2758 = smul.addr %s2757, 8
        %s2759 = smul.addr %s2758, 8
        %s2760 = scalar_lea.vmem %s15, %s2759
      $region92: #{swin_forward.8} parent=87 // pred_fallthru
        _
    $region88: #{swin_forward.8} parent=5 // pred_fallthru
      _
  $region6: #{swin_forward.8} parent=0 // loop_footer
    %s25 = sadd.s32 1, %s21
  $region7: #{swin_forward.8} parent=0 // loop_footer_branch
    %20 = sbr.rel target = $region3
  $region8: #{swin_forward.8} parent=0 // loop_exit
    _

// kernel: swin_forward.10
$region0: #{swin_forward.10}
  #allocation0 [shape = 'u32[]', space=smem, size = 0x4, offset = 0x4, fixed_abs, tag = 'smem constant byte address 0x4 - core index']
  #allocation1 [shape = 'u32[144,128]{1,0:T(1,128)}', space=vmem, size = 0x12000, scoped, tag = 'internal scratch']
  %s0 = inlined_call_operand.vmem [shape: f32[32,64], index: 0, kind: input, shape index: {}]
  %s1 = inlined_call_operand.vmem [shape: f32[1,64], index: 1, kind: input, shape index: {}]
  %s2 = inlined_call_operand.vmem [shape: f32[1,64], index: 2, kind: input, shape index: {}]
  %s3 = inlined_call_operand.vmem [shape: bf16[64,32], index: 3, kind: input, shape index: {}]
  %s4 = inlined_call_operand.vmem [shape: f32[32,32], index: 4, kind: output, shape index: {}]
  %s5 = sld [smem:[#allocation0]]
  $region26: #{swin_forward.10} parent=0
    _
  %s7 = ssub.s32 1, %s5
  %s8 = scalar_select 0, %s7, %s5
  // Predicated region
  $region2: #{swin_forward.10} parent=0 // pred_check
    _
  $region3: #{swin_forward.10} parent=0 // pred_check_branch
    %10 = sbr.rel (0) target = $region5
  $region4: #{swin_forward.10} parent=0 // pred_region
    _
  $region5: #{swin_forward.10} parent=0 // pred_fallthru
    _
  // Predicated region
  $region6: #{swin_forward.10} parent=0 // pred_check
    _
  $region7: #{swin_forward.10} parent=0 // pred_check_branch
    %12 = sbr.rel (0) target = $region9
  $region8: #{swin_forward.10} parent=0 // pred_region
    _
  $region9: #{swin_forward.10} parent=0 // pred_fallthru
    _
  // Predicated region
  $region10: #{swin_forward.10} parent=0 // pred_check
    _
  $region11: #{swin_forward.10} parent=0 // pred_check_branch
    %14 = sbr.rel (0) target = $region13
  $region12: #{swin_forward.10} parent=0 // pred_region
    _
  $region13: #{swin_forward.10} parent=0 // pred_fallthru
    _
  // Predicated region
  $region14: #{swin_forward.10} parent=0 // pred_check
    _
  $region15: #{swin_forward.10} parent=0 // pred_check_branch
    %16 = sbr.rel (0) target = $region17
  $region16: #{swin_forward.10} parent=0 // pred_region
    _
  $region17: #{swin_forward.10} parent=0 // pred_fallthru
    _
  %v18 = vld [vmem:[%s0] sm:$0xff]
  %v19 = vld [vmem:[%s0 + $0x8] sm:$0xff]
  %v20 = vld [vmem:[%s0 + $0x10] sm:$0xff]
  %v21 = vld [vmem:[%s0 + $0x18] sm:$0xff]
  %v22 = vld [vmem:[%s1] sm:$0x1]
  %v23 = vld [vmem:[%s2] sm:$0x1]
  %vm24 = vcmask 523264
  %v25 = vsel %vm24, %v18, 0.0
  %26 = vadd.xlane.f32.xlu0 %v25
  %v27 = vpop.xlane.xlu0 %26
  %v28 = vsel %vm24, %v19, 0.0
  %29 = vadd.xlane.f32.xlu0 %v28
  %v30 = vpop.xlane.xlu0 %29
  %v31 = vsel %vm24, %v20, 0.0
  %32 = vadd.xlane.f32.xlu0 %v31
  %v33 = vpop.xlane.xlu0 %32
  %v34 = vsel %vm24, %v21, 0.0
  %35 = vadd.xlane.f32.xlu0 %v34
  %v36 = vpop.xlane.xlu0 %35
  %v37 = vrcp.pop 64.0
  %v38 = vmul.f32 %v27, %v37
  %v39 = vmul.f32 %v30, %v37
  %v40 = vmul.f32 %v33, %v37
  %v41 = vmul.f32 %v36, %v37
  %v42 = vsub.f32 %v18, %v38
  %v43 = vsub.f32 %v19, %v39
  %v44 = vsub.f32 %v20, %v40
  %v45 = vsub.f32 %v21, %v41
  %v46 = vmul.f32 %v42, %v42
  %v47 = vmul.f32 %v43, %v43
  %v48 = vmul.f32 %v44, %v44
  %v49 = vmul.f32 %v45, %v45
  %v50 = vsel %vm24, %v46, 0.0
  %51 = vadd.xlane.f32.xlu0 %v50
  %v52 = vpop.xlane.xlu0 %51
  %v53 = vsel %vm24, %v47, 0.0
  %54 = vadd.xlane.f32.xlu0 %v53
  %v55 = vpop.xlane.xlu0 %54
  %v56 = vsel %vm24, %v48, 0.0
  %57 = vadd.xlane.f32.xlu0 %v56
  %v58 = vpop.xlane.xlu0 %57
  %v59 = vsel %vm24, %v49, 0.0
  %60 = vadd.xlane.f32.xlu0 %v59
  %v61 = vpop.xlane.xlu0 %60
  %v62 = vmul.f32 %v52, %v37
  %v63 = vmul.f32 %v55, %v37
  %v64 = vmul.f32 %v58, %v37
  %v65 = vmul.f32 %v61, %v37
  %v66 = vadd.f32 %v62, 1e-05
  %v67 = vadd.f32 %v63, 1e-05
  %v68 = vadd.f32 %v64, 1e-05
  %v69 = vadd.f32 %v65, 1e-05
  %v70 = vrsqrt.pop %v66
  %v71 = vrsqrt.pop %v67
  %v72 = vrsqrt.pop %v68
  %v73 = vrsqrt.pop %v69
  %v74 = vmul.f32 %v42, %v70
  %v75 = vmul.f32 %v43, %v71
  %v76 = vmul.f32 %v44, %v72
  %v77 = vmul.f32 %v45, %v73
  %v79 = vlaneseq
  %v80 = vshrl.u32 %v79, 7
  %v81 = vsub.s32 0, %v80
  %v82 = vrot.slane %v22, %v81
  %v84 = vmul.f32 %v74, %v82
  %v85 = vmul.f32 %v75, %v82
  %v86 = vmul.f32 %v76, %v82
  %v87 = vmul.f32 %v77, %v82
  %v89 = vlaneseq
  %v90 = vshrl.u32 %v89, 7
  %v91 = vsub.s32 0, %v90
  %v92 = vrot.slane %v23, %v91
  %v94 = vadd.f32 %v84, %v92
  %v95 = vadd.f32 %v85, %v92
  %v96 = vadd.f32 %v86, %v92
  %v97 = vadd.f32 %v87, %v92
  %v98 = vpack.c.bf16 %v95, %v94
  %v99 = vpack.c.bf16 %v97, %v96
  %v100 = vld [vmem:[%s3] sm:$0xf]
  %v101 = vld [vmem:[%s3 + $0x4] sm:$0xf]
  %v102 = vld [vmem:[%s3 + $0x8] sm:$0xf]
  %v103 = vld [vmem:[%s3 + $0xc] sm:$0xf]
  %v104 = vld [vmem:[%s3 + $0x10] sm:$0xf]
  %v105 = vld [vmem:[%s3 + $0x14] sm:$0xf]
  %v106 = vld [vmem:[%s3 + $0x18] sm:$0xf]
  %v107 = vld [vmem:[%s3 + $0x1c] sm:$0xf]
  %v116 = vunpack.c.l.b16 %v100
  %v117 = vunpack.c.l.b16 %v101
  %v118 = vunpack.c.l.b16 %v102
  %v119 = vunpack.c.l.b16 %v103
  %v120 = vunpack.c.l.b16 %v104
  %v121 = vunpack.c.l.b16 %v105
  %v122 = vunpack.c.l.b16 %v106
  %v123 = vunpack.c.l.b16 %v107
  %v124 = vpack.c.b16 %v117, %v116
  %v125 = vpack.c.b16 %v119, %v118
  %v126 = vpack.c.b16 %v121, %v120
  %v127 = vpack.c.b16 %v123, %v122
  %v133 = vsel %vm24, %v98, 0
  %v136 = vsel %vm24, %v99, 0
  %138 = vmatprep.subr.bf16.mxu0 0
  %139 = vmatpush1.bf16.msra.mxu0 %v124
  %140 = vmatprep.subr.bf16.mxu0 0
  %141 = vmatpush1.bf16.msra.mxu0 %v125
  %142 = vmatprep.subr.bf16.mxu0 0
  %143 = vmatpush1.bf16.msra.mxu0 %v126
  %144 = vmatprep.subr.bf16.mxu0 0
  %145 = vmatpush1.bf16.msra.mxu0 %v127
  %146 = vmatprep.subr.bf16.mxu0 0
  %147 = vmatpush1.bf16.msra.mxu0 0
  %148 = vmatprep.subr.bf16.mxu0 0
  %149 = vmatpush1.bf16.msra.mxu0 0
  %150 = vmatprep.subr.bf16.mxu0 0
  %151 = vmatpush1.bf16.msra.mxu0 0
  %152 = vmatprep.subr.bf16.mxu0 0
  %153 = vmatpush1.bf16.msra.mxu0 0
  %154 = vmatprep.subr.bf16.mxu0 0
  %155 = vmatpush1.bf16.msra.mxu0 0
  %156 = vmatprep.subr.bf16.mxu0 0
  %157 = vmatpush1.bf16.msra.mxu0 0
  %158 = vmatprep.subr.bf16.mxu0 0
  %159 = vmatpush1.bf16.msra.mxu0 0
  %160 = vmatprep.subr.bf16.mxu0 0
  %161 = vmatpush1.bf16.msra.mxu0 0
  %162 = vmatprep.subr.bf16.mxu0 0
  %163 = vmatpush1.bf16.msra.mxu0 0
  %164 = vmatprep.subr.bf16.mxu0 0
  %165 = vmatpush1.bf16.msra.mxu0 0
  %166 = vmatprep.subr.bf16.mxu0 0
  %167 = vmatpush1.bf16.msra.mxu0 0
  %168 = vmatprep.subr.bf16.mxu0 0
  %169 = vmatpush1.bf16.msra.mxu0 0
  %170 = vmatprep.mubr.bf16.mxu0 0
  %171 = vmatmul.mubr.bf16.gmra.mrb[0].mxu0 %v133
  %v172 = vpop.f32.mrb[0].mxu0
  %v173 = vadd.f32 0.0, %v172
  %v174 = vpop.f32.mrb[0].mxu0
  %v175 = vpop.f32.mrb[0].mxu0
  %v176 = vadd.f32 0.0, %v175
  %v177 = vpop.f32.mrb[0].mxu0
  %178 = vmatprep.mubr.bf16.mxu0 0
  %179 = vmatmul.mubr.bf16.gmra.mrb[0].mxu0 %v136
  %v180 = vpop.f32.mrb[0].mxu0
  %v181 = vadd.f32 0.0, %v180
  %v182 = vpop.f32.mrb[0].mxu0
  %v183 = vpop.f32.mrb[0].mxu0
  %v184 = vadd.f32 0.0, %v183
  %v185 = vpop.f32.mrb[0].mxu0
  %186 = vdwg.mxu0
  %vm187 = vcmask 261120
  %188 = vst.msk [vmem:[%s4] sm:$0xff] %vm187, %v173
  %189 = vst.msk [vmem:[%s4 + $0x8] sm:$0xff] %vm187, %v176
  %190 = vst.msk [vmem:[%s4 + $0x10] sm:$0xff] %vm187, %v181
  %191 = vst.msk [vmem:[%s4 + $0x18] sm:$0xff] %vm187, %v184
  // Predicated region
  $region18: #{swin_forward.10} parent=0 // pred_check
    _
  $region19: #{swin_forward.10} parent=0 // pred_check_branch
    %193 = sbr.rel (0) target = $region21
  $region20: #{swin_forward.10} parent=0 // pred_region
    _
  $region21: #{swin_forward.10} parent=0 // pred_fallthru
    _
  // Predicated region
  $region22: #{swin_forward.10} parent=0 // pred_check
    _
  $region23: #{swin_forward.10} parent=0 // pred_check_branch
    %195 = sbr.rel (0) target = $region25
  $region24: #{swin_forward.10} parent=0 // pred_region
    _
  $region25: #{swin_forward.10} parent=0 // pred_fallthru
    _

// kernel: swin_forward.9
$region0: #{swin_forward.9}
  #allocation0 [shape = 'u32[]', space=smem, size = 0x4, offset = 0x4, fixed_abs, tag = 'smem constant byte address 0x4 - core index']
  #allocation1 [shape = 'u32[144,128]{1,0:T(1,128)}', space=vmem, size = 0x12000, scoped, tag = 'internal scratch']
  %s0 = inlined_call_operand.vmem [shape: f32[2,64,16], index: 0, kind: input, shape index: {}]
  %s1 = inlined_call_operand.vmem [shape: f32[1,16], index: 1, kind: input, shape index: {}]
  %s2 = inlined_call_operand.vmem [shape: f32[1,16], index: 2, kind: input, shape index: {}]
  %s3 = inlined_call_operand.vmem [shape: bf16[16,48], index: 3, kind: input, shape index: {}]
  %s4 = inlined_call_operand.vmem [shape: f32[1,48], index: 4, kind: input, shape index: {}]
  %s5 = inlined_call_operand.vmem [shape: bf16[16,16], index: 5, kind: input, shape index: {}]
  %s6 = inlined_call_operand.vmem [shape: f32[1,16], index: 6, kind: input, shape index: {}]
  %s7 = inlined_call_operand.vmem [shape: f32[2,16,16], index: 7, kind: input, shape index: {}]
  %s8 = inlined_call_operand.vmem [shape: f32[4,16,16], index: 8, kind: input, shape index: {}]
  %s9 = inlined_call_operand.vmem [shape: f32[1,16], index: 9, kind: input, shape index: {}]
  %s10 = inlined_call_operand.vmem [shape: f32[1,16], index: 10, kind: input, shape index: {}]
  %s11 = inlined_call_operand.vmem [shape: bf16[16,64], index: 11, kind: input, shape index: {}]
  %s12 = inlined_call_operand.vmem [shape: f32[1,64], index: 12, kind: input, shape index: {}]
  %s13 = inlined_call_operand.vmem [shape: bf16[64,16], index: 13, kind: input, shape index: {}]
  %s14 = inlined_call_operand.vmem [shape: f32[1,16], index: 14, kind: input, shape index: {}]
  %s15 = inlined_call_operand.vmem [shape: f32[2,64,16], index: 15, kind: output, shape index: {}]
  %s16 = sld [smem:[#allocation0]]
  $region93: #{swin_forward.9} parent=0
    _
  %s18 = ssub.s32 1, %s16
  %s19 = scalar_select 0, %s18, %s16
  loop: start=0, step=1, limit=4
  $region2: #{swin_forward.9} parent=0 // loop_pre_header
    _
  $region3: #{swin_forward.9} parent=0 // loop_header
    %s21 = sphi 0, %s25
    %p22 = scmp.ge.s32.totalorder %s21, 4
    %s31 = sphi 0, %s33
    %s34 = sphi 0, %s31
    %s35 = sphi 0, %s34
    %s51 = sphi 0, %s35
    %s55 = sphi 0, %s55
    %s57 = sphi 0, %s55
    %s58 = sphi 0, %s57
    %s72 = sphi 0, %s58
    %s76 = sphi 0, %s76
    %s78 = sphi 0, %s76
    %s79 = sphi 0, %s78
    %s93 = sphi 0, %s79
    %s97 = sphi 0, %s97
    %s99 = sphi 0, %s97
    %s100 = sphi 0, %s99
    %s114 = sphi 0, %s100
    %s118 = sphi 0, %s118
    %s120 = sphi 0, %s118
    %s121 = sphi 0, %s120
    %s135 = sphi 0, %s121
    %s139 = sphi 0, %s139
    %s141 = sphi 0, %s139
    %s142 = sphi 0, %s141
    %s156 = sphi 0, %s142
    %s160 = sphi 0, %s160
    %s162 = sphi 0, %s160
    %s163 = sphi 0, %s162
    %s177 = sphi 0, %s163
    %s181 = sphi 0, %s181
    %s183 = sphi 0, %s181
    %s184 = sphi 0, %s183
    %s198 = sphi 0, %s184
    %s202 = sphi 0, %s202
    %s204 = sphi 0, %s202
    %s205 = sphi 0, %s204
    %s219 = sphi 0, %s205
    %s223 = sphi 0, %s223
    %s225 = sphi 0, %s223
    %s226 = sphi 0, %s225
    %s240 = sphi 0, %s226
    %s244 = sphi 0, %s244
    %s246 = sphi 0, %s244
    %s247 = sphi 0, %s246
    %s261 = sphi 0, %s247
    %s265 = sphi 0, %s265
    %s267 = sphi 0, %s265
    %s268 = sphi 0, %s267
    %s282 = sphi 0, %s268
    %s286 = sphi 0, %s286
    %s288 = sphi 0, %s286
    %s289 = sphi 0, %s288
    %s303 = sphi 0, %s289
    %s307 = sphi 0, %s307
    %s309 = sphi 0, %s307
    %s310 = sphi 0, %s309
    %s324 = sphi 0, %s310
    %s328 = sphi 0, %s328
    %s330 = sphi 0, %s328
    %s331 = sphi 0, %s330
    %s345 = sphi 0, %s331
    %s351 = sphi 0, %s353
    %s354 = sphi 0, %s351
    %s355 = sphi 0, %s354
    %s371 = sphi 0, %s355
  $region4: #{swin_forward.9} parent=0 // loop_header_branch
    %24 = sbr.rel (%p22) target = $region8
  $region5: #{swin_forward.9} parent=0 // loop_body
    %s26 = ssub.s32 %s21, 1
    %s27 = ssub.s32 %s21, 2
    %s28 = sadd.s32 %s21, 1
    %s29 = ssub.s32 %s21, %s28
    %p30 = scmp.eq.s32.totalorder %s29, 0
    %s32 = sadd.s32 %s31, 1
    %s33 = scalar_select %p30, %s31, %s32
    %p36 = pneg %p30
    %p37 = scmp.eq.s32.totalorder %s21, 1
    %p38 = por %p36, %p37
    %p39 = scmp.ne.s32.totalorder %s31, %s34
    %p40 = scmp.eq.s32.totalorder %s21, 0
    %p41 = por %p39, %p40
    %p42 = scmp.ne.s32.totalorder %s31, %s34
    %p43 = scmp.eq.s32.totalorder %s26, 1
    %p44 = por %p42, %p43
    %p45 = scmp.ne.s32.totalorder %s34, %s35
    %p46 = scmp.eq.s32.totalorder %s26, 0
    %p47 = por %p45, %p46
    %p48 = scmp.ne.s32.totalorder %s34, %s35
    %p49 = scmp.eq.s32.totalorder %s27, 1
    %p50 = por %p48, %p49
    %p52 = scmp.ne.s32.totalorder %s35, %s51
    %p53 = scmp.eq.s32.totalorder %s27, 0
    %p54 = por %p52, %p53
    %s56 = sadd.s32 %s55, 1
    %p59 = scmp.eq.s32.totalorder %s21, 1
    %p60 = scmp.ne.s32.totalorder %s55, %s57
    %p61 = scmp.eq.s32.totalorder %s21, 0
    %p62 = por %p60, %p61
    %p63 = scmp.ne.s32.totalorder %s55, %s57
    %p64 = scmp.eq.s32.totalorder %s26, 1
    %p65 = por %p63, %p64
    %p66 = scmp.ne.s32.totalorder %s57, %s58
    %p67 = scmp.eq.s32.totalorder %s26, 0
    %p68 = por %p66, %p67
    %p69 = scmp.ne.s32.totalorder %s57, %s58
    %p70 = scmp.eq.s32.totalorder %s27, 1
    %p71 = por %p69, %p70
    %p73 = scmp.ne.s32.totalorder %s58, %s72
    %p74 = scmp.eq.s32.totalorder %s27, 0
    %p75 = por %p73, %p74
    %s77 = sadd.s32 %s76, 1
    %p80 = scmp.eq.s32.totalorder %s21, 1
    %p81 = scmp.ne.s32.totalorder %s76, %s78
    %p82 = scmp.eq.s32.totalorder %s21, 0
    %p83 = por %p81, %p82
    %p84 = scmp.ne.s32.totalorder %s76, %s78
    %p85 = scmp.eq.s32.totalorder %s26, 1
    %p86 = por %p84, %p85
    %p87 = scmp.ne.s32.totalorder %s78, %s79
    %p88 = scmp.eq.s32.totalorder %s26, 0
    %p89 = por %p87, %p88
    %p90 = scmp.ne.s32.totalorder %s78, %s79
    %p91 = scmp.eq.s32.totalorder %s27, 1
    %p92 = por %p90, %p91
    %p94 = scmp.ne.s32.totalorder %s79, %s93
    %p95 = scmp.eq.s32.totalorder %s27, 0
    %p96 = por %p94, %p95
    %s98 = sadd.s32 %s97, 1
    %p101 = scmp.eq.s32.totalorder %s21, 1
    %p102 = scmp.ne.s32.totalorder %s97, %s99
    %p103 = scmp.eq.s32.totalorder %s21, 0
    %p104 = por %p102, %p103
    %p105 = scmp.ne.s32.totalorder %s97, %s99
    %p106 = scmp.eq.s32.totalorder %s26, 1
    %p107 = por %p105, %p106
    %p108 = scmp.ne.s32.totalorder %s99, %s100
    %p109 = scmp.eq.s32.totalorder %s26, 0
    %p110 = por %p108, %p109
    %p111 = scmp.ne.s32.totalorder %s99, %s100
    %p112 = scmp.eq.s32.totalorder %s27, 1
    %p113 = por %p111, %p112
    %p115 = scmp.ne.s32.totalorder %s100, %s114
    %p116 = scmp.eq.s32.totalorder %s27, 0
    %p117 = por %p115, %p116
    %s119 = sadd.s32 %s118, 1
    %p122 = scmp.eq.s32.totalorder %s21, 1
    %p123 = scmp.ne.s32.totalorder %s118, %s120
    %p124 = scmp.eq.s32.totalorder %s21, 0
    %p125 = por %p123, %p124
    %p126 = scmp.ne.s32.totalorder %s118, %s120
    %p127 = scmp.eq.s32.totalorder %s26, 1
    %p128 = por %p126, %p127
    %p129 = scmp.ne.s32.totalorder %s120, %s121
    %p130 = scmp.eq.s32.totalorder %s26, 0
    %p131 = por %p129, %p130
    %p132 = scmp.ne.s32.totalorder %s120, %s121
    %p133 = scmp.eq.s32.totalorder %s27, 1
    %p134 = por %p132, %p133
    %p136 = scmp.ne.s32.totalorder %s121, %s135
    %p137 = scmp.eq.s32.totalorder %s27, 0
    %p138 = por %p136, %p137
    %s140 = sadd.s32 %s139, 1
    %p143 = scmp.eq.s32.totalorder %s21, 1
    %p144 = scmp.ne.s32.totalorder %s139, %s141
    %p145 = scmp.eq.s32.totalorder %s21, 0
    %p146 = por %p144, %p145
    %p147 = scmp.ne.s32.totalorder %s139, %s141
    %p148 = scmp.eq.s32.totalorder %s26, 1
    %p149 = por %p147, %p148
    %p150 = scmp.ne.s32.totalorder %s141, %s142
    %p151 = scmp.eq.s32.totalorder %s26, 0
    %p152 = por %p150, %p151
    %p153 = scmp.ne.s32.totalorder %s141, %s142
    %p154 = scmp.eq.s32.totalorder %s27, 1
    %p155 = por %p153, %p154
    %p157 = scmp.ne.s32.totalorder %s142, %s156
    %p158 = scmp.eq.s32.totalorder %s27, 0
    %p159 = por %p157, %p158
    %s161 = sadd.s32 %s160, 1
    %p164 = scmp.eq.s32.totalorder %s21, 1
    %p165 = scmp.ne.s32.totalorder %s160, %s162
    %p166 = scmp.eq.s32.totalorder %s21, 0
    %p167 = por %p165, %p166
    %p168 = scmp.ne.s32.totalorder %s160, %s162
    %p169 = scmp.eq.s32.totalorder %s26, 1
    %p170 = por %p168, %p169
    %p171 = scmp.ne.s32.totalorder %s162, %s163
    %p172 = scmp.eq.s32.totalorder %s26, 0
    %p173 = por %p171, %p172
    %p174 = scmp.ne.s32.totalorder %s162, %s163
    %p175 = scmp.eq.s32.totalorder %s27, 1
    %p176 = por %p174, %p175
    %p178 = scmp.ne.s32.totalorder %s163, %s177
    %p179 = scmp.eq.s32.totalorder %s27, 0
    %p180 = por %p178, %p179
    %s182 = sadd.s32 %s181, 1
    %p185 = scmp.eq.s32.totalorder %s21, 1
    %p186 = scmp.ne.s32.totalorder %s181, %s183
    %p187 = scmp.eq.s32.totalorder %s21, 0
    %p188 = por %p186, %p187
    %p189 = scmp.ne.s32.totalorder %s181, %s183
    %p190 = scmp.eq.s32.totalorder %s26, 1
    %p191 = por %p189, %p190
    %p192 = scmp.ne.s32.totalorder %s183, %s184
    %p193 = scmp.eq.s32.totalorder %s26, 0
    %p194 = por %p192, %p193
    %p195 = scmp.ne.s32.totalorder %s183, %s184
    %p196 = scmp.eq.s32.totalorder %s27, 1
    %p197 = por %p195, %p196
    %p199 = scmp.ne.s32.totalorder %s184, %s198
    %p200 = scmp.eq.s32.totalorder %s27, 0
    %p201 = por %p199, %p200
    %s203 = sadd.s32 %s202, 1
    %p206 = scmp.eq.s32.totalorder %s21, 1
    %p207 = scmp.ne.s32.totalorder %s202, %s204
    %p208 = scmp.eq.s32.totalorder %s21, 0
    %p209 = por %p207, %p208
    %p210 = scmp.ne.s32.totalorder %s202, %s204
    %p211 = scmp.eq.s32.totalorder %s26, 1
    %p212 = por %p210, %p211
    %p213 = scmp.ne.s32.totalorder %s204, %s205
    %p214 = scmp.eq.s32.totalorder %s26, 0
    %p215 = por %p213, %p214
    %p216 = scmp.ne.s32.totalorder %s204, %s205
    %p217 = scmp.eq.s32.totalorder %s27, 1
    %p218 = por %p216, %p217
    %p220 = scmp.ne.s32.totalorder %s205, %s219
    %p221 = scmp.eq.s32.totalorder %s27, 0
    %p222 = por %p220, %p221
    %s224 = sadd.s32 %s223, 1
    %p227 = scmp.eq.s32.totalorder %s21, 1
    %p228 = scmp.ne.s32.totalorder %s223, %s225
    %p229 = scmp.eq.s32.totalorder %s21, 0
    %p230 = por %p228, %p229
    %p231 = scmp.ne.s32.totalorder %s223, %s225
    %p232 = scmp.eq.s32.totalorder %s26, 1
    %p233 = por %p231, %p232
    %p234 = scmp.ne.s32.totalorder %s225, %s226
    %p235 = scmp.eq.s32.totalorder %s26, 0
    %p236 = por %p234, %p235
    %p237 = scmp.ne.s32.totalorder %s225, %s226
    %p238 = scmp.eq.s32.totalorder %s27, 1
    %p239 = por %p237, %p238
    %p241 = scmp.ne.s32.totalorder %s226, %s240
    %p242 = scmp.eq.s32.totalorder %s27, 0
    %p243 = por %p241, %p242
    %s245 = sadd.s32 %s244, 1
    %p248 = scmp.eq.s32.totalorder %s21, 1
    %p249 = scmp.ne.s32.totalorder %s244, %s246
    %p250 = scmp.eq.s32.totalorder %s21, 0
    %p251 = por %p249, %p250
    %p252 = scmp.ne.s32.totalorder %s244, %s246
    %p253 = scmp.eq.s32.totalorder %s26, 1
    %p254 = por %p252, %p253
    %p255 = scmp.ne.s32.totalorder %s246, %s247
    %p256 = scmp.eq.s32.totalorder %s26, 0
    %p257 = por %p255, %p256
    %p258 = scmp.ne.s32.totalorder %s246, %s247
    %p259 = scmp.eq.s32.totalorder %s27, 1
    %p260 = por %p258, %p259
    %p262 = scmp.ne.s32.totalorder %s247, %s261
    %p263 = scmp.eq.s32.totalorder %s27, 0
    %p264 = por %p262, %p263
    %s266 = sadd.s32 %s265, 1
    %p269 = scmp.eq.s32.totalorder %s21, 1
    %p270 = scmp.ne.s32.totalorder %s265, %s267
    %p271 = scmp.eq.s32.totalorder %s21, 0
    %p272 = por %p270, %p271
    %p273 = scmp.ne.s32.totalorder %s265, %s267
    %p274 = scmp.eq.s32.totalorder %s26, 1
    %p275 = por %p273, %p274
    %p276 = scmp.ne.s32.totalorder %s267, %s268
    %p277 = scmp.eq.s32.totalorder %s26, 0
    %p278 = por %p276, %p277
    %p279 = scmp.ne.s32.totalorder %s267, %s268
    %p280 = scmp.eq.s32.totalorder %s27, 1
    %p281 = por %p279, %p280
    %p283 = scmp.ne.s32.totalorder %s268, %s282
    %p284 = scmp.eq.s32.totalorder %s27, 0
    %p285 = por %p283, %p284
    %s287 = sadd.s32 %s286, 1
    %p290 = scmp.eq.s32.totalorder %s21, 1
    %p291 = scmp.ne.s32.totalorder %s286, %s288
    %p292 = scmp.eq.s32.totalorder %s21, 0
    %p293 = por %p291, %p292
    %p294 = scmp.ne.s32.totalorder %s286, %s288
    %p295 = scmp.eq.s32.totalorder %s26, 1
    %p296 = por %p294, %p295
    %p297 = scmp.ne.s32.totalorder %s288, %s289
    %p298 = scmp.eq.s32.totalorder %s26, 0
    %p299 = por %p297, %p298
    %p300 = scmp.ne.s32.totalorder %s288, %s289
    %p301 = scmp.eq.s32.totalorder %s27, 1
    %p302 = por %p300, %p301
    %p304 = scmp.ne.s32.totalorder %s289, %s303
    %p305 = scmp.eq.s32.totalorder %s27, 0
    %p306 = por %p304, %p305
    %s308 = sadd.s32 %s307, 1
    %p311 = scmp.eq.s32.totalorder %s21, 1
    %p312 = scmp.ne.s32.totalorder %s307, %s309
    %p313 = scmp.eq.s32.totalorder %s21, 0
    %p314 = por %p312, %p313
    %p315 = scmp.ne.s32.totalorder %s307, %s309
    %p316 = scmp.eq.s32.totalorder %s26, 1
    %p317 = por %p315, %p316
    %p318 = scmp.ne.s32.totalorder %s309, %s310
    %p319 = scmp.eq.s32.totalorder %s26, 0
    %p320 = por %p318, %p319
    %p321 = scmp.ne.s32.totalorder %s309, %s310
    %p322 = scmp.eq.s32.totalorder %s27, 1
    %p323 = por %p321, %p322
    %p325 = scmp.ne.s32.totalorder %s310, %s324
    %p326 = scmp.eq.s32.totalorder %s27, 0
    %p327 = por %p325, %p326
    %s329 = sadd.s32 %s328, 1
    %p332 = scmp.eq.s32.totalorder %s21, 1
    %p333 = scmp.ne.s32.totalorder %s328, %s330
    %p334 = scmp.eq.s32.totalorder %s21, 0
    %p335 = por %p333, %p334
    %p336 = scmp.ne.s32.totalorder %s328, %s330
    %p337 = scmp.eq.s32.totalorder %s26, 1
    %p338 = por %p336, %p337
    %p339 = scmp.ne.s32.totalorder %s330, %s331
    %p340 = scmp.eq.s32.totalorder %s26, 0
    %p341 = por %p339, %p340
    %p342 = scmp.ne.s32.totalorder %s330, %s331
    %p343 = scmp.eq.s32.totalorder %s27, 1
    %p344 = por %p342, %p343
    %p346 = scmp.ne.s32.totalorder %s331, %s345
    %p347 = scmp.eq.s32.totalorder %s27, 0
    %p348 = por %p346, %p347
    %s349 = ssub.s32 %s21, %s28
    %p350 = scmp.eq.s32.totalorder %s349, 0
    %s352 = sadd.s32 %s351, 1
    %s353 = scalar_select %p350, %s351, %s352
    %p356 = pneg %p350
    %p357 = scmp.eq.s32.totalorder %s21, 1
    %p358 = por %p356, %p357
    %p359 = scmp.ne.s32.totalorder %s351, %s354
    %p360 = scmp.eq.s32.totalorder %s21, 0
    %p361 = por %p359, %p360
    %p362 = scmp.ne.s32.totalorder %s351, %s354
    %p363 = scmp.eq.s32.totalorder %s26, 1
    %p364 = por %p362, %p363
    %p365 = scmp.ne.s32.totalorder %s354, %s355
    %p366 = scmp.eq.s32.totalorder %s26, 0
    %p367 = por %p365, %p366
    %p368 = scmp.ne.s32.totalorder %s354, %s355
    %p369 = scmp.eq.s32.totalorder %s27, 1
    %p370 = por %p368, %p369
    %p372 = scmp.ne.s32.totalorder %s355, %s371
    %p373 = scmp.eq.s32.totalorder %s27, 0
    %p374 = por %p372, %p373
    %p375 = scmp.le.s32.totalorder 1, %s21
    %p376 = scmp.lt.s32.totalorder %s21, 3
    %p377 = pnand %p375, %p376
    %p378 = pneg %p377
    // Predicated region
    $region9: #{swin_forward.9} parent=5 // pred_check
      _
    $region10: #{swin_forward.9} parent=5 // pred_check_branch
      %380 = sbr.rel (%p377) target = $region12
    $region11: #{swin_forward.9} parent=5 // pred_region
      %s381 = ssub.s32 %s21, 1
      // Predicated region
      $region13: #{swin_forward.9} parent=11 // pred_check
        %p382 = pneg %p68
      $region14: #{swin_forward.9} parent=11 // pred_check_branch
        %384 = sbr.rel (%p382) target = $region16
      $region15: #{swin_forward.9} parent=11 // pred_region
        _
      $region16: #{swin_forward.9} parent=11 // pred_fallthru
        _
      // Predicated region
      $region17: #{swin_forward.9} parent=11 // pred_check
        %p385 = pneg %p89
      $region18: #{swin_forward.9} parent=11 // pred_check_branch
        %387 = sbr.rel (%p385) target = $region20
      $region19: #{swin_forward.9} parent=11 // pred_region
        _
      $region20: #{swin_forward.9} parent=11 // pred_fallthru
        _
      // Predicated region
      $region21: #{swin_forward.9} parent=11 // pred_check
        %p388 = pneg %p110
      $region22: #{swin_forward.9} parent=11 // pred_check_branch
        %390 = sbr.rel (%p388) target = $region24
      $region23: #{swin_forward.9} parent=11 // pred_region
        _
      $region24: #{swin_forward.9} parent=11 // pred_fallthru
        _
      // Predicated region
      $region25: #{swin_forward.9} parent=11 // pred_check
        %p391 = pneg %p131
      $region26: #{swin_forward.9} parent=11 // pred_check_branch
        %393 = sbr.rel (%p391) target = $region28
      $region27: #{swin_forward.9} parent=11 // pred_region
        _
      $region28: #{swin_forward.9} parent=11 // pred_fallthru
        _
      // Predicated region
      $region29: #{swin_forward.9} parent=11 // pred_check
        %p394 = pneg %p152
      $region30: #{swin_forward.9} parent=11 // pred_check_branch
        %396 = sbr.rel (%p394) target = $region32
      $region31: #{swin_forward.9} parent=11 // pred_region
        _
      $region32: #{swin_forward.9} parent=11 // pred_fallthru
        _
      // Predicated region
      $region33: #{swin_forward.9} parent=11 // pred_check
        %p397 = pneg %p173
      $region34: #{swin_forward.9} parent=11 // pred_check_branch
        %399 = sbr.rel (%p397) target = $region36
      $region35: #{swin_forward.9} parent=11 // pred_region
        _
      $region36: #{swin_forward.9} parent=11 // pred_fallthru
        _
      // Predicated region
      $region37: #{swin_forward.9} parent=11 // pred_check
        %p400 = pneg %p194
      $region38: #{swin_forward.9} parent=11 // pred_check_branch
        %402 = sbr.rel (%p400) target = $region40
      $region39: #{swin_forward.9} parent=11 // pred_region
        _
      $region40: #{swin_forward.9} parent=11 // pred_fallthru
        _
      // Predicated region
      $region41: #{swin_forward.9} parent=11 // pred_check
        %p403 = pneg %p215
      $region42: #{swin_forward.9} parent=11 // pred_check_branch
        %405 = sbr.rel (%p403) target = $region44
      $region43: #{swin_forward.9} parent=11 // pred_region
        _
      $region44: #{swin_forward.9} parent=11 // pred_fallthru
        _
      // Predicated region
      $region45: #{swin_forward.9} parent=11 // pred_check
        %p406 = pneg %p236
      $region46: #{swin_forward.9} parent=11 // pred_check_branch
        %408 = sbr.rel (%p406) target = $region48
      $region47: #{swin_forward.9} parent=11 // pred_region
        _
      $region48: #{swin_forward.9} parent=11 // pred_fallthru
        _
      // Predicated region
      $region49: #{swin_forward.9} parent=11 // pred_check
        %p409 = pneg %p257
      $region50: #{swin_forward.9} parent=11 // pred_check_branch
        %411 = sbr.rel (%p409) target = $region52
      $region51: #{swin_forward.9} parent=11 // pred_region
        _
      $region52: #{swin_forward.9} parent=11 // pred_fallthru
        _
      // Predicated region
      $region53: #{swin_forward.9} parent=11 // pred_check
        %p412 = pneg %p278
      $region54: #{swin_forward.9} parent=11 // pred_check_branch
        %414 = sbr.rel (%p412) target = $region56
      $region55: #{swin_forward.9} parent=11 // pred_region
        _
      $region56: #{swin_forward.9} parent=11 // pred_fallthru
        _
      // Predicated region
      $region57: #{swin_forward.9} parent=11 // pred_check
        %p415 = pneg %p299
      $region58: #{swin_forward.9} parent=11 // pred_check_branch
        %417 = sbr.rel (%p415) target = $region60
      $region59: #{swin_forward.9} parent=11 // pred_region
        _
      $region60: #{swin_forward.9} parent=11 // pred_fallthru
        _
      // Predicated region
      $region61: #{swin_forward.9} parent=11 // pred_check
        %p418 = pneg %p320
      $region62: #{swin_forward.9} parent=11 // pred_check_branch
        %420 = sbr.rel (%p418) target = $region64
      $region63: #{swin_forward.9} parent=11 // pred_region
        _
      $region64: #{swin_forward.9} parent=11 // pred_fallthru
        _
      // Predicated region
      $region65: #{swin_forward.9} parent=11 // pred_check
        %p421 = pneg %p341
      $region66: #{swin_forward.9} parent=11 // pred_check_branch
        %423 = sbr.rel (%p421) target = $region68
      $region67: #{swin_forward.9} parent=11 // pred_region
        _
      $region68: #{swin_forward.9} parent=11 // pred_fallthru
        _
    $region12: #{swin_forward.9} parent=5 // pred_fallthru
      _
    %p424 = scmp.lt.s32.totalorder %s21, 2
    // Predicated region
    $region69: #{swin_forward.9} parent=5 // pred_check
      %p425 = pneg %p424
    $region70: #{swin_forward.9} parent=5 // pred_check_branch
      %427 = sbr.rel (%p425) target = $region72
    $region71: #{swin_forward.9} parent=5 // pred_region
      // Predicated region
      $region73: #{swin_forward.9} parent=71 // pred_check
        %p428 = pneg %p41
      $region74: #{swin_forward.9} parent=71 // pred_check_branch
        %430 = sbr.rel (%p428) target = $region76
      $region75: #{swin_forward.9} parent=71 // pred_region
        %p431 = scmp.lt.s32.totalorder %s21, 1
        %s432 = scalar_select %p431, %s21, 1
        %s433 = smul.addr %s432, 8
        %s434 = smul.addr %s433, 8
        %s435 = scalar_lea.vmem %s0, %s434
      $region76: #{swin_forward.9} parent=71 // pred_fallthru
        _
    $region72: #{swin_forward.9} parent=5 // pred_fallthru
      _
    %p436 = scmp.le.s32.totalorder 1, %s21
    %p437 = scmp.lt.s32.totalorder %s21, 3
    %p438 = pnand %p436, %p437
    %p439 = pneg %p438
    // Predicated region
    $region77: #{swin_forward.9} parent=5 // pred_check
      _
    $region78: #{swin_forward.9} parent=5 // pred_check_branch
      %441 = sbr.rel (%p438) target = $region80
    $region79: #{swin_forward.9} parent=5 // pred_region
      %s442 = ssub.s32 %s21, 1
      %p443 = scmp.lt.s32.totalorder %s26, 1
      %s444 = scalar_select %p443, %s26, 1
      %s445 = smul.addr %s444, 8
      %s446 = smul.addr %s445, 8
      %s447 = scalar_lea.vmem %s0, %s446
      %p448 = pneg %p47
      %p449 = pneg %p44
      %p450 = pneg %p68
      %p451 = pneg %p65
      %p452 = pneg %p89
      %p453 = pneg %p86
      %p454 = pneg %p110
      %p455 = pneg %p107
      %p456 = pneg %p131
      %p457 = pneg %p128
      %p458 = pneg %p152
      %p459 = pneg %p149
      %p460 = pneg %p173
      %p461 = pneg %p170
      %p462 = pneg %p194
      %p463 = pneg %p191
      %p464 = pneg %p215
      %p465 = pneg %p212
      %p466 = pneg %p236
      %p467 = pneg %p233
      %p468 = pneg %p257
      %p469 = pneg %p254
      %p470 = pneg %p278
      %p471 = pneg %p275
      %p472 = pneg %p299
      %p473 = pneg %p296
      %p474 = pneg %p320
      %p475 = pneg %p317
      %p476 = pneg %p341
      %p477 = pneg %p338
      %p478 = pneg %p367
      %p479 = pneg %p364
      %p480 = scmp.lt.s32.totalorder %s26, 1
      %s481 = scalar_select %p480, %s26, 1
      %s482 = smul.addr %s481, 8
      %s483 = smul.addr %s482, 8
      %s484 = scalar_lea.vmem %s15, %s483
      %p485 = scmp.lt.s32.totalorder %s26, 1
      %s486 = scalar_select %p485, %s26, 1
      %s487 = smul.addr %s486, 8
      %s488 = smul.addr %s487, 8
      %s489 = scalar_lea.vmem %s0, %s488
      %p490 = scmp.lt.s32.totalorder %s26, 1
      %s491 = scalar_select %p490, %s26, 1
      %s492 = smul.addr %s491, 8
      %s493 = smul.addr %s492, 8
      %s494 = scalar_lea.vmem %s15, %s493
      %v496 = vld [vmem:[%s489] sm:$0xff]
      %v497 = vld [vmem:[%s489 + $0x8] sm:$0xff]
      %v498 = vld [vmem:[%s489 + $0x10] sm:$0xff]
      %v499 = vld [vmem:[%s489 + $0x18] sm:$0xff]
      %v500 = vld [vmem:[%s489 + $0x20] sm:$0xff]
      %v501 = vld [vmem:[%s489 + $0x28] sm:$0xff]
      %v502 = vld [vmem:[%s489 + $0x30] sm:$0xff]
      %v503 = vld [vmem:[%s489 + $0x38] sm:$0xff]
      %v504 = vld [vmem:[%s1] sm:$0x1]
      %v505 = vld [vmem:[%s2] sm:$0x1]
      %vm506 = vcmask 130048
      %v507 = vsel %vm506, %v496, 0.0
      %508 = vadd.xlane.f32.xlu0 %v507
      %v509 = vpop.xlane.xlu0 %508
      %v510 = vsel %vm506, %v497, 0.0
      %511 = vadd.xlane.f32.xlu0 %v510
      %v512 = vpop.xlane.xlu0 %511
      %v513 = vsel %vm506, %v498, 0.0
      %514 = vadd.xlane.f32.xlu0 %v513
      %v515 = vpop.xlane.xlu0 %514
      %v516 = vsel %vm506, %v499, 0.0
      %517 = vadd.xlane.f32.xlu0 %v516
      %v518 = vpop.xlane.xlu0 %517
      %v519 = vsel %vm506, %v500, 0.0
      %520 = vadd.xlane.f32.xlu0 %v519
      %v521 = vpop.xlane.xlu0 %520
      %v522 = vsel %vm506, %v501, 0.0
      %523 = vadd.xlane.f32.xlu0 %v522
      %v524 = vpop.xlane.xlu0 %523
      %v525 = vsel %vm506, %v502, 0.0
      %526 = vadd.xlane.f32.xlu0 %v525
      %v527 = vpop.xlane.xlu0 %526
      %v528 = vsel %vm506, %v503, 0.0
      %529 = vadd.xlane.f32.xlu0 %v528
      %v530 = vpop.xlane.xlu0 %529
      %v531 = vrcp.pop 16.0
      %v532 = vmul.f32 %v509, %v531
      %v533 = vmul.f32 %v512, %v531
      %v534 = vmul.f32 %v515, %v531
      %v535 = vmul.f32 %v518, %v531
      %v536 = vmul.f32 %v521, %v531
      %v537 = vmul.f32 %v524, %v531
      %v538 = vmul.f32 %v527, %v531
      %v539 = vmul.f32 %v530, %v531
      %v540 = vsub.f32 %v496, %v532
      %v541 = vsub.f32 %v497, %v533
      %v542 = vsub.f32 %v498, %v534
      %v543 = vsub.f32 %v499, %v535
      %v544 = vsub.f32 %v500, %v536
      %v545 = vsub.f32 %v501, %v537
      %v546 = vsub.f32 %v502, %v538
      %v547 = vsub.f32 %v503, %v539
      %v548 = vmul.f32 %v540, %v540
      %v549 = vmul.f32 %v541, %v541
      %v550 = vmul.f32 %v542, %v542
      %v551 = vmul.f32 %v543, %v543
      %v552 = vmul.f32 %v544, %v544
      %v553 = vmul.f32 %v545, %v545
      %v554 = vmul.f32 %v546, %v546
      %v555 = vmul.f32 %v547, %v547
      %v556 = vsel %vm506, %v548, 0.0
      %557 = vadd.xlane.f32.xlu0 %v556
      %v558 = vpop.xlane.xlu0 %557
      %v559 = vsel %vm506, %v549, 0.0
      %560 = vadd.xlane.f32.xlu0 %v559
      %v561 = vpop.xlane.xlu0 %560
      %v562 = vsel %vm506, %v550, 0.0
      %563 = vadd.xlane.f32.xlu0 %v562
      %v564 = vpop.xlane.xlu0 %563
      %v565 = vsel %vm506, %v551, 0.0
      %566 = vadd.xlane.f32.xlu0 %v565
      %v567 = vpop.xlane.xlu0 %566
      %v568 = vsel %vm506, %v552, 0.0
      %569 = vadd.xlane.f32.xlu0 %v568
      %v570 = vpop.xlane.xlu0 %569
      %v571 = vsel %vm506, %v553, 0.0
      %572 = vadd.xlane.f32.xlu0 %v571
      %v573 = vpop.xlane.xlu0 %572
      %v574 = vsel %vm506, %v554, 0.0
      %575 = vadd.xlane.f32.xlu0 %v574
      %v576 = vpop.xlane.xlu0 %575
      %v577 = vsel %vm506, %v555, 0.0
      %578 = vadd.xlane.f32.xlu0 %v577
      %v579 = vpop.xlane.xlu0 %578
      %v580 = vmul.f32 %v558, %v531
      %v581 = vmul.f32 %v561, %v531
      %v582 = vmul.f32 %v564, %v531
      %v583 = vmul.f32 %v567, %v531
      %v584 = vmul.f32 %v570, %v531
      %v585 = vmul.f32 %v573, %v531
      %v586 = vmul.f32 %v576, %v531
      %v587 = vmul.f32 %v579, %v531
      %v588 = vadd.f32 %v580, 1e-05
      %v589 = vadd.f32 %v581, 1e-05
      %v590 = vadd.f32 %v582, 1e-05
      %v591 = vadd.f32 %v583, 1e-05
      %v592 = vadd.f32 %v584, 1e-05
      %v593 = vadd.f32 %v585, 1e-05
      %v594 = vadd.f32 %v586, 1e-05
      %v595 = vadd.f32 %v587, 1e-05
      %v596 = vrsqrt.pop %v588
      %v597 = vrsqrt.pop %v589
      %v598 = vrsqrt.pop %v590
      %v599 = vrsqrt.pop %v591
      %v600 = vrsqrt.pop %v592
      %v601 = vrsqrt.pop %v593
      %v602 = vrsqrt.pop %v594
      %v603 = vrsqrt.pop %v595
      %v604 = vmul.f32 %v540, %v596
      %v605 = vmul.f32 %v541, %v597
      %v606 = vmul.f32 %v542, %v598
      %v607 = vmul.f32 %v543, %v599
      %v608 = vmul.f32 %v544, %v600
      %v609 = vmul.f32 %v545, %v601
      %v610 = vmul.f32 %v546, %v602
      %v611 = vmul.f32 %v547, %v603
      %v613 = vlaneseq
      %v614 = vshrl.u32 %v613, 7
      %v615 = vsub.s32 0, %v614
      %v616 = vrot.slane %v504, %v615
      %v618 = vmul.f32 %v604, %v616
      %v619 = vmul.f32 %v605, %v616
      %v620 = vmul.f32 %v606, %v616
      %v621 = vmul.f32 %v607, %v616
      %v622 = vmul.f32 %v608, %v616
      %v623 = vmul.f32 %v609, %v616
      %v624 = vmul.f32 %v610, %v616
      %v625 = vmul.f32 %v611, %v616
      %v627 = vlaneseq
      %v628 = vshrl.u32 %v627, 7
      %v629 = vsub.s32 0, %v628
      %v630 = vrot.slane %v505, %v629
      %v632 = vadd.f32 %v618, %v630
      %v633 = vadd.f32 %v619, %v630
      %v634 = vadd.f32 %v620, %v630
      %v635 = vadd.f32 %v621, %v630
      %v636 = vadd.f32 %v622, %v630
      %v637 = vadd.f32 %v623, %v630
      %v638 = vadd.f32 %v624, %v630
      %v639 = vadd.f32 %v625, %v630
      %v640 = vpack.c.bf16 %v633, %v632
      %v641 = vpack.c.bf16 %v635, %v634
      %v642 = vpack.c.bf16 %v637, %v636
      %v643 = vpack.c.bf16 %v639, %v638
      %v644 = vld [vmem:[%s3] sm:$0xf]
      %v645 = vld [vmem:[%s3 + $0x4] sm:$0xf]
      %v646 = vld [vmem:[%s4] sm:$0x1]
      %v648 = vlaneseq
      %v649 = vshrl.u32 %v648, 7
      %v650 = vsub.s32 0, %v649
      %v651 = vrot.slane %v646, %v650
      %v655 = vunpack.c.l.b16 %v644
      %v656 = vunpack.c.l.b16 %v645
      %v657 = vpack.c.b16 %v656, %v655
      %v660 = vsel %vm506, %v640, 0
      %v663 = vsel %vm506, %v641, 0
      %v666 = vsel %vm506, %v642, 0
      %v669 = vsel %vm506, %v643, 0
      %671 = vmatprep.subr.bf16.mxu0 0
      %672 = vmatpush1.bf16.msra.mxu0 %v657
      %673 = vmatprep.subr.bf16.mxu0 0
      %674 = vmatpush1.bf16.msra.mxu0 0
      %675 = vmatprep.subr.bf16.mxu0 0
      %676 = vmatpush1.bf16.msra.mxu0 0
      %677 = vmatprep.subr.bf16.mxu0 0
      %678 = vmatpush1.bf16.msra.mxu0 0
      %679 = vmatprep.subr.bf16.mxu0 0
      %680 = vmatpush1.bf16.msra.mxu0 0
      %681 = vmatprep.subr.bf16.mxu0 0
      %682 = vmatpush1.bf16.msra.mxu0 0
      %683 = vmatprep.subr.bf16.mxu0 0
      %684 = vmatpush1.bf16.msra.mxu0 0
      %685 = vmatprep.subr.bf16.mxu0 0
      %686 = vmatpush1.bf16.msra.mxu0 0
      %687 = vmatprep.subr.bf16.mxu0 0
      %688 = vmatpush1.bf16.msra.mxu0 0
      %689 = vmatprep.subr.bf16.mxu0 0
      %690 = vmatpush1.bf16.msra.mxu0 0
      %691 = vmatprep.subr.bf16.mxu0 0
      %692 = vmatpush1.bf16.msra.mxu0 0
      %693 = vmatprep.subr.bf16.mxu0 0
      %694 = vmatpush1.bf16.msra.mxu0 0
      %695 = vmatprep.subr.bf16.mxu0 0
      %696 = vmatpush1.bf16.msra.mxu0 0
      %697 = vmatprep.subr.bf16.mxu0 0
      %698 = vmatpush1.bf16.msra.mxu0 0
      %699 = vmatprep.subr.bf16.mxu0 0
      %700 = vmatpush1.bf16.msra.mxu0 0
      %701 = vmatprep.subr.bf16.mxu0 0
      %702 = vmatpush1.bf16.msra.mxu0 0
      %703 = vmatprep.mubr.bf16.mxu0 0
      %704 = vmatmul.mubr.bf16.gmra.mrb[0].mxu0 %v660
      %v705 = vpop.f32.mrb[0].mxu0
      %v706 = vadd.f32 %v651, %v705
      %v707 = vpop.f32.mrb[0].mxu0
      %v708 = vpop.f32.mrb[0].mxu0
      %v709 = vadd.f32 %v651, %v708
      %v710 = vpop.f32.mrb[0].mxu0
      %711 = vmatprep.mubr.bf16.mxu0 0
      %712 = vmatmul.mubr.bf16.gmra.mrb[0].mxu0 %v663
      %v713 = vpop.f32.mrb[0].mxu0
      %v714 = vadd.f32 %v651, %v713
      %v715 = vpop.f32.mrb[0].mxu0
      %v716 = vpop.f32.mrb[0].mxu0
      %v717 = vadd.f32 %v651, %v716
      %v718 = vpop.f32.mrb[0].mxu0
      %719 = vmatprep.mubr.bf16.mxu0 0
      %720 = vmatmul.mubr.bf16.gmra.mrb[0].mxu0 %v666
      %v721 = vpop.f32.mrb[0].mxu0
      %v722 = vadd.f32 %v651, %v721
      %v723 = vpop.f32.mrb[0].mxu0
      %v724 = vpop.f32.mrb[0].mxu0
      %v725 = vadd.f32 %v651, %v724
      %v726 = vpop.f32.mrb[0].mxu0
      %727 = vmatprep.mubr.bf16.mxu0 0
      %728 = vmatmul.mubr.bf16.gmra.mrb[0].mxu0 %v669
      %v729 = vpop.f32.mrb[0].mxu0
      %v730 = vadd.f32 %v651, %v729
      %v731 = vpop.f32.mrb[0].mxu0
      %v732 = vpop.f32.mrb[0].mxu0
      %v733 = vadd.f32 %v651, %v732
      %v734 = vpop.f32.mrb[0].mxu0
      %735 = vdwg.mxu0
      %v736 = vld [vmem:[%s7] sm:$0xff]
      %v737 = vld [vmem:[%s7 + $0x8] sm:$0xff]
      %v738 = vld [vmem:[%s7 + $0x10] sm:$0xff]
      %v739 = vld [vmem:[%s7 + $0x18] sm:$0xff]
      %v740 = vld [vmem:[%s5] sm:$0xf]
      %v741 = vld [vmem:[%s5 + $0x4] sm:$0xf]
      %v742 = vpack.c.bf16 %v709, %v706
      %744 = vrot.lane.b32.xlu0 %v742, 112
      %v745 = vpop.permute.xlu0 %744
      %vm746 = vcmask 64512
      %v748 = vsel %vm746, %v742, 0
      %v751 = vsel %vm746, %v745, 0
      %753 = vmatprep.subr.bf16.mxu0 0
      %754 = vmatpush1.bf16.xpose.msra.mxu0 %v751
      %755 = vmatprep.subr.bf16.mxu0 0
      %756 = vmatpush1.bf16.xpose.msra.mxu0 0
      %757 = vmatprep.subr.bf16.mxu0 0
      %758 = vmatpush1.bf16.xpose.msra.mxu0 0
      %759 = vmatprep.subr.bf16.mxu0 0
      %760 = vmatpush1.bf16.xpose.msra.mxu0 0
      %761 = vmatprep.subr.bf16.mxu0 0
      %762 = vmatpush1.bf16.xpose.msra.mxu0 0
      %763 = vmatprep.subr.bf16.mxu0 0
      %764 = vmatpush1.bf16.xpose.msra.mxu0 0
      %765 = vmatprep.subr.bf16.mxu0 0
      %766 = vmatpush1.bf16.xpose.msra.mxu0 0
      %767 = vmatprep.subr.bf16.mxu0 0
      %768 = vmatpush1.bf16.xpose.msra.mxu0 0
      %769 = vmatprep.subr.bf16.mxu0 0
      %770 = vmatpush1.bf16.xpose.msra.mxu0 0
      %771 = vmatprep.subr.bf16.mxu0 0
      %772 = vmatpush1.bf16.xpose.msra.mxu0 0
      %773 = vmatprep.subr.bf16.mxu0 0
      %774 = vmatpush1.bf16.xpose.msra.mxu0 0
      %775 = vmatprep.subr.bf16.mxu0 0
      %776 = vmatpush1.bf16.xpose.msra.mxu0 0
      %777 = vmatprep.subr.bf16.mxu0 0
      %778 = vmatpush1.bf16.xpose.msra.mxu0 0
      %779 = vmatprep.subr.bf16.mxu0 0
      %780 = vmatpush1.bf16.xpose.msra.mxu0 0
      %781 = vmatprep.subr.bf16.mxu0 0
      %782 = vmatpush1.bf16.xpose.msra.mxu0 0
      %783 = vmatprep.subr.bf16.mxu0 0
      %784 = vmatpush1.bf16.xpose.msra.mxu0 0
      %785 = vmatprep.mubr.bf16.mxu0 0
      %786 = vmatmul.mubr.bf16.gmra.mrb[0].mxu0 %v748
      %v787 = vpop.f32.mrb[0].mxu0
      %v788 = vadd.f32 0.0, %v787
      %v789 = vpop.f32.mrb[0].mxu0
      %v790 = vpop.f32.mrb[0].mxu0
      %v791 = vadd.f32 0.0, %v790
      %v792 = vpop.f32.mrb[0].mxu0
      %793 = vdwg.mxu0
      %v794 = vmul.f32 %v788, 0.35355338
      %v795 = vmul.f32 %v791, 0.35355338
      %v796 = vadd.f32 %v794, %v736
      %v797 = vadd.f32 %v795, %v737
      %v798 = vld [vmem:[%s8] sm:$0xff]
      %v799 = vld [vmem:[%s8 + $0x8] sm:$0xff]
      %v800 = vadd.f32 %v796, %v798
      %v801 = vadd.f32 %v797, %v799
      %v802 = vsel %vm506, %v800, -inf
      %803 = vmax.xlane.f32.xlu0 %v802
      %v804 = vpop.xlane.xlu0 %803
      %v805 = vsel %vm506, %v801, -inf
      %806 = vmax.xlane.f32.xlu0 %v805
      %v807 = vpop.xlane.xlu0 %806
      %v808 = vsub.f32 %v800, %v804
      %v809 = vsub.f32 %v801, %v807
      %v810 = vmul.f32 %v808, 1.442695
      %v811 = vpow.pop %v810
      %v812 = vmul.f32 %v809, 1.442695
      %v813 = vpow.pop %v812
      %v814 = vsel %vm506, %v811, 0.0
      %815 = vadd.xlane.f32.xlu0 %v814
      %v816 = vpop.xlane.xlu0 %815
      %v817 = vsel %vm506, %v813, 0.0
      %818 = vadd.xlane.f32.xlu0 %v817
      %v819 = vpop.xlane.xlu0 %818
      %v820 = vrcp.pop %v816
      %v821 = vrcp.pop %v819
      %v822 = vmul.f32 %v811, %v820
      %v823 = vmul.f32 %v813, %v821
      %v824 = vpack.c.bf16 %v823, %v822
      %825 = vrot.lane.b32.xlu0 %v742, 96
      %v826 = vpop.permute.xlu0 %825
      %v829 = vsel %vm506, %v824, 0
      %831 = vmatprep.subr.bf16.mxu0 0
      %832 = vmatpush1.bf16.msra.mxu0 %v826
      %833 = vmatprep.subr.bf16.mxu0 0
      %834 = vmatpush1.bf16.msra.mxu0 0
      %835 = vmatprep.subr.bf16.mxu0 0
      %836 = vmatpush1.bf16.msra.mxu0 0
      %837 = vmatprep.subr.bf16.mxu0 0
      %838 = vmatpush1.bf16.msra.mxu0 0
      %839 = vmatprep.subr.bf16.mxu0 0
      %840 = vmatpush1.bf16.msra.mxu0 0
      %841 = vmatprep.subr.bf16.mxu0 0
      %842 = vmatpush1.bf16.msra.mxu0 0
      %843 = vmatprep.subr.bf16.mxu0 0
      %844 = vmatpush1.bf16.msra.mxu0 0
      %845 = vmatprep.subr.bf16.mxu0 0
      %846 = vmatpush1.bf16.msra.mxu0 0
      %847 = vmatprep.subr.bf16.mxu0 0
      %848 = vmatpush1.bf16.msra.mxu0 0
      %849 = vmatprep.subr.bf16.mxu0 0
      %850 = vmatpush1.bf16.msra.mxu0 0
      %851 = vmatprep.subr.bf16.mxu0 0
      %852 = vmatpush1.bf16.msra.mxu0 0
      %853 = vmatprep.subr.bf16.mxu0 0
      %854 = vmatpush1.bf16.msra.mxu0 0
      %855 = vmatprep.subr.bf16.mxu0 0
      %856 = vmatpush1.bf16.msra.mxu0 0
      %857 = vmatprep.subr.bf16.mxu0 0
      %858 = vmatpush1.bf16.msra.mxu0 0
      %859 = vmatprep.subr.bf16.mxu0 0
      %860 = vmatpush1.bf16.msra.mxu0 0
      %861 = vmatprep.subr.bf16.mxu0 0
      %862 = vmatpush1.bf16.msra.mxu0 0
      %863 = vmatprep.mubr.bf16.mxu0 0
      %864 = vmatmul.mubr.bf16.gmra.mrb[0].mxu0 %v829
      %v865 = vpop.f32.mrb[0].mxu0
      %v866 = vadd.f32 0.0, %v865
      %v867 = vpop.f32.mrb[0].mxu0
      %v868 = vpop.f32.mrb[0].mxu0
      %v869 = vadd.f32 0.0, %v868
      %v870 = vpop.f32.mrb[0].mxu0
      %871 = vdwg.mxu0
      %v872 = vpack.c.bf16 %v869, %v866
      %873 = vrot.lane.b32.xlu0 %v742, 120
      %v874 = vpop.permute.xlu0 %873
      %875 = vrot.lane.b32.xlu0 %v742, 104
      %v876 = vpop.permute.xlu0 %875
      %v878 = vsel %vm746, %v874, 0
      %v881 = vsel %vm746, %v876, 0
      %883 = vmatprep.subr.bf16.mxu0 0
      %884 = vmatpush1.bf16.xpose.msra.mxu0 %v881
      %885 = vmatprep.subr.bf16.mxu0 0
      %886 = vmatpush1.bf16.xpose.msra.mxu0 0
      %887 = vmatprep.subr.bf16.mxu0 0
      %888 = vmatpush1.bf16.xpose.msra.mxu0 0
      %889 = vmatprep.subr.bf16.mxu0 0
      %890 = vmatpush1.bf16.xpose.msra.mxu0 0
      %891 = vmatprep.subr.bf16.mxu0 0
      %892 = vmatpush1.bf16.xpose.msra.mxu0 0
      %893 = vmatprep.subr.bf16.mxu0 0
      %894 = vmatpush1.bf16.xpose.msra.mxu0 0
      %895 = vmatprep.subr.bf16.mxu0 0
      %896 = vmatpush1.bf16.xpose.msra.mxu0 0
      %897 = vmatprep.subr.bf16.mxu0 0
      %898 = vmatpush1.bf16.xpose.msra.mxu0 0
      %899 = vmatprep.subr.bf16.mxu0 0
      %900 = vmatpush1.bf16.xpose.msra.mxu0 0
      %901 = vmatprep.subr.bf16.mxu0 0
      %902 = vmatpush1.bf16.xpose.msra.mxu0 0
      %903 = vmatprep.subr.bf16.mxu0 0
      %904 = vmatpush1.bf16.xpose.msra.mxu0 0
      %905 = vmatprep.subr.bf16.mxu0 0
      %906 = vmatpush1.bf16.xpose.msra.mxu0 0
      %907 = vmatprep.subr.bf16.mxu0 0
      %908 = vmatpush1.bf16.xpose.msra.mxu0 0
      %909 = vmatprep.subr.bf16.mxu0 0
      %910 = vmatpush1.bf16.xpose.msra.mxu0 0
      %911 = vmatprep.subr.bf16.mxu0 0
      %912 = vmatpush1.bf16.xpose.msra.mxu0 0
      %913 = vmatprep.subr.bf16.mxu0 0
      %914 = vmatpush1.bf16.xpose.msra.mxu0 0
      %915 = vmatprep.mubr.bf16.mxu0 0
      %916 = vmatmul.mubr.bf16.gmra.mrb[0].mxu0 %v878
      %v917 = vpop.f32.mrb[0].mxu0
      %v918 = vadd.f32 0.0, %v917
      %v919 = vpop.f32.mrb[0].mxu0
      %v920 = vpop.f32.mrb[0].mxu0
      %v921 = vadd.f32 0.0, %v920
      %v922 = vpop.f32.mrb[0].mxu0
      %923 = vdwg.mxu0
      %v924 = vmul.f32 %v918, 0.35355338
      %v925 = vmul.f32 %v921, 0.35355338
      %v926 = vadd.f32 %v924, %v738
      %v927 = vadd.f32 %v925, %v739
      %v928 = vadd.f32 %v926, %v798
      %v929 = vadd.f32 %v927, %v799
      %v930 = vsel %vm506, %v928, -inf
      %931 = vmax.xlane.f32.xlu0 %v930
      %v932 = vpop.xlane.xlu0 %931
      %v933 = vsel %vm506, %v929, -inf
      %934 = vmax.xlane.f32.xlu0 %v933
      %v935 = vpop.xlane.xlu0 %934
      %v936 = vsub.f32 %v928, %v932
      %v937 = vsub.f32 %v929, %v935
      %v938 = vmul.f32 %v936, 1.442695
      %v939 = vpow.pop %v938
      %v940 = vmul.f32 %v937, 1.442695
      %v941 = vpow.pop %v940
      %v942 = vsel %vm506, %v939, 0.0
      %943 = vadd.xlane.f32.xlu0 %v942
      %v944 = vpop.xlane.xlu0 %943
      %v945 = vsel %vm506, %v941, 0.0
      %946 = vadd.xlane.f32.xlu0 %v945
      %v947 = vpop.xlane.xlu0 %946
      %v948 = vrcp.pop %v944
      %v949 = vrcp.pop %v947
      %v950 = vmul.f32 %v939, %v948
      %v951 = vmul.f32 %v941, %v949
      %v952 = vpack.c.bf16 %v951, %v950
      %953 = vrot.lane.b32.xlu0 %v742, 88
      %v954 = vpop.permute.xlu0 %953
      %v957 = vsel %vm506, %v952, 0
      %959 = vmatprep.subr.bf16.mxu0 0
      %960 = vmatpush1.bf16.msra.mxu0 %v954
      %961 = vmatprep.subr.bf16.mxu0 0
      %962 = vmatpush1.bf16.msra.mxu0 0
      %963 = vmatprep.subr.bf16.mxu0 0
      %964 = vmatpush1.bf16.msra.mxu0 0
      %965 = vmatprep.subr.bf16.mxu0 0
      %966 = vmatpush1.bf16.msra.mxu0 0
      %967 = vmatprep.subr.bf16.mxu0 0
      %968 = vmatpush1.bf16.msra.mxu0 0
      %969 = vmatprep.subr.bf16.mxu0 0
      %970 = vmatpush1.bf16.msra.mxu0 0
      %971 = vmatprep.subr.bf16.mxu0 0
      %972 = vmatpush1.bf16.msra.mxu0 0
      %973 = vmatprep.subr.bf16.mxu0 0
      %974 = vmatpush1.bf16.msra.mxu0 0
      %975 = vmatprep.subr.bf16.mxu0 0
      %976 = vmatpush1.bf16.msra.mxu0 0
      %977 = vmatprep.subr.bf16.mxu0 0
      %978 = vmatpush1.bf16.msra.mxu0 0
      %979 = vmatprep.subr.bf16.mxu0 0
      %980 = vmatpush1.bf16.msra.mxu0 0
      %981 = vmatprep.subr.bf16.mxu0 0
      %982 = vmatpush1.bf16.msra.mxu0 0
      %983 = vmatprep.subr.bf16.mxu0 0
      %984 = vmatpush1.bf16.msra.mxu0 0
      %985 = vmatprep.subr.bf16.mxu0 0
      %986 = vmatpush1.bf16.msra.mxu0 0
      %987 = vmatprep.subr.bf16.mxu0 0
      %988 = vmatpush1.bf16.msra.mxu0 0
      %989 = vmatprep.subr.bf16.mxu0 0
      %990 = vmatpush1.bf16.msra.mxu0 0
      %991 = vmatprep.mubr.bf16.mxu0 0
      %992 = vmatmul.mubr.bf16.gmra.mrb[0].mxu0 %v957
      %v993 = vpop.f32.mrb[0].mxu0
      %v994 = vadd.f32 0.0, %v993
      %v995 = vpop.f32.mrb[0].mxu0
      %v996 = vpop.f32.mrb[0].mxu0
      %v997 = vadd.f32 0.0, %v996
      %v998 = vpop.f32.mrb[0].mxu0
      %999 = vdwg.mxu0
      %v1000 = vpack.c.bf16 %v997, %v994
      %v1002 = vsel %vm746, %v1000, 0
      %vm1004 = vcmask 1043456
      %v1006 = vsel %vm1004, %v741, 0
      %1008 = vmatprep.subr.bf16.mxu0 0
      %1009 = vmatpush1.bf16.msra.mxu0 %v1006
      %1010 = vmatprep.subr.bf16.mxu0 0
      %1011 = vmatpush1.bf16.msra.mxu0 0
      %1012 = vmatprep.subr.bf16.mxu0 0
      %1013 = vmatpush1.bf16.msra.mxu0 0
      %1014 = vmatprep.subr.bf16.mxu0 0
      %1015 = vmatpush1.bf16.msra.mxu0 0
      %1016 = vmatprep.subr.bf16.mxu0 0
      %1017 = vmatpush1.bf16.msra.mxu0 0
      %1018 = vmatprep.subr.bf16.mxu0 0
      %1019 = vmatpush1.bf16.msra.mxu0 0
      %1020 = vmatprep.subr.bf16.mxu0 0
      %1021 = vmatpush1.bf16.msra.mxu0 0
      %1022 = vmatprep.subr.bf16.mxu0 0
      %1023 = vmatpush1.bf16.msra.mxu0 0
      %1024 = vmatprep.subr.bf16.mxu0 0
      %1025 = vmatpush1.bf16.msra.mxu0 0
      %1026 = vmatprep.subr.bf16.mxu0 0
      %1027 = vmatpush1.bf16.msra.mxu0 0
      %1028 = vmatprep.subr.bf16.mxu0 0
      %1029 = vmatpush1.bf16.msra.mxu0 0
      %1030 = vmatprep.subr.bf16.mxu0 0
      %1031 = vmatpush1.bf16.msra.mxu0 0
      %1032 = vmatprep.subr.bf16.mxu0 0
      %1033 = vmatpush1.bf16.msra.mxu0 0
      %1034 = vmatprep.subr.bf16.mxu0 0
      %1035 = vmatpush1.bf16.msra.mxu0 0
      %1036 = vmatprep.subr.bf16.mxu0 0
      %1037 = vmatpush1.bf16.msra.mxu0 0
      %1038 = vmatprep.subr.bf16.mxu0 0
      %1039 = vmatpush1.bf16.msra.mxu0 0
      %1040 = vmatprep.mubr.bf16.mxu0 0
      %1041 = vmatmul.mubr.bf16.gmra.mrb[0].mxu0 %v1002
      %v1042 = vpop.f32.mrb[0].mxu0
      %v1043 = vadd.f32 0.0, %v1042
      %v1044 = vpop.f32.mrb[0].mxu0
      %v1045 = vpop.f32.mrb[0].mxu0
      %v1046 = vadd.f32 0.0, %v1045
      %v1047 = vpop.f32.mrb[0].mxu0
      %1048 = vdwg.mxu0
      %v1050 = vsel %vm746, %v872, 0
      %v1053 = vsel %vm1004, %v740, 0
      %1055 = vmatprep.subr.bf16.mxu0 0
      %1056 = vmatpush1.bf16.msra.mxu0 %v1053
      %1057 = vmatprep.subr.bf16.mxu0 0
      %1058 = vmatpush1.bf16.msra.mxu0 0
      %1059 = vmatprep.subr.bf16.mxu0 0
      %1060 = vmatpush1.bf16.msra.mxu0 0
      %1061 = vmatprep.subr.bf16.mxu0 0
      %1062 = vmatpush1.bf16.msra.mxu0 0
      %1063 = vmatprep.subr.bf16.mxu0 0
      %1064 = vmatpush1.bf16.msra.mxu0 0
      %1065 = vmatprep.subr.bf16.mxu0 0
      %1066 = vmatpush1.bf16.msra.mxu0 0
      %1067 = vmatprep.subr.bf16.mxu0 0
      %1068 = vmatpush1.bf16.msra.mxu0 0
      %1069 = vmatprep.subr.bf16.mxu0 0
      %1070 = vmatpush1.bf16.msra.mxu0 0
      %1071 = vmatprep.subr.bf16.mxu0 0
      %1072 = vmatpush1.bf16.msra.mxu0 0
      %1073 = vmatprep.subr.bf16.mxu0 0
      %1074 = vmatpush1.bf16.msra.mxu0 0
      %1075 = vmatprep.subr.bf16.mxu0 0
      %1076 = vmatpush1.bf16.msra.mxu0 0
      %1077 = vmatprep.subr.bf16.mxu0 0
      %1078 = vmatpush1.bf16.msra.mxu0 0
      %1079 = vmatprep.subr.bf16.mxu0 0
      %1080 = vmatpush1.bf16.msra.mxu0 0
      %1081 = vmatprep.subr.bf16.mxu0 0
      %1082 = vmatpush1.bf16.msra.mxu0 0
      %1083 = vmatprep.subr.bf16.mxu0 0
      %1084 = vmatpush1.bf16.msra.mxu0 0
      %1085 = vmatprep.subr.bf16.mxu0 0
      %1086 = vmatpush1.bf16.msra.mxu0 0
      %1087 = vmatprep.mubr.bf16.mxu0 0
      %1088 = vmatmul.mubr.bf16.gmra.mrb[0].mxu0 %v1050
      %v1089 = vpop.f32.mrb[0].mxu0
      %v1090 = vadd.f32 %v1043, %v1089
      %v1091 = vpop.f32.mrb[0].mxu0
      %v1092 = vpop.f32.mrb[0].mxu0
      %v1093 = vadd.f32 %v1046, %v1092
      %v1094 = vpop.f32.mrb[0].mxu0
      %1095 = vdwg.mxu0
      %v1096 = vpack.c.bf16 %v717, %v714
      %1098 = vrot.lane.b32.xlu0 %v1096, 112
      %v1099 = vpop.permute.xlu0 %1098
      %v1101 = vsel %vm746, %v1096, 0
      %v1104 = vsel %vm746, %v1099, 0
      %1106 = vmatprep.subr.bf16.mxu0 0
      %1107 = vmatpush1.bf16.xpose.msra.mxu0 %v1104
      %1108 = vmatprep.subr.bf16.mxu0 0
      %1109 = vmatpush1.bf16.xpose.msra.mxu0 0
      %1110 = vmatprep.subr.bf16.mxu0 0
      %1111 = vmatpush1.bf16.xpose.msra.mxu0 0
      %1112 = vmatprep.subr.bf16.mxu0 0
      %1113 = vmatpush1.bf16.xpose.msra.mxu0 0
      %1114 = vmatprep.subr.bf16.mxu0 0
      %1115 = vmatpush1.bf16.xpose.msra.mxu0 0
      %1116 = vmatprep.subr.bf16.mxu0 0
      %1117 = vmatpush1.bf16.xpose.msra.mxu0 0
      %1118 = vmatprep.subr.bf16.mxu0 0
      %1119 = vmatpush1.bf16.xpose.msra.mxu0 0
      %1120 = vmatprep.subr.bf16.mxu0 0
      %1121 = vmatpush1.bf16.xpose.msra.mxu0 0
      %1122 = vmatprep.subr.bf16.mxu0 0
      %1123 = vmatpush1.bf16.xpose.msra.mxu0 0
      %1124 = vmatprep.subr.bf16.mxu0 0
      %1125 = vmatpush1.bf16.xpose.msra.mxu0 0
      %1126 = vmatprep.subr.bf16.mxu0 0
      %1127 = vmatpush1.bf16.xpose.msra.mxu0 0
      %1128 = vmatprep.subr.bf16.mxu0 0
      %1129 = vmatpush1.bf16.xpose.msra.mxu0 0
      %1130 = vmatprep.subr.bf16.mxu0 0
      %1131 = vmatpush1.bf16.xpose.msra.mxu0 0
      %1132 = vmatprep.subr.bf16.mxu0 0
      %1133 = vmatpush1.bf16.xpose.msra.mxu0 0
      %1134 = vmatprep.subr.bf16.mxu0 0
      %1135 = vmatpush1.bf16.xpose.msra.mxu0 0
      %1136 = vmatprep.subr.bf16.mxu0 0
      %1137 = vmatpush1.bf16.xpose.msra.mxu0 0
      %1138 = vmatprep.mubr.bf16.mxu0 0
      %1139 = vmatmul.mubr.bf16.gmra.mrb[0].mxu0 %v1101
      %v1140 = vpop.f32.mrb[0].mxu0
      %v1141 = vadd.f32 0.0, %v1140
      %v1142 = vpop.f32.mrb[0].mxu0
      %v1143 = vpop.f32.mrb[0].mxu0
      %v1144 = vadd.f32 0.0, %v1143
      %v1145 = vpop.f32.mrb[0].mxu0
      %1146 = vdwg.mxu0
      %v1147 = vmul.f32 %v1141, 0.35355338
      %v1148 = vmul.f32 %v1144, 0.35355338
      %v1149 = vadd.f32 %v1147, %v736
      %v1150 = vadd.f32 %v1148, %v737
      %s1151 = scalar_lea.vmem %s8, 16
      %v1152 = vld [vmem:[%s1151] sm:$0xff]
      %v1153 = vld [vmem:[%s1151 + $0x8] sm:$0xff]
      %v1154 = vadd.f32 %v1149, %v1152
      %v1155 = vadd.f32 %v1150, %v1153
      %v1156 = vsel %vm506, %v1154, -inf
      %1157 = vmax.xlane.f32.xlu0 %v1156
      %v1158 = vpop.xlane.xlu0 %1157
      %v1159 = vsel %vm506, %v1155, -inf
      %1160 = vmax.xlane.f32.xlu0 %v1159
      %v1161 = vpop.xlane.xlu0 %1160
      %v1162 = vsub.f32 %v1154, %v1158
      %v1163 = vsub.f32 %v1155, %v1161
      %v1164 = vmul.f32 %v1162, 1.442695
      %v1165 = vpow.pop %v1164
      %v1166 = vmul.f32 %v1163, 1.442695
      %v1167 = vpow.pop %v1166
      %v1168 = vsel %vm506, %v1165, 0.0
      %1169 = vadd.xlane.f32.xlu0 %v1168
      %v1170 = vpop.xlane.xlu0 %1169
      %v1171 = vsel %vm506, %v1167, 0.0
      %1172 = vadd.xlane.f32.xlu0 %v1171
      %v1173 = vpop.xlane.xlu0 %1172
      %v1174 = vrcp.pop %v1170
      %v1175 = vrcp.pop %v1173
      %v1176 = vmul.f32 %v1165, %v1174
      %v1177 = vmul.f32 %v1167, %v1175
      %v1178 = vpack.c.bf16 %v1177, %v1176
      %1179 = vrot.lane.b32.xlu0 %v1096, 96
      %v1180 = vpop.permute.xlu0 %1179
      %v1183 = vsel %vm506, %v1178, 0
      %1185 = vmatprep.subr.bf16.mxu0 0
      %1186 = vmatpush1.bf16.msra.mxu0 %v1180
      %1187 = vmatprep.subr.bf16.mxu0 0
      %1188 = vmatpush1.bf16.msra.mxu0 0
      %1189 = vmatprep.subr.bf16.mxu0 0
      %1190 = vmatpush1.bf16.msra.mxu0 0
      %1191 = vmatprep.subr.bf16.mxu0 0
      %1192 = vmatpush1.bf16.msra.mxu0 0
      %1193 = vmatprep.subr.bf16.mxu0 0
      %1194 = vmatpush1.bf16.msra.mxu0 0
      %1195 = vmatprep.subr.bf16.mxu0 0
      %1196 = vmatpush1.bf16.msra.mxu0 0
      %1197 = vmatprep.subr.bf16.mxu0 0
      %1198 = vmatpush1.bf16.msra.mxu0 0
      %1199 = vmatprep.subr.bf16.mxu0 0
      %1200 = vmatpush1.bf16.msra.mxu0 0
      %1201 = vmatprep.subr.bf16.mxu0 0
      %1202 = vmatpush1.bf16.msra.mxu0 0
      %1203 = vmatprep.subr.bf16.mxu0 0
      %1204 = vmatpush1.bf16.msra.mxu0 0
      %1205 = vmatprep.subr.bf16.mxu0 0
      %1206 = vmatpush1.bf16.msra.mxu0 0
      %1207 = vmatprep.subr.bf16.mxu0 0
      %1208 = vmatpush1.bf16.msra.mxu0 0
      %1209 = vmatprep.subr.bf16.mxu0 0
      %1210 = vmatpush1.bf16.msra.mxu0 0
      %1211 = vmatprep.subr.bf16.mxu0 0
      %1212 = vmatpush1.bf16.msra.mxu0 0
      %1213 = vmatprep.subr.bf16.mxu0 0
      %1214 = vmatpush1.bf16.msra.mxu0 0
      %1215 = vmatprep.subr.bf16.mxu0 0
      %1216 = vmatpush1.bf16.msra.mxu0 0
      %1217 = vmatprep.mubr.bf16.mxu0 0
      %1218 = vmatmul.mubr.bf16.gmra.mrb[0].mxu0 %v1183
      %v1219 = vpop.f32.mrb[0].mxu0
      %v1220 = vadd.f32 0.0, %v1219
      %v1221 = vpop.f32.mrb[0].mxu0
      %v1222 = vpop.f32.mrb[0].mxu0
      %v1223 = vadd.f32 0.0, %v1222
      %v1224 = vpop.f32.mrb[0].mxu0
      %1225 = vdwg.mxu0
      %v1226 = vpack.c.bf16 %v1223, %v1220
      %1227 = vrot.lane.b32.xlu0 %v1096, 120
      %v1228 = vpop.permute.xlu0 %1227
      %1229 = vrot.lane.b32.xlu0 %v1096, 104
      %v1230 = vpop.permute.xlu0 %1229
      %v1232 = vsel %vm746, %v1228, 0
      %v1235 = vsel %vm746, %v1230, 0
      %1237 = vmatprep.subr.bf16.mxu0 0
      %1238 = vmatpush1.bf16.xpose.msra.mxu0 %v1235
      %1239 = vmatprep.subr.bf16.mxu0 0
      %1240 = vmatpush1.bf16.xpose.msra.mxu0 0
      %1241 = vmatprep.subr.bf16.mxu0 0
      %1242 = vmatpush1.bf16.xpose.msra.mxu0 0
      %1243 = vmatprep.subr.bf16.mxu0 0
      %1244 = vmatpush1.bf16.xpose.msra.mxu0 0
      %1245 = vmatprep.subr.bf16.mxu0 0
      %1246 = vmatpush1.bf16.xpose.msra.mxu0 0
      %1247 = vmatprep.subr.bf16.mxu0 0
      %1248 = vmatpush1.bf16.xpose.msra.mxu0 0
      %1249 = vmatprep.subr.bf16.mxu0 0
      %1250 = vmatpush1.bf16.xpose.msra.mxu0 0
      %1251 = vmatprep.subr.bf16.mxu0 0
      %1252 = vmatpush1.bf16.xpose.msra.mxu0 0
      %1253 = vmatprep.subr.bf16.mxu0 0
      %1254 = vmatpush1.bf16.xpose.msra.mxu0 0
      %1255 = vmatprep.subr.bf16.mxu0 0
      %1256 = vmatpush1.bf16.xpose.msra.mxu0 0
      %1257 = vmatprep.subr.bf16.mxu0 0
      %1258 = vmatpush1.bf16.xpose.msra.mxu0 0
      %1259 = vmatprep.subr.bf16.mxu0 0
      %1260 = vmatpush1.bf16.xpose.msra.mxu0 0
      %1261 = vmatprep.subr.bf16.mxu0 0
      %1262 = vmatpush1.bf16.xpose.msra.mxu0 0
      %1263 = vmatprep.subr.bf16.mxu0 0
      %1264 = vmatpush1.bf16.xpose.msra.mxu0 0
      %1265 = vmatprep.subr.bf16.mxu0 0
      %1266 = vmatpush1.bf16.xpose.msra.mxu0 0
      %1267 = vmatprep.subr.bf16.mxu0 0
      %1268 = vmatpush1.bf16.xpose.msra.mxu0 0
      %1269 = vmatprep.mubr.bf16.mxu0 0
      %1270 = vmatmul.mubr.bf16.gmra.mrb[0].mxu0 %v1232
      %v1271 = vpop.f32.mrb[0].mxu0
      %v1272 = vadd.f32 0.0, %v1271
      %v1273 = vpop.f32.mrb[0].mxu0
      %v1274 = vpop.f32.mrb[0].mxu0
      %v1275 = vadd.f32 0.0, %v1274
      %v1276 = vpop.f32.mrb[0].mxu0
      %1277 = vdwg.mxu0
      %v1278 = vmul.f32 %v1272, 0.35355338
      %v1279 = vmul.f32 %v1275, 0.35355338
      %v1280 = vadd.f32 %v1278, %v738
      %v1281 = vadd.f32 %v1279, %v739
      %v1282 = vadd.f32 %v1280, %v1152
      %v1283 = vadd.f32 %v1281, %v1153
      %v1284 = vsel %vm506, %v1282, -inf
      %1285 = vmax.xlane.f32.xlu0 %v1284
      %v1286 = vpop.xlane.xlu0 %1285
      %v1287 = vsel %vm506, %v1283, -inf
      %1288 = vmax.xlane.f32.xlu0 %v1287
      %v1289 = vpop.xlane.xlu0 %1288
      %v1290 = vsub.f32 %v1282, %v1286
      %v1291 = vsub.f32 %v1283, %v1289
      %v1292 = vmul.f32 %v1290, 1.442695
      %v1293 = vpow.pop %v1292
      %v1294 = vmul.f32 %v1291, 1.442695
      %v1295 = vpow.pop %v1294
      %v1296 = vsel %vm506, %v1293, 0.0
      %1297 = vadd.xlane.f32.xlu0 %v1296
      %v1298 = vpop.xlane.xlu0 %1297
      %v1299 = vsel %vm506, %v1295, 0.0
      %1300 = vadd.xlane.f32.xlu0 %v1299
      %v1301 = vpop.xlane.xlu0 %1300
      %v1302 = vrcp.pop %v1298
      %v1303 = vrcp.pop %v1301
      %v1304 = vmul.f32 %v1293, %v1302
      %v1305 = vmul.f32 %v1295, %v1303
      %v1306 = vpack.c.bf16 %v1305, %v1304
      %1307 = vrot.lane.b32.xlu0 %v1096, 88
      %v1308 = vpop.permute.xlu0 %1307
      %v1311 = vsel %vm506, %v1306, 0
      %1313 = vmatprep.subr.bf16.mxu0 0
      %1314 = vmatpush1.bf16.msra.mxu0 %v1308
      %1315 = vmatprep.subr.bf16.mxu0 0
      %1316 = vmatpush1.bf16.msra.mxu0 0
      %1317 = vmatprep.subr.bf16.mxu0 0
      %1318 = vmatpush1.bf16.msra.mxu0 0
      %1319 = vmatprep.subr.bf16.mxu0 0
      %1320 = vmatpush1.bf16.msra.mxu0 0
      %1321 = vmatprep.subr.bf16.mxu0 0
      %1322 = vmatpush1.bf16.msra.mxu0 0
      %1323 = vmatprep.subr.bf16.mxu0 0
      %1324 = vmatpush1.bf16.msra.mxu0 0
      %1325 = vmatprep.subr.bf16.mxu0 0
      %1326 = vmatpush1.bf16.msra.mxu0 0
      %1327 = vmatprep.subr.bf16.mxu0 0
      %1328 = vmatpush1.bf16.msra.mxu0 0
      %1329 = vmatprep.subr.bf16.mxu0 0
      %1330 = vmatpush1.bf16.msra.mxu0 0
      %1331 = vmatprep.subr.bf16.mxu0 0
      %1332 = vmatpush1.bf16.msra.mxu0 0
      %1333 = vmatprep.subr.bf16.mxu0 0
      %1334 = vmatpush1.bf16.msra.mxu0 0
      %1335 = vmatprep.subr.bf16.mxu0 0
      %1336 = vmatpush1.bf16.msra.mxu0 0
      %1337 = vmatprep.subr.bf16.mxu0 0
      %1338 = vmatpush1.bf16.msra.mxu0 0
      %1339 = vmatprep.subr.bf16.mxu0 0
      %1340 = vmatpush1.bf16.msra.mxu0 0
      %1341 = vmatprep.subr.bf16.mxu0 0
      %1342 = vmatpush1.bf16.msra.mxu0 0
      %1343 = vmatprep.subr.bf16.mxu0 0
      %1344 = vmatpush1.bf16.msra.mxu0 0
      %1345 = vmatprep.mubr.bf16.mxu0 0
      %1346 = vmatmul.mubr.bf16.gmra.mrb[0].mxu0 %v1311
      %v1347 = vpop.f32.mrb[0].mxu0
      %v1348 = vadd.f32 0.0, %v1347
      %v1349 = vpop.f32.mrb[0].mxu0
      %v1350 = vpop.f32.mrb[0].mxu0
      %v1351 = vadd.f32 0.0, %v1350
      %v1352 = vpop.f32.mrb[0].mxu0
      %1353 = vdwg.mxu0
      %v1354 = vpack.c.bf16 %v1351, %v1348
      %v1356 = vsel %vm746, %v1354, 0
      %1358 = vmatprep.subr.bf16.mxu0 0
      %1359 = vmatpush1.bf16.msra.mxu0 %v1006
      %1360 = vmatprep.subr.bf16.mxu0 0
      %1361 = vmatpush1.bf16.msra.mxu0 0
      %1362 = vmatprep.subr.bf16.mxu0 0
      %1363 = vmatpush1.bf16.msra.mxu0 0
      %1364 = vmatprep.subr.bf16.mxu0 0
      %1365 = vmatpush1.bf16.msra.mxu0 0
      %1366 = vmatprep.subr.bf16.mxu0 0
      %1367 = vmatpush1.bf16.msra.mxu0 0
      %1368 = vmatprep.subr.bf16.mxu0 0
      %1369 = vmatpush1.bf16.msra.mxu0 0
      %1370 = vmatprep.subr.bf16.mxu0 0
      %1371 = vmatpush1.bf16.msra.mxu0 0
      %1372 = vmatprep.subr.bf16.mxu0 0
      %1373 = vmatpush1.bf16.msra.mxu0 0
      %1374 = vmatprep.subr.bf16.mxu0 0
      %1375 = vmatpush1.bf16.msra.mxu0 0
      %1376 = vmatprep.subr.bf16.mxu0 0
      %1377 = vmatpush1.bf16.msra.mxu0 0
      %1378 = vmatprep.subr.bf16.mxu0 0
      %1379 = vmatpush1.bf16.msra.mxu0 0
      %1380 = vmatprep.subr.bf16.mxu0 0
      %1381 = vmatpush1.bf16.msra.mxu0 0
      %1382 = vmatprep.subr.bf16.mxu0 0
      %1383 = vmatpush1.bf16.msra.mxu0 0
      %1384 = vmatprep.subr.bf16.mxu0 0
      %1385 = vmatpush1.bf16.msra.mxu0 0
      %1386 = vmatprep.subr.bf16.mxu0 0
      %1387 = vmatpush1.bf16.msra.mxu0 0
      %1388 = vmatprep.subr.bf16.mxu0 0
      %1389 = vmatpush1.bf16.msra.mxu0 0
      %1390 = vmatprep.mubr.bf16.mxu0 0
      %1391 = vmatmul.mubr.bf16.gmra.mrb[0].mxu0 %v1356
      %v1392 = vpop.f32.mrb[0].mxu0
      %v1393 = vadd.f32 0.0, %v1392
      %v1394 = vpop.f32.mrb[0].mxu0
      %v1395 = vpop.f32.mrb[0].mxu0
      %v1396 = vadd.f32 0.0, %v1395
      %v1397 = vpop.f32.mrb[0].mxu0
      %1398 = vdwg.mxu0
      %v1400 = vsel %vm746, %v1226, 0
      %1402 = vmatprep.subr.bf16.mxu0 0
      %1403 = vmatpush1.bf16.msra.mxu0 %v1053
      %1404 = vmatprep.subr.bf16.mxu0 0
      %1405 = vmatpush1.bf16.msra.mxu0 0
      %1406 = vmatprep.subr.bf16.mxu0 0
      %1407 = vmatpush1.bf16.msra.mxu0 0
      %1408 = vmatprep.subr.bf16.mxu0 0
      %1409 = vmatpush1.bf16.msra.mxu0 0
      %1410 = vmatprep.subr.bf16.mxu0 0
      %1411 = vmatpush1.bf16.msra.mxu0 0
      %1412 = vmatprep.subr.bf16.mxu0 0
      %1413 = vmatpush1.bf16.msra.mxu0 0
      %1414 = vmatprep.subr.bf16.mxu0 0
      %1415 = vmatpush1.bf16.msra.mxu0 0
      %1416 = vmatprep.subr.bf16.mxu0 0
      %1417 = vmatpush1.bf16.msra.mxu0 0
      %1418 = vmatprep.subr.bf16.mxu0 0
      %1419 = vmatpush1.bf16.msra.mxu0 0
      %1420 = vmatprep.subr.bf16.mxu0 0
      %1421 = vmatpush1.bf16.msra.mxu0 0
      %1422 = vmatprep.subr.bf16.mxu0 0
      %1423 = vmatpush1.bf16.msra.mxu0 0
      %1424 = vmatprep.subr.bf16.mxu0 0
      %1425 = vmatpush1.bf16.msra.mxu0 0
      %1426 = vmatprep.subr.bf16.mxu0 0
      %1427 = vmatpush1.bf16.msra.mxu0 0
      %1428 = vmatprep.subr.bf16.mxu0 0
      %1429 = vmatpush1.bf16.msra.mxu0 0
      %1430 = vmatprep.subr.bf16.mxu0 0
      %1431 = vmatpush1.bf16.msra.mxu0 0
      %1432 = vmatprep.subr.bf16.mxu0 0
      %1433 = vmatpush1.bf16.msra.mxu0 0
      %1434 = vmatprep.mubr.bf16.mxu0 0
      %1435 = vmatmul.mubr.bf16.gmra.mrb[0].mxu0 %v1400
      %v1436 = vpop.f32.mrb[0].mxu0
      %v1437 = vadd.f32 %v1393, %v1436
      %v1438 = vpop.f32.mrb[0].mxu0
      %v1439 = vpop.f32.mrb[0].mxu0
      %v1440 = vadd.f32 %v1396, %v1439
      %v1441 = vpop.f32.mrb[0].mxu0
      %1442 = vdwg.mxu0
      %v1443 = vpack.c.bf16 %v725, %v722
      %1445 = vrot.lane.b32.xlu0 %v1443, 112
      %v1446 = vpop.permute.xlu0 %1445
      %v1448 = vsel %vm746, %v1443, 0
      %v1451 = vsel %vm746, %v1446, 0
      %1453 = vmatprep.subr.bf16.mxu0 0
      %1454 = vmatpush1.bf16.xpose.msra.mxu0 %v1451
      %1455 = vmatprep.subr.bf16.mxu0 0
      %1456 = vmatpush1.bf16.xpose.msra.mxu0 0
      %1457 = vmatprep.subr.bf16.mxu0 0
      %1458 = vmatpush1.bf16.xpose.msra.mxu0 0
      %1459 = vmatprep.subr.bf16.mxu0 0
      %1460 = vmatpush1.bf16.xpose.msra.mxu0 0
      %1461 = vmatprep.subr.bf16.mxu0 0
      %1462 = vmatpush1.bf16.xpose.msra.mxu0 0
      %1463 = vmatprep.subr.bf16.mxu0 0
      %1464 = vmatpush1.bf16.xpose.msra.mxu0 0
      %1465 = vmatprep.subr.bf16.mxu0 0
      %1466 = vmatpush1.bf16.xpose.msra.mxu0 0
      %1467 = vmatprep.subr.bf16.mxu0 0
      %1468 = vmatpush1.bf16.xpose.msra.mxu0 0
      %1469 = vmatprep.subr.bf16.mxu0 0
      %1470 = vmatpush1.bf16.xpose.msra.mxu0 0
      %1471 = vmatprep.subr.bf16.mxu0 0
      %1472 = vmatpush1.bf16.xpose.msra.mxu0 0
      %1473 = vmatprep.subr.bf16.mxu0 0
      %1474 = vmatpush1.bf16.xpose.msra.mxu0 0
      %1475 = vmatprep.subr.bf16.mxu0 0
      %1476 = vmatpush1.bf16.xpose.msra.mxu0 0
      %1477 = vmatprep.subr.bf16.mxu0 0
      %1478 = vmatpush1.bf16.xpose.msra.mxu0 0
      %1479 = vmatprep.subr.bf16.mxu0 0
      %1480 = vmatpush1.bf16.xpose.msra.mxu0 0
      %1481 = vmatprep.subr.bf16.mxu0 0
      %1482 = vmatpush1.bf16.xpose.msra.mxu0 0
      %1483 = vmatprep.subr.bf16.mxu0 0
      %1484 = vmatpush1.bf16.xpose.msra.mxu0 0
      %1485 = vmatprep.mubr.bf16.mxu0 0
      %1486 = vmatmul.mubr.bf16.gmra.mrb[0].mxu0 %v1448
      %v1487 = vpop.f32.mrb[0].mxu0
      %v1488 = vadd.f32 0.0, %v1487
      %v1489 = vpop.f32.mrb[0].mxu0
      %v1490 = vpop.f32.mrb[0].mxu0
      %v1491 = vadd.f32 0.0, %v1490
      %v1492 = vpop.f32.mrb[0].mxu0
      %1493 = vdwg.mxu0
      %v1494 = vmul.f32 %v1488, 0.35355338
      %v1495 = vmul.f32 %v1491, 0.35355338
      %v1496 = vadd.f32 %v1494, %v736
      %v1497 = vadd.f32 %v1495, %v737
      %s1498 = scalar_lea.vmem %s8, 32
      %v1499 = vld [vmem:[%s1498] sm:$0xff]
      %v1500 = vld [vmem:[%s1498 + $0x8] sm:$0xff]
      %v1501 = vadd.f32 %v1496, %v1499
      %v1502 = vadd.f32 %v1497, %v1500
      %v1503 = vsel %vm506, %v1501, -inf
      %1504 = vmax.xlane.f32.xlu0 %v1503
      %v1505 = vpop.xlane.xlu0 %1504
      %v1506 = vsel %vm506, %v1502, -inf
      %1507 = vmax.xlane.f32.xlu0 %v1506
      %v1508 = vpop.xlane.xlu0 %1507
      %v1509 = vsub.f32 %v1501, %v1505
      %v1510 = vsub.f32 %v1502, %v1508
      %v1511 = vmul.f32 %v1509, 1.442695
      %v1512 = vpow.pop %v1511
      %v1513 = vmul.f32 %v1510, 1.442695
      %v1514 = vpow.pop %v1513
      %v1515 = vsel %vm506, %v1512, 0.0
      %1516 = vadd.xlane.f32.xlu0 %v1515
      %v1517 = vpop.xlane.xlu0 %1516
      %v1518 = vsel %vm506, %v1514, 0.0
      %1519 = vadd.xlane.f32.xlu0 %v1518
      %v1520 = vpop.xlane.xlu0 %1519
      %v1521 = vrcp.pop %v1517
      %v1522 = vrcp.pop %v1520
      %v1523 = vmul.f32 %v1512, %v1521
      %v1524 = vmul.f32 %v1514, %v1522
      %v1525 = vpack.c.bf16 %v1524, %v1523
      %1526 = vrot.lane.b32.xlu0 %v1443, 96
      %v1527 = vpop.permute.xlu0 %1526
      %v1530 = vsel %vm506, %v1525, 0
      %1532 = vmatprep.subr.bf16.mxu0 0
      %1533 = vmatpush1.bf16.msra.mxu0 %v1527
      %1534 = vmatprep.subr.bf16.mxu0 0
      %1535 = vmatpush1.bf16.msra.mxu0 0
      %1536 = vmatprep.subr.bf16.mxu0 0
      %1537 = vmatpush1.bf16.msra.mxu0 0
      %1538 = vmatprep.subr.bf16.mxu0 0
      %1539 = vmatpush1.bf16.msra.mxu0 0
      %1540 = vmatprep.subr.bf16.mxu0 0
      %1541 = vmatpush1.bf16.msra.mxu0 0
      %1542 = vmatprep.subr.bf16.mxu0 0
      %1543 = vmatpush1.bf16.msra.mxu0 0
      %1544 = vmatprep.subr.bf16.mxu0 0
      %1545 = vmatpush1.bf16.msra.mxu0 0
      %1546 = vmatprep.subr.bf16.mxu0 0
      %1547 = vmatpush1.bf16.msra.mxu0 0
      %1548 = vmatprep.subr.bf16.mxu0 0
      %1549 = vmatpush1.bf16.msra.mxu0 0
      %1550 = vmatprep.subr.bf16.mxu0 0
      %1551 = vmatpush1.bf16.msra.mxu0 0
      %1552 = vmatprep.subr.bf16.mxu0 0
      %1553 = vmatpush1.bf16.msra.mxu0 0
      %1554 = vmatprep.subr.bf16.mxu0 0
      %1555 = vmatpush1.bf16.msra.mxu0 0
      %1556 = vmatprep.subr.bf16.mxu0 0
      %1557 = vmatpush1.bf16.msra.mxu0 0
      %1558 = vmatprep.subr.bf16.mxu0 0
      %1559 = vmatpush1.bf16.msra.mxu0 0
      %1560 = vmatprep.subr.bf16.mxu0 0
      %1561 = vmatpush1.bf16.msra.mxu0 0
      %1562 = vmatprep.subr.bf16.mxu0 0
      %1563 = vmatpush1.bf16.msra.mxu0 0
      %1564 = vmatprep.mubr.bf16.mxu0 0
      %1565 = vmatmul.mubr.bf16.gmra.mrb[0].mxu0 %v1530
      %v1566 = vpop.f32.mrb[0].mxu0
      %v1567 = vadd.f32 0.0, %v1566
      %v1568 = vpop.f32.mrb[0].mxu0
      %v1569 = vpop.f32.mrb[0].mxu0
      %v1570 = vadd.f32 0.0, %v1569
      %v1571 = vpop.f32.mrb[0].mxu0
      %1572 = vdwg.mxu0
      %v1573 = vpack.c.bf16 %v1570, %v1567
      %1574 = vrot.lane.b32.xlu0 %v1443, 120
      %v1575 = vpop.permute.xlu0 %1574
      %1576 = vrot.lane.b32.xlu0 %v1443, 104
      %v1577 = vpop.permute.xlu0 %1576
      %v1579 = vsel %vm746, %v1575, 0
      %v1582 = vsel %vm746, %v1577, 0
      %1584 = vmatprep.subr.bf16.mxu0 0
      %1585 = vmatpush1.bf16.xpose.msra.mxu0 %v1582
      %1586 = vmatprep.subr.bf16.mxu0 0
      %1587 = vmatpush1.bf16.xpose.msra.mxu0 0
      %1588 = vmatprep.subr.bf16.mxu0 0
      %1589 = vmatpush1.bf16.xpose.msra.mxu0 0
      %1590 = vmatprep.subr.bf16.mxu0 0
      %1591 = vmatpush1.bf16.xpose.msra.mxu0 0
      %1592 = vmatprep.subr.bf16.mxu0 0
      %1593 = vmatpush1.bf16.xpose.msra.mxu0 0
      %1594 = vmatprep.subr.bf16.mxu0 0
      %1595 = vmatpush1.bf16.xpose.msra.mxu0 0
      %1596 = vmatprep.subr.bf16.mxu0 0
      %1597 = vmatpush1.bf16.xpose.msra.mxu0 0
      %1598 = vmatprep.subr.bf16.mxu0 0
      %1599 = vmatpush1.bf16.xpose.msra.mxu0 0
      %1600 = vmatprep.subr.bf16.mxu0 0
      %1601 = vmatpush1.bf16.xpose.msra.mxu0 0
      %1602 = vmatprep.subr.bf16.mxu0 0
      %1603 = vmatpush1.bf16.xpose.msra.mxu0 0
      %1604 = vmatprep.subr.bf16.mxu0 0
      %1605 = vmatpush1.bf16.xpose.msra.mxu0 0
      %1606 = vmatprep.subr.bf16.mxu0 0
      %1607 = vmatpush1.bf16.xpose.msra.mxu0 0
      %1608 = vmatprep.subr.bf16.mxu0 0
      %1609 = vmatpush1.bf16.xpose.msra.mxu0 0
      %1610 = vmatprep.subr.bf16.mxu0 0
      %1611 = vmatpush1.bf16.xpose.msra.mxu0 0
      %1612 = vmatprep.subr.bf16.mxu0 0
      %1613 = vmatpush1.bf16.xpose.msra.mxu0 0
      %1614 = vmatprep.subr.bf16.mxu0 0
      %1615 = vmatpush1.bf16.xpose.msra.mxu0 0
      %1616 = vmatprep.mubr.bf16.mxu0 0
      %1617 = vmatmul.mubr.bf16.gmra.mrb[0].mxu0 %v1579
      %v1618 = vpop.f32.mrb[0].mxu0
      %v1619 = vadd.f32 0.0, %v1618
      %v1620 = vpop.f32.mrb[0].mxu0
      %v1621 = vpop.f32.mrb[0].mxu0
      %v1622 = vadd.f32 0.0, %v1621
      %v1623 = vpop.f32.mrb[0].mxu0
      %1624 = vdwg.mxu0
      %v1625 = vmul.f32 %v1619, 0.35355338
      %v1626 = vmul.f32 %v1622, 0.35355338
      %v1627 = vadd.f32 %v1625, %v738
      %v1628 = vadd.f32 %v1626, %v739
      %v1629 = vadd.f32 %v1627, %v1499
      %v1630 = vadd.f32 %v1628, %v1500
      %v1631 = vsel %vm506, %v1629, -inf
      %1632 = vmax.xlane.f32.xlu0 %v1631
      %v1633 = vpop.xlane.xlu0 %1632
      %v1634 = vsel %vm506, %v1630, -inf
      %1635 = vmax.xlane.f32.xlu0 %v1634
      %v1636 = vpop.xlane.xlu0 %1635
      %v1637 = vsub.f32 %v1629, %v1633
      %v1638 = vsub.f32 %v1630, %v1636
      %v1639 = vmul.f32 %v1637, 1.442695
      %v1640 = vpow.pop %v1639
      %v1641 = vmul.f32 %v1638, 1.442695
      %v1642 = vpow.pop %v1641
      %v1643 = vsel %vm506, %v1640, 0.0
      %1644 = vadd.xlane.f32.xlu0 %v1643
      %v1645 = vpop.xlane.xlu0 %1644
      %v1646 = vsel %vm506, %v1642, 0.0
      %1647 = vadd.xlane.f32.xlu0 %v1646
      %v1648 = vpop.xlane.xlu0 %1647
      %v1649 = vrcp.pop %v1645
      %v1650 = vrcp.pop %v1648
      %v1651 = vmul.f32 %v1640, %v1649
      %v1652 = vmul.f32 %v1642, %v1650
      %v1653 = vpack.c.bf16 %v1652, %v1651
      %1654 = vrot.lane.b32.xlu0 %v1443, 88
      %v1655 = vpop.permute.xlu0 %1654
      %v1658 = vsel %vm506, %v1653, 0
      %1660 = vmatprep.subr.bf16.mxu0 0
      %1661 = vmatpush1.bf16.msra.mxu0 %v1655
      %1662 = vmatprep.subr.bf16.mxu0 0
      %1663 = vmatpush1.bf16.msra.mxu0 0
      %1664 = vmatprep.subr.bf16.mxu0 0
      %1665 = vmatpush1.bf16.msra.mxu0 0
      %1666 = vmatprep.subr.bf16.mxu0 0
      %1667 = vmatpush1.bf16.msra.mxu0 0
      %1668 = vmatprep.subr.bf16.mxu0 0
      %1669 = vmatpush1.bf16.msra.mxu0 0
      %1670 = vmatprep.subr.bf16.mxu0 0
      %1671 = vmatpush1.bf16.msra.mxu0 0
      %1672 = vmatprep.subr.bf16.mxu0 0
      %1673 = vmatpush1.bf16.msra.mxu0 0
      %1674 = vmatprep.subr.bf16.mxu0 0
      %1675 = vmatpush1.bf16.msra.mxu0 0
      %1676 = vmatprep.subr.bf16.mxu0 0
      %1677 = vmatpush1.bf16.msra.mxu0 0
      %1678 = vmatprep.subr.bf16.mxu0 0
      %1679 = vmatpush1.bf16.msra.mxu0 0
      %1680 = vmatprep.subr.bf16.mxu0 0
      %1681 = vmatpush1.bf16.msra.mxu0 0
      %1682 = vmatprep.subr.bf16.mxu0 0
      %1683 = vmatpush1.bf16.msra.mxu0 0
      %1684 = vmatprep.subr.bf16.mxu0 0
      %1685 = vmatpush1.bf16.msra.mxu0 0
      %1686 = vmatprep.subr.bf16.mxu0 0
      %1687 = vmatpush1.bf16.msra.mxu0 0
      %1688 = vmatprep.subr.bf16.mxu0 0
      %1689 = vmatpush1.bf16.msra.mxu0 0
      %1690 = vmatprep.subr.bf16.mxu0 0
      %1691 = vmatpush1.bf16.msra.mxu0 0
      %1692 = vmatprep.mubr.bf16.mxu0 0
      %1693 = vmatmul.mubr.bf16.gmra.mrb[0].mxu0 %v1658
      %v1694 = vpop.f32.mrb[0].mxu0
      %v1695 = vadd.f32 0.0, %v1694
      %v1696 = vpop.f32.mrb[0].mxu0
      %v1697 = vpop.f32.mrb[0].mxu0
      %v1698 = vadd.f32 0.0, %v1697
      %v1699 = vpop.f32.mrb[0].mxu0
      %1700 = vdwg.mxu0
      %v1701 = vpack.c.bf16 %v1698, %v1695
      %v1703 = vsel %vm746, %v1701, 0
      %1705 = vmatprep.subr.bf16.mxu0 0
      %1706 = vmatpush1.bf16.msra.mxu0 %v1006
      %1707 = vmatprep.subr.bf16.mxu0 0
      %1708 = vmatpush1.bf16.msra.mxu0 0
      %1709 = vmatprep.subr.bf16.mxu0 0
      %1710 = vmatpush1.bf16.msra.mxu0 0
      %1711 = vmatprep.subr.bf16.mxu0 0
      %1712 = vmatpush1.bf16.msra.mxu0 0
      %1713 = vmatprep.subr.bf16.mxu0 0
      %1714 = vmatpush1.bf16.msra.mxu0 0
      %1715 = vmatprep.subr.bf16.mxu0 0
      %1716 = vmatpush1.bf16.msra.mxu0 0
      %1717 = vmatprep.subr.bf16.mxu0 0
      %1718 = vmatpush1.bf16.msra.mxu0 0
      %1719 = vmatprep.subr.bf16.mxu0 0
      %1720 = vmatpush1.bf16.msra.mxu0 0
      %1721 = vmatprep.subr.bf16.mxu0 0
      %1722 = vmatpush1.bf16.msra.mxu0 0
      %1723 = vmatprep.subr.bf16.mxu0 0
      %1724 = vmatpush1.bf16.msra.mxu0 0
      %1725 = vmatprep.subr.bf16.mxu0 0
      %1726 = vmatpush1.bf16.msra.mxu0 0
      %1727 = vmatprep.subr.bf16.mxu0 0
      %1728 = vmatpush1.bf16.msra.mxu0 0
      %1729 = vmatprep.subr.bf16.mxu0 0
      %1730 = vmatpush1.bf16.msra.mxu0 0
      %1731 = vmatprep.subr.bf16.mxu0 0
      %1732 = vmatpush1.bf16.msra.mxu0 0
      %1733 = vmatprep.subr.bf16.mxu0 0
      %1734 = vmatpush1.bf16.msra.mxu0 0
      %1735 = vmatprep.subr.bf16.mxu0 0
      %1736 = vmatpush1.bf16.msra.mxu0 0
      %1737 = vmatprep.mubr.bf16.mxu0 0
      %1738 = vmatmul.mubr.bf16.gmra.mrb[0].mxu0 %v1703
      %v1739 = vpop.f32.mrb[0].mxu0
      %v1740 = vadd.f32 0.0, %v1739
      %v1741 = vpop.f32.mrb[0].mxu0
      %v1742 = vpop.f32.mrb[0].mxu0
      %v1743 = vadd.f32 0.0, %v1742
      %v1744 = vpop.f32.mrb[0].mxu0
      %1745 = vdwg.mxu0
      %v1747 = vsel %vm746, %v1573, 0
      %1749 = vmatprep.subr.bf16.mxu0 0
      %1750 = vmatpush1.bf16.msra.mxu0 %v1053
      %1751 = vmatprep.subr.bf16.mxu0 0
      %1752 = vmatpush1.bf16.msra.mxu0 0
      %1753 = vmatprep.subr.bf16.mxu0 0
      %1754 = vmatpush1.bf16.msra.mxu0 0
      %1755 = vmatprep.subr.bf16.mxu0 0
      %1756 = vmatpush1.bf16.msra.mxu0 0
      %1757 = vmatprep.subr.bf16.mxu0 0
      %1758 = vmatpush1.bf16.msra.mxu0 0
      %1759 = vmatprep.subr.bf16.mxu0 0
      %1760 = vmatpush1.bf16.msra.mxu0 0
      %1761 = vmatprep.subr.bf16.mxu0 0
      %1762 = vmatpush1.bf16.msra.mxu0 0
      %1763 = vmatprep.subr.bf16.mxu0 0
      %1764 = vmatpush1.bf16.msra.mxu0 0
      %1765 = vmatprep.subr.bf16.mxu0 0
      %1766 = vmatpush1.bf16.msra.mxu0 0
      %1767 = vmatprep.subr.bf16.mxu0 0
      %1768 = vmatpush1.bf16.msra.mxu0 0
      %1769 = vmatprep.subr.bf16.mxu0 0
      %1770 = vmatpush1.bf16.msra.mxu0 0
      %1771 = vmatprep.subr.bf16.mxu0 0
      %1772 = vmatpush1.bf16.msra.mxu0 0
      %1773 = vmatprep.subr.bf16.mxu0 0
      %1774 = vmatpush1.bf16.msra.mxu0 0
      %1775 = vmatprep.subr.bf16.mxu0 0
      %1776 = vmatpush1.bf16.msra.mxu0 0
      %1777 = vmatprep.subr.bf16.mxu0 0
      %1778 = vmatpush1.bf16.msra.mxu0 0
      %1779 = vmatprep.subr.bf16.mxu0 0
      %1780 = vmatpush1.bf16.msra.mxu0 0
      %1781 = vmatprep.mubr.bf16.mxu0 0
      %1782 = vmatmul.mubr.bf16.gmra.mrb[0].mxu0 %v1747
      %v1783 = vpop.f32.mrb[0].mxu0
      %v1784 = vadd.f32 %v1740, %v1783
      %v1785 = vpop.f32.mrb[0].mxu0
      %v1786 = vpop.f32.mrb[0].mxu0
      %v1787 = vadd.f32 %v1743, %v1786
      %v1788 = vpop.f32.mrb[0].mxu0
      %1789 = vdwg.mxu0
      %v1790 = vpack.c.bf16 %v733, %v730
      %1792 = vrot.lane.b32.xlu0 %v1790, 112
      %v1793 = vpop.permute.xlu0 %1792
      %v1795 = vsel %vm746, %v1790, 0
      %v1798 = vsel %vm746, %v1793, 0
      %1800 = vmatprep.subr.bf16.mxu0 0
      %1801 = vmatpush1.bf16.xpose.msra.mxu0 %v1798
      %1802 = vmatprep.subr.bf16.mxu0 0
      %1803 = vmatpush1.bf16.xpose.msra.mxu0 0
      %1804 = vmatprep.subr.bf16.mxu0 0
      %1805 = vmatpush1.bf16.xpose.msra.mxu0 0
      %1806 = vmatprep.subr.bf16.mxu0 0
      %1807 = vmatpush1.bf16.xpose.msra.mxu0 0
      %1808 = vmatprep.subr.bf16.mxu0 0
      %1809 = vmatpush1.bf16.xpose.msra.mxu0 0
      %1810 = vmatprep.subr.bf16.mxu0 0
      %1811 = vmatpush1.bf16.xpose.msra.mxu0 0
      %1812 = vmatprep.subr.bf16.mxu0 0
      %1813 = vmatpush1.bf16.xpose.msra.mxu0 0
      %1814 = vmatprep.subr.bf16.mxu0 0
      %1815 = vmatpush1.bf16.xpose.msra.mxu0 0
      %1816 = vmatprep.subr.bf16.mxu0 0
      %1817 = vmatpush1.bf16.xpose.msra.mxu0 0
      %1818 = vmatprep.subr.bf16.mxu0 0
      %1819 = vmatpush1.bf16.xpose.msra.mxu0 0
      %1820 = vmatprep.subr.bf16.mxu0 0
      %1821 = vmatpush1.bf16.xpose.msra.mxu0 0
      %1822 = vmatprep.subr.bf16.mxu0 0
      %1823 = vmatpush1.bf16.xpose.msra.mxu0 0
      %1824 = vmatprep.subr.bf16.mxu0 0
      %1825 = vmatpush1.bf16.xpose.msra.mxu0 0
      %1826 = vmatprep.subr.bf16.mxu0 0
      %1827 = vmatpush1.bf16.xpose.msra.mxu0 0
      %1828 = vmatprep.subr.bf16.mxu0 0
      %1829 = vmatpush1.bf16.xpose.msra.mxu0 0
      %1830 = vmatprep.subr.bf16.mxu0 0
      %1831 = vmatpush1.bf16.xpose.msra.mxu0 0
      %1832 = vmatprep.mubr.bf16.mxu0 0
      %1833 = vmatmul.mubr.bf16.gmra.mrb[0].mxu0 %v1795
      %v1834 = vpop.f32.mrb[0].mxu0
      %v1835 = vadd.f32 0.0, %v1834
      %v1836 = vpop.f32.mrb[0].mxu0
      %v1837 = vpop.f32.mrb[0].mxu0
      %v1838 = vadd.f32 0.0, %v1837
      %v1839 = vpop.f32.mrb[0].mxu0
      %1840 = vdwg.mxu0
      %v1841 = vmul.f32 %v1835, 0.35355338
      %v1842 = vmul.f32 %v1838, 0.35355338
      %v1843 = vadd.f32 %v1841, %v736
      %v1844 = vadd.f32 %v1842, %v737
      %s1845 = scalar_lea.vmem %s8, 48
      %v1846 = vld [vmem:[%s1845] sm:$0xff]
      %v1847 = vld [vmem:[%s1845 + $0x8] sm:$0xff]
      %v1848 = vadd.f32 %v1843, %v1846
      %v1849 = vadd.f32 %v1844, %v1847
      %v1850 = vsel %vm506, %v1848, -inf
      %1851 = vmax.xlane.f32.xlu0 %v1850
      %v1852 = vpop.xlane.xlu0 %1851
      %v1853 = vsel %vm506, %v1849, -inf
      %1854 = vmax.xlane.f32.xlu0 %v1853
      %v1855 = vpop.xlane.xlu0 %1854
      %v1856 = vsub.f32 %v1848, %v1852
      %v1857 = vsub.f32 %v1849, %v1855
      %v1858 = vmul.f32 %v1856, 1.442695
      %v1859 = vpow.pop %v1858
      %v1860 = vmul.f32 %v1857, 1.442695
      %v1861 = vpow.pop %v1860
      %v1862 = vsel %vm506, %v1859, 0.0
      %1863 = vadd.xlane.f32.xlu0 %v1862
      %v1864 = vpop.xlane.xlu0 %1863
      %v1865 = vsel %vm506, %v1861, 0.0
      %1866 = vadd.xlane.f32.xlu0 %v1865
      %v1867 = vpop.xlane.xlu0 %1866
      %v1868 = vrcp.pop %v1864
      %v1869 = vrcp.pop %v1867
      %v1870 = vmul.f32 %v1859, %v1868
      %v1871 = vmul.f32 %v1861, %v1869
      %v1872 = vpack.c.bf16 %v1871, %v1870
      %1873 = vrot.lane.b32.xlu0 %v1790, 96
      %v1874 = vpop.permute.xlu0 %1873
      %v1877 = vsel %vm506, %v1872, 0
      %1879 = vmatprep.subr.bf16.mxu0 0
      %1880 = vmatpush1.bf16.msra.mxu0 %v1874
      %1881 = vmatprep.subr.bf16.mxu0 0
      %1882 = vmatpush1.bf16.msra.mxu0 0
      %1883 = vmatprep.subr.bf16.mxu0 0
      %1884 = vmatpush1.bf16.msra.mxu0 0
      %1885 = vmatprep.subr.bf16.mxu0 0
      %1886 = vmatpush1.bf16.msra.mxu0 0
      %1887 = vmatprep.subr.bf16.mxu0 0
      %1888 = vmatpush1.bf16.msra.mxu0 0
      %1889 = vmatprep.subr.bf16.mxu0 0
      %1890 = vmatpush1.bf16.msra.mxu0 0
      %1891 = vmatprep.subr.bf16.mxu0 0
      %1892 = vmatpush1.bf16.msra.mxu0 0
      %1893 = vmatprep.subr.bf16.mxu0 0
      %1894 = vmatpush1.bf16.msra.mxu0 0
      %1895 = vmatprep.subr.bf16.mxu0 0
      %1896 = vmatpush1.bf16.msra.mxu0 0
      %1897 = vmatprep.subr.bf16.mxu0 0
      %1898 = vmatpush1.bf16.msra.mxu0 0
      %1899 = vmatprep.subr.bf16.mxu0 0
      %1900 = vmatpush1.bf16.msra.mxu0 0
      %1901 = vmatprep.subr.bf16.mxu0 0
      %1902 = vmatpush1.bf16.msra.mxu0 0
      %1903 = vmatprep.subr.bf16.mxu0 0
      %1904 = vmatpush1.bf16.msra.mxu0 0
      %1905 = vmatprep.subr.bf16.mxu0 0
      %1906 = vmatpush1.bf16.msra.mxu0 0
      %1907 = vmatprep.subr.bf16.mxu0 0
      %1908 = vmatpush1.bf16.msra.mxu0 0
      %1909 = vmatprep.subr.bf16.mxu0 0
      %1910 = vmatpush1.bf16.msra.mxu0 0
      %1911 = vmatprep.mubr.bf16.mxu0 0
      %1912 = vmatmul.mubr.bf16.gmra.mrb[0].mxu0 %v1877
      %v1913 = vpop.f32.mrb[0].mxu0
      %v1914 = vadd.f32 0.0, %v1913
      %v1915 = vpop.f32.mrb[0].mxu0
      %v1916 = vpop.f32.mrb[0].mxu0
      %v1917 = vadd.f32 0.0, %v1916
      %v1918 = vpop.f32.mrb[0].mxu0
      %1919 = vdwg.mxu0
      %v1920 = vpack.c.bf16 %v1917, %v1914
      %1921 = vrot.lane.b32.xlu0 %v1790, 120
      %v1922 = vpop.permute.xlu0 %1921
      %1923 = vrot.lane.b32.xlu0 %v1790, 104
      %v1924 = vpop.permute.xlu0 %1923
      %v1926 = vsel %vm746, %v1922, 0
      %v1929 = vsel %vm746, %v1924, 0
      %1931 = vmatprep.subr.bf16.mxu0 0
      %1932 = vmatpush1.bf16.xpose.msra.mxu0 %v1929
      %1933 = vmatprep.subr.bf16.mxu0 0
      %1934 = vmatpush1.bf16.xpose.msra.mxu0 0
      %1935 = vmatprep.subr.bf16.mxu0 0
      %1936 = vmatpush1.bf16.xpose.msra.mxu0 0
      %1937 = vmatprep.subr.bf16.mxu0 0
      %1938 = vmatpush1.bf16.xpose.msra.mxu0 0
      %1939 = vmatprep.subr.bf16.mxu0 0
      %1940 = vmatpush1.bf16.xpose.msra.mxu0 0
      %1941 = vmatprep.subr.bf16.mxu0 0
      %1942 = vmatpush1.bf16.xpose.msra.mxu0 0
      %1943 = vmatprep.subr.bf16.mxu0 0
      %1944 = vmatpush1.bf16.xpose.msra.mxu0 0
      %1945 = vmatprep.subr.bf16.mxu0 0
      %1946 = vmatpush1.bf16.xpose.msra.mxu0 0
      %1947 = vmatprep.subr.bf16.mxu0 0
      %1948 = vmatpush1.bf16.xpose.msra.mxu0 0
      %1949 = vmatprep.subr.bf16.mxu0 0
      %1950 = vmatpush1.bf16.xpose.msra.mxu0 0
      %1951 = vmatprep.subr.bf16.mxu0 0
      %1952 = vmatpush1.bf16.xpose.msra.mxu0 0
      %1953 = vmatprep.subr.bf16.mxu0 0
      %1954 = vmatpush1.bf16.xpose.msra.mxu0 0
      %1955 = vmatprep.subr.bf16.mxu0 0
      %1956 = vmatpush1.bf16.xpose.msra.mxu0 0
      %1957 = vmatprep.subr.bf16.mxu0 0
      %1958 = vmatpush1.bf16.xpose.msra.mxu0 0
      %1959 = vmatprep.subr.bf16.mxu0 0
      %1960 = vmatpush1.bf16.xpose.msra.mxu0 0
      %1961 = vmatprep.subr.bf16.mxu0 0
      %1962 = vmatpush1.bf16.xpose.msra.mxu0 0
      %1963 = vmatprep.mubr.bf16.mxu0 0
      %1964 = vmatmul.mubr.bf16.gmra.mrb[0].mxu0 %v1926
      %v1965 = vpop.f32.mrb[0].mxu0
      %v1966 = vadd.f32 0.0, %v1965
      %v1967 = vpop.f32.mrb[0].mxu0
      %v1968 = vpop.f32.mrb[0].mxu0
      %v1969 = vadd.f32 0.0, %v1968
      %v1970 = vpop.f32.mrb[0].mxu0
      %1971 = vdwg.mxu0
      %v1972 = vmul.f32 %v1966, 0.35355338
      %v1973 = vmul.f32 %v1969, 0.35355338
      %v1974 = vadd.f32 %v1972, %v738
      %v1975 = vadd.f32 %v1973, %v739
      %v1976 = vadd.f32 %v1974, %v1846
      %v1977 = vadd.f32 %v1975, %v1847
      %v1978 = vsel %vm506, %v1976, -inf
      %1979 = vmax.xlane.f32.xlu0 %v1978
      %v1980 = vpop.xlane.xlu0 %1979
      %v1981 = vsel %vm506, %v1977, -inf
      %1982 = vmax.xlane.f32.xlu0 %v1981
      %v1983 = vpop.xlane.xlu0 %1982
      %v1984 = vsub.f32 %v1976, %v1980
      %v1985 = vsub.f32 %v1977, %v1983
      %v1986 = vmul.f32 %v1984, 1.442695
      %v1987 = vpow.pop %v1986
      %v1988 = vmul.f32 %v1985, 1.442695
      %v1989 = vpow.pop %v1988
      %v1990 = vsel %vm506, %v1987, 0.0
      %1991 = vadd.xlane.f32.xlu0 %v1990
      %v1992 = vpop.xlane.xlu0 %1991
      %v1993 = vsel %vm506, %v1989, 0.0
      %1994 = vadd.xlane.f32.xlu0 %v1993
      %v1995 = vpop.xlane.xlu0 %1994
      %v1996 = vrcp.pop %v1992
      %v1997 = vrcp.pop %v1995
      %v1998 = vmul.f32 %v1987, %v1996
      %v1999 = vmul.f32 %v1989, %v1997
      %v2000 = vpack.c.bf16 %v1999, %v1998
      %2001 = vrot.lane.b32.xlu0 %v1790, 88
      %v2002 = vpop.permute.xlu0 %2001
      %v2005 = vsel %vm506, %v2000, 0
      %2007 = vmatprep.subr.bf16.mxu0 0
      %2008 = vmatpush1.bf16.msra.mxu0 %v2002
      %2009 = vmatprep.subr.bf16.mxu0 0
      %2010 = vmatpush1.bf16.msra.mxu0 0
      %2011 = vmatprep.subr.bf16.mxu0 0
      %2012 = vmatpush1.bf16.msra.mxu0 0
      %2013 = vmatprep.subr.bf16.mxu0 0
      %2014 = vmatpush1.bf16.msra.mxu0 0
      %2015 = vmatprep.subr.bf16.mxu0 0
      %2016 = vmatpush1.bf16.msra.mxu0 0
      %2017 = vmatprep.subr.bf16.mxu0 0
      %2018 = vmatpush1.bf16.msra.mxu0 0
      %2019 = vmatprep.subr.bf16.mxu0 0
      %2020 = vmatpush1.bf16.msra.mxu0 0
      %2021 = vmatprep.subr.bf16.mxu0 0
      %2022 = vmatpush1.bf16.msra.mxu0 0
      %2023 = vmatprep.subr.bf16.mxu0 0
      %2024 = vmatpush1.bf16.msra.mxu0 0
      %2025 = vmatprep.subr.bf16.mxu0 0
      %2026 = vmatpush1.bf16.msra.mxu0 0
      %2027 = vmatprep.subr.bf16.mxu0 0
      %2028 = vmatpush1.bf16.msra.mxu0 0
      %2029 = vmatprep.subr.bf16.mxu0 0
      %2030 = vmatpush1.bf16.msra.mxu0 0
      %2031 = vmatprep.subr.bf16.mxu0 0
      %2032 = vmatpush1.bf16.msra.mxu0 0
      %2033 = vmatprep.subr.bf16.mxu0 0
      %2034 = vmatpush1.bf16.msra.mxu0 0
      %2035 = vmatprep.subr.bf16.mxu0 0
      %2036 = vmatpush1.bf16.msra.mxu0 0
      %2037 = vmatprep.subr.bf16.mxu0 0
      %2038 = vmatpush1.bf16.msra.mxu0 0
      %2039 = vmatprep.mubr.bf16.mxu0 0
      %2040 = vmatmul.mubr.bf16.gmra.mrb[0].mxu0 %v2005
      %v2041 = vpop.f32.mrb[0].mxu0
      %v2042 = vadd.f32 0.0, %v2041
      %v2043 = vpop.f32.mrb[0].mxu0
      %v2044 = vpop.f32.mrb[0].mxu0
      %v2045 = vadd.f32 0.0, %v2044
      %v2046 = vpop.f32.mrb[0].mxu0
      %2047 = vdwg.mxu0
      %v2048 = vpack.c.bf16 %v2045, %v2042
      %v2050 = vsel %vm746, %v2048, 0
      %2052 = vmatprep.subr.bf16.mxu0 0
      %2053 = vmatpush1.bf16.msra.mxu0 %v1006
      %2054 = vmatprep.subr.bf16.mxu0 0
      %2055 = vmatpush1.bf16.msra.mxu0 0
      %2056 = vmatprep.subr.bf16.mxu0 0
      %2057 = vmatpush1.bf16.msra.mxu0 0
      %2058 = vmatprep.subr.bf16.mxu0 0
      %2059 = vmatpush1.bf16.msra.mxu0 0
      %2060 = vmatprep.subr.bf16.mxu0 0
      %2061 = vmatpush1.bf16.msra.mxu0 0
      %2062 = vmatprep.subr.bf16.mxu0 0
      %2063 = vmatpush1.bf16.msra.mxu0 0
      %2064 = vmatprep.subr.bf16.mxu0 0
      %2065 = vmatpush1.bf16.msra.mxu0 0
      %2066 = vmatprep.subr.bf16.mxu0 0
      %2067 = vmatpush1.bf16.msra.mxu0 0
      %2068 = vmatprep.subr.bf16.mxu0 0
      %2069 = vmatpush1.bf16.msra.mxu0 0
      %2070 = vmatprep.subr.bf16.mxu0 0
      %2071 = vmatpush1.bf16.msra.mxu0 0
      %2072 = vmatprep.subr.bf16.mxu0 0
      %2073 = vmatpush1.bf16.msra.mxu0 0
      %2074 = vmatprep.subr.bf16.mxu0 0
      %2075 = vmatpush1.bf16.msra.mxu0 0
      %2076 = vmatprep.subr.bf16.mxu0 0
      %2077 = vmatpush1.bf16.msra.mxu0 0
      %2078 = vmatprep.subr.bf16.mxu0 0
      %2079 = vmatpush1.bf16.msra.mxu0 0
      %2080 = vmatprep.subr.bf16.mxu0 0
      %2081 = vmatpush1.bf16.msra.mxu0 0
      %2082 = vmatprep.subr.bf16.mxu0 0
      %2083 = vmatpush1.bf16.msra.mxu0 0
      %2084 = vmatprep.mubr.bf16.mxu0 0
      %2085 = vmatmul.mubr.bf16.gmra.mrb[0].mxu0 %v2050
      %v2086 = vpop.f32.mrb[0].mxu0
      %v2087 = vadd.f32 0.0, %v2086
      %v2088 = vpop.f32.mrb[0].mxu0
      %v2089 = vpop.f32.mrb[0].mxu0
      %v2090 = vadd.f32 0.0, %v2089
      %v2091 = vpop.f32.mrb[0].mxu0
      %2092 = vdwg.mxu0
      %v2094 = vsel %vm746, %v1920, 0
      %2096 = vmatprep.subr.bf16.mxu0 0
      %2097 = vmatpush1.bf16.msra.mxu0 %v1053
      %2098 = vmatprep.subr.bf16.mxu0 0
      %2099 = vmatpush1.bf16.msra.mxu0 0
      %2100 = vmatprep.subr.bf16.mxu0 0
      %2101 = vmatpush1.bf16.msra.mxu0 0
      %2102 = vmatprep.subr.bf16.mxu0 0
      %2103 = vmatpush1.bf16.msra.mxu0 0
      %2104 = vmatprep.subr.bf16.mxu0 0
      %2105 = vmatpush1.bf16.msra.mxu0 0
      %2106 = vmatprep.subr.bf16.mxu0 0
      %2107 = vmatpush1.bf16.msra.mxu0 0
      %2108 = vmatprep.subr.bf16.mxu0 0
      %2109 = vmatpush1.bf16.msra.mxu0 0
      %2110 = vmatprep.subr.bf16.mxu0 0
      %2111 = vmatpush1.bf16.msra.mxu0 0
      %2112 = vmatprep.subr.bf16.mxu0 0
      %2113 = vmatpush1.bf16.msra.mxu0 0
      %2114 = vmatprep.subr.bf16.mxu0 0
      %2115 = vmatpush1.bf16.msra.mxu0 0
      %2116 = vmatprep.subr.bf16.mxu0 0
      %2117 = vmatpush1.bf16.msra.mxu0 0
      %2118 = vmatprep.subr.bf16.mxu0 0
      %2119 = vmatpush1.bf16.msra.mxu0 0
      %2120 = vmatprep.subr.bf16.mxu0 0
      %2121 = vmatpush1.bf16.msra.mxu0 0
      %2122 = vmatprep.subr.bf16.mxu0 0
      %2123 = vmatpush1.bf16.msra.mxu0 0
      %2124 = vmatprep.subr.bf16.mxu0 0
      %2125 = vmatpush1.bf16.msra.mxu0 0
      %2126 = vmatprep.subr.bf16.mxu0 0
      %2127 = vmatpush1.bf16.msra.mxu0 0
      %2128 = vmatprep.mubr.bf16.mxu0 0
      %2129 = vmatmul.mubr.bf16.gmra.mrb[0].mxu0 %v2094
      %v2130 = vpop.f32.mrb[0].mxu0
      %v2131 = vadd.f32 %v2087, %v2130
      %v2132 = vpop.f32.mrb[0].mxu0
      %v2133 = vpop.f32.mrb[0].mxu0
      %v2134 = vadd.f32 %v2090, %v2133
      %v2135 = vpop.f32.mrb[0].mxu0
      %2136 = vdwg.mxu0
      %v2137 = vadd.f32 %v496, %v1090
      %v2138 = vadd.f32 %v497, %v1093
      %v2139 = vadd.f32 %v498, %v1437
      %v2140 = vadd.f32 %v499, %v1440
      %v2141 = vadd.f32 %v500, %v1784
      %v2142 = vadd.f32 %v501, %v1787
      %v2143 = vadd.f32 %v502, %v2131
      %v2144 = vadd.f32 %v503, %v2134
      %v2145 = vld [vmem:[%s6] sm:$0x1]
      %v2147 = vlaneseq
      %v2148 = vshrl.u32 %v2147, 7
      %v2149 = vsub.s32 0, %v2148
      %v2150 = vrot.slane %v2145, %v2149
      %v2152 = vadd.f32 %v2137, %v2150
      %v2153 = vadd.f32 %v2138, %v2150
      %v2154 = vadd.f32 %v2139, %v2150
      %v2155 = vadd.f32 %v2140, %v2150
      %v2156 = vadd.f32 %v2141, %v2150
      %v2157 = vadd.f32 %v2142, %v2150
      %v2158 = vadd.f32 %v2143, %v2150
      %v2159 = vadd.f32 %v2144, %v2150
      %v2160 = vld [vmem:[%s9] sm:$0x1]
      %v2161 = vld [vmem:[%s10] sm:$0x1]
      %v2162 = vsel %vm506, %v2152, 0.0
      %2163 = vadd.xlane.f32.xlu0 %v2162
      %v2164 = vpop.xlane.xlu0 %2163
      %v2165 = vsel %vm506, %v2153, 0.0
      %2166 = vadd.xlane.f32.xlu0 %v2165
      %v2167 = vpop.xlane.xlu0 %2166
      %v2168 = vsel %vm506, %v2154, 0.0
      %2169 = vadd.xlane.f32.xlu0 %v2168
      %v2170 = vpop.xlane.xlu0 %2169
      %v2171 = vsel %vm506, %v2155, 0.0
      %2172 = vadd.xlane.f32.xlu0 %v2171
      %v2173 = vpop.xlane.xlu0 %2172
      %v2174 = vsel %vm506, %v2156, 0.0
      %2175 = vadd.xlane.f32.xlu0 %v2174
      %v2176 = vpop.xlane.xlu0 %2175
      %v2177 = vsel %vm506, %v2157, 0.0
      %2178 = vadd.xlane.f32.xlu0 %v2177
      %v2179 = vpop.xlane.xlu0 %2178
      %v2180 = vsel %vm506, %v2158, 0.0
      %2181 = vadd.xlane.f32.xlu0 %v2180
      %v2182 = vpop.xlane.xlu0 %2181
      %v2183 = vsel %vm506, %v2159, 0.0
      %2184 = vadd.xlane.f32.xlu0 %v2183
      %v2185 = vpop.xlane.xlu0 %2184
      %v2186 = vmul.f32 %v2164, %v531
      %v2187 = vmul.f32 %v2167, %v531
      %v2188 = vmul.f32 %v2170, %v531
      %v2189 = vmul.f32 %v2173, %v531
      %v2190 = vmul.f32 %v2176, %v531
      %v2191 = vmul.f32 %v2179, %v531
      %v2192 = vmul.f32 %v2182, %v531
      %v2193 = vmul.f32 %v2185, %v531
      %v2194 = vsub.f32 %v2152, %v2186
      %v2195 = vsub.f32 %v2153, %v2187
      %v2196 = vsub.f32 %v2154, %v2188
      %v2197 = vsub.f32 %v2155, %v2189
      %v2198 = vsub.f32 %v2156, %v2190
      %v2199 = vsub.f32 %v2157, %v2191
      %v2200 = vsub.f32 %v2158, %v2192
      %v2201 = vsub.f32 %v2159, %v2193
      %v2202 = vmul.f32 %v2194, %v2194
      %v2203 = vmul.f32 %v2195, %v2195
      %v2204 = vmul.f32 %v2196, %v2196
      %v2205 = vmul.f32 %v2197, %v2197
      %v2206 = vmul.f32 %v2198, %v2198
      %v2207 = vmul.f32 %v2199, %v2199
      %v2208 = vmul.f32 %v2200, %v2200
      %v2209 = vmul.f32 %v2201, %v2201
      %v2210 = vsel %vm506, %v2202, 0.0
      %2211 = vadd.xlane.f32.xlu0 %v2210
      %v2212 = vpop.xlane.xlu0 %2211
      %v2213 = vsel %vm506, %v2203, 0.0
      %2214 = vadd.xlane.f32.xlu0 %v2213
      %v2215 = vpop.xlane.xlu0 %2214
      %v2216 = vsel %vm506, %v2204, 0.0
      %2217 = vadd.xlane.f32.xlu0 %v2216
      %v2218 = vpop.xlane.xlu0 %2217
      %v2219 = vsel %vm506, %v2205, 0.0
      %2220 = vadd.xlane.f32.xlu0 %v2219
      %v2221 = vpop.xlane.xlu0 %2220
      %v2222 = vsel %vm506, %v2206, 0.0
      %2223 = vadd.xlane.f32.xlu0 %v2222
      %v2224 = vpop.xlane.xlu0 %2223
      %v2225 = vsel %vm506, %v2207, 0.0
      %2226 = vadd.xlane.f32.xlu0 %v2225
      %v2227 = vpop.xlane.xlu0 %2226
      %v2228 = vsel %vm506, %v2208, 0.0
      %2229 = vadd.xlane.f32.xlu0 %v2228
      %v2230 = vpop.xlane.xlu0 %2229
      %v2231 = vsel %vm506, %v2209, 0.0
      %2232 = vadd.xlane.f32.xlu0 %v2231
      %v2233 = vpop.xlane.xlu0 %2232
      %v2234 = vmul.f32 %v2212, %v531
      %v2235 = vmul.f32 %v2215, %v531
      %v2236 = vmul.f32 %v2218, %v531
      %v2237 = vmul.f32 %v2221, %v531
      %v2238 = vmul.f32 %v2224, %v531
      %v2239 = vmul.f32 %v2227, %v531
      %v2240 = vmul.f32 %v2230, %v531
      %v2241 = vmul.f32 %v2233, %v531
      %v2242 = vadd.f32 %v2234, 1e-05
      %v2243 = vadd.f32 %v2235, 1e-05
      %v2244 = vadd.f32 %v2236, 1e-05
      %v2245 = vadd.f32 %v2237, 1e-05
      %v2246 = vadd.f32 %v2238, 1e-05
      %v2247 = vadd.f32 %v2239, 1e-05
      %v2248 = vadd.f32 %v2240, 1e-05
      %v2249 = vadd.f32 %v2241, 1e-05
      %v2250 = vrsqrt.pop %v2242
      %v2251 = vrsqrt.pop %v2243
      %v2252 = vrsqrt.pop %v2244
      %v2253 = vrsqrt.pop %v2245
      %v2254 = vrsqrt.pop %v2246
      %v2255 = vrsqrt.pop %v2247
      %v2256 = vrsqrt.pop %v2248
      %v2257 = vrsqrt.pop %v2249
      %v2258 = vmul.f32 %v2194, %v2250
      %v2259 = vmul.f32 %v2195, %v2251
      %v2260 = vmul.f32 %v2196, %v2252
      %v2261 = vmul.f32 %v2197, %v2253
      %v2262 = vmul.f32 %v2198, %v2254
      %v2263 = vmul.f32 %v2199, %v2255
      %v2264 = vmul.f32 %v2200, %v2256
      %v2265 = vmul.f32 %v2201, %v2257
      %v2267 = vlaneseq
      %v2268 = vshrl.u32 %v2267, 7
      %v2269 = vsub.s32 0, %v2268
      %v2270 = vrot.slane %v2160, %v2269
      %v2272 = vmul.f32 %v2258, %v2270
      %v2273 = vmul.f32 %v2259, %v2270
      %v2274 = vmul.f32 %v2260, %v2270
      %v2275 = vmul.f32 %v2261, %v2270
      %v2276 = vmul.f32 %v2262, %v2270
      %v2277 = vmul.f32 %v2263, %v2270
      %v2278 = vmul.f32 %v2264, %v2270
      %v2279 = vmul.f32 %v2265, %v2270
      %v2281 = vlaneseq
      %v2282 = vshrl.u32 %v2281, 7
      %v2283 = vsub.s32 0, %v2282
      %v2284 = vrot.slane %v2161, %v2283
      %v2286 = vadd.f32 %v2272, %v2284
      %v2287 = vadd.f32 %v2273, %v2284
      %v2288 = vadd.f32 %v2274, %v2284
      %v2289 = vadd.f32 %v2275, %v2284
      %v2290 = vadd.f32 %v2276, %v2284
      %v2291 = vadd.f32 %v2277, %v2284
      %v2292 = vadd.f32 %v2278, %v2284
      %v2293 = vadd.f32 %v2279, %v2284
      %v2294 = vpack.c.bf16 %v2287, %v2286
      %v2295 = vpack.c.bf16 %v2289, %v2288
      %v2296 = vpack.c.bf16 %v2291, %v2290
      %v2297 = vpack.c.bf16 %v2293, %v2292
      %v2298 = vld [vmem:[%s11] sm:$0xf]
      %v2299 = vld [vmem:[%s11 + $0x4] sm:$0xf]
      %v2300 = vld [vmem:[%s12] sm:$0x1]
      %v2302 = vlaneseq
      %v2303 = vshrl.u32 %v2302, 7
      %v2304 = vsub.s32 0, %v2303
      %v2305 = vrot.slane %v2300, %v2304
      %v2309 = vunpack.c.l.b16 %v2298
      %v2310 = vunpack.c.l.b16 %v2299
      %v2311 = vpack.c.b16 %v2310, %v2309
      %v2314 = vsel %vm506, %v2294, 0
      %v2317 = vsel %vm506, %v2295, 0
      %v2320 = vsel %vm506, %v2296, 0
      %v2323 = vsel %vm506, %v2297, 0
      %2325 = vmatprep.subr.bf16.mxu0 0
      %2326 = vmatpush1.bf16.msra.mxu0 %v2311
      %2327 = vmatprep.subr.bf16.mxu0 0
      %2328 = vmatpush1.bf16.msra.mxu0 0
      %2329 = vmatprep.subr.bf16.mxu0 0
      %2330 = vmatpush1.bf16.msra.mxu0 0
      %2331 = vmatprep.subr.bf16.mxu0 0
      %2332 = vmatpush1.bf16.msra.mxu0 0
      %2333 = vmatprep.subr.bf16.mxu0 0
      %2334 = vmatpush1.bf16.msra.mxu0 0
      %2335 = vmatprep.subr.bf16.mxu0 0
      %2336 = vmatpush1.bf16.msra.mxu0 0
      %2337 = vmatprep.subr.bf16.mxu0 0
      %2338 = vmatpush1.bf16.msra.mxu0 0
      %2339 = vmatprep.subr.bf16.mxu0 0
      %2340 = vmatpush1.bf16.msra.mxu0 0
      %2341 = vmatprep.subr.bf16.mxu0 0
      %2342 = vmatpush1.bf16.msra.mxu0 0
      %2343 = vmatprep.subr.bf16.mxu0 0
      %2344 = vmatpush1.bf16.msra.mxu0 0
      %2345 = vmatprep.subr.bf16.mxu0 0
      %2346 = vmatpush1.bf16.msra.mxu0 0
      %2347 = vmatprep.subr.bf16.mxu0 0
      %2348 = vmatpush1.bf16.msra.mxu0 0
      %2349 = vmatprep.subr.bf16.mxu0 0
      %2350 = vmatpush1.bf16.msra.mxu0 0
      %2351 = vmatprep.subr.bf16.mxu0 0
      %2352 = vmatpush1.bf16.msra.mxu0 0
      %2353 = vmatprep.subr.bf16.mxu0 0
      %2354 = vmatpush1.bf16.msra.mxu0 0
      %2355 = vmatprep.subr.bf16.mxu0 0
      %2356 = vmatpush1.bf16.msra.mxu0 0
      %2357 = vmatprep.mubr.bf16.mxu0 0
      %2358 = vmatmul.mubr.bf16.gmra.mrb[0].mxu0 %v2314
      %v2359 = vpop.f32.mrb[0].mxu0
      %v2360 = vadd.f32 %v2305, %v2359
      %v2361 = vpop.f32.mrb[0].mxu0
      %v2362 = vpop.f32.mrb[0].mxu0
      %v2363 = vadd.f32 %v2305, %v2362
      %v2364 = vpop.f32.mrb[0].mxu0
      %2365 = vmatprep.mubr.bf16.mxu0 0
      %2366 = vmatmul.mubr.bf16.gmra.mrb[0].mxu0 %v2317
      %v2367 = vpop.f32.mrb[0].mxu0
      %v2368 = vadd.f32 %v2305, %v2367
      %v2369 = vpop.f32.mrb[0].mxu0
      %v2370 = vpop.f32.mrb[0].mxu0
      %v2371 = vadd.f32 %v2305, %v2370
      %v2372 = vpop.f32.mrb[0].mxu0
      %2373 = vmatprep.mubr.bf16.mxu0 0
      %2374 = vmatmul.mubr.bf16.gmra.mrb[0].mxu0 %v2320
      %v2375 = vpop.f32.mrb[0].mxu0
      %v2376 = vadd.f32 %v2305, %v2375
      %v2377 = vpop.f32.mrb[0].mxu0
      %v2378 = vpop.f32.mrb[0].mxu0
      %v2379 = vadd.f32 %v2305, %v2378
      %v2380 = vpop.f32.mrb[0].mxu0
      %2381 = vmatprep.mubr.bf16.mxu0 0
      %2382 = vmatmul.mubr.bf16.gmra.mrb[0].mxu0 %v2323
      %v2383 = vpop.f32.mrb[0].mxu0
      %v2384 = vadd.f32 %v2305, %v2383
      %v2385 = vpop.f32.mrb[0].mxu0
      %v2386 = vpop.f32.mrb[0].mxu0
      %v2387 = vadd.f32 %v2305, %v2386
      %v2388 = vpop.f32.mrb[0].mxu0
      %2389 = vdwg.mxu0
      %v2390 = vmul.f32 %v2360, 0.5
      %v2391 = vmul.f32 %v2363, 0.5
      %v2392 = vmul.f32 %v2368, 0.5
      %v2393 = vmul.f32 %v2371, 0.5
      %v2394 = vmul.f32 %v2376, 0.5
      %v2395 = vmul.f32 %v2379, 0.5
      %v2396 = vmul.f32 %v2384, 0.5
      %v2397 = vmul.f32 %v2387, 0.5
      %v2398 = vmul.f32 %v2360, 0.70710677
      %v2399 = vmul.f32 %v2363, 0.70710677
      %v2400 = vmul.f32 %v2368, 0.70710677
      %v2401 = vmul.f32 %v2371, 0.70710677
      %v2402 = vmul.f32 %v2376, 0.70710677
      %v2403 = vmul.f32 %v2379, 0.70710677
      %v2404 = vmul.f32 %v2384, 0.70710677
      %v2405 = vmul.f32 %v2387, 0.70710677
      %v2406 = vmax.f32 %v2398, -4.0
      %v2407 = vmax.f32 %v2399, -4.0
      %v2408 = vmax.f32 %v2400, -4.0
      %v2409 = vmax.f32 %v2401, -4.0
      %v2410 = vmax.f32 %v2402, -4.0
      %v2411 = vmax.f32 %v2403, -4.0
      %v2412 = vmax.f32 %v2404, -4.0
      %v2413 = vmax.f32 %v2405, -4.0
      %v2414 = vmin.f32 %v2406, 4.0
      %v2415 = vmin.f32 %v2407, 4.0
      %v2416 = vmin.f32 %v2408, 4.0
      %v2417 = vmin.f32 %v2409, 4.0
      %v2418 = vmin.f32 %v2410, 4.0
      %v2419 = vmin.f32 %v2411, 4.0
      %v2420 = vmin.f32 %v2412, 4.0
      %v2421 = vmin.f32 %v2413, 4.0
      %v2422 = vmul.f32 %v2414, %v2414
      %v2423 = vmul.f32 %v2415, %v2415
      %v2424 = vmul.f32 %v2416, %v2416
      %v2425 = vmul.f32 %v2417, %v2417
      %v2426 = vmul.f32 %v2418, %v2418
      %v2427 = vmul.f32 %v2419, %v2419
      %v2428 = vmul.f32 %v2420, %v2420
      %v2429 = vmul.f32 %v2421, %v2421
      %v2430 = vmul.f32 %v2422, 0.00022905065
      %v2431 = vmul.f32 %v2423, 0.00022905065
      %v2432 = vmul.f32 %v2424, 0.00022905065
      %v2433 = vmul.f32 %v2425, 0.00022905065
      %v2434 = vmul.f32 %v2426, 0.00022905065
      %v2435 = vmul.f32 %v2427, 0.00022905065
      %v2436 = vmul.f32 %v2428, 0.00022905065
      %v2437 = vmul.f32 %v2429, 0.00022905065
      %v2438 = vadd.f32 %v2430, 0.003408291
      %v2439 = vadd.f32 %v2431, 0.003408291
      %v2440 = vadd.f32 %v2432, 0.003408291
      %v2441 = vadd.f32 %v2433, 0.003408291
      %v2442 = vadd.f32 %v2434, 0.003408291
      %v2443 = vadd.f32 %v2435, 0.003408291
      %v2444 = vadd.f32 %v2436, 0.003408291
      %v2445 = vadd.f32 %v2437, 0.003408291
      %v2446 = vmul.f32 %v2438, %v2422
      %v2447 = vmul.f32 %v2439, %v2423
      %v2448 = vmul.f32 %v2440, %v2424
      %v2449 = vmul.f32 %v2441, %v2425
      %v2450 = vmul.f32 %v2442, %v2426
      %v2451 = vmul.f32 %v2443, %v2427
      %v2452 = vmul.f32 %v2444, %v2428
      %v2453 = vmul.f32 %v2445, %v2429
      %v2454 = vadd.f32 %v2446, 0.050955694
      %v2455 = vadd.f32 %v2447, 0.050955694
      %v2456 = vadd.f32 %v2448, 0.050955694
      %v2457 = vadd.f32 %v2449, 0.050955694
      %v2458 = vadd.f32 %v2450, 0.050955694
      %v2459 = vadd.f32 %v2451, 0.050955694
      %v2460 = vadd.f32 %v2452, 0.050955694
      %v2461 = vadd.f32 %v2453, 0.050955694
      %v2462 = vmul.f32 %v2454, %v2422
      %v2463 = vmul.f32 %v2455, %v2423
      %v2464 = vmul.f32 %v2456, %v2424
      %v2465 = vmul.f32 %v2457, %v2425
      %v2466 = vmul.f32 %v2458, %v2426
      %v2467 = vmul.f32 %v2459, %v2427
      %v2468 = vmul.f32 %v2460, %v2428
      %v2469 = vmul.f32 %v2461, %v2429
      %v2470 = vadd.f32 %v2462, 0.18520832
      %v2471 = vadd.f32 %v2463, 0.18520832
      %v2472 = vadd.f32 %v2464, 0.18520832
      %v2473 = vadd.f32 %v2465, 0.18520832
      %v2474 = vadd.f32 %v2466, 0.18520832
      %v2475 = vadd.f32 %v2467, 0.18520832
      %v2476 = vadd.f32 %v2468, 0.18520832
      %v2477 = vadd.f32 %v2469, 0.18520832
      %v2478 = vmul.f32 %v2470, %v2422
      %v2479 = vmul.f32 %v2471, %v2423
      %v2480 = vmul.f32 %v2472, %v2424
      %v2481 = vmul.f32 %v2473, %v2425
      %v2482 = vmul.f32 %v2474, %v2426
      %v2483 = vmul.f32 %v2475, %v2427
      %v2484 = vmul.f32 %v2476, %v2428
      %v2485 = vmul.f32 %v2477, %v2429
      %v2486 = vadd.f32 %v2478, 1.1283791
      %v2487 = vadd.f32 %v2479, 1.1283791
      %v2488 = vadd.f32 %v2480, 1.1283791
      %v2489 = vadd.f32 %v2481, 1.1283791
      %v2490 = vadd.f32 %v2482, 1.1283791
      %v2491 = vadd.f32 %v2483, 1.1283791
      %v2492 = vadd.f32 %v2484, 1.1283791
      %v2493 = vadd.f32 %v2485, 1.1283791
      %v2494 = vmul.f32 %v2422, -1.1791603e-07
      %v2495 = vmul.f32 %v2423, -1.1791603e-07
      %v2496 = vmul.f32 %v2424, -1.1791603e-07
      %v2497 = vmul.f32 %v2425, -1.1791603e-07
      %v2498 = vmul.f32 %v2426, -1.1791603e-07
      %v2499 = vmul.f32 %v2427, -1.1791603e-07
      %v2500 = vmul.f32 %v2428, -1.1791603e-07
      %v2501 = vmul.f32 %v2429, -1.1791603e-07
      %v2502 = vadd.f32 %v2494, 2.3547966e-05
      %v2503 = vadd.f32 %v2495, 2.3547966e-05
      %v2504 = vadd.f32 %v2496, 2.3547966e-05
      %v2505 = vadd.f32 %v2497, 2.3547966e-05
      %v2506 = vadd.f32 %v2498, 2.3547966e-05
      %v2507 = vadd.f32 %v2499, 2.3547966e-05
      %v2508 = vadd.f32 %v2500, 2.3547966e-05
      %v2509 = vadd.f32 %v2501, 2.3547966e-05
      %v2510 = vmul.f32 %v2502, %v2422
      %v2511 = vmul.f32 %v2503, %v2423
      %v2512 = vmul.f32 %v2504, %v2424
      %v2513 = vmul.f32 %v2505, %v2425
      %v2514 = vmul.f32 %v2506, %v2426
      %v2515 = vmul.f32 %v2507, %v2427
      %v2516 = vmul.f32 %v2508, %v2428
      %v2517 = vmul.f32 %v2509, %v2429
      %v2518 = vadd.f32 %v2510, 0.0010179626
      %v2519 = vadd.f32 %v2511, 0.0010179626
      %v2520 = vadd.f32 %v2512, 0.0010179626
      %v2521 = vadd.f32 %v2513, 0.0010179626
      %v2522 = vadd.f32 %v2514, 0.0010179626
      %v2523 = vadd.f32 %v2515, 0.0010179626
      %v2524 = vadd.f32 %v2516, 0.0010179626
      %v2525 = vadd.f32 %v2517, 0.0010179626
      %v2526 = vmul.f32 %v2518, %v2422
      %v2527 = vmul.f32 %v2519, %v2423
      %v2528 = vmul.f32 %v2520, %v2424
      %v2529 = vmul.f32 %v2521, %v2425
      %v2530 = vmul.f32 %v2522, %v2426
      %v2531 = vmul.f32 %v2523, %v2427
      %v2532 = vmul.f32 %v2524, %v2428
      %v2533 = vmul.f32 %v2525, %v2429
      %v2534 = vadd.f32 %v2526, 0.01407047
      %v2535 = vadd.f32 %v2527, 0.01407047
      %v2536 = vadd.f32 %v2528, 0.01407047
      %v2537 = vadd.f32 %v2529, 0.01407047
      %v2538 = vadd.f32 %v2530, 0.01407047
      %v2539 = vadd.f32 %v2531, 0.01407047
      %v2540 = vadd.f32 %v2532, 0.01407047
      %v2541 = vadd.f32 %v2533, 0.01407047
      %v2542 = vmul.f32 %v2534, %v2422
      %v2543 = vmul.f32 %v2535, %v2423
      %v2544 = vmul.f32 %v2536, %v2424
      %v2545 = vmul.f32 %v2537, %v2425
      %v2546 = vmul.f32 %v2538, %v2426
      %v2547 = vmul.f32 %v2539, %v2427
      %v2548 = vmul.f32 %v2540, %v2428
      %v2549 = vmul.f32 %v2541, %v2429
      %v2550 = vadd.f32 %v2542, 0.11098505
      %v2551 = vadd.f32 %v2543, 0.11098505
      %v2552 = vadd.f32 %v2544, 0.11098505
      %v2553 = vadd.f32 %v2545, 0.11098505
      %v2554 = vadd.f32 %v2546, 0.11098505
      %v2555 = vadd.f32 %v2547, 0.11098505
      %v2556 = vadd.f32 %v2548, 0.11098505
      %v2557 = vadd.f32 %v2549, 0.11098505
      %v2558 = vmul.f32 %v2550, %v2422
      %v2559 = vmul.f32 %v2551, %v2423
      %v2560 = vmul.f32 %v2552, %v2424
      %v2561 = vmul.f32 %v2553, %v2425
      %v2562 = vmul.f32 %v2554, %v2426
      %v2563 = vmul.f32 %v2555, %v2427
      %v2564 = vmul.f32 %v2556, %v2428
      %v2565 = vmul.f32 %v2557, %v2429
      %v2566 = vadd.f32 %v2558, 0.49746925
      %v2567 = vadd.f32 %v2559, 0.49746925
      %v2568 = vadd.f32 %v2560, 0.49746925
      %v2569 = vadd.f32 %v2561, 0.49746925
      %v2570 = vadd.f32 %v2562, 0.49746925
      %v2571 = vadd.f32 %v2563, 0.49746925
      %v2572 = vadd.f32 %v2564, 0.49746925
      %v2573 = vadd.f32 %v2565, 0.49746925
      %v2574 = vmul.f32 %v2566, %v2422
      %v2575 = vmul.f32 %v2567, %v2423
      %v2576 = vmul.f32 %v2568, %v2424
      %v2577 = vmul.f32 %v2569, %v2425
      %v2578 = vmul.f32 %v2570, %v2426
      %v2579 = vmul.f32 %v2571, %v2427
      %v2580 = vmul.f32 %v2572, %v2428
      %v2581 = vmul.f32 %v2573, %v2429
      %v2582 = vadd.f32 %v2574, 1.0
      %v2583 = vadd.f32 %v2575, 1.0
      %v2584 = vadd.f32 %v2576, 1.0
      %v2585 = vadd.f32 %v2577, 1.0
      %v2586 = vadd.f32 %v2578, 1.0
      %v2587 = vadd.f32 %v2579, 1.0
      %v2588 = vadd.f32 %v2580, 1.0
      %v2589 = vadd.f32 %v2581, 1.0
      %v2590 = vmul.f32 %v2414, %v2486
      %v2591 = vmul.f32 %v2415, %v2487
      %v2592 = vmul.f32 %v2416, %v2488
      %v2593 = vmul.f32 %v2417, %v2489
      %v2594 = vmul.f32 %v2418, %v2490
      %v2595 = vmul.f32 %v2419, %v2491
      %v2596 = vmul.f32 %v2420, %v2492
      %v2597 = vmul.f32 %v2421, %v2493
      %v2598 = vrcp.pop %v2582
      %v2599 = vrcp.pop %v2583
      %v2600 = vrcp.pop %v2584
      %v2601 = vrcp.pop %v2585
      %v2602 = vrcp.pop %v2586
      %v2603 = vrcp.pop %v2587
      %v2604 = vrcp.pop %v2588
      %v2605 = vrcp.pop %v2589
      %v2606 = vmul.f32 %v2590, %v2598
      %v2607 = vmul.f32 %v2591, %v2599
      %v2608 = vmul.f32 %v2592, %v2600
      %v2609 = vmul.f32 %v2593, %v2601
      %v2610 = vmul.f32 %v2594, %v2602
      %v2611 = vmul.f32 %v2595, %v2603
      %v2612 = vmul.f32 %v2596, %v2604
      %v2613 = vmul.f32 %v2597, %v2605
      %v2614 = vadd.f32 %v2606, 1.0
      %v2615 = vadd.f32 %v2607, 1.0
      %v2616 = vadd.f32 %v2608, 1.0
      %v2617 = vadd.f32 %v2609, 1.0
      %v2618 = vadd.f32 %v2610, 1.0
      %v2619 = vadd.f32 %v2611, 1.0
      %v2620 = vadd.f32 %v2612, 1.0
      %v2621 = vadd.f32 %v2613, 1.0
      %v2622 = vmul.f32 %v2390, %v2614
      %v2623 = vmul.f32 %v2391, %v2615
      %v2624 = vmul.f32 %v2392, %v2616
      %v2625 = vmul.f32 %v2393, %v2617
      %v2626 = vmul.f32 %v2394, %v2618
      %v2627 = vmul.f32 %v2395, %v2619
      %v2628 = vmul.f32 %v2396, %v2620
      %v2629 = vmul.f32 %v2397, %v2621
      %v2630 = vpack.c.bf16 %v2623, %v2622
      %v2631 = vpack.c.bf16 %v2625, %v2624
      %v2632 = vpack.c.bf16 %v2627, %v2626
      %v2633 = vpack.c.bf16 %v2629, %v2628
      %v2634 = vld [vmem:[%s13] sm:$0xf]
      %v2635 = vld [vmem:[%s13 + $0x4] sm:$0xf]
      %v2636 = vld [vmem:[%s13 + $0x8] sm:$0xf]
      %v2637 = vld [vmem:[%s13 + $0xc] sm:$0xf]
      %v2638 = vld [vmem:[%s13 + $0x10] sm:$0xf]
      %v2639 = vld [vmem:[%s13 + $0x14] sm:$0xf]
      %v2640 = vld [vmem:[%s13 + $0x18] sm:$0xf]
      %v2641 = vld [vmem:[%s13 + $0x1c] sm:$0xf]
      %v2642 = vld [vmem:[%s14] sm:$0x1]
      %v2644 = vlaneseq
      %v2645 = vshrl.u32 %v2644, 7
      %v2646 = vsub.s32 0, %v2645
      %v2647 = vrot.slane %v2642, %v2646
      %v2657 = vunpack.c.l.b16 %v2634
      %v2658 = vunpack.c.l.b16 %v2635
      %v2659 = vunpack.c.l.b16 %v2636
      %v2660 = vunpack.c.l.b16 %v2637
      %v2661 = vunpack.c.l.b16 %v2638
      %v2662 = vunpack.c.l.b16 %v2639
      %v2663 = vunpack.c.l.b16 %v2640
      %v2664 = vunpack.c.l.b16 %v2641
      %v2665 = vpack.c.b16 %v2658, %v2657
      %v2666 = vpack.c.b16 %v2660, %v2659
      %v2667 = vpack.c.b16 %v2662, %v2661
      %v2668 = vpack.c.b16 %v2664, %v2663
      %vm2673 = vcmask 523264
      %v2675 = vsel %vm2673, %v2630, 0
      %v2678 = vsel %vm2673, %v2631, 0
      %v2681 = vsel %vm2673, %v2632, 0
      %v2684 = vsel %vm2673, %v2633, 0
      %2686 = vmatprep.subr.bf16.mxu0 0
      %2687 = vmatpush1.bf16.msra.mxu0 %v2665
      %2688 = vmatprep.subr.bf16.mxu0 0
      %2689 = vmatpush1.bf16.msra.mxu0 %v2666
      %2690 = vmatprep.subr.bf16.mxu0 0
      %2691 = vmatpush1.bf16.msra.mxu0 %v2667
      %2692 = vmatprep.subr.bf16.mxu0 0
      %2693 = vmatpush1.bf16.msra.mxu0 %v2668
      %2694 = vmatprep.subr.bf16.mxu0 0
      %2695 = vmatpush1.bf16.msra.mxu0 0
      %2696 = vmatprep.subr.bf16.mxu0 0
      %2697 = vmatpush1.bf16.msra.mxu0 0
      %2698 = vmatprep.subr.bf16.mxu0 0
      %2699 = vmatpush1.bf16.msra.mxu0 0
      %2700 = vmatprep.subr.bf16.mxu0 0
      %2701 = vmatpush1.bf16.msra.mxu0 0
      %2702 = vmatprep.subr.bf16.mxu0 0
      %2703 = vmatpush1.bf16.msra.mxu0 0
      %2704 = vmatprep.subr.bf16.mxu0 0
      %2705 = vmatpush1.bf16.msra.mxu0 0
      %2706 = vmatprep.subr.bf16.mxu0 0
      %2707 = vmatpush1.bf16.msra.mxu0 0
      %2708 = vmatprep.subr.bf16.mxu0 0
      %2709 = vmatpush1.bf16.msra.mxu0 0
      %2710 = vmatprep.subr.bf16.mxu0 0
      %2711 = vmatpush1.bf16.msra.mxu0 0
      %2712 = vmatprep.subr.bf16.mxu0 0
      %2713 = vmatpush1.bf16.msra.mxu0 0
      %2714 = vmatprep.subr.bf16.mxu0 0
      %2715 = vmatpush1.bf16.msra.mxu0 0
      %2716 = vmatprep.subr.bf16.mxu0 0
      %2717 = vmatpush1.bf16.msra.mxu0 0
      %2718 = vmatprep.mubr.bf16.mxu0 0
      %2719 = vmatmul.mubr.bf16.gmra.mrb[0].mxu0 %v2675
      %v2720 = vpop.f32.mrb[0].mxu0
      %v2721 = vadd.f32 %v2647, %v2720
      %v2722 = vpop.f32.mrb[0].mxu0
      %v2723 = vpop.f32.mrb[0].mxu0
      %v2724 = vadd.f32 %v2647, %v2723
      %v2725 = vpop.f32.mrb[0].mxu0
      %2726 = vmatprep.mubr.bf16.mxu0 0
      %2727 = vmatmul.mubr.bf16.gmra.mrb[0].mxu0 %v2678
      %v2728 = vpop.f32.mrb[0].mxu0
      %v2729 = vadd.f32 %v2647, %v2728
      %v2730 = vpop.f32.mrb[0].mxu0
      %v2731 = vpop.f32.mrb[0].mxu0
      %v2732 = vadd.f32 %v2647, %v2731
      %v2733 = vpop.f32.mrb[0].mxu0
      %2734 = vmatprep.mubr.bf16.mxu0 0
      %2735 = vmatmul.mubr.bf16.gmra.mrb[0].mxu0 %v2681
      %v2736 = vpop.f32.mrb[0].mxu0
      %v2737 = vadd.f32 %v2647, %v2736
      %v2738 = vpop.f32.mrb[0].mxu0
      %v2739 = vpop.f32.mrb[0].mxu0
      %v2740 = vadd.f32 %v2647, %v2739
      %v2741 = vpop.f32.mrb[0].mxu0
      %2742 = vmatprep.mubr.bf16.mxu0 0
      %2743 = vmatmul.mubr.bf16.gmra.mrb[0].mxu0 %v2684
      %v2744 = vpop.f32.mrb[0].mxu0
      %v2745 = vadd.f32 %v2647, %v2744
      %v2746 = vpop.f32.mrb[0].mxu0
      %v2747 = vpop.f32.mrb[0].mxu0
      %v2748 = vadd.f32 %v2647, %v2747
      %v2749 = vpop.f32.mrb[0].mxu0
      %2750 = vdwg.mxu0
      %v2751 = vadd.f32 %v2152, %v2721
      %v2752 = vadd.f32 %v2153, %v2724
      %v2753 = vadd.f32 %v2154, %v2729
      %v2754 = vadd.f32 %v2155, %v2732
      %v2755 = vadd.f32 %v2156, %v2737
      %v2756 = vadd.f32 %v2157, %v2740
      %v2757 = vadd.f32 %v2158, %v2745
      %v2758 = vadd.f32 %v2159, %v2748
      %2759 = vst.msk [vmem:[%s494] sm:$0xff] %vm506, %v2751
      %2760 = vst.msk [vmem:[%s494 + $0x8] sm:$0xff] %vm506, %v2752
      %2761 = vst.msk [vmem:[%s494 + $0x10] sm:$0xff] %vm506, %v2753
      %2762 = vst.msk [vmem:[%s494 + $0x18] sm:$0xff] %vm506, %v2754
      %2763 = vst.msk [vmem:[%s494 + $0x20] sm:$0xff] %vm506, %v2755
      %2764 = vst.msk [vmem:[%s494 + $0x28] sm:$0xff] %vm506, %v2756
      %2765 = vst.msk [vmem:[%s494 + $0x30] sm:$0xff] %vm506, %v2757
      %2766 = vst.msk [vmem:[%s494 + $0x38] sm:$0xff] %vm506, %v2758
      %p2767 = scmp.lt.s32.totalorder %s26, 1
      %s2768 = scalar_select %p2767, %s26, 1
      %s2769 = smul.addr %s2768, 8
      %s2770 = smul.addr %s2769, 8
      %s2771 = scalar_lea.vmem %s15, %s2770
      // Predicated region
      $region81: #{swin_forward.9} parent=79 // pred_check
        %p2772 = pneg %p364
      $region82: #{swin_forward.9} parent=79 // pred_check_branch
        %2774 = sbr.rel (%p2772) target = $region84
      $region83: #{swin_forward.9} parent=79 // pred_region
        _
      $region84: #{swin_forward.9} parent=79 // pred_fallthru
        _
    $region80: #{swin_forward.9} parent=5 // pred_fallthru
      _
    %p2775 = scmp.le.s32.totalorder 2, %s21
    // Predicated region
    $region85: #{swin_forward.9} parent=5 // pred_check
      %p2776 = pneg %p2775
    $region86: #{swin_forward.9} parent=5 // pred_check_branch
      %2778 = sbr.rel (%p2776) target = $region88
    $region87: #{swin_forward.9} parent=5 // pred_region
      %s2779 = ssub.s32 %s21, 2
      // Predicated region
      $region89: #{swin_forward.9} parent=87 // pred_check
        %p2780 = pneg %p370
      $region90: #{swin_forward.9} parent=87 // pred_check_branch
        %2782 = sbr.rel (%p2780) target = $region92
      $region91: #{swin_forward.9} parent=87 // pred_region
        %p2783 = scmp.lt.s32.totalorder %s27, 1
        %s2784 = scalar_select %p2783, %s27, 1
        %s2785 = smul.addr %s2784, 8
        %s2786 = smul.addr %s2785, 8
        %s2787 = scalar_lea.vmem %s15, %s2786
      $region92: #{swin_forward.9} parent=87 // pred_fallthru
        _
    $region88: #{swin_forward.9} parent=5 // pred_fallthru
      _
  $region6: #{swin_forward.9} parent=0 // loop_footer
    %s25 = sadd.s32 1, %s21
  $region7: #{swin_forward.9} parent=0 // loop_footer_branch
    %20 = sbr.rel target = $region3
  $region8: #{swin_forward.9} parent=0 // loop_exit
    _

// kernel: swin_forward.13
$region0: #{swin_forward.13}
  #allocation0 [shape = 'u32[]', space=smem, size = 0x4, offset = 0x4, fixed_abs, tag = 'smem constant byte address 0x4 - core index']
  #allocation1 [shape = 'u32[144,128]{1,0:T(1,128)}', space=vmem, size = 0x12000, scoped, tag = 'internal scratch']
  %s0 = inlined_call_operand.vmem [shape: f32[2,16,32], index: 0, kind: input, shape index: {}]
  %s1 = inlined_call_operand.vmem [shape: f32[1,32], index: 1, kind: input, shape index: {}]
  %s2 = inlined_call_operand.vmem [shape: f32[1,32], index: 2, kind: input, shape index: {}]
  %s3 = inlined_call_operand.vmem [shape: bf16[32,10], index: 3, kind: input, shape index: {}]
  %s4 = inlined_call_operand.vmem [shape: f32[1,10], index: 4, kind: input, shape index: {}]
  %s5 = inlined_call_operand.hbm [shape: f32[2,10], index: 5, kind: output, shape index: {}]
  %s6 = sld [smem:[#allocation0]]
  $region30: #{swin_forward.13} parent=0
    _
  %s8 = ssub.s32 1, %s6
  %s9 = scalar_select 0, %s8, %s6
  $region1: #{swin_forward.13} parent=0
    #allocation2 [shape = 'u8[1024]{0}', space=vmem, size = 0x400, scoped, tag = 'output window, operand 0, single buffered']
    #allocation3 [shape = 's32[1]{0}', space=sflag, size = 0x4, scoped, tag = 'scoped memory for swin_forward.13']
    %10 = vsyncpa [#allocation3], 0
    // Predicated region
    $region2: #{swin_forward.13} parent=1 // pred_check
      _
    $region3: #{swin_forward.13} parent=1 // pred_check_branch
      %12 = sbr.rel (0) target = $region5
    $region4: #{swin_forward.13} parent=1 // pred_region
      _
    $region5: #{swin_forward.13} parent=1 // pred_fallthru
      _
    // Predicated region
    $region6: #{swin_forward.13} parent=1 // pred_check
      _
    $region7: #{swin_forward.13} parent=1 // pred_check_branch
      %14 = sbr.rel (0) target = $region9
    $region8: #{swin_forward.13} parent=1 // pred_region
      _
    $region9: #{swin_forward.13} parent=1 // pred_fallthru
      _
    // Predicated region
    $region10: #{swin_forward.13} parent=1 // pred_check
      _
    $region11: #{swin_forward.13} parent=1 // pred_check_branch
      %16 = sbr.rel (0) target = $region13
    $region12: #{swin_forward.13} parent=1 // pred_region
      _
    $region13: #{swin_forward.13} parent=1 // pred_fallthru
      _
    // Predicated region
    $region14: #{swin_forward.13} parent=1 // pred_check
      _
    $region15: #{swin_forward.13} parent=1 // pred_check_branch
      %18 = sbr.rel (0) target = $region17
    $region16: #{swin_forward.13} parent=1 // pred_region
      _
    $region17: #{swin_forward.13} parent=1 // pred_fallthru
      _
    // Predicated region
    $region18: #{swin_forward.13} parent=1 // pred_check
      _
    $region19: #{swin_forward.13} parent=1 // pred_check_branch
      %20 = sbr.rel (0) target = $region21
    $region20: #{swin_forward.13} parent=1 // pred_region
      _
    $region21: #{swin_forward.13} parent=1 // pred_fallthru
      _
    %v22 = vld [vmem:[%s0] sm:$0xff]
    %v23 = vld [vmem:[%s0 + $0x8] sm:$0xff]
    %v24 = vld [vmem:[%s0 + $0x10] sm:$0xff]
    %v25 = vld [vmem:[%s0 + $0x18] sm:$0xff]
    %v26 = vld [vmem:[%s1] sm:$0x1]
    %v27 = vld [vmem:[%s2] sm:$0x1]
    %vm28 = vcmask 261120
    %v29 = vsel %vm28, %v22, 0.0
    %30 = vadd.xlane.f32.xlu0 %v29
    %v31 = vpop.xlane.xlu0 %30
    %v32 = vsel %vm28, %v23, 0.0
    %33 = vadd.xlane.f32.xlu0 %v32
    %v34 = vpop.xlane.xlu0 %33
    %v35 = vsel %vm28, %v24, 0.0
    %36 = vadd.xlane.f32.xlu0 %v35
    %v37 = vpop.xlane.xlu0 %36
    %v38 = vsel %vm28, %v25, 0.0
    %39 = vadd.xlane.f32.xlu0 %v38
    %v40 = vpop.xlane.xlu0 %39
    %v41 = vrcp.pop 32.0
    %v42 = vmul.f32 %v31, %v41
    %v43 = vmul.f32 %v34, %v41
    %v44 = vmul.f32 %v37, %v41
    %v45 = vmul.f32 %v40, %v41
    %v46 = vsub.f32 %v22, %v42
    %v47 = vsub.f32 %v23, %v43
    %v48 = vsub.f32 %v24, %v44
    %v49 = vsub.f32 %v25, %v45
    %v50 = vmul.f32 %v46, %v46
    %v51 = vmul.f32 %v47, %v47
    %v52 = vmul.f32 %v48, %v48
    %v53 = vmul.f32 %v49, %v49
    %v54 = vsel %vm28, %v50, 0.0
    %55 = vadd.xlane.f32.xlu0 %v54
    %v56 = vpop.xlane.xlu0 %55
    %v57 = vsel %vm28, %v51, 0.0
    %58 = vadd.xlane.f32.xlu0 %v57
    %v59 = vpop.xlane.xlu0 %58
    %v60 = vsel %vm28, %v52, 0.0
    %61 = vadd.xlane.f32.xlu0 %v60
    %v62 = vpop.xlane.xlu0 %61
    %v63 = vsel %vm28, %v53, 0.0
    %64 = vadd.xlane.f32.xlu0 %v63
    %v65 = vpop.xlane.xlu0 %64
    %v66 = vmul.f32 %v56, %v41
    %v67 = vmul.f32 %v59, %v41
    %v68 = vmul.f32 %v62, %v41
    %v69 = vmul.f32 %v65, %v41
    %v70 = vadd.f32 %v66, 1e-05
    %v71 = vadd.f32 %v67, 1e-05
    %v72 = vadd.f32 %v68, 1e-05
    %v73 = vadd.f32 %v69, 1e-05
    %v74 = vrsqrt.pop %v70
    %v75 = vrsqrt.pop %v71
    %v76 = vrsqrt.pop %v72
    %v77 = vrsqrt.pop %v73
    %v78 = vmul.f32 %v46, %v74
    %v79 = vmul.f32 %v47, %v75
    %v80 = vmul.f32 %v48, %v76
    %v81 = vmul.f32 %v49, %v77
    %v83 = vlaneseq
    %v84 = vshrl.u32 %v83, 7
    %v85 = vsub.s32 0, %v84
    %v86 = vrot.slane %v26, %v85
    %v88 = vmul.f32 %v78, %v86
    %v89 = vmul.f32 %v79, %v86
    %v90 = vmul.f32 %v80, %v86
    %v91 = vmul.f32 %v81, %v86
    %v93 = vlaneseq
    %v94 = vshrl.u32 %v93, 7
    %v95 = vsub.s32 0, %v94
    %v96 = vrot.slane %v27, %v95
    %v98 = vadd.f32 %v88, %v96
    %v99 = vadd.f32 %v89, %v96
    %v100 = vadd.f32 %v90, %v96
    %v101 = vadd.f32 %v91, %v96
    %v102 = vsel %vm28, %v98, 0.0
    %v103 = vsel %vm28, %v99, 0.0
    %v104 = vadd.f32 %v102, %v103
    %v105 = vrot.slane %v104, 4
    %v106 = vadd.f32 %v104, %v105
    %v107 = vrot.slane %v106, 2
    %v108 = vadd.f32 %v106, %v107
    %v109 = vrot.slane %v108, 1
    %v110 = vadd.f32 %v108, %v109
    %v111 = vsel %vm28, %v100, 0.0
    %v112 = vsel %vm28, %v101, 0.0
    %v113 = vadd.f32 %v111, %v112
    %v114 = vrot.slane %v113, 4
    %v115 = vadd.f32 %v113, %v114
    %v116 = vrot.slane %v115, 2
    %v117 = vadd.f32 %v115, %v116
    %v118 = vrot.slane %v117, 1
    %v119 = vadd.f32 %v117, %v118
    %v120 = vrcp.pop 16.0
    %v121 = vmul.f32 %v110, %v120
    %v122 = vmul.f32 %v119, %v120
    %v123 = vpack.c.bf16 %v121, %v121
    %v124 = vpack.c.bf16 %v122, %v122
    %v125 = vld [vmem:[%s3] sm:$0xf]
    %v126 = vld [vmem:[%s3 + $0x4] sm:$0xf]
    %v127 = vld [vmem:[%s3 + $0x8] sm:$0xf]
    %v128 = vld [vmem:[%s3 + $0xc] sm:$0xf]
    %v129 = vld [vmem:[%s4] sm:$0x1]
    %v131 = vlaneseq
    %v132 = vshrl.u32 %v131, 7
    %v133 = vsub.s32 0, %v132
    %v134 = vrot.slane %v129, %v133
    %v138 = vunpack.c.l.b16 %v123
    %v139 = vunpack.c.l.b16 %v124
    %vm140 = vcmask 1041409
    %v141 = vsel %vm140, %v139, %v138
    %v142 = vpack.c.b16 %v141, %v141
    %v147 = vunpack.c.l.b16 %v125
    %v148 = vunpack.c.l.b16 %v126
    %v149 = vunpack.c.l.b16 %v127
    %v150 = vunpack.c.l.b16 %v128
    %v151 = vpack.c.b16 %v148, %v147
    %v152 = vpack.c.b16 %v150, %v149
    %v156 = vsel %vm28, %v142, 0
    %158 = vmatprep.subr.bf16.mxu0 0
    %159 = vmatpush1.bf16.msra.mxu0 %v151
    %160 = vmatprep.subr.bf16.mxu0 0
    %161 = vmatpush1.bf16.msra.mxu0 %v152
    %162 = vmatprep.subr.bf16.mxu0 0
    %163 = vmatpush1.bf16.msra.mxu0 0
    %164 = vmatprep.subr.bf16.mxu0 0
    %165 = vmatpush1.bf16.msra.mxu0 0
    %166 = vmatprep.subr.bf16.mxu0 0
    %167 = vmatpush1.bf16.msra.mxu0 0
    %168 = vmatprep.subr.bf16.mxu0 0
    %169 = vmatpush1.bf16.msra.mxu0 0
    %170 = vmatprep.subr.bf16.mxu0 0
    %171 = vmatpush1.bf16.msra.mxu0 0
    %172 = vmatprep.subr.bf16.mxu0 0
    %173 = vmatpush1.bf16.msra.mxu0 0
    %174 = vmatprep.subr.bf16.mxu0 0
    %175 = vmatpush1.bf16.msra.mxu0 0
    %176 = vmatprep.subr.bf16.mxu0 0
    %177 = vmatpush1.bf16.msra.mxu0 0
    %178 = vmatprep.subr.bf16.mxu0 0
    %179 = vmatpush1.bf16.msra.mxu0 0
    %180 = vmatprep.subr.bf16.mxu0 0
    %181 = vmatpush1.bf16.msra.mxu0 0
    %182 = vmatprep.subr.bf16.mxu0 0
    %183 = vmatpush1.bf16.msra.mxu0 0
    %184 = vmatprep.subr.bf16.mxu0 0
    %185 = vmatpush1.bf16.msra.mxu0 0
    %186 = vmatprep.subr.bf16.mxu0 0
    %187 = vmatpush1.bf16.msra.mxu0 0
    %188 = vmatprep.subr.bf16.mxu0 0
    %189 = vmatpush1.bf16.msra.mxu0 0
    %190 = vmatprep.mubr.bf16.mxu0 0
    %191 = vmatmul.mubr.bf16.gmra.mrb[0].mxu0 %v156
    %v192 = vpop.f32.mrb[0].mxu0
    %v193 = vadd.f32 %v134, %v192
    %v194 = vpop.f32.mrb[0].mxu0
    %v195 = vpop.f32.mrb[0].mxu0
    %v196 = vpop.f32.mrb[0].mxu0
    %197 = vdwg.mxu0
    %vm198 = vcmask 74752
    %199 = vst.msk [vmem:[#allocation2] sm:$0x3] %vm198, %v193
    // Predicated region
    $region22: #{swin_forward.13} parent=1 // pred_check
      _
    $region23: #{swin_forward.13} parent=1 // pred_check_branch
      %201 = sbr.rel (0) target = $region25
    $region24: #{swin_forward.13} parent=1 // pred_region
      %s203 = ssub.s32 32, 32
      %204 = vsyncadd [#allocation3], %s203
      %s206 = sshll.u32 [#allocation2], 4
      %s207 = int_to_ptr.vmem [resolvable:$true] %s206
      %209 = dma.vmem_to_hbm [thread:$0]  %s207, 32, %s5, [#allocation3]
    $region25: #{swin_forward.13} parent=1 // pred_fallthru
      _
    // Predicated region
    $region26: #{swin_forward.13} parent=1 // pred_check
      _
    $region27: #{swin_forward.13} parent=1 // pred_check_branch
      %211 = sbr.rel (0) target = $region29
    $region28: #{swin_forward.13} parent=1 // pred_region
      %212 = dma.done [#allocation3], 32
    $region29: #{swin_forward.13} parent=1 // pred_fallthru
      _
    %213 = vsyncpa [#allocation3], 1

// kernel: swin_forward.11
$region0: #{swin_forward.11}
  #allocation0 [shape = 'u32[]', space=smem, size = 0x4, offset = 0x4, fixed_abs, tag = 'smem constant byte address 0x4 - core index']
  #allocation1 [shape = 'u32[144,128]{1,0:T(1,128)}', space=vmem, size = 0x12000, scoped, tag = 'internal scratch']
  %s0 = inlined_call_operand.vmem [shape: f32[2,16,32], index: 0, kind: input, shape index: {}]
  %s1 = inlined_call_operand.vmem [shape: f32[1,32], index: 1, kind: input, shape index: {}]
  %s2 = inlined_call_operand.vmem [shape: f32[1,32], index: 2, kind: input, shape index: {}]
  %s3 = inlined_call_operand.vmem [shape: bf16[32,96], index: 3, kind: input, shape index: {}]
  %s4 = inlined_call_operand.vmem [shape: f32[1,96], index: 4, kind: input, shape index: {}]
  %s5 = inlined_call_operand.vmem [shape: bf16[32,32], index: 5, kind: input, shape index: {}]
  %s6 = inlined_call_operand.vmem [shape: f32[1,32], index: 6, kind: input, shape index: {}]
  %s7 = inlined_call_operand.vmem [shape: f32[4,16,16], index: 7, kind: input, shape index: {}]
  %s8 = inlined_call_operand.vmem [shape: f32[1,16,16], index: 8, kind: input, shape index: {}]
  %s9 = inlined_call_operand.vmem [shape: f32[1,32], index: 9, kind: input, shape index: {}]
  %s10 = inlined_call_operand.vmem [shape: f32[1,32], index: 10, kind: input, shape index: {}]
  %s11 = inlined_call_operand.vmem [shape: bf16[32,128], index: 11, kind: input, shape index: {}]
  %s12 = inlined_call_operand.vmem [shape: f32[1,128], index: 12, kind: input, shape index: {}]
  %s13 = inlined_call_operand.vmem [shape: bf16[128,32], index: 13, kind: input, shape index: {}]
  %s14 = inlined_call_operand.vmem [shape: f32[1,32], index: 14, kind: input, shape index: {}]
  %s15 = inlined_call_operand.vmem [shape: f32[2,16,32], index: 15, kind: output, shape index: {}]
  %s16 = sld [smem:[#allocation0]]
  $region93: #{swin_forward.11} parent=0
    _
  %s18 = ssub.s32 1, %s16
  %s19 = scalar_select 0, %s18, %s16
  loop: start=0, step=1, limit=4
  $region2: #{swin_forward.11} parent=0 // loop_pre_header
    _
  $region3: #{swin_forward.11} parent=0 // loop_header
    %s21 = sphi 0, %s25
    %p22 = scmp.ge.s32.totalorder %s21, 4
    %s31 = sphi 0, %s33
    %s34 = sphi 0, %s31
    %s35 = sphi 0, %s34
    %s51 = sphi 0, %s35
    %s55 = sphi 0, %s55
    %s57 = sphi 0, %s55
    %s58 = sphi 0, %s57
    %s72 = sphi 0, %s58
    %s76 = sphi 0, %s76
    %s78 = sphi 0, %s76
    %s79 = sphi 0, %s78
    %s93 = sphi 0, %s79
    %s97 = sphi 0, %s97
    %s99 = sphi 0, %s97
    %s100 = sphi 0, %s99
    %s114 = sphi 0, %s100
    %s118 = sphi 0, %s118
    %s120 = sphi 0, %s118
    %s121 = sphi 0, %s120
    %s135 = sphi 0, %s121
    %s139 = sphi 0, %s139
    %s141 = sphi 0, %s139
    %s142 = sphi 0, %s141
    %s156 = sphi 0, %s142
    %s160 = sphi 0, %s160
    %s162 = sphi 0, %s160
    %s163 = sphi 0, %s162
    %s177 = sphi 0, %s163
    %s181 = sphi 0, %s181
    %s183 = sphi 0, %s181
    %s184 = sphi 0, %s183
    %s198 = sphi 0, %s184
    %s202 = sphi 0, %s202
    %s204 = sphi 0, %s202
    %s205 = sphi 0, %s204
    %s219 = sphi 0, %s205
    %s223 = sphi 0, %s223
    %s225 = sphi 0, %s223
    %s226 = sphi 0, %s225
    %s240 = sphi 0, %s226
    %s244 = sphi 0, %s244
    %s246 = sphi 0, %s244
    %s247 = sphi 0, %s246
    %s261 = sphi 0, %s247
    %s265 = sphi 0, %s265
    %s267 = sphi 0, %s265
    %s268 = sphi 0, %s267
    %s282 = sphi 0, %s268
    %s286 = sphi 0, %s286
    %s288 = sphi 0, %s286
    %s289 = sphi 0, %s288
    %s303 = sphi 0, %s289
    %s307 = sphi 0, %s307
    %s309 = sphi 0, %s307
    %s310 = sphi 0, %s309
    %s324 = sphi 0, %s310
    %s328 = sphi 0, %s328
    %s330 = sphi 0, %s328
    %s331 = sphi 0, %s330
    %s345 = sphi 0, %s331
    %s351 = sphi 0, %s353
    %s354 = sphi 0, %s351
    %s355 = sphi 0, %s354
    %s371 = sphi 0, %s355
  $region4: #{swin_forward.11} parent=0 // loop_header_branch
    %24 = sbr.rel (%p22) target = $region8
  $region5: #{swin_forward.11} parent=0 // loop_body
    %s26 = ssub.s32 %s21, 1
    %s27 = ssub.s32 %s21, 2
    %s28 = sadd.s32 %s21, 1
    %s29 = ssub.s32 %s21, %s28
    %p30 = scmp.eq.s32.totalorder %s29, 0
    %s32 = sadd.s32 %s31, 1
    %s33 = scalar_select %p30, %s31, %s32
    %p36 = pneg %p30
    %p37 = scmp.eq.s32.totalorder %s21, 1
    %p38 = por %p36, %p37
    %p39 = scmp.ne.s32.totalorder %s31, %s34
    %p40 = scmp.eq.s32.totalorder %s21, 0
    %p41 = por %p39, %p40
    %p42 = scmp.ne.s32.totalorder %s31, %s34
    %p43 = scmp.eq.s32.totalorder %s26, 1
    %p44 = por %p42, %p43
    %p45 = scmp.ne.s32.totalorder %s34, %s35
    %p46 = scmp.eq.s32.totalorder %s26, 0
    %p47 = por %p45, %p46
    %p48 = scmp.ne.s32.totalorder %s34, %s35
    %p49 = scmp.eq.s32.totalorder %s27, 1
    %p50 = por %p48, %p49
    %p52 = scmp.ne.s32.totalorder %s35, %s51
    %p53 = scmp.eq.s32.totalorder %s27, 0
    %p54 = por %p52, %p53
    %s56 = sadd.s32 %s55, 1
    %p59 = scmp.eq.s32.totalorder %s21, 1
    %p60 = scmp.ne.s32.totalorder %s55, %s57
    %p61 = scmp.eq.s32.totalorder %s21, 0
    %p62 = por %p60, %p61
    %p63 = scmp.ne.s32.totalorder %s55, %s57
    %p64 = scmp.eq.s32.totalorder %s26, 1
    %p65 = por %p63, %p64
    %p66 = scmp.ne.s32.totalorder %s57, %s58
    %p67 = scmp.eq.s32.totalorder %s26, 0
    %p68 = por %p66, %p67
    %p69 = scmp.ne.s32.totalorder %s57, %s58
    %p70 = scmp.eq.s32.totalorder %s27, 1
    %p71 = por %p69, %p70
    %p73 = scmp.ne.s32.totalorder %s58, %s72
    %p74 = scmp.eq.s32.totalorder %s27, 0
    %p75 = por %p73, %p74
    %s77 = sadd.s32 %s76, 1
    %p80 = scmp.eq.s32.totalorder %s21, 1
    %p81 = scmp.ne.s32.totalorder %s76, %s78
    %p82 = scmp.eq.s32.totalorder %s21, 0
    %p83 = por %p81, %p82
    %p84 = scmp.ne.s32.totalorder %s76, %s78
    %p85 = scmp.eq.s32.totalorder %s26, 1
    %p86 = por %p84, %p85
    %p87 = scmp.ne.s32.totalorder %s78, %s79
    %p88 = scmp.eq.s32.totalorder %s26, 0
    %p89 = por %p87, %p88
    %p90 = scmp.ne.s32.totalorder %s78, %s79
    %p91 = scmp.eq.s32.totalorder %s27, 1
    %p92 = por %p90, %p91
    %p94 = scmp.ne.s32.totalorder %s79, %s93
    %p95 = scmp.eq.s32.totalorder %s27, 0
    %p96 = por %p94, %p95
    %s98 = sadd.s32 %s97, 1
    %p101 = scmp.eq.s32.totalorder %s21, 1
    %p102 = scmp.ne.s32.totalorder %s97, %s99
    %p103 = scmp.eq.s32.totalorder %s21, 0
    %p104 = por %p102, %p103
    %p105 = scmp.ne.s32.totalorder %s97, %s99
    %p106 = scmp.eq.s32.totalorder %s26, 1
    %p107 = por %p105, %p106
    %p108 = scmp.ne.s32.totalorder %s99, %s100
    %p109 = scmp.eq.s32.totalorder %s26, 0
    %p110 = por %p108, %p109
    %p111 = scmp.ne.s32.totalorder %s99, %s100
    %p112 = scmp.eq.s32.totalorder %s27, 1
    %p113 = por %p111, %p112
    %p115 = scmp.ne.s32.totalorder %s100, %s114
    %p116 = scmp.eq.s32.totalorder %s27, 0
    %p117 = por %p115, %p116
    %s119 = sadd.s32 %s118, 1
    %p122 = scmp.eq.s32.totalorder %s21, 1
    %p123 = scmp.ne.s32.totalorder %s118, %s120
    %p124 = scmp.eq.s32.totalorder %s21, 0
    %p125 = por %p123, %p124
    %p126 = scmp.ne.s32.totalorder %s118, %s120
    %p127 = scmp.eq.s32.totalorder %s26, 1
    %p128 = por %p126, %p127
    %p129 = scmp.ne.s32.totalorder %s120, %s121
    %p130 = scmp.eq.s32.totalorder %s26, 0
    %p131 = por %p129, %p130
    %p132 = scmp.ne.s32.totalorder %s120, %s121
    %p133 = scmp.eq.s32.totalorder %s27, 1
    %p134 = por %p132, %p133
    %p136 = scmp.ne.s32.totalorder %s121, %s135
    %p137 = scmp.eq.s32.totalorder %s27, 0
    %p138 = por %p136, %p137
    %s140 = sadd.s32 %s139, 1
    %p143 = scmp.eq.s32.totalorder %s21, 1
    %p144 = scmp.ne.s32.totalorder %s139, %s141
    %p145 = scmp.eq.s32.totalorder %s21, 0
    %p146 = por %p144, %p145
    %p147 = scmp.ne.s32.totalorder %s139, %s141
    %p148 = scmp.eq.s32.totalorder %s26, 1
    %p149 = por %p147, %p148
    %p150 = scmp.ne.s32.totalorder %s141, %s142
    %p151 = scmp.eq.s32.totalorder %s26, 0
    %p152 = por %p150, %p151
    %p153 = scmp.ne.s32.totalorder %s141, %s142
    %p154 = scmp.eq.s32.totalorder %s27, 1
    %p155 = por %p153, %p154
    %p157 = scmp.ne.s32.totalorder %s142, %s156
    %p158 = scmp.eq.s32.totalorder %s27, 0
    %p159 = por %p157, %p158
    %s161 = sadd.s32 %s160, 1
    %p164 = scmp.eq.s32.totalorder %s21, 1
    %p165 = scmp.ne.s32.totalorder %s160, %s162
    %p166 = scmp.eq.s32.totalorder %s21, 0
    %p167 = por %p165, %p166
    %p168 = scmp.ne.s32.totalorder %s160, %s162
    %p169 = scmp.eq.s32.totalorder %s26, 1
    %p170 = por %p168, %p169
    %p171 = scmp.ne.s32.totalorder %s162, %s163
    %p172 = scmp.eq.s32.totalorder %s26, 0
    %p173 = por %p171, %p172
    %p174 = scmp.ne.s32.totalorder %s162, %s163
    %p175 = scmp.eq.s32.totalorder %s27, 1
    %p176 = por %p174, %p175
    %p178 = scmp.ne.s32.totalorder %s163, %s177
    %p179 = scmp.eq.s32.totalorder %s27, 0
    %p180 = por %p178, %p179
    %s182 = sadd.s32 %s181, 1
    %p185 = scmp.eq.s32.totalorder %s21, 1
    %p186 = scmp.ne.s32.totalorder %s181, %s183
    %p187 = scmp.eq.s32.totalorder %s21, 0
    %p188 = por %p186, %p187
    %p189 = scmp.ne.s32.totalorder %s181, %s183
    %p190 = scmp.eq.s32.totalorder %s26, 1
    %p191 = por %p189, %p190
    %p192 = scmp.ne.s32.totalorder %s183, %s184
    %p193 = scmp.eq.s32.totalorder %s26, 0
    %p194 = por %p192, %p193
    %p195 = scmp.ne.s32.totalorder %s183, %s184
    %p196 = scmp.eq.s32.totalorder %s27, 1
    %p197 = por %p195, %p196
    %p199 = scmp.ne.s32.totalorder %s184, %s198
    %p200 = scmp.eq.s32.totalorder %s27, 0
    %p201 = por %p199, %p200
    %s203 = sadd.s32 %s202, 1
    %p206 = scmp.eq.s32.totalorder %s21, 1
    %p207 = scmp.ne.s32.totalorder %s202, %s204
    %p208 = scmp.eq.s32.totalorder %s21, 0
    %p209 = por %p207, %p208
    %p210 = scmp.ne.s32.totalorder %s202, %s204
    %p211 = scmp.eq.s32.totalorder %s26, 1
    %p212 = por %p210, %p211
    %p213 = scmp.ne.s32.totalorder %s204, %s205
    %p214 = scmp.eq.s32.totalorder %s26, 0
    %p215 = por %p213, %p214
    %p216 = scmp.ne.s32.totalorder %s204, %s205
    %p217 = scmp.eq.s32.totalorder %s27, 1
    %p218 = por %p216, %p217
    %p220 = scmp.ne.s32.totalorder %s205, %s219
    %p221 = scmp.eq.s32.totalorder %s27, 0
    %p222 = por %p220, %p221
    %s224 = sadd.s32 %s223, 1
    %p227 = scmp.eq.s32.totalorder %s21, 1
    %p228 = scmp.ne.s32.totalorder %s223, %s225
    %p229 = scmp.eq.s32.totalorder %s21, 0
    %p230 = por %p228, %p229
    %p231 = scmp.ne.s32.totalorder %s223, %s225
    %p232 = scmp.eq.s32.totalorder %s26, 1
    %p233 = por %p231, %p232
    %p234 = scmp.ne.s32.totalorder %s225, %s226
    %p235 = scmp.eq.s32.totalorder %s26, 0
    %p236 = por %p234, %p235
    %p237 = scmp.ne.s32.totalorder %s225, %s226
    %p238 = scmp.eq.s32.totalorder %s27, 1
    %p239 = por %p237, %p238
    %p241 = scmp.ne.s32.totalorder %s226, %s240
    %p242 = scmp.eq.s32.totalorder %s27, 0
    %p243 = por %p241, %p242
    %s245 = sadd.s32 %s244, 1
    %p248 = scmp.eq.s32.totalorder %s21, 1
    %p249 = scmp.ne.s32.totalorder %s244, %s246
    %p250 = scmp.eq.s32.totalorder %s21, 0
    %p251 = por %p249, %p250
    %p252 = scmp.ne.s32.totalorder %s244, %s246
    %p253 = scmp.eq.s32.totalorder %s26, 1
    %p254 = por %p252, %p253
    %p255 = scmp.ne.s32.totalorder %s246, %s247
    %p256 = scmp.eq.s32.totalorder %s26, 0
    %p257 = por %p255, %p256
    %p258 = scmp.ne.s32.totalorder %s246, %s247
    %p259 = scmp.eq.s32.totalorder %s27, 1
    %p260 = por %p258, %p259
    %p262 = scmp.ne.s32.totalorder %s247, %s261
    %p263 = scmp.eq.s32.totalorder %s27, 0
    %p264 = por %p262, %p263
    %s266 = sadd.s32 %s265, 1
    %p269 = scmp.eq.s32.totalorder %s21, 1
    %p270 = scmp.ne.s32.totalorder %s265, %s267
    %p271 = scmp.eq.s32.totalorder %s21, 0
    %p272 = por %p270, %p271
    %p273 = scmp.ne.s32.totalorder %s265, %s267
    %p274 = scmp.eq.s32.totalorder %s26, 1
    %p275 = por %p273, %p274
    %p276 = scmp.ne.s32.totalorder %s267, %s268
    %p277 = scmp.eq.s32.totalorder %s26, 0
    %p278 = por %p276, %p277
    %p279 = scmp.ne.s32.totalorder %s267, %s268
    %p280 = scmp.eq.s32.totalorder %s27, 1
    %p281 = por %p279, %p280
    %p283 = scmp.ne.s32.totalorder %s268, %s282
    %p284 = scmp.eq.s32.totalorder %s27, 0
    %p285 = por %p283, %p284
    %s287 = sadd.s32 %s286, 1
    %p290 = scmp.eq.s32.totalorder %s21, 1
    %p291 = scmp.ne.s32.totalorder %s286, %s288
    %p292 = scmp.eq.s32.totalorder %s21, 0
    %p293 = por %p291, %p292
    %p294 = scmp.ne.s32.totalorder %s286, %s288
    %p295 = scmp.eq.s32.totalorder %s26, 1
    %p296 = por %p294, %p295
    %p297 = scmp.ne.s32.totalorder %s288, %s289
    %p298 = scmp.eq.s32.totalorder %s26, 0
    %p299 = por %p297, %p298
    %p300 = scmp.ne.s32.totalorder %s288, %s289
    %p301 = scmp.eq.s32.totalorder %s27, 1
    %p302 = por %p300, %p301
    %p304 = scmp.ne.s32.totalorder %s289, %s303
    %p305 = scmp.eq.s32.totalorder %s27, 0
    %p306 = por %p304, %p305
    %s308 = sadd.s32 %s307, 1
    %p311 = scmp.eq.s32.totalorder %s21, 1
    %p312 = scmp.ne.s32.totalorder %s307, %s309
    %p313 = scmp.eq.s32.totalorder %s21, 0
    %p314 = por %p312, %p313
    %p315 = scmp.ne.s32.totalorder %s307, %s309
    %p316 = scmp.eq.s32.totalorder %s26, 1
    %p317 = por %p315, %p316
    %p318 = scmp.ne.s32.totalorder %s309, %s310
    %p319 = scmp.eq.s32.totalorder %s26, 0
    %p320 = por %p318, %p319
    %p321 = scmp.ne.s32.totalorder %s309, %s310
    %p322 = scmp.eq.s32.totalorder %s27, 1
    %p323 = por %p321, %p322
    %p325 = scmp.ne.s32.totalorder %s310, %s324
    %p326 = scmp.eq.s32.totalorder %s27, 0
    %p327 = por %p325, %p326
    %s329 = sadd.s32 %s328, 1
    %p332 = scmp.eq.s32.totalorder %s21, 1
    %p333 = scmp.ne.s32.totalorder %s328, %s330
    %p334 = scmp.eq.s32.totalorder %s21, 0
    %p335 = por %p333, %p334
    %p336 = scmp.ne.s32.totalorder %s328, %s330
    %p337 = scmp.eq.s32.totalorder %s26, 1
    %p338 = por %p336, %p337
    %p339 = scmp.ne.s32.totalorder %s330, %s331
    %p340 = scmp.eq.s32.totalorder %s26, 0
    %p341 = por %p339, %p340
    %p342 = scmp.ne.s32.totalorder %s330, %s331
    %p343 = scmp.eq.s32.totalorder %s27, 1
    %p344 = por %p342, %p343
    %p346 = scmp.ne.s32.totalorder %s331, %s345
    %p347 = scmp.eq.s32.totalorder %s27, 0
    %p348 = por %p346, %p347
    %s349 = ssub.s32 %s21, %s28
    %p350 = scmp.eq.s32.totalorder %s349, 0
    %s352 = sadd.s32 %s351, 1
    %s353 = scalar_select %p350, %s351, %s352
    %p356 = pneg %p350
    %p357 = scmp.eq.s32.totalorder %s21, 1
    %p358 = por %p356, %p357
    %p359 = scmp.ne.s32.totalorder %s351, %s354
    %p360 = scmp.eq.s32.totalorder %s21, 0
    %p361 = por %p359, %p360
    %p362 = scmp.ne.s32.totalorder %s351, %s354
    %p363 = scmp.eq.s32.totalorder %s26, 1
    %p364 = por %p362, %p363
    %p365 = scmp.ne.s32.totalorder %s354, %s355
    %p366 = scmp.eq.s32.totalorder %s26, 0
    %p367 = por %p365, %p366
    %p368 = scmp.ne.s32.totalorder %s354, %s355
    %p369 = scmp.eq.s32.totalorder %s27, 1
    %p370 = por %p368, %p369
    %p372 = scmp.ne.s32.totalorder %s355, %s371
    %p373 = scmp.eq.s32.totalorder %s27, 0
    %p374 = por %p372, %p373
    %p375 = scmp.le.s32.totalorder 1, %s21
    %p376 = scmp.lt.s32.totalorder %s21, 3
    %p377 = pnand %p375, %p376
    %p378 = pneg %p377
    // Predicated region
    $region9: #{swin_forward.11} parent=5 // pred_check
      _
    $region10: #{swin_forward.11} parent=5 // pred_check_branch
      %380 = sbr.rel (%p377) target = $region12
    $region11: #{swin_forward.11} parent=5 // pred_region
      %s381 = ssub.s32 %s21, 1
      // Predicated region
      $region13: #{swin_forward.11} parent=11 // pred_check
        %p382 = pneg %p68
      $region14: #{swin_forward.11} parent=11 // pred_check_branch
        %384 = sbr.rel (%p382) target = $region16
      $region15: #{swin_forward.11} parent=11 // pred_region
        _
      $region16: #{swin_forward.11} parent=11 // pred_fallthru
        _
      // Predicated region
      $region17: #{swin_forward.11} parent=11 // pred_check
        %p385 = pneg %p89
      $region18: #{swin_forward.11} parent=11 // pred_check_branch
        %387 = sbr.rel (%p385) target = $region20
      $region19: #{swin_forward.11} parent=11 // pred_region
        _
      $region20: #{swin_forward.11} parent=11 // pred_fallthru
        _
      // Predicated region
      $region21: #{swin_forward.11} parent=11 // pred_check
        %p388 = pneg %p110
      $region22: #{swin_forward.11} parent=11 // pred_check_branch
        %390 = sbr.rel (%p388) target = $region24
      $region23: #{swin_forward.11} parent=11 // pred_region
        _
      $region24: #{swin_forward.11} parent=11 // pred_fallthru
        _
      // Predicated region
      $region25: #{swin_forward.11} parent=11 // pred_check
        %p391 = pneg %p131
      $region26: #{swin_forward.11} parent=11 // pred_check_branch
        %393 = sbr.rel (%p391) target = $region28
      $region27: #{swin_forward.11} parent=11 // pred_region
        _
      $region28: #{swin_forward.11} parent=11 // pred_fallthru
        _
      // Predicated region
      $region29: #{swin_forward.11} parent=11 // pred_check
        %p394 = pneg %p152
      $region30: #{swin_forward.11} parent=11 // pred_check_branch
        %396 = sbr.rel (%p394) target = $region32
      $region31: #{swin_forward.11} parent=11 // pred_region
        _
      $region32: #{swin_forward.11} parent=11 // pred_fallthru
        _
      // Predicated region
      $region33: #{swin_forward.11} parent=11 // pred_check
        %p397 = pneg %p173
      $region34: #{swin_forward.11} parent=11 // pred_check_branch
        %399 = sbr.rel (%p397) target = $region36
      $region35: #{swin_forward.11} parent=11 // pred_region
        _
      $region36: #{swin_forward.11} parent=11 // pred_fallthru
        _
      // Predicated region
      $region37: #{swin_forward.11} parent=11 // pred_check
        %p400 = pneg %p194
      $region38: #{swin_forward.11} parent=11 // pred_check_branch
        %402 = sbr.rel (%p400) target = $region40
      $region39: #{swin_forward.11} parent=11 // pred_region
        _
      $region40: #{swin_forward.11} parent=11 // pred_fallthru
        _
      // Predicated region
      $region41: #{swin_forward.11} parent=11 // pred_check
        %p403 = pneg %p215
      $region42: #{swin_forward.11} parent=11 // pred_check_branch
        %405 = sbr.rel (%p403) target = $region44
      $region43: #{swin_forward.11} parent=11 // pred_region
        _
      $region44: #{swin_forward.11} parent=11 // pred_fallthru
        _
      // Predicated region
      $region45: #{swin_forward.11} parent=11 // pred_check
        %p406 = pneg %p236
      $region46: #{swin_forward.11} parent=11 // pred_check_branch
        %408 = sbr.rel (%p406) target = $region48
      $region47: #{swin_forward.11} parent=11 // pred_region
        _
      $region48: #{swin_forward.11} parent=11 // pred_fallthru
        _
      // Predicated region
      $region49: #{swin_forward.11} parent=11 // pred_check
        %p409 = pneg %p257
      $region50: #{swin_forward.11} parent=11 // pred_check_branch
        %411 = sbr.rel (%p409) target = $region52
      $region51: #{swin_forward.11} parent=11 // pred_region
        _
      $region52: #{swin_forward.11} parent=11 // pred_fallthru
        _
      // Predicated region
      $region53: #{swin_forward.11} parent=11 // pred_check
        %p412 = pneg %p278
      $region54: #{swin_forward.11} parent=11 // pred_check_branch
        %414 = sbr.rel (%p412) target = $region56
      $region55: #{swin_forward.11} parent=11 // pred_region
        _
      $region56: #{swin_forward.11} parent=11 // pred_fallthru
        _
      // Predicated region
      $region57: #{swin_forward.11} parent=11 // pred_check
        %p415 = pneg %p299
      $region58: #{swin_forward.11} parent=11 // pred_check_branch
        %417 = sbr.rel (%p415) target = $region60
      $region59: #{swin_forward.11} parent=11 // pred_region
        _
      $region60: #{swin_forward.11} parent=11 // pred_fallthru
        _
      // Predicated region
      $region61: #{swin_forward.11} parent=11 // pred_check
        %p418 = pneg %p320
      $region62: #{swin_forward.11} parent=11 // pred_check_branch
        %420 = sbr.rel (%p418) target = $region64
      $region63: #{swin_forward.11} parent=11 // pred_region
        _
      $region64: #{swin_forward.11} parent=11 // pred_fallthru
        _
      // Predicated region
      $region65: #{swin_forward.11} parent=11 // pred_check
        %p421 = pneg %p341
      $region66: #{swin_forward.11} parent=11 // pred_check_branch
        %423 = sbr.rel (%p421) target = $region68
      $region67: #{swin_forward.11} parent=11 // pred_region
        _
      $region68: #{swin_forward.11} parent=11 // pred_fallthru
        _
    $region12: #{swin_forward.11} parent=5 // pred_fallthru
      _
    %p424 = scmp.lt.s32.totalorder %s21, 2
    // Predicated region
    $region69: #{swin_forward.11} parent=5 // pred_check
      %p425 = pneg %p424
    $region70: #{swin_forward.11} parent=5 // pred_check_branch
      %427 = sbr.rel (%p425) target = $region72
    $region71: #{swin_forward.11} parent=5 // pred_region
      // Predicated region
      $region73: #{swin_forward.11} parent=71 // pred_check
        %p428 = pneg %p41
      $region74: #{swin_forward.11} parent=71 // pred_check_branch
        %430 = sbr.rel (%p428) target = $region76
      $region75: #{swin_forward.11} parent=71 // pred_region
        %p431 = scmp.lt.s32.totalorder %s21, 1
        %s432 = scalar_select %p431, %s21, 1
        %s433 = smul.addr %s432, 2
        %s434 = smul.addr %s433, 8
        %s435 = scalar_lea.vmem %s0, %s434
      $region76: #{swin_forward.11} parent=71 // pred_fallthru
        _
    $region72: #{swin_forward.11} parent=5 // pred_fallthru
      _
    %p436 = scmp.le.s32.totalorder 1, %s21
    %p437 = scmp.lt.s32.totalorder %s21, 3
    %p438 = pnand %p436, %p437
    %p439 = pneg %p438
    // Predicated region
    $region77: #{swin_forward.11} parent=5 // pred_check
      _
    $region78: #{swin_forward.11} parent=5 // pred_check_branch
      %441 = sbr.rel (%p438) target = $region80
    $region79: #{swin_forward.11} parent=5 // pred_region
      %s442 = ssub.s32 %s21, 1
      %p443 = scmp.lt.s32.totalorder %s26, 1
      %s444 = scalar_select %p443, %s26, 1
      %s445 = smul.addr %s444, 2
      %s446 = smul.addr %s445, 8
      %s447 = scalar_lea.vmem %s0, %s446
      %p448 = pneg %p47
      %p449 = pneg %p44
      %p450 = pneg %p68
      %p451 = pneg %p65
      %p452 = pneg %p89
      %p453 = pneg %p86
      %p454 = pneg %p110
      %p455 = pneg %p107
      %p456 = pneg %p131
      %p457 = pneg %p128
      %p458 = pneg %p152
      %p459 = pneg %p149
      %p460 = pneg %p173
      %p461 = pneg %p170
      %p462 = pneg %p194
      %p463 = pneg %p191
      %p464 = pneg %p215
      %p465 = pneg %p212
      %p466 = pneg %p236
      %p467 = pneg %p233
      %p468 = pneg %p257
      %p469 = pneg %p254
      %p470 = pneg %p278
      %p471 = pneg %p275
      %p472 = pneg %p299
      %p473 = pneg %p296
      %p474 = pneg %p320
      %p475 = pneg %p317
      %p476 = pneg %p341
      %p477 = pneg %p338
      %p478 = pneg %p367
      %p479 = pneg %p364
      %p480 = scmp.lt.s32.totalorder %s26, 1
      %s481 = scalar_select %p480, %s26, 1
      %s482 = smul.addr %s481, 2
      %s483 = smul.addr %s482, 8
      %s484 = scalar_lea.vmem %s15, %s483
      %p485 = scmp.lt.s32.totalorder %s26, 1
      %s486 = scalar_select %p485, %s26, 1
      %s487 = smul.addr %s486, 2
      %s488 = smul.addr %s487, 8
      %s489 = scalar_lea.vmem %s0, %s488
      %p490 = scmp.lt.s32.totalorder %s26, 1
      %s491 = scalar_select %p490, %s26, 1
      %s492 = smul.addr %s491, 2
      %s493 = smul.addr %s492, 8
      %s494 = scalar_lea.vmem %s15, %s493
      %v496 = vld [vmem:[%s489] sm:$0xff]
      %v497 = vld [vmem:[%s489 + $0x8] sm:$0xff]
      %v498 = vld [vmem:[%s1] sm:$0x1]
      %v499 = vld [vmem:[%s2] sm:$0x1]
      %vm500 = vcmask 261120
      %v501 = vsel %vm500, %v496, 0.0
      %502 = vadd.xlane.f32.xlu0 %v501
      %v503 = vpop.xlane.xlu0 %502
      %v504 = vsel %vm500, %v497, 0.0
      %505 = vadd.xlane.f32.xlu0 %v504
      %v506 = vpop.xlane.xlu0 %505
      %v507 = vrcp.pop 32.0
      %v508 = vmul.f32 %v503, %v507
      %v509 = vmul.f32 %v506, %v507
      %v510 = vsub.f32 %v496, %v508
      %v511 = vsub.f32 %v497, %v509
      %v512 = vmul.f32 %v510, %v510
      %v513 = vmul.f32 %v511, %v511
      %v514 = vsel %vm500, %v512, 0.0
      %515 = vadd.xlane.f32.xlu0 %v514
      %v516 = vpop.xlane.xlu0 %515
      %v517 = vsel %vm500, %v513, 0.0
      %518 = vadd.xlane.f32.xlu0 %v517
      %v519 = vpop.xlane.xlu0 %518
      %v520 = vmul.f32 %v516, %v507
      %v521 = vmul.f32 %v519, %v507
      %v522 = vadd.f32 %v520, 1e-05
      %v523 = vadd.f32 %v521, 1e-05
      %v524 = vrsqrt.pop %v522
      %v525 = vrsqrt.pop %v523
      %v526 = vmul.f32 %v510, %v524
      %v527 = vmul.f32 %v511, %v525
      %v529 = vlaneseq
      %v530 = vshrl.u32 %v529, 7
      %v531 = vsub.s32 0, %v530
      %v532 = vrot.slane %v498, %v531
      %v534 = vmul.f32 %v526, %v532
      %v535 = vmul.f32 %v527, %v532
      %v537 = vlaneseq
      %v538 = vshrl.u32 %v537, 7
      %v539 = vsub.s32 0, %v538
      %v540 = vrot.slane %v499, %v539
      %v542 = vadd.f32 %v534, %v540
      %v543 = vadd.f32 %v535, %v540
      %v544 = vpack.c.bf16 %v543, %v542
      %v545 = vld [vmem:[%s3] sm:$0xf]
      %v546 = vld [vmem:[%s3 + $0x4] sm:$0xf]
      %v547 = vld [vmem:[%s3 + $0x8] sm:$0xf]
      %v548 = vld [vmem:[%s3 + $0xc] sm:$0xf]
      %v549 = vld [vmem:[%s4] sm:$0x1]
      %v551 = vlaneseq
      %v552 = vshrl.u32 %v551, 7
      %v553 = vsub.s32 0, %v552
      %v554 = vrot.slane %v549, %v553
      %v560 = vunpack.c.l.b16 %v545
      %v561 = vunpack.c.l.b16 %v546
      %v562 = vunpack.c.l.b16 %v547
      %v563 = vunpack.c.l.b16 %v548
      %v564 = vpack.c.b16 %v561, %v560
      %v565 = vpack.c.b16 %v563, %v562
      %v569 = vsel %vm500, %v544, 0
      %571 = vmatprep.subr.bf16.mxu0 0
      %572 = vmatpush1.bf16.msra.mxu0 %v564
      %573 = vmatprep.subr.bf16.mxu0 0
      %574 = vmatpush1.bf16.msra.mxu0 %v565
      %575 = vmatprep.subr.bf16.mxu0 0
      %576 = vmatpush1.bf16.msra.mxu0 0
      %577 = vmatprep.subr.bf16.mxu0 0
      %578 = vmatpush1.bf16.msra.mxu0 0
      %579 = vmatprep.subr.bf16.mxu0 0
      %580 = vmatpush1.bf16.msra.mxu0 0
      %581 = vmatprep.subr.bf16.mxu0 0
      %582 = vmatpush1.bf16.msra.mxu0 0
      %583 = vmatprep.subr.bf16.mxu0 0
      %584 = vmatpush1.bf16.msra.mxu0 0
      %585 = vmatprep.subr.bf16.mxu0 0
      %586 = vmatpush1.bf16.msra.mxu0 0
      %587 = vmatprep.subr.bf16.mxu0 0
      %588 = vmatpush1.bf16.msra.mxu0 0
      %589 = vmatprep.subr.bf16.mxu0 0
      %590 = vmatpush1.bf16.msra.mxu0 0
      %591 = vmatprep.subr.bf16.mxu0 0
      %592 = vmatpush1.bf16.msra.mxu0 0
      %593 = vmatprep.subr.bf16.mxu0 0
      %594 = vmatpush1.bf16.msra.mxu0 0
      %595 = vmatprep.subr.bf16.mxu0 0
      %596 = vmatpush1.bf16.msra.mxu0 0
      %597 = vmatprep.subr.bf16.mxu0 0
      %598 = vmatpush1.bf16.msra.mxu0 0
      %599 = vmatprep.subr.bf16.mxu0 0
      %600 = vmatpush1.bf16.msra.mxu0 0
      %601 = vmatprep.subr.bf16.mxu0 0
      %602 = vmatpush1.bf16.msra.mxu0 0
      %603 = vmatprep.mubr.bf16.mxu0 0
      %604 = vmatmul.mubr.bf16.gmra.mrb[0].mxu0 %v569
      %v605 = vpop.f32.mrb[0].mxu0
      %v606 = vadd.f32 %v554, %v605
      %v607 = vpop.f32.mrb[0].mxu0
      %v608 = vpop.f32.mrb[0].mxu0
      %v609 = vadd.f32 %v554, %v608
      %v610 = vpop.f32.mrb[0].mxu0
      %611 = vdwg.mxu0
      %v612 = vld [vmem:[%s7] sm:$0xff]
      %v613 = vld [vmem:[%s7 + $0x8] sm:$0xff]
      %v614 = vld [vmem:[%s7 + $0x10] sm:$0xff]
      %v615 = vld [vmem:[%s7 + $0x18] sm:$0xff]
      %v616 = vld [vmem:[%s7 + $0x20] sm:$0xff]
      %v617 = vld [vmem:[%s7 + $0x28] sm:$0xff]
      %v618 = vld [vmem:[%s7 + $0x30] sm:$0xff]
      %v619 = vld [vmem:[%s7 + $0x38] sm:$0xff]
      %v620 = vld [vmem:[%s5] sm:$0xf]
      %v621 = vld [vmem:[%s5 + $0x4] sm:$0xf]
      %v622 = vld [vmem:[%s5 + $0x8] sm:$0xf]
      %v623 = vld [vmem:[%s5 + $0xc] sm:$0xf]
      %v624 = vpack.c.bf16 %v609, %v606
      %626 = vrot.lane.b32.xlu0 %v624, 96
      %v627 = vpop.permute.xlu0 %626
      %vm628 = vcmask 64512
      %v630 = vsel %vm628, %v624, 0
      %v633 = vsel %vm628, %v627, 0
      %635 = vmatprep.subr.bf16.mxu0 0
      %636 = vmatpush1.bf16.xpose.msra.mxu0 %v633
      %637 = vmatprep.subr.bf16.mxu0 0
      %638 = vmatpush1.bf16.xpose.msra.mxu0 0
      %639 = vmatprep.subr.bf16.mxu0 0
      %640 = vmatpush1.bf16.xpose.msra.mxu0 0
      %641 = vmatprep.subr.bf16.mxu0 0
      %642 = vmatpush1.bf16.xpose.msra.mxu0 0
      %643 = vmatprep.subr.bf16.mxu0 0
      %644 = vmatpush1.bf16.xpose.msra.mxu0 0
      %645 = vmatprep.subr.bf16.mxu0 0
      %646 = vmatpush1.bf16.xpose.msra.mxu0 0
      %647 = vmatprep.subr.bf16.mxu0 0
      %648 = vmatpush1.bf16.xpose.msra.mxu0 0
      %649 = vmatprep.subr.bf16.mxu0 0
      %650 = vmatpush1.bf16.xpose.msra.mxu0 0
      %651 = vmatprep.subr.bf16.mxu0 0
      %652 = vmatpush1.bf16.xpose.msra.mxu0 0
      %653 = vmatprep.subr.bf16.mxu0 0
      %654 = vmatpush1.bf16.xpose.msra.mxu0 0
      %655 = vmatprep.subr.bf16.mxu0 0
      %656 = vmatpush1.bf16.xpose.msra.mxu0 0
      %657 = vmatprep.subr.bf16.mxu0 0
      %658 = vmatpush1.bf16.xpose.msra.mxu0 0
      %659 = vmatprep.subr.bf16.mxu0 0
      %660 = vmatpush1.bf16.xpose.msra.mxu0 0
      %661 = vmatprep.subr.bf16.mxu0 0
      %662 = vmatpush1.bf16.xpose.msra.mxu0 0
      %663 = vmatprep.subr.bf16.mxu0 0
      %664 = vmatpush1.bf16.xpose.msra.mxu0 0
      %665 = vmatprep.subr.bf16.mxu0 0
      %666 = vmatpush1.bf16.xpose.msra.mxu0 0
      %667 = vmatprep.mubr.bf16.mxu0 0
      %668 = vmatmul.mubr.bf16.gmra.mrb[0].mxu0 %v630
      %v669 = vpop.f32.mrb[0].mxu0
      %v670 = vadd.f32 0.0, %v669
      %v671 = vpop.f32.mrb[0].mxu0
      %v672 = vpop.f32.mrb[0].mxu0
      %v673 = vadd.f32 0.0, %v672
      %v674 = vpop.f32.mrb[0].mxu0
      %675 = vdwg.mxu0
      %v676 = vmul.f32 %v670, 0.35355338
      %v677 = vmul.f32 %v673, 0.35355338
      %v678 = vadd.f32 %v676, %v612
      %v679 = vadd.f32 %v677, %v613
      %vm680 = vcmask 130048
      %v681 = vsel %vm680, %v678, -inf
      %682 = vmax.xlane.f32.xlu0 %v681
      %v683 = vpop.xlane.xlu0 %682
      %v684 = vsel %vm680, %v679, -inf
      %685 = vmax.xlane.f32.xlu0 %v684
      %v686 = vpop.xlane.xlu0 %685
      %v687 = vsub.f32 %v678, %v683
      %v688 = vsub.f32 %v679, %v686
      %v689 = vmul.f32 %v687, 1.442695
      %v690 = vpow.pop %v689
      %v691 = vmul.f32 %v688, 1.442695
      %v692 = vpow.pop %v691
      %v693 = vsel %vm680, %v690, 0.0
      %694 = vadd.xlane.f32.xlu0 %v693
      %v695 = vpop.xlane.xlu0 %694
      %v696 = vsel %vm680, %v692, 0.0
      %697 = vadd.xlane.f32.xlu0 %v696
      %v698 = vpop.xlane.xlu0 %697
      %v699 = vrcp.pop %v695
      %v700 = vrcp.pop %v698
      %v701 = vmul.f32 %v690, %v699
      %v702 = vmul.f32 %v692, %v700
      %v703 = vpack.c.bf16 %v702, %v701
      %704 = vrot.lane.b32.xlu0 %v624, 64
      %v705 = vpop.permute.xlu0 %704
      %v708 = vsel %vm680, %v703, 0
      %710 = vmatprep.subr.bf16.mxu0 0
      %711 = vmatpush1.bf16.msra.mxu0 %v705
      %712 = vmatprep.subr.bf16.mxu0 0
      %713 = vmatpush1.bf16.msra.mxu0 0
      %714 = vmatprep.subr.bf16.mxu0 0
      %715 = vmatpush1.bf16.msra.mxu0 0
      %716 = vmatprep.subr.bf16.mxu0 0
      %717 = vmatpush1.bf16.msra.mxu0 0
      %718 = vmatprep.subr.bf16.mxu0 0
      %719 = vmatpush1.bf16.msra.mxu0 0
      %720 = vmatprep.subr.bf16.mxu0 0
      %721 = vmatpush1.bf16.msra.mxu0 0
      %722 = vmatprep.subr.bf16.mxu0 0
      %723 = vmatpush1.bf16.msra.mxu0 0
      %724 = vmatprep.subr.bf16.mxu0 0
      %725 = vmatpush1.bf16.msra.mxu0 0
      %726 = vmatprep.subr.bf16.mxu0 0
      %727 = vmatpush1.bf16.msra.mxu0 0
      %728 = vmatprep.subr.bf16.mxu0 0
      %729 = vmatpush1.bf16.msra.mxu0 0
      %730 = vmatprep.subr.bf16.mxu0 0
      %731 = vmatpush1.bf16.msra.mxu0 0
      %732 = vmatprep.subr.bf16.mxu0 0
      %733 = vmatpush1.bf16.msra.mxu0 0
      %734 = vmatprep.subr.bf16.mxu0 0
      %735 = vmatpush1.bf16.msra.mxu0 0
      %736 = vmatprep.subr.bf16.mxu0 0
      %737 = vmatpush1.bf16.msra.mxu0 0
      %738 = vmatprep.subr.bf16.mxu0 0
      %739 = vmatpush1.bf16.msra.mxu0 0
      %740 = vmatprep.subr.bf16.mxu0 0
      %741 = vmatpush1.bf16.msra.mxu0 0
      %742 = vmatprep.mubr.bf16.mxu0 0
      %743 = vmatmul.mubr.bf16.gmra.mrb[0].mxu0 %v708
      %v744 = vpop.f32.mrb[0].mxu0
      %v745 = vadd.f32 0.0, %v744
      %v746 = vpop.f32.mrb[0].mxu0
      %v747 = vpop.f32.mrb[0].mxu0
      %v748 = vadd.f32 0.0, %v747
      %v749 = vpop.f32.mrb[0].mxu0
      %750 = vdwg.mxu0
      %v751 = vpack.c.bf16 %v748, %v745
      %752 = vrot.lane.b32.xlu0 %v624, 120
      %v753 = vpop.permute.xlu0 %752
      %754 = vrot.lane.b32.xlu0 %v624, 88
      %v755 = vpop.permute.xlu0 %754
      %v757 = vsel %vm628, %v753, 0
      %v760 = vsel %vm628, %v755, 0
      %762 = vmatprep.subr.bf16.mxu0 0
      %763 = vmatpush1.bf16.xpose.msra.mxu0 %v760
      %764 = vmatprep.subr.bf16.mxu0 0
      %765 = vmatpush1.bf16.xpose.msra.mxu0 0
      %766 = vmatprep.subr.bf16.mxu0 0
      %767 = vmatpush1.bf16.xpose.msra.mxu0 0
      %768 = vmatprep.subr.bf16.mxu0 0
      %769 = vmatpush1.bf16.xpose.msra.mxu0 0
      %770 = vmatprep.subr.bf16.mxu0 0
      %771 = vmatpush1.bf16.xpose.msra.mxu0 0
      %772 = vmatprep.subr.bf16.mxu0 0
      %773 = vmatpush1.bf16.xpose.msra.mxu0 0
      %774 = vmatprep.subr.bf16.mxu0 0
      %775 = vmatpush1.bf16.xpose.msra.mxu0 0
      %776 = vmatprep.subr.bf16.mxu0 0
      %777 = vmatpush1.bf16.xpose.msra.mxu0 0
      %778 = vmatprep.subr.bf16.mxu0 0
      %779 = vmatpush1.bf16.xpose.msra.mxu0 0
      %780 = vmatprep.subr.bf16.mxu0 0
      %781 = vmatpush1.bf16.xpose.msra.mxu0 0
      %782 = vmatprep.subr.bf16.mxu0 0
      %783 = vmatpush1.bf16.xpose.msra.mxu0 0
      %784 = vmatprep.subr.bf16.mxu0 0
      %785 = vmatpush1.bf16.xpose.msra.mxu0 0
      %786 = vmatprep.subr.bf16.mxu0 0
      %787 = vmatpush1.bf16.xpose.msra.mxu0 0
      %788 = vmatprep.subr.bf16.mxu0 0
      %789 = vmatpush1.bf16.xpose.msra.mxu0 0
      %790 = vmatprep.subr.bf16.mxu0 0
      %791 = vmatpush1.bf16.xpose.msra.mxu0 0
      %792 = vmatprep.subr.bf16.mxu0 0
      %793 = vmatpush1.bf16.xpose.msra.mxu0 0
      %794 = vmatprep.mubr.bf16.mxu0 0
      %795 = vmatmul.mubr.bf16.gmra.mrb[0].mxu0 %v757
      %v796 = vpop.f32.mrb[0].mxu0
      %v797 = vadd.f32 0.0, %v796
      %v798 = vpop.f32.mrb[0].mxu0
      %v799 = vpop.f32.mrb[0].mxu0
      %v800 = vadd.f32 0.0, %v799
      %v801 = vpop.f32.mrb[0].mxu0
      %802 = vdwg.mxu0
      %v803 = vmul.f32 %v797, 0.35355338
      %v804 = vmul.f32 %v800, 0.35355338
      %v805 = vadd.f32 %v803, %v614
      %v806 = vadd.f32 %v804, %v615
      %v807 = vsel %vm680, %v805, -inf
      %808 = vmax.xlane.f32.xlu0 %v807
      %v809 = vpop.xlane.xlu0 %808
      %v810 = vsel %vm680, %v806, -inf
      %811 = vmax.xlane.f32.xlu0 %v810
      %v812 = vpop.xlane.xlu0 %811
      %v813 = vsub.f32 %v805, %v809
      %v814 = vsub.f32 %v806, %v812
      %v815 = vmul.f32 %v813, 1.442695
      %v816 = vpow.pop %v815
      %v817 = vmul.f32 %v814, 1.442695
      %v818 = vpow.pop %v817
      %v819 = vsel %vm680, %v816, 0.0
      %820 = vadd.xlane.f32.xlu0 %v819
      %v821 = vpop.xlane.xlu0 %820
      %v822 = vsel %vm680, %v818, 0.0
      %823 = vadd.xlane.f32.xlu0 %v822
      %v824 = vpop.xlane.xlu0 %823
      %v825 = vrcp.pop %v821
      %v826 = vrcp.pop %v824
      %v827 = vmul.f32 %v816, %v825
      %v828 = vmul.f32 %v818, %v826
      %v829 = vpack.c.bf16 %v828, %v827
      %830 = vrot.lane.b32.xlu0 %v624, 56
      %v831 = vpop.permute.xlu0 %830
      %v834 = vsel %vm680, %v829, 0
      %836 = vmatprep.subr.bf16.mxu0 0
      %837 = vmatpush1.bf16.msra.mxu0 %v831
      %838 = vmatprep.subr.bf16.mxu0 0
      %839 = vmatpush1.bf16.msra.mxu0 0
      %840 = vmatprep.subr.bf16.mxu0 0
      %841 = vmatpush1.bf16.msra.mxu0 0
      %842 = vmatprep.subr.bf16.mxu0 0
      %843 = vmatpush1.bf16.msra.mxu0 0
      %844 = vmatprep.subr.bf16.mxu0 0
      %845 = vmatpush1.bf16.msra.mxu0 0
      %846 = vmatprep.subr.bf16.mxu0 0
      %847 = vmatpush1.bf16.msra.mxu0 0
      %848 = vmatprep.subr.bf16.mxu0 0
      %849 = vmatpush1.bf16.msra.mxu0 0
      %850 = vmatprep.subr.bf16.mxu0 0
      %851 = vmatpush1.bf16.msra.mxu0 0
      %852 = vmatprep.subr.bf16.mxu0 0
      %853 = vmatpush1.bf16.msra.mxu0 0
      %854 = vmatprep.subr.bf16.mxu0 0
      %855 = vmatpush1.bf16.msra.mxu0 0
      %856 = vmatprep.subr.bf16.mxu0 0
      %857 = vmatpush1.bf16.msra.mxu0 0
      %858 = vmatprep.subr.bf16.mxu0 0
      %859 = vmatpush1.bf16.msra.mxu0 0
      %860 = vmatprep.subr.bf16.mxu0 0
      %861 = vmatpush1.bf16.msra.mxu0 0
      %862 = vmatprep.subr.bf16.mxu0 0
      %863 = vmatpush1.bf16.msra.mxu0 0
      %864 = vmatprep.subr.bf16.mxu0 0
      %865 = vmatpush1.bf16.msra.mxu0 0
      %866 = vmatprep.subr.bf16.mxu0 0
      %867 = vmatpush1.bf16.msra.mxu0 0
      %868 = vmatprep.mubr.bf16.mxu0 0
      %869 = vmatmul.mubr.bf16.gmra.mrb[0].mxu0 %v834
      %v870 = vpop.f32.mrb[0].mxu0
      %v871 = vadd.f32 0.0, %v870
      %v872 = vpop.f32.mrb[0].mxu0
      %v873 = vpop.f32.mrb[0].mxu0
      %v874 = vadd.f32 0.0, %v873
      %v875 = vpop.f32.mrb[0].mxu0
      %876 = vdwg.mxu0
      %v877 = vpack.c.bf16 %v874, %v871
      %v879 = vsel %vm628, %v877, 0
      %vm881 = vcmask 1043456
      %v883 = vsel %vm881, %v621, 0
      %885 = vmatprep.subr.bf16.mxu0 0
      %886 = vmatpush1.bf16.msra.mxu0 %v883
      %887 = vmatprep.subr.bf16.mxu0 0
      %888 = vmatpush1.bf16.msra.mxu0 0
      %889 = vmatprep.subr.bf16.mxu0 0
      %890 = vmatpush1.bf16.msra.mxu0 0
      %891 = vmatprep.subr.bf16.mxu0 0
      %892 = vmatpush1.bf16.msra.mxu0 0
      %893 = vmatprep.subr.bf16.mxu0 0
      %894 = vmatpush1.bf16.msra.mxu0 0
      %895 = vmatprep.subr.bf16.mxu0 0
      %896 = vmatpush1.bf16.msra.mxu0 0
      %897 = vmatprep.subr.bf16.mxu0 0
      %898 = vmatpush1.bf16.msra.mxu0 0
      %899 = vmatprep.subr.bf16.mxu0 0
      %900 = vmatpush1.bf16.msra.mxu0 0
      %901 = vmatprep.subr.bf16.mxu0 0
      %902 = vmatpush1.bf16.msra.mxu0 0
      %903 = vmatprep.subr.bf16.mxu0 0
      %904 = vmatpush1.bf16.msra.mxu0 0
      %905 = vmatprep.subr.bf16.mxu0 0
      %906 = vmatpush1.bf16.msra.mxu0 0
      %907 = vmatprep.subr.bf16.mxu0 0
      %908 = vmatpush1.bf16.msra.mxu0 0
      %909 = vmatprep.subr.bf16.mxu0 0
      %910 = vmatpush1.bf16.msra.mxu0 0
      %911 = vmatprep.subr.bf16.mxu0 0
      %912 = vmatpush1.bf16.msra.mxu0 0
      %913 = vmatprep.subr.bf16.mxu0 0
      %914 = vmatpush1.bf16.msra.mxu0 0
      %915 = vmatprep.subr.bf16.mxu0 0
      %916 = vmatpush1.bf16.msra.mxu0 0
      %917 = vmatprep.mubr.bf16.mxu0 0
      %918 = vmatmul.mubr.bf16.gmra.mrb[0].mxu0 %v879
      %v919 = vpop.f32.mrb[0].mxu0
      %v920 = vadd.f32 0.0, %v919
      %v921 = vpop.f32.mrb[0].mxu0
      %v922 = vpop.f32.mrb[0].mxu0
      %v923 = vadd.f32 0.0, %v922
      %v924 = vpop.f32.mrb[0].mxu0
      %925 = vdwg.mxu0
      %v927 = vsel %vm628, %v751, 0
      %v930 = vsel %vm881, %v620, 0
      %932 = vmatprep.subr.bf16.mxu0 0
      %933 = vmatpush1.bf16.msra.mxu0 %v930
      %934 = vmatprep.subr.bf16.mxu0 0
      %935 = vmatpush1.bf16.msra.mxu0 0
      %936 = vmatprep.subr.bf16.mxu0 0
      %937 = vmatpush1.bf16.msra.mxu0 0
      %938 = vmatprep.subr.bf16.mxu0 0
      %939 = vmatpush1.bf16.msra.mxu0 0
      %940 = vmatprep.subr.bf16.mxu0 0
      %941 = vmatpush1.bf16.msra.mxu0 0
      %942 = vmatprep.subr.bf16.mxu0 0
      %943 = vmatpush1.bf16.msra.mxu0 0
      %944 = vmatprep.subr.bf16.mxu0 0
      %945 = vmatpush1.bf16.msra.mxu0 0
      %946 = vmatprep.subr.bf16.mxu0 0
      %947 = vmatpush1.bf16.msra.mxu0 0
      %948 = vmatprep.subr.bf16.mxu0 0
      %949 = vmatpush1.bf16.msra.mxu0 0
      %950 = vmatprep.subr.bf16.mxu0 0
      %951 = vmatpush1.bf16.msra.mxu0 0
      %952 = vmatprep.subr.bf16.mxu0 0
      %953 = vmatpush1.bf16.msra.mxu0 0
      %954 = vmatprep.subr.bf16.mxu0 0
      %955 = vmatpush1.bf16.msra.mxu0 0
      %956 = vmatprep.subr.bf16.mxu0 0
      %957 = vmatpush1.bf16.msra.mxu0 0
      %958 = vmatprep.subr.bf16.mxu0 0
      %959 = vmatpush1.bf16.msra.mxu0 0
      %960 = vmatprep.subr.bf16.mxu0 0
      %961 = vmatpush1.bf16.msra.mxu0 0
      %962 = vmatprep.subr.bf16.mxu0 0
      %963 = vmatpush1.bf16.msra.mxu0 0
      %964 = vmatprep.mubr.bf16.mxu0 0
      %965 = vmatmul.mubr.bf16.gmra.mrb[0].mxu0 %v927
      %v966 = vpop.f32.mrb[0].mxu0
      %v967 = vadd.f32 %v920, %v966
      %v968 = vpop.f32.mrb[0].mxu0
      %v969 = vpop.f32.mrb[0].mxu0
      %v970 = vadd.f32 %v923, %v969
      %v971 = vpop.f32.mrb[0].mxu0
      %972 = vdwg.mxu0
      %973 = vrot.lane.b32.xlu0 %v624, 112
      %v974 = vpop.permute.xlu0 %973
      %975 = vrot.lane.b32.xlu0 %v624, 80
      %v976 = vpop.permute.xlu0 %975
      %v978 = vsel %vm628, %v974, 0
      %v981 = vsel %vm628, %v976, 0
      %983 = vmatprep.subr.bf16.mxu0 0
      %984 = vmatpush1.bf16.xpose.msra.mxu0 %v981
      %985 = vmatprep.subr.bf16.mxu0 0
      %986 = vmatpush1.bf16.xpose.msra.mxu0 0
      %987 = vmatprep.subr.bf16.mxu0 0
      %988 = vmatpush1.bf16.xpose.msra.mxu0 0
      %989 = vmatprep.subr.bf16.mxu0 0
      %990 = vmatpush1.bf16.xpose.msra.mxu0 0
      %991 = vmatprep.subr.bf16.mxu0 0
      %992 = vmatpush1.bf16.xpose.msra.mxu0 0
      %993 = vmatprep.subr.bf16.mxu0 0
      %994 = vmatpush1.bf16.xpose.msra.mxu0 0
      %995 = vmatprep.subr.bf16.mxu0 0
      %996 = vmatpush1.bf16.xpose.msra.mxu0 0
      %997 = vmatprep.subr.bf16.mxu0 0
      %998 = vmatpush1.bf16.xpose.msra.mxu0 0
      %999 = vmatprep.subr.bf16.mxu0 0
      %1000 = vmatpush1.bf16.xpose.msra.mxu0 0
      %1001 = vmatprep.subr.bf16.mxu0 0
      %1002 = vmatpush1.bf16.xpose.msra.mxu0 0
      %1003 = vmatprep.subr.bf16.mxu0 0
      %1004 = vmatpush1.bf16.xpose.msra.mxu0 0
      %1005 = vmatprep.subr.bf16.mxu0 0
      %1006 = vmatpush1.bf16.xpose.msra.mxu0 0
      %1007 = vmatprep.subr.bf16.mxu0 0
      %1008 = vmatpush1.bf16.xpose.msra.mxu0 0
      %1009 = vmatprep.subr.bf16.mxu0 0
      %1010 = vmatpush1.bf16.xpose.msra.mxu0 0
      %1011 = vmatprep.subr.bf16.mxu0 0
      %1012 = vmatpush1.bf16.xpose.msra.mxu0 0
      %1013 = vmatprep.subr.bf16.mxu0 0
      %1014 = vmatpush1.bf16.xpose.msra.mxu0 0
      %1015 = vmatprep.mubr.bf16.mxu0 0
      %1016 = vmatmul.mubr.bf16.gmra.mrb[0].mxu0 %v978
      %v1017 = vpop.f32.mrb[0].mxu0
      %v1018 = vadd.f32 0.0, %v1017
      %v1019 = vpop.f32.mrb[0].mxu0
      %v1020 = vpop.f32.mrb[0].mxu0
      %v1021 = vadd.f32 0.0, %v1020
      %v1022 = vpop.f32.mrb[0].mxu0
      %1023 = vdwg.mxu0
      %v1024 = vmul.f32 %v1018, 0.35355338
      %v1025 = vmul.f32 %v1021, 0.35355338
      %v1026 = vadd.f32 %v1024, %v616
      %v1027 = vadd.f32 %v1025, %v617
      %v1028 = vsel %vm680, %v1026, -inf
      %1029 = vmax.xlane.f32.xlu0 %v1028
      %v1030 = vpop.xlane.xlu0 %1029
      %v1031 = vsel %vm680, %v1027, -inf
      %1032 = vmax.xlane.f32.xlu0 %v1031
      %v1033 = vpop.xlane.xlu0 %1032
      %v1034 = vsub.f32 %v1026, %v1030
      %v1035 = vsub.f32 %v1027, %v1033
      %v1036 = vmul.f32 %v1034, 1.442695
      %v1037 = vpow.pop %v1036
      %v1038 = vmul.f32 %v1035, 1.442695
      %v1039 = vpow.pop %v1038
      %v1040 = vsel %vm680, %v1037, 0.0
      %1041 = vadd.xlane.f32.xlu0 %v1040
      %v1042 = vpop.xlane.xlu0 %1041
      %v1043 = vsel %vm680, %v1039, 0.0
      %1044 = vadd.xlane.f32.xlu0 %v1043
      %v1045 = vpop.xlane.xlu0 %1044
      %v1046 = vrcp.pop %v1042
      %v1047 = vrcp.pop %v1045
      %v1048 = vmul.f32 %v1037, %v1046
      %v1049 = vmul.f32 %v1039, %v1047
      %v1050 = vpack.c.bf16 %v1049, %v1048
      %1051 = vrot.lane.b32.xlu0 %v624, 48
      %v1052 = vpop.permute.xlu0 %1051
      %v1055 = vsel %vm680, %v1050, 0
      %1057 = vmatprep.subr.bf16.mxu0 0
      %1058 = vmatpush1.bf16.msra.mxu0 %v1052
      %1059 = vmatprep.subr.bf16.mxu0 0
      %1060 = vmatpush1.bf16.msra.mxu0 0
      %1061 = vmatprep.subr.bf16.mxu0 0
      %1062 = vmatpush1.bf16.msra.mxu0 0
      %1063 = vmatprep.subr.bf16.mxu0 0
      %1064 = vmatpush1.bf16.msra.mxu0 0
      %1065 = vmatprep.subr.bf16.mxu0 0
      %1066 = vmatpush1.bf16.msra.mxu0 0
      %1067 = vmatprep.subr.bf16.mxu0 0
      %1068 = vmatpush1.bf16.msra.mxu0 0
      %1069 = vmatprep.subr.bf16.mxu0 0
      %1070 = vmatpush1.bf16.msra.mxu0 0
      %1071 = vmatprep.subr.bf16.mxu0 0
      %1072 = vmatpush1.bf16.msra.mxu0 0
      %1073 = vmatprep.subr.bf16.mxu0 0
      %1074 = vmatpush1.bf16.msra.mxu0 0
      %1075 = vmatprep.subr.bf16.mxu0 0
      %1076 = vmatpush1.bf16.msra.mxu0 0
      %1077 = vmatprep.subr.bf16.mxu0 0
      %1078 = vmatpush1.bf16.msra.mxu0 0
      %1079 = vmatprep.subr.bf16.mxu0 0
      %1080 = vmatpush1.bf16.msra.mxu0 0
      %1081 = vmatprep.subr.bf16.mxu0 0
      %1082 = vmatpush1.bf16.msra.mxu0 0
      %1083 = vmatprep.subr.bf16.mxu0 0
      %1084 = vmatpush1.bf16.msra.mxu0 0
      %1085 = vmatprep.subr.bf16.mxu0 0
      %1086 = vmatpush1.bf16.msra.mxu0 0
      %1087 = vmatprep.subr.bf16.mxu0 0
      %1088 = vmatpush1.bf16.msra.mxu0 0
      %1089 = vmatprep.mubr.bf16.mxu0 0
      %1090 = vmatmul.mubr.bf16.gmra.mrb[0].mxu0 %v1055
      %v1091 = vpop.f32.mrb[0].mxu0
      %v1092 = vadd.f32 0.0, %v1091
      %v1093 = vpop.f32.mrb[0].mxu0
      %v1094 = vpop.f32.mrb[0].mxu0
      %v1095 = vadd.f32 0.0, %v1094
      %v1096 = vpop.f32.mrb[0].mxu0
      %1097 = vdwg.mxu0
      %v1098 = vpack.c.bf16 %v1095, %v1092
      %v1100 = vsel %vm628, %v1098, 0
      %v1103 = vsel %vm881, %v622, 0
      %1105 = vmatprep.subr.bf16.mxu0 0
      %1106 = vmatpush1.bf16.msra.mxu0 %v1103
      %1107 = vmatprep.subr.bf16.mxu0 0
      %1108 = vmatpush1.bf16.msra.mxu0 0
      %1109 = vmatprep.subr.bf16.mxu0 0
      %1110 = vmatpush1.bf16.msra.mxu0 0
      %1111 = vmatprep.subr.bf16.mxu0 0
      %1112 = vmatpush1.bf16.msra.mxu0 0
      %1113 = vmatprep.subr.bf16.mxu0 0
      %1114 = vmatpush1.bf16.msra.mxu0 0
      %1115 = vmatprep.subr.bf16.mxu0 0
      %1116 = vmatpush1.bf16.msra.mxu0 0
      %1117 = vmatprep.subr.bf16.mxu0 0
      %1118 = vmatpush1.bf16.msra.mxu0 0
      %1119 = vmatprep.subr.bf16.mxu0 0
      %1120 = vmatpush1.bf16.msra.mxu0 0
      %1121 = vmatprep.subr.bf16.mxu0 0
      %1122 = vmatpush1.bf16.msra.mxu0 0
      %1123 = vmatprep.subr.bf16.mxu0 0
      %1124 = vmatpush1.bf16.msra.mxu0 0
      %1125 = vmatprep.subr.bf16.mxu0 0
      %1126 = vmatpush1.bf16.msra.mxu0 0
      %1127 = vmatprep.subr.bf16.mxu0 0
      %1128 = vmatpush1.bf16.msra.mxu0 0
      %1129 = vmatprep.subr.bf16.mxu0 0
      %1130 = vmatpush1.bf16.msra.mxu0 0
      %1131 = vmatprep.subr.bf16.mxu0 0
      %1132 = vmatpush1.bf16.msra.mxu0 0
      %1133 = vmatprep.subr.bf16.mxu0 0
      %1134 = vmatpush1.bf16.msra.mxu0 0
      %1135 = vmatprep.subr.bf16.mxu0 0
      %1136 = vmatpush1.bf16.msra.mxu0 0
      %1137 = vmatprep.mubr.bf16.mxu0 0
      %1138 = vmatmul.mubr.bf16.gmra.mrb[0].mxu0 %v1100
      %v1139 = vpop.f32.mrb[0].mxu0
      %v1140 = vadd.f32 0.0, %v1139
      %v1141 = vpop.f32.mrb[0].mxu0
      %v1142 = vpop.f32.mrb[0].mxu0
      %v1143 = vadd.f32 0.0, %v1142
      %v1144 = vpop.f32.mrb[0].mxu0
      %1145 = vdwg.mxu0
      %v1146 = vadd.f32 %v967, %v1140
      %v1147 = vadd.f32 %v970, %v1143
      %1148 = vrot.lane.b32.xlu0 %v624, 104
      %v1149 = vpop.permute.xlu0 %1148
      %1150 = vrot.lane.b32.xlu0 %v624, 72
      %v1151 = vpop.permute.xlu0 %1150
      %v1153 = vsel %vm628, %v1149, 0
      %v1156 = vsel %vm628, %v1151, 0
      %1158 = vmatprep.subr.bf16.mxu0 0
      %1159 = vmatpush1.bf16.xpose.msra.mxu0 %v1156
      %1160 = vmatprep.subr.bf16.mxu0 0
      %1161 = vmatpush1.bf16.xpose.msra.mxu0 0
      %1162 = vmatprep.subr.bf16.mxu0 0
      %1163 = vmatpush1.bf16.xpose.msra.mxu0 0
      %1164 = vmatprep.subr.bf16.mxu0 0
      %1165 = vmatpush1.bf16.xpose.msra.mxu0 0
      %1166 = vmatprep.subr.bf16.mxu0 0
      %1167 = vmatpush1.bf16.xpose.msra.mxu0 0
      %1168 = vmatprep.subr.bf16.mxu0 0
      %1169 = vmatpush1.bf16.xpose.msra.mxu0 0
      %1170 = vmatprep.subr.bf16.mxu0 0
      %1171 = vmatpush1.bf16.xpose.msra.mxu0 0
      %1172 = vmatprep.subr.bf16.mxu0 0
      %1173 = vmatpush1.bf16.xpose.msra.mxu0 0
      %1174 = vmatprep.subr.bf16.mxu0 0
      %1175 = vmatpush1.bf16.xpose.msra.mxu0 0
      %1176 = vmatprep.subr.bf16.mxu0 0
      %1177 = vmatpush1.bf16.xpose.msra.mxu0 0
      %1178 = vmatprep.subr.bf16.mxu0 0
      %1179 = vmatpush1.bf16.xpose.msra.mxu0 0
      %1180 = vmatprep.subr.bf16.mxu0 0
      %1181 = vmatpush1.bf16.xpose.msra.mxu0 0
      %1182 = vmatprep.subr.bf16.mxu0 0
      %1183 = vmatpush1.bf16.xpose.msra.mxu0 0
      %1184 = vmatprep.subr.bf16.mxu0 0
      %1185 = vmatpush1.bf16.xpose.msra.mxu0 0
      %1186 = vmatprep.subr.bf16.mxu0 0
      %1187 = vmatpush1.bf16.xpose.msra.mxu0 0
      %1188 = vmatprep.subr.bf16.mxu0 0
      %1189 = vmatpush1.bf16.xpose.msra.mxu0 0
      %1190 = vmatprep.mubr.bf16.mxu0 0
      %1191 = vmatmul.mubr.bf16.gmra.mrb[0].mxu0 %v1153
      %v1192 = vpop.f32.mrb[0].mxu0
      %v1193 = vadd.f32 0.0, %v1192
      %v1194 = vpop.f32.mrb[0].mxu0
      %v1195 = vpop.f32.mrb[0].mxu0
      %v1196 = vadd.f32 0.0, %v1195
      %v1197 = vpop.f32.mrb[0].mxu0
      %1198 = vdwg.mxu0
      %v1199 = vmul.f32 %v1193, 0.35355338
      %v1200 = vmul.f32 %v1196, 0.35355338
      %v1201 = vadd.f32 %v1199, %v618
      %v1202 = vadd.f32 %v1200, %v619
      %v1203 = vsel %vm680, %v1201, -inf
      %1204 = vmax.xlane.f32.xlu0 %v1203
      %v1205 = vpop.xlane.xlu0 %1204
      %v1206 = vsel %vm680, %v1202, -inf
      %1207 = vmax.xlane.f32.xlu0 %v1206
      %v1208 = vpop.xlane.xlu0 %1207
      %v1209 = vsub.f32 %v1201, %v1205
      %v1210 = vsub.f32 %v1202, %v1208
      %v1211 = vmul.f32 %v1209, 1.442695
      %v1212 = vpow.pop %v1211
      %v1213 = vmul.f32 %v1210, 1.442695
      %v1214 = vpow.pop %v1213
      %v1215 = vsel %vm680, %v1212, 0.0
      %1216 = vadd.xlane.f32.xlu0 %v1215
      %v1217 = vpop.xlane.xlu0 %1216
      %v1218 = vsel %vm680, %v1214, 0.0
      %1219 = vadd.xlane.f32.xlu0 %v1218
      %v1220 = vpop.xlane.xlu0 %1219
      %v1221 = vrcp.pop %v1217
      %v1222 = vrcp.pop %v1220
      %v1223 = vmul.f32 %v1212, %v1221
      %v1224 = vmul.f32 %v1214, %v1222
      %v1225 = vpack.c.bf16 %v1224, %v1223
      %1226 = vrot.lane.b32.xlu0 %v624, 40
      %v1227 = vpop.permute.xlu0 %1226
      %v1230 = vsel %vm680, %v1225, 0
      %1232 = vmatprep.subr.bf16.mxu0 0
      %1233 = vmatpush1.bf16.msra.mxu0 %v1227
      %1234 = vmatprep.subr.bf16.mxu0 0
      %1235 = vmatpush1.bf16.msra.mxu0 0
      %1236 = vmatprep.subr.bf16.mxu0 0
      %1237 = vmatpush1.bf16.msra.mxu0 0
      %1238 = vmatprep.subr.bf16.mxu0 0
      %1239 = vmatpush1.bf16.msra.mxu0 0
      %1240 = vmatprep.subr.bf16.mxu0 0
      %1241 = vmatpush1.bf16.msra.mxu0 0
      %1242 = vmatprep.subr.bf16.mxu0 0
      %1243 = vmatpush1.bf16.msra.mxu0 0
      %1244 = vmatprep.subr.bf16.mxu0 0
      %1245 = vmatpush1.bf16.msra.mxu0 0
      %1246 = vmatprep.subr.bf16.mxu0 0
      %1247 = vmatpush1.bf16.msra.mxu0 0
      %1248 = vmatprep.subr.bf16.mxu0 0
      %1249 = vmatpush1.bf16.msra.mxu0 0
      %1250 = vmatprep.subr.bf16.mxu0 0
      %1251 = vmatpush1.bf16.msra.mxu0 0
      %1252 = vmatprep.subr.bf16.mxu0 0
      %1253 = vmatpush1.bf16.msra.mxu0 0
      %1254 = vmatprep.subr.bf16.mxu0 0
      %1255 = vmatpush1.bf16.msra.mxu0 0
      %1256 = vmatprep.subr.bf16.mxu0 0
      %1257 = vmatpush1.bf16.msra.mxu0 0
      %1258 = vmatprep.subr.bf16.mxu0 0
      %1259 = vmatpush1.bf16.msra.mxu0 0
      %1260 = vmatprep.subr.bf16.mxu0 0
      %1261 = vmatpush1.bf16.msra.mxu0 0
      %1262 = vmatprep.subr.bf16.mxu0 0
      %1263 = vmatpush1.bf16.msra.mxu0 0
      %1264 = vmatprep.mubr.bf16.mxu0 0
      %1265 = vmatmul.mubr.bf16.gmra.mrb[0].mxu0 %v1230
      %v1266 = vpop.f32.mrb[0].mxu0
      %v1267 = vadd.f32 0.0, %v1266
      %v1268 = vpop.f32.mrb[0].mxu0
      %v1269 = vpop.f32.mrb[0].mxu0
      %v1270 = vadd.f32 0.0, %v1269
      %v1271 = vpop.f32.mrb[0].mxu0
      %1272 = vdwg.mxu0
      %v1273 = vpack.c.bf16 %v1270, %v1267
      %v1275 = vsel %vm628, %v1273, 0
      %v1278 = vsel %vm881, %v623, 0
      %1280 = vmatprep.subr.bf16.mxu0 0
      %1281 = vmatpush1.bf16.msra.mxu0 %v1278
      %1282 = vmatprep.subr.bf16.mxu0 0
      %1283 = vmatpush1.bf16.msra.mxu0 0
      %1284 = vmatprep.subr.bf16.mxu0 0
      %1285 = vmatpush1.bf16.msra.mxu0 0
      %1286 = vmatprep.subr.bf16.mxu0 0
      %1287 = vmatpush1.bf16.msra.mxu0 0
      %1288 = vmatprep.subr.bf16.mxu0 0
      %1289 = vmatpush1.bf16.msra.mxu0 0
      %1290 = vmatprep.subr.bf16.mxu0 0
      %1291 = vmatpush1.bf16.msra.mxu0 0
      %1292 = vmatprep.subr.bf16.mxu0 0
      %1293 = vmatpush1.bf16.msra.mxu0 0
      %1294 = vmatprep.subr.bf16.mxu0 0
      %1295 = vmatpush1.bf16.msra.mxu0 0
      %1296 = vmatprep.subr.bf16.mxu0 0
      %1297 = vmatpush1.bf16.msra.mxu0 0
      %1298 = vmatprep.subr.bf16.mxu0 0
      %1299 = vmatpush1.bf16.msra.mxu0 0
      %1300 = vmatprep.subr.bf16.mxu0 0
      %1301 = vmatpush1.bf16.msra.mxu0 0
      %1302 = vmatprep.subr.bf16.mxu0 0
      %1303 = vmatpush1.bf16.msra.mxu0 0
      %1304 = vmatprep.subr.bf16.mxu0 0
      %1305 = vmatpush1.bf16.msra.mxu0 0
      %1306 = vmatprep.subr.bf16.mxu0 0
      %1307 = vmatpush1.bf16.msra.mxu0 0
      %1308 = vmatprep.subr.bf16.mxu0 0
      %1309 = vmatpush1.bf16.msra.mxu0 0
      %1310 = vmatprep.subr.bf16.mxu0 0
      %1311 = vmatpush1.bf16.msra.mxu0 0
      %1312 = vmatprep.mubr.bf16.mxu0 0
      %1313 = vmatmul.mubr.bf16.gmra.mrb[0].mxu0 %v1275
      %v1314 = vpop.f32.mrb[0].mxu0
      %v1315 = vadd.f32 0.0, %v1314
      %v1316 = vpop.f32.mrb[0].mxu0
      %v1317 = vpop.f32.mrb[0].mxu0
      %v1318 = vadd.f32 0.0, %v1317
      %v1319 = vpop.f32.mrb[0].mxu0
      %1320 = vdwg.mxu0
      %v1321 = vadd.f32 %v1146, %v1315
      %v1322 = vadd.f32 %v1147, %v1318
      %v1323 = vadd.f32 %v496, %v1321
      %v1324 = vadd.f32 %v497, %v1322
      %v1325 = vld [vmem:[%s6] sm:$0x1]
      %v1327 = vlaneseq
      %v1328 = vshrl.u32 %v1327, 7
      %v1329 = vsub.s32 0, %v1328
      %v1330 = vrot.slane %v1325, %v1329
      %v1332 = vadd.f32 %v1323, %v1330
      %v1333 = vadd.f32 %v1324, %v1330
      %v1334 = vld [vmem:[%s9] sm:$0x1]
      %v1335 = vld [vmem:[%s10] sm:$0x1]
      %v1336 = vsel %vm500, %v1332, 0.0
      %1337 = vadd.xlane.f32.xlu0 %v1336
      %v1338 = vpop.xlane.xlu0 %1337
      %v1339 = vsel %vm500, %v1333, 0.0
      %1340 = vadd.xlane.f32.xlu0 %v1339
      %v1341 = vpop.xlane.xlu0 %1340
      %v1342 = vmul.f32 %v1338, %v507
      %v1343 = vmul.f32 %v1341, %v507
      %v1344 = vsub.f32 %v1332, %v1342
      %v1345 = vsub.f32 %v1333, %v1343
      %v1346 = vmul.f32 %v1344, %v1344
      %v1347 = vmul.f32 %v1345, %v1345
      %v1348 = vsel %vm500, %v1346, 0.0
      %1349 = vadd.xlane.f32.xlu0 %v1348
      %v1350 = vpop.xlane.xlu0 %1349
      %v1351 = vsel %vm500, %v1347, 0.0
      %1352 = vadd.xlane.f32.xlu0 %v1351
      %v1353 = vpop.xlane.xlu0 %1352
      %v1354 = vmul.f32 %v1350, %v507
      %v1355 = vmul.f32 %v1353, %v507
      %v1356 = vadd.f32 %v1354, 1e-05
      %v1357 = vadd.f32 %v1355, 1e-05
      %v1358 = vrsqrt.pop %v1356
      %v1359 = vrsqrt.pop %v1357
      %v1360 = vmul.f32 %v1344, %v1358
      %v1361 = vmul.f32 %v1345, %v1359
      %v1363 = vlaneseq
      %v1364 = vshrl.u32 %v1363, 7
      %v1365 = vsub.s32 0, %v1364
      %v1366 = vrot.slane %v1334, %v1365
      %v1368 = vmul.f32 %v1360, %v1366
      %v1369 = vmul.f32 %v1361, %v1366
      %v1371 = vlaneseq
      %v1372 = vshrl.u32 %v1371, 7
      %v1373 = vsub.s32 0, %v1372
      %v1374 = vrot.slane %v1335, %v1373
      %v1376 = vadd.f32 %v1368, %v1374
      %v1377 = vadd.f32 %v1369, %v1374
      %v1378 = vpack.c.bf16 %v1377, %v1376
      %v1379 = vld [vmem:[%s11] sm:$0xf]
      %v1380 = vld [vmem:[%s11 + $0x4] sm:$0xf]
      %v1381 = vld [vmem:[%s11 + $0x8] sm:$0xf]
      %v1382 = vld [vmem:[%s11 + $0xc] sm:$0xf]
      %v1383 = vld [vmem:[%s12] sm:$0x1]
      %v1385 = vlaneseq
      %v1386 = vshrl.u32 %v1385, 7
      %v1387 = vsub.s32 0, %v1386
      %v1388 = vrot.slane %v1383, %v1387
      %v1394 = vunpack.c.l.b16 %v1379
      %v1395 = vunpack.c.l.b16 %v1380
      %v1396 = vunpack.c.l.b16 %v1381
      %v1397 = vunpack.c.l.b16 %v1382
      %v1398 = vpack.c.b16 %v1395, %v1394
      %v1399 = vpack.c.b16 %v1397, %v1396
      %v1403 = vsel %vm500, %v1378, 0
      %1405 = vmatprep.subr.bf16.mxu0 0
      %1406 = vmatpush1.bf16.msra.mxu0 %v1398
      %1407 = vmatprep.subr.bf16.mxu0 0
      %1408 = vmatpush1.bf16.msra.mxu0 %v1399
      %1409 = vmatprep.subr.bf16.mxu0 0
      %1410 = vmatpush1.bf16.msra.mxu0 0
      %1411 = vmatprep.subr.bf16.mxu0 0
      %1412 = vmatpush1.bf16.msra.mxu0 0
      %1413 = vmatprep.subr.bf16.mxu0 0
      %1414 = vmatpush1.bf16.msra.mxu0 0
      %1415 = vmatprep.subr.bf16.mxu0 0
      %1416 = vmatpush1.bf16.msra.mxu0 0
      %1417 = vmatprep.subr.bf16.mxu0 0
      %1418 = vmatpush1.bf16.msra.mxu0 0
      %1419 = vmatprep.subr.bf16.mxu0 0
      %1420 = vmatpush1.bf16.msra.mxu0 0
      %1421 = vmatprep.subr.bf16.mxu0 0
      %1422 = vmatpush1.bf16.msra.mxu0 0
      %1423 = vmatprep.subr.bf16.mxu0 0
      %1424 = vmatpush1.bf16.msra.mxu0 0
      %1425 = vmatprep.subr.bf16.mxu0 0
      %1426 = vmatpush1.bf16.msra.mxu0 0
      %1427 = vmatprep.subr.bf16.mxu0 0
      %1428 = vmatpush1.bf16.msra.mxu0 0
      %1429 = vmatprep.subr.bf16.mxu0 0
      %1430 = vmatpush1.bf16.msra.mxu0 0
      %1431 = vmatprep.subr.bf16.mxu0 0
      %1432 = vmatpush1.bf16.msra.mxu0 0
      %1433 = vmatprep.subr.bf16.mxu0 0
      %1434 = vmatpush1.bf16.msra.mxu0 0
      %1435 = vmatprep.subr.bf16.mxu0 0
      %1436 = vmatpush1.bf16.msra.mxu0 0
      %1437 = vmatprep.mubr.bf16.mxu0 0
      %1438 = vmatmul.mubr.bf16.gmra.mrb[0].mxu0 %v1403
      %v1439 = vpop.f32.mrb[0].mxu0
      %v1440 = vadd.f32 %v1388, %v1439
      %v1441 = vpop.f32.mrb[0].mxu0
      %v1442 = vpop.f32.mrb[0].mxu0
      %v1443 = vadd.f32 %v1388, %v1442
      %v1444 = vpop.f32.mrb[0].mxu0
      %1445 = vdwg.mxu0
      %v1446 = vmul.f32 %v1440, 0.5
      %v1447 = vmul.f32 %v1443, 0.5
      %v1448 = vmul.f32 %v1440, 0.70710677
      %v1449 = vmul.f32 %v1443, 0.70710677
      %v1450 = vmax.f32 %v1448, -4.0
      %v1451 = vmax.f32 %v1449, -4.0
      %v1452 = vmin.f32 %v1450, 4.0
      %v1453 = vmin.f32 %v1451, 4.0
      %v1454 = vmul.f32 %v1452, %v1452
      %v1455 = vmul.f32 %v1453, %v1453
      %v1456 = vmul.f32 %v1454, 0.00022905065
      %v1457 = vmul.f32 %v1455, 0.00022905065
      %v1458 = vadd.f32 %v1456, 0.003408291
      %v1459 = vadd.f32 %v1457, 0.003408291
      %v1460 = vmul.f32 %v1458, %v1454
      %v1461 = vmul.f32 %v1459, %v1455
      %v1462 = vadd.f32 %v1460, 0.050955694
      %v1463 = vadd.f32 %v1461, 0.050955694
      %v1464 = vmul.f32 %v1462, %v1454
      %v1465 = vmul.f32 %v1463, %v1455
      %v1466 = vadd.f32 %v1464, 0.18520832
      %v1467 = vadd.f32 %v1465, 0.18520832
      %v1468 = vmul.f32 %v1466, %v1454
      %v1469 = vmul.f32 %v1467, %v1455
      %v1470 = vadd.f32 %v1468, 1.1283791
      %v1471 = vadd.f32 %v1469, 1.1283791
      %v1472 = vmul.f32 %v1454, -1.1791603e-07
      %v1473 = vmul.f32 %v1455, -1.1791603e-07
      %v1474 = vadd.f32 %v1472, 2.3547966e-05
      %v1475 = vadd.f32 %v1473, 2.3547966e-05
      %v1476 = vmul.f32 %v1474, %v1454
      %v1477 = vmul.f32 %v1475, %v1455
      %v1478 = vadd.f32 %v1476, 0.0010179626
      %v1479 = vadd.f32 %v1477, 0.0010179626
      %v1480 = vmul.f32 %v1478, %v1454
      %v1481 = vmul.f32 %v1479, %v1455
      %v1482 = vadd.f32 %v1480, 0.01407047
      %v1483 = vadd.f32 %v1481, 0.01407047
      %v1484 = vmul.f32 %v1482, %v1454
      %v1485 = vmul.f32 %v1483, %v1455
      %v1486 = vadd.f32 %v1484, 0.11098505
      %v1487 = vadd.f32 %v1485, 0.11098505
      %v1488 = vmul.f32 %v1486, %v1454
      %v1489 = vmul.f32 %v1487, %v1455
      %v1490 = vadd.f32 %v1488, 0.49746925
      %v1491 = vadd.f32 %v1489, 0.49746925
      %v1492 = vmul.f32 %v1490, %v1454
      %v1493 = vmul.f32 %v1491, %v1455
      %v1494 = vadd.f32 %v1492, 1.0
      %v1495 = vadd.f32 %v1493, 1.0
      %v1496 = vmul.f32 %v1452, %v1470
      %v1497 = vmul.f32 %v1453, %v1471
      %v1498 = vrcp.pop %v1494
      %v1499 = vrcp.pop %v1495
      %v1500 = vmul.f32 %v1496, %v1498
      %v1501 = vmul.f32 %v1497, %v1499
      %v1502 = vadd.f32 %v1500, 1.0
      %v1503 = vadd.f32 %v1501, 1.0
      %v1504 = vmul.f32 %v1446, %v1502
      %v1505 = vmul.f32 %v1447, %v1503
      %v1506 = vpack.c.bf16 %v1505, %v1504
      %v1507 = vld [vmem:[%s13] sm:$0xf]
      %v1508 = vld [vmem:[%s13 + $0x4] sm:$0xf]
      %v1509 = vld [vmem:[%s13 + $0x8] sm:$0xf]
      %v1510 = vld [vmem:[%s13 + $0xc] sm:$0xf]
      %v1511 = vld [vmem:[%s13 + $0x10] sm:$0xf]
      %v1512 = vld [vmem:[%s13 + $0x14] sm:$0xf]
      %v1513 = vld [vmem:[%s13 + $0x18] sm:$0xf]
      %v1514 = vld [vmem:[%s13 + $0x1c] sm:$0xf]
      %v1515 = vld [vmem:[%s13 + $0x20] sm:$0xf]
      %v1516 = vld [vmem:[%s13 + $0x24] sm:$0xf]
      %v1517 = vld [vmem:[%s13 + $0x28] sm:$0xf]
      %v1518 = vld [vmem:[%s13 + $0x2c] sm:$0xf]
      %v1519 = vld [vmem:[%s13 + $0x30] sm:$0xf]
      %v1520 = vld [vmem:[%s13 + $0x34] sm:$0xf]
      %v1521 = vld [vmem:[%s13 + $0x38] sm:$0xf]
      %v1522 = vld [vmem:[%s13 + $0x3c] sm:$0xf]
      %v1523 = vld [vmem:[%s14] sm:$0x1]
      %v1525 = vlaneseq
      %v1526 = vshrl.u32 %v1525, 7
      %v1527 = vsub.s32 0, %v1526
      %v1528 = vrot.slane %v1523, %v1527
      %v1546 = vunpack.c.l.b16 %v1507
      %v1547 = vunpack.c.l.b16 %v1508
      %v1548 = vunpack.c.l.b16 %v1509
      %v1549 = vunpack.c.l.b16 %v1510
      %v1550 = vunpack.c.l.b16 %v1511
      %v1551 = vunpack.c.l.b16 %v1512
      %v1552 = vunpack.c.l.b16 %v1513
      %v1553 = vunpack.c.l.b16 %v1514
      %v1554 = vunpack.c.l.b16 %v1515
      %v1555 = vunpack.c.l.b16 %v1516
      %v1556 = vunpack.c.l.b16 %v1517
      %v1557 = vunpack.c.l.b16 %v1518
      %v1558 = vunpack.c.l.b16 %v1519
      %v1559 = vunpack.c.l.b16 %v1520
      %v1560 = vunpack.c.l.b16 %v1521
      %v1561 = vunpack.c.l.b16 %v1522
      %v1562 = vpack.c.b16 %v1547, %v1546
      %v1563 = vpack.c.b16 %v1549, %v1548
      %v1564 = vpack.c.b16 %v1551, %v1550
      %v1565 = vpack.c.b16 %v1553, %v1552
      %v1566 = vpack.c.b16 %v1555, %v1554
      %v1567 = vpack.c.b16 %v1557, %v1556
      %v1568 = vpack.c.b16 %v1559, %v1558
      %v1569 = vpack.c.b16 %v1561, %v1560
      %1578 = vmatprep.subr.bf16.mxu0 0
      %1579 = vmatpush1.bf16.msra.mxu0 %v1562
      %1580 = vmatprep.subr.bf16.mxu0 0
      %1581 = vmatpush1.bf16.msra.mxu0 %v1563
      %1582 = vmatprep.subr.bf16.mxu0 0
      %1583 = vmatpush1.bf16.msra.mxu0 %v1564
      %1584 = vmatprep.subr.bf16.mxu0 0
      %1585 = vmatpush1.bf16.msra.mxu0 %v1565
      %1586 = vmatprep.subr.bf16.mxu0 0
      %1587 = vmatpush1.bf16.msra.mxu0 %v1566
      %1588 = vmatprep.subr.bf16.mxu0 0
      %1589 = vmatpush1.bf16.msra.mxu0 %v1567
      %1590 = vmatprep.subr.bf16.mxu0 0
      %1591 = vmatpush1.bf16.msra.mxu0 %v1568
      %1592 = vmatprep.subr.bf16.mxu0 0
      %1593 = vmatpush1.bf16.msra.mxu0 %v1569
      %1594 = vmatprep.subr.bf16.mxu0 0
      %1595 = vmatpush1.bf16.msra.mxu0 0
      %1596 = vmatprep.subr.bf16.mxu0 0
      %1597 = vmatpush1.bf16.msra.mxu0 0
      %1598 = vmatprep.subr.bf16.mxu0 0
      %1599 = vmatpush1.bf16.msra.mxu0 0
      %1600 = vmatprep.subr.bf16.mxu0 0
      %1601 = vmatpush1.bf16.msra.mxu0 0
      %1602 = vmatprep.subr.bf16.mxu0 0
      %1603 = vmatpush1.bf16.msra.mxu0 0
      %1604 = vmatprep.subr.bf16.mxu0 0
      %1605 = vmatpush1.bf16.msra.mxu0 0
      %1606 = vmatprep.subr.bf16.mxu0 0
      %1607 = vmatpush1.bf16.msra.mxu0 0
      %1608 = vmatprep.subr.bf16.mxu0 0
      %1609 = vmatpush1.bf16.msra.mxu0 0
      %1610 = vmatprep.mubr.bf16.mxu0 0
      %1611 = vmatmul.mubr.bf16.gmra.mrb[0].mxu0 %v1506
      %v1612 = vpop.f32.mrb[0].mxu0
      %v1613 = vadd.f32 %v1528, %v1612
      %v1614 = vpop.f32.mrb[0].mxu0
      %v1615 = vpop.f32.mrb[0].mxu0
      %v1616 = vadd.f32 %v1528, %v1615
      %v1617 = vpop.f32.mrb[0].mxu0
      %1618 = vdwg.mxu0
      %v1619 = vadd.f32 %v1332, %v1613
      %v1620 = vadd.f32 %v1333, %v1616
      %1621 = vst.msk [vmem:[%s494] sm:$0xff] %vm500, %v1619
      %1622 = vst.msk [vmem:[%s494 + $0x8] sm:$0xff] %vm500, %v1620
      %p1623 = scmp.lt.s32.totalorder %s26, 1
      %s1624 = scalar_select %p1623, %s26, 1
      %s1625 = smul.addr %s1624, 2
      %s1626 = smul.addr %s1625, 8
      %s1627 = scalar_lea.vmem %s15, %s1626
      // Predicated region
      $region81: #{swin_forward.11} parent=79 // pred_check
        %p1628 = pneg %p364
      $region82: #{swin_forward.11} parent=79 // pred_check_branch
        %1630 = sbr.rel (%p1628) target = $region84
      $region83: #{swin_forward.11} parent=79 // pred_region
        _
      $region84: #{swin_forward.11} parent=79 // pred_fallthru
        _
    $region80: #{swin_forward.11} parent=5 // pred_fallthru
      _
    %p1631 = scmp.le.s32.totalorder 2, %s21
    // Predicated region
    $region85: #{swin_forward.11} parent=5 // pred_check
      %p1632 = pneg %p1631
    $region86: #{swin_forward.11} parent=5 // pred_check_branch
      %1634 = sbr.rel (%p1632) target = $region88
    $region87: #{swin_forward.11} parent=5 // pred_region
      %s1635 = ssub.s32 %s21, 2
      // Predicated region
      $region89: #{swin_forward.11} parent=87 // pred_check
        %p1636 = pneg %p370
      $region90: #{swin_forward.11} parent=87 // pred_check_branch
        %1638 = sbr.rel (%p1636) target = $region92
      $region91: #{swin_forward.11} parent=87 // pred_region
        %p1639 = scmp.lt.s32.totalorder %s27, 1
        %s1640 = scalar_select %p1639, %s27, 1
        %s1641 = smul.addr %s1640, 2
        %s1642 = smul.addr %s1641, 8
        %s1643 = scalar_lea.vmem %s15, %s1642
      $region92: #{swin_forward.11} parent=87 // pred_fallthru
        _
    $region88: #{swin_forward.11} parent=5 // pred_fallthru
      _
  $region6: #{swin_forward.11} parent=0 // loop_footer
    %s25 = sadd.s32 1, %s21
  $region7: #{swin_forward.11} parent=0 // loop_footer_branch
    %20 = sbr.rel target = $region3
  $region8: #{swin_forward.11} parent=0 // loop_exit
    _

</llo_original>
